<compile_context>
chip_gen: v5e
topology: v5e:2x2
jax: 0.10.0
libtpu: 0.0.40
codegen_flags: <defaults>
</compile_context>

<pallas_src>
import numpy as np
import jax
import jax.numpy as jnp
from jax.experimental import pallas as pl
from jax.experimental.pallas import tpu as pltpu


# ----------------------------------------------------------------------------
# The single fused Pallas kernel
# ----------------------------------------------------------------------------
def _cnn_fused_kernel(
    x_ref,                      # (B, D0)   f32   input, resident
    w1_ref,                     # (D0, TN)  int8  down layer 1 column slab (pipelined)
    s1_ref, b1_ref,             # (1, TN)   f32   per-column dequant scale / bias
    w2_ref,                     # (TN, D2)  bf16  down layer 2 row slab (pipelined)
    b2_ref,                     # (1, D2)   f32
    w3_ref, b3_ref,             # down layer 3, resident
    wc1_ref, bc1_ref,           # conv1+BN as dense channel-last operator, resident
    wc2_ref, bc2_ref,           # conv2+BN
    wc3_ref, bc3_ref,           # conv3+BN
    wc4_ref, bc4_ref,           # conv4+BN
    wf_ref, bf_ref,             # fc head
    o_ref,                      # (B, O) f32
    acc2_ref,                   # VMEM scratch: down-layer-2 pre-activation accumulator
):
    i = pl.program_id(0)

    @pl.when(i == 0)
    def _init():
        acc2_ref[...] = jnp.zeros_like(acc2_ref)

    # ---- down layer 1 (N-tiled, int8 weights) + partial K-reduction into layer 2 ----
    #   z        = x @ dequant(W1[:, tile])  ==  (x @ W1q[:, tile]) * scale[tile]
    #   h1_tile  = relu(z + b1[tile])                                      (B, TN)
    #   acc2    += h1_tile @ W2[tile, :]                                   (B, D2)
    # int8 values (|q| <= 127) are exact in bf16, so the MXU dot stays bf16 on all gens.
    w1q = w1_ref[...].astype(jnp.float32).astype(jnp.bfloat16)
    h1 = jnp.dot(x_ref[...].astype(jnp.bfloat16), w1q,
                 preferred_element_type=jnp.float32)
    h1 = jnp.maximum(h1 * s1_ref[...] + b1_ref[...], 0.0)
    acc2_ref[...] += jnp.dot(h1.astype(jnp.bfloat16), w2_ref[...],
                             preferred_element_type=jnp.float32)

    # ---- everything else runs once, on the last grid step, entirely from VMEM ------
    @pl.when(i == pl.num_programs(0) - 1)
    def _tail():
        def dense(h, w_ref, b_ref, relu=True):
            y = jnp.dot(h.astype(w_ref.dtype), w_ref[...],
                        preferred_element_type=jnp.float32) + b_ref[...]
            return jnp.maximum(y, 0.0) if relu else y

        h = jnp.maximum(acc2_ref[...] + b2_ref[...], 0.0)   # down layer 2   (B, D2)
        h = dense(h, w3_ref, b3_ref)     # down layer 3 -> flat 16x16x1 image (B, 256)
        h = dense(h, wc1_ref, bc1_ref)   # Conv2d(1,4,3,s=2,p=1)+BN+ReLU      (B, 8*8*4)
        h = dense(h, wc2_ref, bc2_ref)   # Conv2d(4,16)+BN+ReLU               (B, 4*4*16)
        h = dense(h, wc3_ref, bc3_ref)   # Conv2d(16,64)+BN+ReLU              (B, 2*2*64)
        h = dense(h, wc4_ref, bc4_ref)   # Conv2d(64,64)+BN+ReLU              (B, 64)
        # AdaptiveAvgPool2d((1,1)) on a 1x1 map + Flatten == identity -> skip the mean.
        logits = dense(h, wf_ref, bf_ref, relu=False)        # (B, O)
        m = jnp.max(logits, axis=-1, keepdims=True)
        e = jnp.exp(logits - m)
        o_ref[...] = (e / jnp.sum(e, axis=-1, keepdims=True)).astype(o_ref.dtype)


def cnn_forward(fused, x):
    """x: (B, inputDim) f32 -> softmax probs (B, outputDim).  One pallas_call."""
    (w1t, s1t, b1t, w2t, b2, w3, b3,
     wc1, bc1, wc2, bc2, wc3, bc3, wc4, bc4, wf, bf) = fused
    n_tiles, D0, TN = w1t.shape
    D2 = w2t.shape[2]
    B = x.shape[0]
    O = wf.shape[1]
    assert x.shape[1] == D0

    def resident(a):                            # whole array as one constant block
        return pl.BlockSpec(a.shape, lambda i: (0,) * a.ndim)

    in_specs = [
        resident(x),                                          # x: resident
        pl.BlockSpec((None, D0, TN), lambda i: (i, 0, 0)),    # W1 int8 slab (pipelined)
        pl.BlockSpec((None, 1, TN), lambda i: (i, 0, 0)),     # per-column scale tile
        pl.BlockSpec((None, 1, TN), lambda i: (i, 0, 0)),     # b1 tile
        pl.BlockSpec((None, TN, D2), lambda i: (i, 0, 0)),    # W2 row slab (pipelined)
        resident(b2), resident(w3), resident(b3),
        resident(wc1), resident(bc1), resident(wc2), resident(bc2),
        resident(wc3), resident(bc3), resident(wc4), resident(bc4),
        resident(wf), resident(bf),
    ]
    return pl.pallas_call(
        _cnn_fused_kernel,
        out_shape=jax.ShapeDtypeStruct((B, O), jnp.float32),
        grid=(n_tiles,),
        in_specs=in_specs,
        out_specs=pl.BlockSpec((B, O), lambda i: (0, 0)),
        scratch_shapes=[pltpu.VMEM((B, D2), jnp.float32)],
        compiler_params=pltpu.CompilerParams(
            # Sequential K-reduction feeding the in-VMEM tail -> must stay "arbitrary".
            # (Per review: do NOT shard this across v7x cores; it would double the
            #  HBM weight bytes that already bound the kernel.)
            dimension_semantics=("arbitrary",),
        ),
    )(x.astype(jnp.float32), w1t, s1t, b1t, w2t, b2, w3, b3,
      wc1, bc1, wc2, bc2, wc3, bc3, wc4, bc4, wf, bf)


# ----------------------------------------------------------------------------
# One-time parameter transforms (host side, at init)
# ----------------------------------------------------------------------------
def _conv_as_dense(w, bias_shift, h_in, w_in, stride=2, pad=1):
    """Exact dense-operator form of Conv2d(k=3, s=2, p=1), channel-last flattening.

    Returns (mat (Hin*Win*Cin, Ho*Wo*Cout), bias (Ho*Wo*Cout,), Ho, Wo) such that
    flatten_hwc(conv(x)) == flatten_hwc(x) @ mat + bias.
    """
    w = np.asarray(w, np.float32)                   # (Cout, Cin, k, k)
    cout, cin, k, _ = w.shape
    ho = (h_in + 2 * pad - k) // stride + 1
    wo = (w_in + 2 * pad - k) // stride + 1
    mat = np.zeros((h_in * w_in * cin, ho * wo * cout), np.float32)
    for oh in range(ho):
        for ow in range(wo):
            c0 = (oh * wo + ow) * cout
            for ki in range(k):
                for kj in range(k):
                    ih = stride * oh - pad + ki
                    iw = stride * ow - pad + kj
                    if 0 <= ih < h_in and 0 <= iw < w_in:
                        r0 = (ih * w_in + iw) * cin
                        mat[r0:r0 + cin, c0:c0 + cout] += w[:, :, ki, kj].T
    bias = np.tile(np.asarray(bias_shift, np.float32), ho * wo)
    return mat, bias, ho, wo


def init_params(key, input_dim, output_dim, num_down_layer=3):
    """PyTorch-shaped random parameters (conv OIHW, eval-mode BN running stats)."""
    params = {"down": [], "conv": []}
    d = input_dim
    for _ in range(num_down_layer):
        key, k1, k2 = jax.random.split(key, 3)
        w = jax.random.normal(k1, (d, d // 2), jnp.float32) * jnp.sqrt(2.0 / d)
        b = jax.random.normal(k2, (d // 2,), jnp.float32) * 0.01
        params["down"].append((w, b))
        d //= 2
    side = int(round(d ** 0.5))
    assert side * side == d, "inputDim / 2**num_downLayer must be a perfect square"
    params["side"] = side
    chans = [1, 4, 16, 64, 64]
    for li in range(4):
        cin, cout = chans[li], chans[li + 1]
        key, k1, k2 = jax.random.split(key, 3)
        w = jax.random.normal(k1, (cout, cin, 3, 3), jnp.float32) * jnp.sqrt(
            2.0 / (cin * 9))
        b = jax.random.normal(k2, (cout,), jnp.float32) * 0.01
        gamma = jnp.linspace(0.9, 1.1, cout, dtype=jnp.float32)
        beta = jnp.linspace(-0.05, 0.05, cout, dtype=jnp.float32)
        mean = jnp.zeros((cout,), jnp.float32)      # fresh BN running stats
        var = jnp.ones((cout,), jnp.float32)
        params["conv"].append((w, b, gamma, beta, mean, var))
    key, k1, k2 = jax.random.split(key, 3)
    params["fc_w"] = jax.random.normal(k1, (64, output_dim), jnp.float32) * jnp.sqrt(
        1.0 / 64)
    params["fc_b"] = jax.random.normal(k2, (output_dim,), jnp.float32) * 0.01
    return params


def fold_and_pack(params, eps=1e-5, tn=512):
    """Fold BN into the conv weights, lower each conv to its dense channel-last
    operator, quantise W1 to per-column int8, pre-tile W1/W2 into contiguous
    per-grid-step slabs and pack the fused-kernel operands."""
    (w1, b1), (w2, b2), (w3, b3) = params["down"]
    w1 = np.asarray(w1, np.float32); b1 = np.asarray(b1, np.float32)
    w2 = np.asarray(w2, np.float32)
    D0, D1 = w1.shape
    D2 = w2.shape[1]
    # One full-width tile if D1 is not a multiple of tn (no pipelining, still correct).
    TN = tn if D1 % tn == 0 else D1
    n_tiles = D1 // TN

    # ---- W1: per-column symmetric int8 (halves the dominant HBM weight stream) ----
    amax = np.maximum(np.abs(w1).max(axis=0), 1e-8)
    scale1 = (amax / 127.0).astype(np.float32)                       # (D1,)
    w1_q = np.clip(np.rint(w1 / scale1[None, :]), -127, 127).astype(np.int8)

    # ---- pre-tile W1 / W2 / scale / b1 into contiguous per-step slabs ----
    w1_t = np.ascontiguousarray(
        w1_q.reshape(D0, n_tiles, TN).transpose(1, 0, 2))            # (nt, D0, TN) i8
    s1_t = scale1.reshape(n_tiles, 1, TN)
    b1_t = b1.reshape(n_tiles, 1, TN)
    w2_t = jnp.asarray(w2.reshape(n_tiles, TN, D2), jnp.bfloat16)    # (nt, TN, D2)

    # ---- conv stack -> dense channel-last operators with BN folded ----
    conv_mats = []
    h = w = params["side"]
    for (cw, cb, gamma, beta, mean, var) in params["conv"]:
        gamma = np.asarray(gamma, np.float32); beta = np.asarray(beta, np.float32)
        mean = np.asarray(mean, np.float32); var = np.asarray(var, np.float32)
        inv_std = gamma / np.sqrt(var + eps)
        w_fold = np.asarray(cw, np.float32) * inv_std[:, None, None, None]
        shift = beta - mean * inv_std + np.asarray(cb, np.float32) * inv_std
        mat, bias, h, w = _conv_as_dense(w_fold, shift, h, w)
        conv_mats.append((jnp.asarray(mat, jnp.bfloat16),
                          jnp.asarray(bias, jnp.float32).reshape(1, -1)))
    assert h == 1 and w == 1, "conv stack is expected to reduce the map to 1x1"

    row = lambda v: jnp.asarray(v, jnp.float32).reshape(1, -1)
    (wc1, bc1), (wc2, bc2), (wc3, bc3), (wc4, bc4) = conv_mats
    return (jnp.asarray(w1_t), jnp.asarray(s1_t, jnp.float32),
            jnp.asarray(b1_t, jnp.float32), w2_t, row(b2),
            jnp.asarray(w3, jnp.bfloat16), row(b3),
            wc1, bc1, wc2, bc2, wc3, bc3, wc4, bc4,
            jnp.asarray(params["fc_w"], jnp.bfloat16), row(params["fc_b"]))


# ----------------------------------------------------------------------------
if __name__ == "__main__":
    INPUT_DIM = 2048      # -> 1024 -> 512 -> 256 -> 16x16 1-channel image
    OUTPUT_DIM = 10
    BATCH = 2             # kernel supports larger B essentially for free (weight-bound)

    key = jax.random.PRNGKey(0)
    key, pkey, xkey = jax.random.split(key, 3)
    params = init_params(pkey, INPUT_DIM, OUTPUT_DIM, num_down_layer=3)
    fused = fold_and_pack(params)
    x = jax.random.normal(xkey, (BATCH, INPUT_DIM), jnp.float32)

    fwd = jax.jit(cnn_forward)
    probs = jax.block_until_ready(fwd(fused, x))

    assert probs.shape == (BATCH, OUTPUT_DIM)
    assert bool(jnp.all(jnp.isfinite(probs)))
    assert bool(jnp.allclose(jnp.sum(probs, axis=-1), 1.0, atol=1e-5))
    print("KERNEL_OK")
</pallas_src>

<mosaic_0001>
module attributes {stable_mosaic.version = 11 : i64} {
  func.func @_cnn_fused_kernel(%arg0: i32, %arg1: memref<2x2048xf32, #tpu.memory_space<vmem>>, %arg2: memref<1x2048x512xi8, #tpu.memory_space<vmem>>, %arg3: memref<1x1x512xf32, #tpu.memory_space<vmem>>, %arg4: memref<1x1x512xf32, #tpu.memory_space<vmem>>, %arg5: memref<1x512x512xbf16, #tpu.memory_space<vmem>>, %arg6: memref<1x512xf32, #tpu.memory_space<vmem>>, %arg7: memref<512x256xbf16, #tpu.memory_space<vmem>>, %arg8: memref<1x256xf32, #tpu.memory_space<vmem>>, %arg9: memref<256x256xbf16, #tpu.memory_space<vmem>>, %arg10: memref<1x256xf32, #tpu.memory_space<vmem>>, %arg11: memref<256x256xbf16, #tpu.memory_space<vmem>>, %arg12: memref<1x256xf32, #tpu.memory_space<vmem>>, %arg13: memref<256x256xbf16, #tpu.memory_space<vmem>>, %arg14: memref<1x256xf32, #tpu.memory_space<vmem>>, %arg15: memref<256x64xbf16, #tpu.memory_space<vmem>>, %arg16: memref<1x64xf32, #tpu.memory_space<vmem>>, %arg17: memref<64x10xbf16, #tpu.memory_space<vmem>>, %arg18: memref<1x10xf32, #tpu.memory_space<vmem>>, %arg19: memref<2x10xf32, #tpu.memory_space<vmem>>, %arg20: memref<2x512xf32, #tpu.memory_space<vmem>>) attributes {dimension_semantics = [#tpu.dimension_semantics<arbitrary>], iteration_bounds = array<i64: 2>, scalar_prefetch = 0 : i64, scratch_operands = 1 : i64, tpu.core_type = #tpu.core_type<tc>, window_params = [{pipeline_mode = #tpu.pipeline_mode<synchronous>, transform_indices = @transform_0, window_bounds = array<i64: 2, 2048>}, {transform_indices = @transform_1, window_bounds = array<i64: 1, 2048, 512>}, {transform_indices = @transform_2, window_bounds = array<i64: 1, 1, 512>}, {transform_indices = @transform_3, window_bounds = array<i64: 1, 1, 512>}, {transform_indices = @transform_4, window_bounds = array<i64: 1, 512, 512>}, {pipeline_mode = #tpu.pipeline_mode<synchronous>, transform_indices = @transform_5, window_bounds = array<i64: 1, 512>}, {pipeline_mode = #tpu.pipeline_mode<synchronous>, transform_indices = @transform_6, window_bounds = array<i64: 512, 256>}, {pipeline_mode = #tpu.pipeline_mode<synchronous>, transform_indices = @transform_7, window_bounds = array<i64: 1, 256>}, {pipeline_mode = #tpu.pipeline_mode<synchronous>, transform_indices = @transform_8, window_bounds = array<i64: 256, 256>}, {pipeline_mode = #tpu.pipeline_mode<synchronous>, transform_indices = @transform_9, window_bounds = array<i64: 1, 256>}, {pipeline_mode = #tpu.pipeline_mode<synchronous>, transform_indices = @transform_10, window_bounds = array<i64: 256, 256>}, {pipeline_mode = #tpu.pipeline_mode<synchronous>, transform_indices = @transform_11, window_bounds = array<i64: 1, 256>}, {pipeline_mode = #tpu.pipeline_mode<synchronous>, transform_indices = @transform_12, window_bounds = array<i64: 256, 256>}, {pipeline_mode = #tpu.pipeline_mode<synchronous>, transform_indices = @transform_13, window_bounds = array<i64: 1, 256>}, {pipeline_mode = #tpu.pipeline_mode<synchronous>, transform_indices = @transform_14, window_bounds = array<i64: 256, 64>}, {pipeline_mode = #tpu.pipeline_mode<synchronous>, transform_indices = @transform_15, window_bounds = array<i64: 1, 64>}, {pipeline_mode = #tpu.pipeline_mode<synchronous>, transform_indices = @transform_16, window_bounds = array<i64: 64, 10>}, {pipeline_mode = #tpu.pipeline_mode<synchronous>, transform_indices = @transform_17, window_bounds = array<i64: 1, 10>}, {pipeline_mode = #tpu.pipeline_mode<synchronous>, transform_indices = @transform_18, window_bounds = array<i64: 2, 10>}]} {
    %c0_i32 = arith.constant 0 : i32
    %0 = arith.cmpi eq, %arg0, %c0_i32 : i32
    %1 = arith.extui %0 : i1 to i32
    %c0_i32_0 = arith.constant 0 : i32
    %2 = arith.cmpi ne, %1, %c0_i32_0 : i32
    scf.if %2 {
      %cst_21 = arith.constant 0.000000e+00 : f32
      %30 = vector.broadcast %cst_21 : f32 to vector<2x512xf32>
      %c0_22 = arith.constant 0 : index
      %c0_23 = arith.constant 0 : index
      %31 = vector.load %arg20[%c0_22, %c0_23] : memref<2x512xf32, #tpu.memory_space<vmem>>, vector<2x512xf32>
      tpu.vector_store %arg20[%c0_22, %c0_23], %30 {strides = array<i32>} : memref<2x512xf32, #tpu.memory_space<vmem>>, vector<2x512xf32>,
    } else {
    }
    %c0 = arith.constant 0 : index
    %c0_1 = arith.constant 0 : index
    %c0_2 = arith.constant 0 : index
    %3 = vector.load %arg2[%c0, %c0_1, %c0_2] : memref<1x2048x512xi8, #tpu.memory_space<vmem>>, vector<1x2048x512xi8>
    %4 = vector.shape_cast %3 : vector<1x2048x512xi8> to vector<2048x512xi8>
    %5 = arith.sitofp %4 : vector<2048x512xi8> to vector<2048x512xf32>
    %6 = arith.truncf %5 : vector<2048x512xf32> to vector<2048x512xbf16>
    %c0_3 = arith.constant 0 : index
    %c0_4 = arith.constant 0 : index
    %7 = vector.load %arg1[%c0_3, %c0_4] : memref<2x2048xf32, #tpu.memory_space<vmem>>, vector<2x2048xf32>
    %8 = arith.truncf %7 : vector<2x2048xf32> to vector<2x2048xbf16>
    %cst = arith.constant dense<0.000000e+00> : vector<2x512xf32>
    %9 = tpu.matmul %8, %6, %cst {dimension_numbers = #tpu.dot_dimension_numbers<[1], [0], [0], [1], [0, 0, 1, 1], [], []>} : vector<2x2048xbf16>, vector<2048x512xbf16>, vector<2x512xf32> -> vector<2x512xf32>
    %c0_5 = arith.constant 0 : index
    %c0_6 = arith.constant 0 : index
    %c0_7 = arith.constant 0 : index
    %10 = vector.load %arg3[%c0_5, %c0_6, %c0_7] : memref<1x1x512xf32, #tpu.memory_space<vmem>>, vector<1x1x512xf32>
    %11 = vector.shape_cast %10 : vector<1x1x512xf32> to vector<1x512xf32>
    %12 = vector.broadcast %11 : vector<1x512xf32> to vector<2x512xf32>
    %13 = arith.mulf %9, %12 : vector<2x512xf32>
    %c0_8 = arith.constant 0 : index
    %c0_9 = arith.constant 0 : index
    %c0_10 = arith.constant 0 : index
    %14 = vector.load %arg4[%c0_8, %c0_9, %c0_10] : memref<1x1x512xf32, #tpu.memory_space<vmem>>, vector<1x1x512xf32>
    %15 = vector.shape_cast %14 : vector<1x1x512xf32> to vector<1x512xf32>
    %16 = vector.broadcast %15 : vector<1x512xf32> to vector<2x512xf32>
    %17 = arith.addf %13, %16 : vector<2x512xf32>
    %cst_11 = arith.constant 0.000000e+00 : f32
    %18 = vector.broadcast %cst_11 : f32 to vector<2x512xf32>
    %19 = arith.maximumf %17, %18 : vector<2x512xf32>
    %c0_12 = arith.constant 0 : index
    %c0_13 = arith.constant 0 : index
    %20 = vector.load %arg20[%c0_12, %c0_13] : memref<2x512xf32, #tpu.memory_space<vmem>>, vector<2x512xf32>
    %21 = arith.truncf %19 : vector<2x512xf32> to vector<2x512xbf16>
    %c0_14 = arith.constant 0 : index
    %c0_15 = arith.constant 0 : index
    %c0_16 = arith.constant 0 : index
    %22 = vector.load %arg5[%c0_14, %c0_15, %c0_16] : memref<1x512x512xbf16, #tpu.memory_space<vmem>>, vector<1x512x512xbf16>
    %23 = vector.shape_cast %22 : vector<1x512x512xbf16> to vector<512x512xbf16>
    %cst_17 = arith.constant dense<0.000000e+00> : vector<2x512xf32>
    %24 = tpu.matmul %21, %23, %cst_17 {dimension_numbers = #tpu.dot_dimension_numbers<[1], [0], [0], [1], [0, 0, 1, 1], [], []>} : vector<2x512xbf16>, vector<512x512xbf16>, vector<2x512xf32> -> vector<2x512xf32>
    %25 = arith.addf %20, %24 : vector<2x512xf32>
    %c0_18 = arith.constant 0 : index
    %c0_19 = arith.constant 0 : index
    %26 = vector.load %arg20[%c0_18, %c0_19] : memref<2x512xf32, #tpu.memory_space<vmem>>, vector<2x512xf32>
    tpu.vector_store %arg20[%c0_18, %c0_19], %25 {strides = array<i32>} : memref<2x512xf32, #tpu.memory_space<vmem>>, vector<2x512xf32>,
    %c1_i32 = arith.constant 1 : i32
    %27 = arith.cmpi eq, %arg0, %c1_i32 : i32
    %28 = arith.extui %27 : i1 to i32
    %c0_i32_20 = arith.constant 0 : i32
    %29 = arith.cmpi ne, %28, %c0_i32_20 : i32
    scf.if %29 {
      %c0_21 = arith.constant 0 : index
      %c0_22 = arith.constant 0 : index
      %30 = vector.load %arg20[%c0_21, %c0_22] : memref<2x512xf32, #tpu.memory_space<vmem>>, vector<2x512xf32>
      %c0_23 = arith.constant 0 : index
      %c0_24 = arith.constant 0 : index
      %31 = vector.load %arg6[%c0_23, %c0_24] : memref<1x512xf32, #tpu.memory_space<vmem>>, vector<1x512xf32>
      %32 = vector.broadcast %31 : vector<1x512xf32> to vector<2x512xf32>
      %33 = arith.addf %30, %32 : vector<2x512xf32>
      %cst_25 = arith.constant 0.000000e+00 : f32
      %34 = vector.broadcast %cst_25 : f32 to vector<2x512xf32>
      %35 = arith.maximumf %33, %34 : vector<2x512xf32>
      %36 = arith.truncf %35 : vector<2x512xf32> to vector<2x512xbf16>
      %c0_26 = arith.constant 0 : index
      %c0_27 = arith.constant 0 : index
      %37 = vector.load %arg7[%c0_26, %c0_27] : memref<512x256xbf16, #tpu.memory_space<vmem>>, vector<512x256xbf16>
      %cst_28 = arith.constant dense<0.000000e+00> : vector<2x256xf32>
      %38 = tpu.matmul %36, %37, %cst_28 {dimension_numbers = #tpu.dot_dimension_numbers<[1], [0], [0], [1], [0, 0, 1, 1], [], []>} : vector<2x512xbf16>, vector<512x256xbf16>, vector<2x256xf32> -> vector<2x256xf32>
      %c0_29 = arith.constant 0 : index
      %c0_30 = arith.constant 0 : index
      %39 = vector.load %arg8[%c0_29, %c0_30] : memref<1x256xf32, #tpu.memory_space<vmem>>, vector<1x256xf32>
      %40 = vector.broadcast %39 : vector<1x256xf32> to vector<2x256xf32>
      %41 = arith.addf %38, %40 : vector<2x256xf32>
      %cst_31 = arith.constant 0.000000e+00 : f32
      %42 = vector.broadcast %cst_31 : f32 to vector<2x256xf32>
      %43 = arith.maximumf %41, %42 : vector<2x256xf32>
      %44 = arith.truncf %43 : vector<2x256xf32> to vector<2x256xbf16>
      %c0_32 = arith.constant 0 : index
      %c0_33 = arith.constant 0 : index
      %45 = vector.load %arg9[%c0_32, %c0_33] : memref<256x256xbf16, #tpu.memory_space<vmem>>, vector<256x256xbf16>
      %cst_34 = arith.constant dense<0.000000e+00> : vector<2x256xf32>
      %46 = tpu.matmul %44, %45, %cst_34 {dimension_numbers = #tpu.dot_dimension_numbers<[1], [0], [0], [1], [0, 0, 1, 1], [], []>} : vector<2x256xbf16>, vector<256x256xbf16>, vector<2x256xf32> -> vector<2x256xf32>
      %c0_35 = arith.constant 0 : index
      %c0_36 = arith.constant 0 : index
      %47 = vector.load %arg10[%c0_35, %c0_36] : memref<1x256xf32, #tpu.memory_space<vmem>>, vector<1x256xf32>
      %48 = vector.broadcast %47 : vector<1x256xf32> to vector<2x256xf32>
      %49 = arith.addf %46, %48 : vector<2x256xf32>
      %cst_37 = arith.constant 0.000000e+00 : f32
      %50 = vector.broadcast %cst_37 : f32 to vector<2x256xf32>
      %51 = arith.maximumf %49, %50 : vector<2x256xf32>
      %52 = arith.truncf %51 : vector<2x256xf32> to vector<2x256xbf16>
      %c0_38 = arith.constant 0 : index
      %c0_39 = arith.constant 0 : index
      %53 = vector.load %arg11[%c0_38, %c0_39] : memref<256x256xbf16, #tpu.memory_space<vmem>>, vector<256x256xbf16>
      %cst_40 = arith.constant dense<0.000000e+00> : vector<2x256xf32>
      %54 = tpu.matmul %52, %53, %cst_40 {dimension_numbers = #tpu.dot_dimension_numbers<[1], [0], [0], [1], [0, 0, 1, 1], [], []>} : vector<2x256xbf16>, vector<256x256xbf16>, vector<2x256xf32> -> vector<2x256xf32>
      %c0_41 = arith.constant 0 : index
      %c0_42 = arith.constant 0 : index
      %55 = vector.load %arg12[%c0_41, %c0_42] : memref<1x256xf32, #tpu.memory_space<vmem>>, vector<1x256xf32>
      %56 = vector.broadcast %55 : vector<1x256xf32> to vector<2x256xf32>
      %57 = arith.addf %54, %56 : vector<2x256xf32>
      %cst_43 = arith.constant 0.000000e+00 : f32
      %58 = vector.broadcast %cst_43 : f32 to vector<2x256xf32>
      %59 = arith.maximumf %57, %58 : vector<2x256xf32>
      %60 = arith.truncf %59 : vector<2x256xf32> to vector<2x256xbf16>
      %c0_44 = arith.constant 0 : index
      %c0_45 = arith.constant 0 : index
      %61 = vector.load %arg13[%c0_44, %c0_45] : memref<256x256xbf16, #tpu.memory_space<vmem>>, vector<256x256xbf16>
      %cst_46 = arith.constant dense<0.000000e+00> : vector<2x256xf32>
      %62 = tpu.matmul %60, %61, %cst_46 {dimension_numbers = #tpu.dot_dimension_numbers<[1], [0], [0], [1], [0, 0, 1, 1], [], []>} : vector<2x256xbf16>, vector<256x256xbf16>, vector<2x256xf32> -> vector<2x256xf32>
      %c0_47 = arith.constant 0 : index
      %c0_48 = arith.constant 0 : index
      %63 = vector.load %arg14[%c0_47, %c0_48] : memref<1x256xf32, #tpu.memory_space<vmem>>, vector<1x256xf32>
      %64 = vector.broadcast %63 : vector<1x256xf32> to vector<2x256xf32>
      %65 = arith.addf %62, %64 : vector<2x256xf32>
      %cst_49 = arith.constant 0.000000e+00 : f32
      %66 = vector.broadcast %cst_49 : f32 to vector<2x256xf32>
      %67 = arith.maximumf %65, %66 : vector<2x256xf32>
      %68 = arith.truncf %67 : vector<2x256xf32> to vector<2x256xbf16>
      %c0_50 = arith.constant 0 : index
      %c0_51 = arith.constant 0 : index
      %69 = vector.load %arg15[%c0_50, %c0_51] : memref<256x64xbf16, #tpu.memory_space<vmem>>, vector<256x64xbf16>
      %cst_52 = arith.constant dense<0.000000e+00> : vector<2x64xf32>
      %70 = tpu.matmul %68, %69, %cst_52 {dimension_numbers = #tpu.dot_dimension_numbers<[1], [0], [0], [1], [0, 0, 1, 1], [], []>} : vector<2x256xbf16>, vector<256x64xbf16>, vector<2x64xf32> -> vector<2x64xf32>
      %c0_53 = arith.constant 0 : index
      %c0_54 = arith.constant 0 : index
      %71 = vector.load %arg16[%c0_53, %c0_54] : memref<1x64xf32, #tpu.memory_space<vmem>>, vector<1x64xf32>
      %72 = vector.broadcast %71 : vector<1x64xf32> to vector<2x64xf32>
      %73 = arith.addf %70, %72 : vector<2x64xf32>
      %cst_55 = arith.constant 0.000000e+00 : f32
      %74 = vector.broadcast %cst_55 : f32 to vector<2x64xf32>
      %75 = arith.maximumf %73, %74 : vector<2x64xf32>
      %76 = arith.truncf %75 : vector<2x64xf32> to vector<2x64xbf16>
      %c0_56 = arith.constant 0 : index
      %c0_57 = arith.constant 0 : index
      %77 = vector.load %arg17[%c0_56, %c0_57] : memref<64x10xbf16, #tpu.memory_space<vmem>>, vector<64x10xbf16>
      %cst_58 = arith.constant dense<0.000000e+00> : vector<2x10xf32>
      %78 = tpu.matmul %76, %77, %cst_58 {dimension_numbers = #tpu.dot_dimension_numbers<[1], [0], [0], [1], [0, 0, 1, 1], [], []>} : vector<2x64xbf16>, vector<64x10xbf16>, vector<2x10xf32> -> vector<2x10xf32>
      %c0_59 = arith.constant 0 : index
      %c0_60 = arith.constant 0 : index
      %79 = vector.load %arg18[%c0_59, %c0_60] : memref<1x10xf32, #tpu.memory_space<vmem>>, vector<1x10xf32>
      %80 = vector.broadcast %79 : vector<1x10xf32> to vector<2x10xf32>
      %81 = arith.addf %78, %80 : vector<2x10xf32>
      %cst_61 = arith.constant dense<0xFF800000> : vector<2xf32>
      %82 = vector.multi_reduction <maximumf>, %81, %cst_61 [1] : vector<2x10xf32> to vector<2xf32>
      %83 = vector.shape_cast %82 : vector<2xf32> to vector<2x1xf32>
      %84 = vector.broadcast %83 : vector<2x1xf32> to vector<2x10xf32>
      %85 = arith.subf %81, %84 : vector<2x10xf32>
      %86 = math.exp %85 : vector<2x10xf32>
      %cst_62 = arith.constant dense<0.000000e+00> : vector<2xf32>
      %87 = vector.multi_reduction <add>, %86, %cst_62 [1] : vector<2x10xf32> to vector<2xf32>
      %88 = vector.shape_cast %87 : vector<2xf32> to vector<2x1xf32>
      %89 = vector.broadcast %88 : vector<2x1xf32> to vector<2x10xf32>
      %90 = arith.divf %86, %89 : vector<2x10xf32>
      %c0_63 = arith.constant 0 : index
      %c0_64 = arith.constant 0 : index
      %91 = vector.load %arg19[%c0_63, %c0_64] : memref<2x10xf32, #tpu.memory_space<vmem>>, vector<2x10xf32>
      tpu.vector_store %arg19[%c0_63, %c0_64], %90 {strides = array<i32>} : memref<2x10xf32, #tpu.memory_space<vmem>>, vector<2x10xf32>,
    } else {
    }
    return
  }
  func.func @transform_0(%arg0: i32) -> (i32, i32) {
    %c0_i32 = arith.constant 0 : i32
    %c0_i32_0 = arith.constant 0 : i32
    %c0_i32_1 = arith.constant 0 : i32
    return %c0_i32, %c0_i32_0 : i32, i32
  }
  func.func @transform_1(%arg0: i32) -> (i32, i32, i32) {
    %c0_i32 = arith.constant 0 : i32
    %c0_i32_0 = arith.constant 0 : i32
    %c0_i32_1 = arith.constant 0 : i32
    return %arg0, %c0_i32, %c0_i32_0 : i32, i32, i32
  }
  func.func @transform_2(%arg0: i32) -> (i32, i32, i32) {
    %c0_i32 = arith.constant 0 : i32
    %c0_i32_0 = arith.constant 0 : i32
    %c0_i32_1 = arith.constant 0 : i32
    return %arg0, %c0_i32, %c0_i32_0 : i32, i32, i32
  }
  func.func @transform_3(%arg0: i32) -> (i32, i32, i32) {
    %c0_i32 = arith.constant 0 : i32
    %c0_i32_0 = arith.constant 0 : i32
    %c0_i32_1 = arith.constant 0 : i32
    return %arg0, %c0_i32, %c0_i32_0 : i32, i32, i32
  }
  func.func @transform_4(%arg0: i32) -> (i32, i32, i32) {
    %c0_i32 = arith.constant 0 : i32
    %c0_i32_0 = arith.constant 0 : i32
    %c0_i32_1 = arith.constant 0 : i32
    return %arg0, %c0_i32, %c0_i32_0 : i32, i32, i32
  }
  func.func @transform_5(%arg0: i32) -> (i32, i32) {
    %c0_i32 = arith.constant 0 : i32
    %c0_i32_0 = arith.constant 0 : i32
    %c0_i32_1 = arith.constant 0 : i32
    return %c0_i32, %c0_i32_0 : i32, i32
  }
  func.func @transform_6(%arg0: i32) -> (i32, i32) {
    %c0_i32 = arith.constant 0 : i32
    %c0_i32_0 = arith.constant 0 : i32
    %c0_i32_1 = arith.constant 0 : i32
    return %c0_i32, %c0_i32_0 : i32, i32
  }
  func.func @transform_7(%arg0: i32) -> (i32, i32) {
    %c0_i32 = arith.constant 0 : i32
    %c0_i32_0 = arith.constant 0 : i32
    %c0_i32_1 = arith.constant 0 : i32
    return %c0_i32, %c0_i32_0 : i32, i32
  }
  func.func @transform_8(%arg0: i32) -> (i32, i32) {
    %c0_i32 = arith.constant 0 : i32
    %c0_i32_0 = arith.constant 0 : i32
    %c0_i32_1 = arith.constant 0 : i32
    return %c0_i32, %c0_i32_0 : i32, i32
  }
  func.func @transform_9(%arg0: i32) -> (i32, i32) {
    %c0_i32 = arith.constant 0 : i32
    %c0_i32_0 = arith.constant 0 : i32
    %c0_i32_1 = arith.constant 0 : i32
    return %c0_i32, %c0_i32_0 : i32, i32
  }
  func.func @transform_10(%arg0: i32) -> (i32, i32) {
    %c0_i32 = arith.constant 0 : i32
    %c0_i32_0 = arith.constant 0 : i32
    %c0_i32_1 = arith.constant 0 : i32
    return %c0_i32, %c0_i32_0 : i32, i32
  }
  func.func @transform_11(%arg0: i32) -> (i32, i32) {
    %c0_i32 = arith.constant 0 : i32
    %c0_i32_0 = arith.constant 0 : i32
    %c0_i32_1 = arith.constant 0 : i32
    return %c0_i32, %c0_i32_0 : i32, i32
  }
  func.func @transform_12(%arg0: i32) -> (i32, i32) {
    %c0_i32 = arith.constant 0 : i32
    %c0_i32_0 = arith.constant 0 : i32
    %c0_i32_1 = arith.constant 0 : i32
    return %c0_i32, %c0_i32_0 : i32, i32
  }
  func.func @transform_13(%arg0: i32) -> (i32, i32) {
    %c0_i32 = arith.constant 0 : i32
    %c0_i32_0 = arith.constant 0 : i32
    %c0_i32_1 = arith.constant 0 : i32
    return %c0_i32, %c0_i32_0 : i32, i32
  }
  func.func @transform_14(%arg0: i32) -> (i32, i32) {
    %c0_i32 = arith.constant 0 : i32
    %c0_i32_0 = arith.constant 0 : i32
    %c0_i32_1 = arith.constant 0 : i32
    return %c0_i32, %c0_i32_0 : i32, i32
  }
  func.func @transform_15(%arg0: i32) -> (i32, i32) {
    %c0_i32 = arith.constant 0 : i32
    %c0_i32_0 = arith.constant 0 : i32
    %c0_i32_1 = arith.constant 0 : i32
    return %c0_i32, %c0_i32_0 : i32, i32
  }
  func.func @transform_16(%arg0: i32) -> (i32, i32) {
    %c0_i32 = arith.constant 0 : i32
    %c0_i32_0 = arith.constant 0 : i32
    %c0_i32_1 = arith.constant 0 : i32
    return %c0_i32, %c0_i32_0 : i32, i32
  }
  func.func @transform_17(%arg0: i32) -> (i32, i32) {
    %c0_i32 = arith.constant 0 : i32
    %c0_i32_0 = arith.constant 0 : i32
    %c0_i32_1 = arith.constant 0 : i32
    return %c0_i32, %c0_i32_0 : i32, i32
  }
  func.func @transform_18(%arg0: i32) -> (i32, i32) {
    %c0_i32 = arith.constant 0 : i32
    %c0_i32_0 = arith.constant 0 : i32
    %c0_i32_1 = arith.constant 0 : i32
    return %c0_i32, %c0_i32_0 : i32, i32
  }
}

</mosaic_0001>

<llo_original>
// kernel: cnn_forward.1
$region0: #{cnn_forward.1}
  #allocation0 [shape = 'u32[]', space=smem, size = 0x4, offset = 0x4, fixed_abs, tag = 'smem constant byte address 0x4 - core index']
  #allocation1 [shape = 'u32[72,128]{1,0:T(1,128)}', space=vmem, size = 0x9000, scoped, tag = 'internal scratch']
  #allocation2 [shape = 'f32[2,512]{1,0:T(2,128)}', space=vmem, size = 0x1000, scoped, tag = 'scratch operand']
  %s0 = inlined_call_operand.hbm [shape: f32[2,2048], index: 0, kind: input, shape index: {}]
  %s1 = inlined_call_operand.hbm [shape: s8[2,2048,512], index: 1, kind: input, shape index: {}]
  %s2 = inlined_call_operand.hbm [shape: f32[2,1,512], index: 2, kind: input, shape index: {}]
  %s3 = inlined_call_operand.hbm [shape: f32[2,1,512], index: 3, kind: input, shape index: {}]
  %s4 = inlined_call_operand.hbm [shape: bf16[2,512,512], index: 4, kind: input, shape index: {}]
  %s5 = inlined_call_operand.hbm [shape: f32[1,512], index: 5, kind: input, shape index: {}]
  %s6 = inlined_call_operand.hbm [shape: bf16[512,256], index: 6, kind: input, shape index: {}]
  %s7 = inlined_call_operand.hbm [shape: f32[1,256], index: 7, kind: input, shape index: {}]
  %s8 = inlined_call_operand.hbm [shape: bf16[256,256], index: 8, kind: input, shape index: {}]
  %s9 = inlined_call_operand.hbm [shape: f32[1,256], index: 9, kind: input, shape index: {}]
  %s10 = inlined_call_operand.hbm [shape: bf16[256,256], index: 10, kind: input, shape index: {}]
  %s11 = inlined_call_operand.hbm [shape: f32[1,256], index: 11, kind: input, shape index: {}]
  %s12 = inlined_call_operand.hbm [shape: bf16[256,256], index: 12, kind: input, shape index: {}]
  %s13 = inlined_call_operand.hbm [shape: f32[1,256], index: 13, kind: input, shape index: {}]
  %s14 = inlined_call_operand.vmem [shape: bf16[256,64], index: 14, kind: input, shape index: {}]
  %s15 = inlined_call_operand.hbm [shape: f32[1,64], index: 15, kind: input, shape index: {}]
  %s16 = inlined_call_operand.vmem [shape: bf16[64,10], index: 16, kind: input, shape index: {}]
  %s17 = inlined_call_operand.hbm [shape: f32[1,10], index: 17, kind: input, shape index: {}]
  %s18 = inlined_call_operand.hbm [shape: f32[2,10], index: 18, kind: output, shape index: {}]
  %s19 = sld [smem:[#allocation0]]
  $region177: #{cnn_forward.1} parent=0
    _
  %s21 = ssub.s32 1, %s19
  %s22 = scalar_select 0, %s21, %s19
  $region1: #{cnn_forward.1} parent=0
    #allocation3 [shape = 'u8[16384]{0}', space=vmem, size = 0x4000, scoped, tag = 'input window, operand 0, single buffered']
    #allocation4 [shape = 's32[2]{0}', space=sflag, size = 0x8, scoped, tag = 'scoped memory for cnn_forward.1']
    #allocation5 [shape = 's32[2]{0}', space=sflag, size = 0x8, scoped, tag = 'scoped memory for cnn_forward.1']
    #allocation6 [shape = 'u8[2097152]{0}', space=vmem, size = 0x200000, scoped, tag = 'input window, operand 1']
    #allocation7 [shape = 's32[2]{0}', space=sflag, size = 0x8, scoped, tag = 'scoped memory for cnn_forward.1']
    #allocation8 [shape = 'u8[4096]{0}', space=vmem, size = 0x1000, scoped, tag = 'input window, operand 2']
    #allocation9 [shape = 'u8[4096]{0}', space=vmem, size = 0x1000, scoped, tag = 'input window, operand 3']
    #allocation10 [shape = 's32[2]{0}', space=sflag, size = 0x8, scoped, tag = 'scoped memory for cnn_forward.1']
    #allocation11 [shape = 'u8[1048576]{0}', space=vmem, size = 0x100000, scoped, tag = 'input window, operand 4']
    #allocation12 [shape = 'u8[2048]{0}', space=vmem, size = 0x800, scoped, tag = 'input window, operand 5, single buffered']
    #allocation13 [shape = 's32[1]{0}', space=sflag, size = 0x4, scoped, tag = 'scoped memory for cnn_forward.1']
    #allocation14 [shape = 'u8[262144]{0}', space=vmem, size = 0x40000, scoped, tag = 'input window, operand 6, single buffered']
    #allocation15 [shape = 'u8[1024]{0}', space=vmem, size = 0x400, scoped, tag = 'input window, operand 7, single buffered']
    #allocation16 [shape = 's32[1]{0}', space=sflag, size = 0x4, scoped, tag = 'scoped memory for cnn_forward.1']
    #allocation17 [shape = 'u8[131072]{0}', space=vmem, size = 0x20000, scoped, tag = 'input window, operand 8, single buffered']
    #allocation18 [shape = 'u8[1024]{0}', space=vmem, size = 0x400, scoped, tag = 'input window, operand 9, single buffered']
    #allocation19 [shape = 's32[1]{0}', space=sflag, size = 0x4, scoped, tag = 'scoped memory for cnn_forward.1']
    #allocation20 [shape = 'u8[131072]{0}', space=vmem, size = 0x20000, scoped, tag = 'input window, operand 10, single buffered']
    #allocation21 [shape = 'u8[1024]{0}', space=vmem, size = 0x400, scoped, tag = 'input window, operand 11, single buffered']
    #allocation22 [shape = 's32[1]{0}', space=sflag, size = 0x4, scoped, tag = 'scoped memory for cnn_forward.1']
    #allocation23 [shape = 'u8[131072]{0}', space=vmem, size = 0x20000, scoped, tag = 'input window, operand 12, single buffered']
    #allocation24 [shape = 'u8[1024]{0}', space=vmem, size = 0x400, scoped, tag = 'input window, operand 13, single buffered']
    #allocation25 [shape = 's32[1]{0}', space=sflag, size = 0x4, scoped, tag = 'scoped memory for cnn_forward.1']
    #allocation26 [shape = 'u8[512]{0}', space=vmem, size = 0x400, scoped, tag = 'input window, operand 15, single buffered']
    #allocation27 [shape = 'u8[512]{0}', space=vmem, size = 0x400, scoped, tag = 'input window, operand 17, single buffered']
    #allocation28 [shape = 's32[1]{0}', space=sflag, size = 0x4, scoped, tag = 'scoped memory for cnn_forward.1']
    #allocation29 [shape = 'u8[1024]{0}', space=vmem, size = 0x400, scoped, tag = 'output window, operand 0, single buffered']
    %23 = vsyncpa [#allocation4], 0
    %24 = vsyncpa [#allocation7], 0
    %s25 = scalar_lea.sflag [#allocation7], 1
    %26 = vsyncpa %s25, 0
    %27 = vsyncpa [#allocation10], 0
    %s28 = scalar_lea.sflag [#allocation10], 1
    %29 = vsyncpa %s28, 0
    %30 = vsyncpa [#allocation13], 0
    %31 = vsyncpa [#allocation16], 0
    %32 = vsyncpa [#allocation19], 0
    %33 = vsyncpa [#allocation22], 0
    %34 = vsyncpa [#allocation25], 0
    %35 = vsyncpa [#allocation28], 0
    %36 = vsyncpa [#allocation5], 0
    loop: start=0, step=1, limit=4
    $region2: #{cnn_forward.1} parent=1 // loop_pre_header
      _
    $region3: #{cnn_forward.1} parent=1 // loop_header
      %s38 = sphi 0, %s42
      %p39 = scmp.ge.s32.totalorder %s38, 4
      %s46 = sphi 0, %s46
      %s48 = sphi 0, %s46
      %s49 = sphi 0, %s48
      %s63 = sphi 0, %s49
      %s69 = sphi 0, %s71
      %s72 = sphi 0, %s69
      %s73 = sphi 0, %s72
      %s89 = sphi 0, %s73
      %s95 = sphi 0, %s97
      %s98 = sphi 0, %s95
      %s99 = sphi 0, %s98
      %s115 = sphi 0, %s99
      %s121 = sphi 0, %s123
      %s124 = sphi 0, %s121
      %s125 = sphi 0, %s124
      %s141 = sphi 0, %s125
      %s147 = sphi 0, %s149
      %s150 = sphi 0, %s147
      %s151 = sphi 0, %s150
      %s167 = sphi 0, %s151
      %s171 = sphi 0, %s171
      %s173 = sphi 0, %s171
      %s174 = sphi 0, %s173
      %s188 = sphi 0, %s174
      %s192 = sphi 0, %s192
      %s194 = sphi 0, %s192
      %s195 = sphi 0, %s194
      %s209 = sphi 0, %s195
      %s213 = sphi 0, %s213
      %s215 = sphi 0, %s213
      %s216 = sphi 0, %s215
      %s230 = sphi 0, %s216
      %s234 = sphi 0, %s234
      %s236 = sphi 0, %s234
      %s237 = sphi 0, %s236
      %s251 = sphi 0, %s237
      %s255 = sphi 0, %s255
      %s257 = sphi 0, %s255
      %s258 = sphi 0, %s257
      %s272 = sphi 0, %s258
      %s276 = sphi 0, %s276
      %s278 = sphi 0, %s276
      %s279 = sphi 0, %s278
      %s293 = sphi 0, %s279
      %s297 = sphi 0, %s297
      %s299 = sphi 0, %s297
      %s300 = sphi 0, %s299
      %s314 = sphi 0, %s300
      %s318 = sphi 0, %s318
      %s320 = sphi 0, %s318
      %s321 = sphi 0, %s320
      %s335 = sphi 0, %s321
      %s339 = sphi 0, %s339
      %s341 = sphi 0, %s339
      %s342 = sphi 0, %s341
      %s356 = sphi 0, %s342
      %s360 = sphi 0, %s360
      %s362 = sphi 0, %s360
      %s363 = sphi 0, %s362
      %s377 = sphi 0, %s363
      %s381 = sphi 0, %s381
      %s383 = sphi 0, %s381
      %s384 = sphi 0, %s383
      %s398 = sphi 0, %s384
      %s402 = sphi 0, %s402
      %s404 = sphi 0, %s402
      %s405 = sphi 0, %s404
      %s419 = sphi 0, %s405
      %s423 = sphi 0, %s423
      %s425 = sphi 0, %s423
      %s426 = sphi 0, %s425
      %s440 = sphi 0, %s426
      %s444 = sphi 0, %s444
      %s446 = sphi 0, %s444
      %s447 = sphi 0, %s446
      %s461 = sphi 0, %s447
    $region4: #{cnn_forward.1} parent=1 // loop_header_branch
      %41 = sbr.rel (%p39) target = $region8
    $region5: #{cnn_forward.1} parent=1 // loop_body
      %s43 = ssub.s32 %s38, 1
      %s44 = ssub.s32 %s38, 2
      %s45 = sadd.s32 %s38, 1
      %s47 = sadd.s32 %s46, 1
      %p50 = scmp.eq.s32.totalorder %s38, 1
      %p51 = scmp.ne.s32.totalorder %s46, %s48
      %p52 = scmp.eq.s32.totalorder %s38, 0
      %p53 = por %p51, %p52
      %p54 = scmp.ne.s32.totalorder %s46, %s48
      %p55 = scmp.eq.s32.totalorder %s43, 1
      %p56 = por %p54, %p55
      %p57 = scmp.ne.s32.totalorder %s48, %s49
      %p58 = scmp.eq.s32.totalorder %s43, 0
      %p59 = por %p57, %p58
      %p60 = scmp.ne.s32.totalorder %s48, %s49
      %p61 = scmp.eq.s32.totalorder %s44, 1
      %p62 = por %p60, %p61
      %p64 = scmp.ne.s32.totalorder %s49, %s63
      %p65 = scmp.eq.s32.totalorder %s44, 0
      %p66 = por %p64, %p65
      %s67 = ssub.s32 %s38, %s45
      %p68 = scmp.eq.s32.totalorder %s67, 0
      %s70 = sadd.s32 %s69, 1
      %s71 = scalar_select %p68, %s69, %s70
      %p74 = pneg %p68
      %p75 = scmp.eq.s32.totalorder %s38, 1
      %p76 = por %p74, %p75
      %p77 = scmp.ne.s32.totalorder %s69, %s72
      %p78 = scmp.eq.s32.totalorder %s38, 0
      %p79 = por %p77, %p78
      %p80 = scmp.ne.s32.totalorder %s69, %s72
      %p81 = scmp.eq.s32.totalorder %s43, 1
      %p82 = por %p80, %p81
      %p83 = scmp.ne.s32.totalorder %s72, %s73
      %p84 = scmp.eq.s32.totalorder %s43, 0
      %p85 = por %p83, %p84
      %p86 = scmp.ne.s32.totalorder %s72, %s73
      %p87 = scmp.eq.s32.totalorder %s44, 1
      %p88 = por %p86, %p87
      %p90 = scmp.ne.s32.totalorder %s73, %s89
      %p91 = scmp.eq.s32.totalorder %s44, 0
      %p92 = por %p90, %p91
      %s93 = ssub.s32 %s38, %s45
      %p94 = scmp.eq.s32.totalorder %s93, 0
      %s96 = sadd.s32 %s95, 1
      %s97 = scalar_select %p94, %s95, %s96
      %p100 = pneg %p94
      %p101 = scmp.eq.s32.totalorder %s38, 1
      %p102 = por %p100, %p101
      %p103 = scmp.ne.s32.totalorder %s95, %s98
      %p104 = scmp.eq.s32.totalorder %s38, 0
      %p105 = por %p103, %p104
      %p106 = scmp.ne.s32.totalorder %s95, %s98
      %p107 = scmp.eq.s32.totalorder %s43, 1
      %p108 = por %p106, %p107
      %p109 = scmp.ne.s32.totalorder %s98, %s99
      %p110 = scmp.eq.s32.totalorder %s43, 0
      %p111 = por %p109, %p110
      %p112 = scmp.ne.s32.totalorder %s98, %s99
      %p113 = scmp.eq.s32.totalorder %s44, 1
      %p114 = por %p112, %p113
      %p116 = scmp.ne.s32.totalorder %s99, %s115
      %p117 = scmp.eq.s32.totalorder %s44, 0
      %p118 = por %p116, %p117
      %s119 = ssub.s32 %s38, %s45
      %p120 = scmp.eq.s32.totalorder %s119, 0
      %s122 = sadd.s32 %s121, 1
      %s123 = scalar_select %p120, %s121, %s122
      %p126 = pneg %p120
      %p127 = scmp.eq.s32.totalorder %s38, 1
      %p128 = por %p126, %p127
      %p129 = scmp.ne.s32.totalorder %s121, %s124
      %p130 = scmp.eq.s32.totalorder %s38, 0
      %p131 = por %p129, %p130
      %p132 = scmp.ne.s32.totalorder %s121, %s124
      %p133 = scmp.eq.s32.totalorder %s43, 1
      %p134 = por %p132, %p133
      %p135 = scmp.ne.s32.totalorder %s124, %s125
      %p136 = scmp.eq.s32.totalorder %s43, 0
      %p137 = por %p135, %p136
      %p138 = scmp.ne.s32.totalorder %s124, %s125
      %p139 = scmp.eq.s32.totalorder %s44, 1
      %p140 = por %p138, %p139
      %p142 = scmp.ne.s32.totalorder %s125, %s141
      %p143 = scmp.eq.s32.totalorder %s44, 0
      %p144 = por %p142, %p143
      %s145 = ssub.s32 %s38, %s45
      %p146 = scmp.eq.s32.totalorder %s145, 0
      %s148 = sadd.s32 %s147, 1
      %s149 = scalar_select %p146, %s147, %s148
      %p152 = pneg %p146
      %p153 = scmp.eq.s32.totalorder %s38, 1
      %p154 = por %p152, %p153
      %p155 = scmp.ne.s32.totalorder %s147, %s150
      %p156 = scmp.eq.s32.totalorder %s38, 0
      %p157 = por %p155, %p156
      %p158 = scmp.ne.s32.totalorder %s147, %s150
      %p159 = scmp.eq.s32.totalorder %s43, 1
      %p160 = por %p158, %p159
      %p161 = scmp.ne.s32.totalorder %s150, %s151
      %p162 = scmp.eq.s32.totalorder %s43, 0
      %p163 = por %p161, %p162
      %p164 = scmp.ne.s32.totalorder %s150, %s151
      %p165 = scmp.eq.s32.totalorder %s44, 1
      %p166 = por %p164, %p165
      %p168 = scmp.ne.s32.totalorder %s151, %s167
      %p169 = scmp.eq.s32.totalorder %s44, 0
      %p170 = por %p168, %p169
      %s172 = sadd.s32 %s171, 1
      %p175 = scmp.eq.s32.totalorder %s38, 1
      %p176 = scmp.ne.s32.totalorder %s171, %s173
      %p177 = scmp.eq.s32.totalorder %s38, 0
      %p178 = por %p176, %p177
      %p179 = scmp.ne.s32.totalorder %s171, %s173
      %p180 = scmp.eq.s32.totalorder %s43, 1
      %p181 = por %p179, %p180
      %p182 = scmp.ne.s32.totalorder %s173, %s174
      %p183 = scmp.eq.s32.totalorder %s43, 0
      %p184 = por %p182, %p183
      %p185 = scmp.ne.s32.totalorder %s173, %s174
      %p186 = scmp.eq.s32.totalorder %s44, 1
      %p187 = por %p185, %p186
      %p189 = scmp.ne.s32.totalorder %s174, %s188
      %p190 = scmp.eq.s32.totalorder %s44, 0
      %p191 = por %p189, %p190
      %s193 = sadd.s32 %s192, 1
      %p196 = scmp.eq.s32.totalorder %s38, 1
      %p197 = scmp.ne.s32.totalorder %s192, %s194
      %p198 = scmp.eq.s32.totalorder %s38, 0
      %p199 = por %p197, %p198
      %p200 = scmp.ne.s32.totalorder %s192, %s194
      %p201 = scmp.eq.s32.totalorder %s43, 1
      %p202 = por %p200, %p201
      %p203 = scmp.ne.s32.totalorder %s194, %s195
      %p204 = scmp.eq.s32.totalorder %s43, 0
      %p205 = por %p203, %p204
      %p206 = scmp.ne.s32.totalorder %s194, %s195
      %p207 = scmp.eq.s32.totalorder %s44, 1
      %p208 = por %p206, %p207
      %p210 = scmp.ne.s32.totalorder %s195, %s209
      %p211 = scmp.eq.s32.totalorder %s44, 0
      %p212 = por %p210, %p211
      %s214 = sadd.s32 %s213, 1
      %p217 = scmp.eq.s32.totalorder %s38, 1
      %p218 = scmp.ne.s32.totalorder %s213, %s215
      %p219 = scmp.eq.s32.totalorder %s38, 0
      %p220 = por %p218, %p219
      %p221 = scmp.ne.s32.totalorder %s213, %s215
      %p222 = scmp.eq.s32.totalorder %s43, 1
      %p223 = por %p221, %p222
      %p224 = scmp.ne.s32.totalorder %s215, %s216
      %p225 = scmp.eq.s32.totalorder %s43, 0
      %p226 = por %p224, %p225
      %p227 = scmp.ne.s32.totalorder %s215, %s216
      %p228 = scmp.eq.s32.totalorder %s44, 1
      %p229 = por %p227, %p228
      %p231 = scmp.ne.s32.totalorder %s216, %s230
      %p232 = scmp.eq.s32.totalorder %s44, 0
      %p233 = por %p231, %p232
      %s235 = sadd.s32 %s234, 1
      %p238 = scmp.eq.s32.totalorder %s38, 1
      %p239 = scmp.ne.s32.totalorder %s234, %s236
      %p240 = scmp.eq.s32.totalorder %s38, 0
      %p241 = por %p239, %p240
      %p242 = scmp.ne.s32.totalorder %s234, %s236
      %p243 = scmp.eq.s32.totalorder %s43, 1
      %p244 = por %p242, %p243
      %p245 = scmp.ne.s32.totalorder %s236, %s237
      %p246 = scmp.eq.s32.totalorder %s43, 0
      %p247 = por %p245, %p246
      %p248 = scmp.ne.s32.totalorder %s236, %s237
      %p249 = scmp.eq.s32.totalorder %s44, 1
      %p250 = por %p248, %p249
      %p252 = scmp.ne.s32.totalorder %s237, %s251
      %p253 = scmp.eq.s32.totalorder %s44, 0
      %p254 = por %p252, %p253
      %s256 = sadd.s32 %s255, 1
      %p259 = scmp.eq.s32.totalorder %s38, 1
      %p260 = scmp.ne.s32.totalorder %s255, %s257
      %p261 = scmp.eq.s32.totalorder %s38, 0
      %p262 = por %p260, %p261
      %p263 = scmp.ne.s32.totalorder %s255, %s257
      %p264 = scmp.eq.s32.totalorder %s43, 1
      %p265 = por %p263, %p264
      %p266 = scmp.ne.s32.totalorder %s257, %s258
      %p267 = scmp.eq.s32.totalorder %s43, 0
      %p268 = por %p266, %p267
      %p269 = scmp.ne.s32.totalorder %s257, %s258
      %p270 = scmp.eq.s32.totalorder %s44, 1
      %p271 = por %p269, %p270
      %p273 = scmp.ne.s32.totalorder %s258, %s272
      %p274 = scmp.eq.s32.totalorder %s44, 0
      %p275 = por %p273, %p274
      %s277 = sadd.s32 %s276, 1
      %p280 = scmp.eq.s32.totalorder %s38, 1
      %p281 = scmp.ne.s32.totalorder %s276, %s278
      %p282 = scmp.eq.s32.totalorder %s38, 0
      %p283 = por %p281, %p282
      %p284 = scmp.ne.s32.totalorder %s276, %s278
      %p285 = scmp.eq.s32.totalorder %s43, 1
      %p286 = por %p284, %p285
      %p287 = scmp.ne.s32.totalorder %s278, %s279
      %p288 = scmp.eq.s32.totalorder %s43, 0
      %p289 = por %p287, %p288
      %p290 = scmp.ne.s32.totalorder %s278, %s279
      %p291 = scmp.eq.s32.totalorder %s44, 1
      %p292 = por %p290, %p291
      %p294 = scmp.ne.s32.totalorder %s279, %s293
      %p295 = scmp.eq.s32.totalorder %s44, 0
      %p296 = por %p294, %p295
      %s298 = sadd.s32 %s297, 1
      %p301 = scmp.eq.s32.totalorder %s38, 1
      %p302 = scmp.ne.s32.totalorder %s297, %s299
      %p303 = scmp.eq.s32.totalorder %s38, 0
      %p304 = por %p302, %p303
      %p305 = scmp.ne.s32.totalorder %s297, %s299
      %p306 = scmp.eq.s32.totalorder %s43, 1
      %p307 = por %p305, %p306
      %p308 = scmp.ne.s32.totalorder %s299, %s300
      %p309 = scmp.eq.s32.totalorder %s43, 0
      %p310 = por %p308, %p309
      %p311 = scmp.ne.s32.totalorder %s299, %s300
      %p312 = scmp.eq.s32.totalorder %s44, 1
      %p313 = por %p311, %p312
      %p315 = scmp.ne.s32.totalorder %s300, %s314
      %p316 = scmp.eq.s32.totalorder %s44, 0
      %p317 = por %p315, %p316
      %s319 = sadd.s32 %s318, 1
      %p322 = scmp.eq.s32.totalorder %s38, 1
      %p323 = scmp.ne.s32.totalorder %s318, %s320
      %p324 = scmp.eq.s32.totalorder %s38, 0
      %p325 = por %p323, %p324
      %p326 = scmp.ne.s32.totalorder %s318, %s320
      %p327 = scmp.eq.s32.totalorder %s43, 1
      %p328 = por %p326, %p327
      %p329 = scmp.ne.s32.totalorder %s320, %s321
      %p330 = scmp.eq.s32.totalorder %s43, 0
      %p331 = por %p329, %p330
      %p332 = scmp.ne.s32.totalorder %s320, %s321
      %p333 = scmp.eq.s32.totalorder %s44, 1
      %p334 = por %p332, %p333
      %p336 = scmp.ne.s32.totalorder %s321, %s335
      %p337 = scmp.eq.s32.totalorder %s44, 0
      %p338 = por %p336, %p337
      %s340 = sadd.s32 %s339, 1
      %p343 = scmp.eq.s32.totalorder %s38, 1
      %p344 = scmp.ne.s32.totalorder %s339, %s341
      %p345 = scmp.eq.s32.totalorder %s38, 0
      %p346 = por %p344, %p345
      %p347 = scmp.ne.s32.totalorder %s339, %s341
      %p348 = scmp.eq.s32.totalorder %s43, 1
      %p349 = por %p347, %p348
      %p350 = scmp.ne.s32.totalorder %s341, %s342
      %p351 = scmp.eq.s32.totalorder %s43, 0
      %p352 = por %p350, %p351
      %p353 = scmp.ne.s32.totalorder %s341, %s342
      %p354 = scmp.eq.s32.totalorder %s44, 1
      %p355 = por %p353, %p354
      %p357 = scmp.ne.s32.totalorder %s342, %s356
      %p358 = scmp.eq.s32.totalorder %s44, 0
      %p359 = por %p357, %p358
      %s361 = sadd.s32 %s360, 1
      %p364 = scmp.eq.s32.totalorder %s38, 1
      %p365 = scmp.ne.s32.totalorder %s360, %s362
      %p366 = scmp.eq.s32.totalorder %s38, 0
      %p367 = por %p365, %p366
      %p368 = scmp.ne.s32.totalorder %s360, %s362
      %p369 = scmp.eq.s32.totalorder %s43, 1
      %p370 = por %p368, %p369
      %p371 = scmp.ne.s32.totalorder %s362, %s363
      %p372 = scmp.eq.s32.totalorder %s43, 0
      %p373 = por %p371, %p372
      %p374 = scmp.ne.s32.totalorder %s362, %s363
      %p375 = scmp.eq.s32.totalorder %s44, 1
      %p376 = por %p374, %p375
      %p378 = scmp.ne.s32.totalorder %s363, %s377
      %p379 = scmp.eq.s32.totalorder %s44, 0
      %p380 = por %p378, %p379
      %s382 = sadd.s32 %s381, 1
      %p385 = scmp.eq.s32.totalorder %s38, 1
      %p386 = scmp.ne.s32.totalorder %s381, %s383
      %p387 = scmp.eq.s32.totalorder %s38, 0
      %p388 = por %p386, %p387
      %p389 = scmp.ne.s32.totalorder %s381, %s383
      %p390 = scmp.eq.s32.totalorder %s43, 1
      %p391 = por %p389, %p390
      %p392 = scmp.ne.s32.totalorder %s383, %s384
      %p393 = scmp.eq.s32.totalorder %s43, 0
      %p394 = por %p392, %p393
      %p395 = scmp.ne.s32.totalorder %s383, %s384
      %p396 = scmp.eq.s32.totalorder %s44, 1
      %p397 = por %p395, %p396
      %p399 = scmp.ne.s32.totalorder %s384, %s398
      %p400 = scmp.eq.s32.totalorder %s44, 0
      %p401 = por %p399, %p400
      %s403 = sadd.s32 %s402, 1
      %p406 = scmp.eq.s32.totalorder %s38, 1
      %p407 = scmp.ne.s32.totalorder %s402, %s404
      %p408 = scmp.eq.s32.totalorder %s38, 0
      %p409 = por %p407, %p408
      %p410 = scmp.ne.s32.totalorder %s402, %s404
      %p411 = scmp.eq.s32.totalorder %s43, 1
      %p412 = por %p410, %p411
      %p413 = scmp.ne.s32.totalorder %s404, %s405
      %p414 = scmp.eq.s32.totalorder %s43, 0
      %p415 = por %p413, %p414
      %p416 = scmp.ne.s32.totalorder %s404, %s405
      %p417 = scmp.eq.s32.totalorder %s44, 1
      %p418 = por %p416, %p417
      %p420 = scmp.ne.s32.totalorder %s405, %s419
      %p421 = scmp.eq.s32.totalorder %s44, 0
      %p422 = por %p420, %p421
      %s424 = sadd.s32 %s423, 1
      %p427 = scmp.eq.s32.totalorder %s38, 1
      %p428 = scmp.ne.s32.totalorder %s423, %s425
      %p429 = scmp.eq.s32.totalorder %s38, 0
      %p430 = por %p428, %p429
      %p431 = scmp.ne.s32.totalorder %s423, %s425
      %p432 = scmp.eq.s32.totalorder %s43, 1
      %p433 = por %p431, %p432
      %p434 = scmp.ne.s32.totalorder %s425, %s426
      %p435 = scmp.eq.s32.totalorder %s43, 0
      %p436 = por %p434, %p435
      %p437 = scmp.ne.s32.totalorder %s425, %s426
      %p438 = scmp.eq.s32.totalorder %s44, 1
      %p439 = por %p437, %p438
      %p441 = scmp.ne.s32.totalorder %s426, %s440
      %p442 = scmp.eq.s32.totalorder %s44, 0
      %p443 = por %p441, %p442
      %s445 = sadd.s32 %s444, 1
      %p448 = scmp.eq.s32.totalorder %s38, 1
      %p449 = scmp.ne.s32.totalorder %s444, %s446
      %p450 = scmp.eq.s32.totalorder %s38, 0
      %p451 = por %p449, %p450
      %p452 = scmp.ne.s32.totalorder %s444, %s446
      %p453 = scmp.eq.s32.totalorder %s43, 1
      %p454 = por %p452, %p453
      %p455 = scmp.ne.s32.totalorder %s446, %s447
      %p456 = scmp.eq.s32.totalorder %s43, 0
      %p457 = por %p455, %p456
      %p458 = scmp.ne.s32.totalorder %s446, %s447
      %p459 = scmp.eq.s32.totalorder %s44, 1
      %p460 = por %p458, %p459
      %p462 = scmp.ne.s32.totalorder %s447, %s461
      %p463 = scmp.eq.s32.totalorder %s44, 0
      %p464 = por %p462, %p463
      %p465 = scmp.le.s32.totalorder 1, %s38
      %p466 = scmp.lt.s32.totalorder %s38, 3
      %p467 = pnand %p465, %p466
      %p468 = pneg %p467
      // Predicated region
      $region9: #{cnn_forward.1} parent=5 // pred_check
        _
      $region10: #{cnn_forward.1} parent=5 // pred_check_branch
        %470 = sbr.rel (%p467) target = $region12
      $region11: #{cnn_forward.1} parent=5 // pred_region
        %s471 = ssub.s32 %s38, 1
        // Predicated region
        $region13: #{cnn_forward.1} parent=11 // pred_check
          %p472 = pneg %p59
        $region14: #{cnn_forward.1} parent=11 // pred_check_branch
          %474 = sbr.rel (%p472) target = $region16
        $region15: #{cnn_forward.1} parent=11 // pred_region
          %476 = vsyncadd [#allocation4], 0
          %s478 = sshll.u32 %s0, 4
          %s479 = int_to_ptr.hbm [resolvable:$true] %s478
          %s480 = sshll.u32 [#allocation3], 4
          %s481 = int_to_ptr.vmem [resolvable:$true] %s480
          %483 = dma.hbm_to_vmem [thread:$0]  %s479, 512, %s481, [#allocation4]
        $region16: #{cnn_forward.1} parent=11 // pred_fallthru
          _
        // Predicated region
        $region17: #{cnn_forward.1} parent=11 // pred_check
          %p484 = pneg %p184
        $region18: #{cnn_forward.1} parent=11 // pred_check_branch
          %486 = sbr.rel (%p484) target = $region20
        $region19: #{cnn_forward.1} parent=11 // pred_region
          %488 = vsyncadd [#allocation13], 0
          %s490 = sshll.u32 %s5, 4
          %s491 = int_to_ptr.hbm [resolvable:$true] %s490
          %s492 = sshll.u32 [#allocation12], 4
          %s493 = int_to_ptr.vmem [resolvable:$true] %s492
          %495 = dma.hbm_to_vmem [thread:$0]  %s491, 64, %s493, [#allocation13]
        $region20: #{cnn_forward.1} parent=11 // pred_fallthru
          _
        // Predicated region
        $region21: #{cnn_forward.1} parent=11 // pred_check
          %p496 = pneg %p205
        $region22: #{cnn_forward.1} parent=11 // pred_check_branch
          %498 = sbr.rel (%p496) target = $region24
        $region23: #{cnn_forward.1} parent=11 // pred_region
          %500 = vsyncadd [#allocation13], 0
          %s501 = sshll.u32 %s6, 4
          %s502 = int_to_ptr.hbm [resolvable:$true] %s501
          %s503 = sshll.u32 [#allocation14], 4
          %s504 = int_to_ptr.vmem [resolvable:$true] %s503
          %509 = dma.hbm_to_vmem [thread:$0]  %s502, 8192, %s504, [#allocation13], 128, 128, 8
        $region24: #{cnn_forward.1} parent=11 // pred_fallthru
          _
        // Predicated region
        $region25: #{cnn_forward.1} parent=11 // pred_check
          %p510 = pneg %p226
        $region26: #{cnn_forward.1} parent=11 // pred_check_branch
          %512 = sbr.rel (%p510) target = $region28
        $region27: #{cnn_forward.1} parent=11 // pred_region
          %514 = vsyncadd [#allocation16], 0
          %s516 = sshll.u32 %s7, 4
          %s517 = int_to_ptr.hbm [resolvable:$true] %s516
          %s518 = sshll.u32 [#allocation15], 4
          %s519 = int_to_ptr.vmem [resolvable:$true] %s518
          %521 = dma.hbm_to_vmem [thread:$0]  %s517, 32, %s519, [#allocation16]
        $region28: #{cnn_forward.1} parent=11 // pred_fallthru
          _
        // Predicated region
        $region29: #{cnn_forward.1} parent=11 // pred_check
          %p522 = pneg %p247
        $region30: #{cnn_forward.1} parent=11 // pred_check_branch
          %524 = sbr.rel (%p522) target = $region32
        $region31: #{cnn_forward.1} parent=11 // pred_region
          %526 = vsyncadd [#allocation16], 0
          %s527 = sshll.u32 %s8, 4
          %s528 = int_to_ptr.hbm [resolvable:$true] %s527
          %s529 = sshll.u32 [#allocation17], 4
          %s530 = int_to_ptr.vmem [resolvable:$true] %s529
          %535 = dma.hbm_to_vmem [thread:$0]  %s528, 4096, %s530, [#allocation16], 128, 128, 8
        $region32: #{cnn_forward.1} parent=11 // pred_fallthru
          _
        // Predicated region
        $region33: #{cnn_forward.1} parent=11 // pred_check
          %p536 = pneg %p268
        $region34: #{cnn_forward.1} parent=11 // pred_check_branch
          %538 = sbr.rel (%p536) target = $region36
        $region35: #{cnn_forward.1} parent=11 // pred_region
          %540 = vsyncadd [#allocation19], 0
          %s542 = sshll.u32 %s9, 4
          %s543 = int_to_ptr.hbm [resolvable:$true] %s542
          %s544 = sshll.u32 [#allocation18], 4
          %s545 = int_to_ptr.vmem [resolvable:$true] %s544
          %547 = dma.hbm_to_vmem [thread:$0]  %s543, 32, %s545, [#allocation19]
        $region36: #{cnn_forward.1} parent=11 // pred_fallthru
          _
        // Predicated region
        $region37: #{cnn_forward.1} parent=11 // pred_check
          %p548 = pneg %p289
        $region38: #{cnn_forward.1} parent=11 // pred_check_branch
          %550 = sbr.rel (%p548) target = $region40
        $region39: #{cnn_forward.1} parent=11 // pred_region
          %552 = vsyncadd [#allocation19], 0
          %s553 = sshll.u32 %s10, 4
          %s554 = int_to_ptr.hbm [resolvable:$true] %s553
          %s555 = sshll.u32 [#allocation20], 4
          %s556 = int_to_ptr.vmem [resolvable:$true] %s555
          %561 = dma.hbm_to_vmem [thread:$0]  %s554, 4096, %s556, [#allocation19], 128, 128, 8
        $region40: #{cnn_forward.1} parent=11 // pred_fallthru
          _
        // Predicated region
        $region41: #{cnn_forward.1} parent=11 // pred_check
          %p562 = pneg %p310
        $region42: #{cnn_forward.1} parent=11 // pred_check_branch
          %564 = sbr.rel (%p562) target = $region44
        $region43: #{cnn_forward.1} parent=11 // pred_region
          %566 = vsyncadd [#allocation22], 0
          %s568 = sshll.u32 %s11, 4
          %s569 = int_to_ptr.hbm [resolvable:$true] %s568
          %s570 = sshll.u32 [#allocation21], 4
          %s571 = int_to_ptr.vmem [resolvable:$true] %s570
          %573 = dma.hbm_to_vmem [thread:$0]  %s569, 32, %s571, [#allocation22]
        $region44: #{cnn_forward.1} parent=11 // pred_fallthru
          _
        // Predicated region
        $region45: #{cnn_forward.1} parent=11 // pred_check
          %p574 = pneg %p331
        $region46: #{cnn_forward.1} parent=11 // pred_check_branch
          %576 = sbr.rel (%p574) target = $region48
        $region47: #{cnn_forward.1} parent=11 // pred_region
          %578 = vsyncadd [#allocation22], 0
          %s579 = sshll.u32 %s12, 4
          %s580 = int_to_ptr.hbm [resolvable:$true] %s579
          %s581 = sshll.u32 [#allocation23], 4
          %s582 = int_to_ptr.vmem [resolvable:$true] %s581
          %587 = dma.hbm_to_vmem [thread:$0]  %s580, 4096, %s582, [#allocation22], 128, 128, 8
        $region48: #{cnn_forward.1} parent=11 // pred_fallthru
          _
        // Predicated region
        $region49: #{cnn_forward.1} parent=11 // pred_check
          %p588 = pneg %p352
        $region50: #{cnn_forward.1} parent=11 // pred_check_branch
          %590 = sbr.rel (%p588) target = $region52
        $region51: #{cnn_forward.1} parent=11 // pred_region
          %592 = vsyncadd [#allocation25], 0
          %s594 = sshll.u32 %s13, 4
          %s595 = int_to_ptr.hbm [resolvable:$true] %s594
          %s596 = sshll.u32 [#allocation24], 4
          %s597 = int_to_ptr.vmem [resolvable:$true] %s596
          %599 = dma.hbm_to_vmem [thread:$0]  %s595, 32, %s597, [#allocation25]
        $region52: #{cnn_forward.1} parent=11 // pred_fallthru
          _
        // Predicated region
        $region53: #{cnn_forward.1} parent=11 // pred_check
          %p600 = pneg %p373
        $region54: #{cnn_forward.1} parent=11 // pred_check_branch
          %602 = sbr.rel (%p600) target = $region56
        $region55: #{cnn_forward.1} parent=11 // pred_region
          _
        $region56: #{cnn_forward.1} parent=11 // pred_fallthru
          _
        // Predicated region
        $region57: #{cnn_forward.1} parent=11 // pred_check
          %p603 = pneg %p394
        $region58: #{cnn_forward.1} parent=11 // pred_check_branch
          %605 = sbr.rel (%p603) target = $region60
        $region59: #{cnn_forward.1} parent=11 // pred_region
          %607 = vsyncadd [#allocation25], 0
          %s609 = sshll.u32 %s15, 4
          %s610 = int_to_ptr.hbm [resolvable:$true] %s609
          %s611 = sshll.u32 [#allocation26], 4
          %s612 = int_to_ptr.vmem [resolvable:$true] %s611
          %614 = dma.hbm_to_vmem [thread:$0]  %s610, 16, %s612, [#allocation25]
        $region60: #{cnn_forward.1} parent=11 // pred_fallthru
          _
        // Predicated region
        $region61: #{cnn_forward.1} parent=11 // pred_check
          %p615 = pneg %p415
        $region62: #{cnn_forward.1} parent=11 // pred_check_branch
          %617 = sbr.rel (%p615) target = $region64
        $region63: #{cnn_forward.1} parent=11 // pred_region
          _
        $region64: #{cnn_forward.1} parent=11 // pred_fallthru
          _
        // Predicated region
        $region65: #{cnn_forward.1} parent=11 // pred_check
          %p618 = pneg %p436
        $region66: #{cnn_forward.1} parent=11 // pred_check_branch
          %620 = sbr.rel (%p618) target = $region68
        $region67: #{cnn_forward.1} parent=11 // pred_region
          %622 = vsyncadd [#allocation28], 0
          %s624 = sshll.u32 %s17, 4
          %s625 = int_to_ptr.hbm [resolvable:$true] %s624
          %s626 = sshll.u32 [#allocation27], 4
          %s627 = int_to_ptr.vmem [resolvable:$true] %s626
          %629 = dma.hbm_to_vmem [thread:$0]  %s625, 16, %s627, [#allocation28]
        $region68: #{cnn_forward.1} parent=11 // pred_fallthru
          _
      $region12: #{cnn_forward.1} parent=5 // pred_fallthru
        _
      %p630 = scmp.lt.s32.totalorder %s38, 2
      // Predicated region
      $region69: #{cnn_forward.1} parent=5 // pred_check
        %p631 = pneg %p630
      $region70: #{cnn_forward.1} parent=5 // pred_check_branch
        %633 = sbr.rel (%p631) target = $region72
      $region71: #{cnn_forward.1} parent=5 // pred_region
        // Predicated region
        $region73: #{cnn_forward.1} parent=71 // pred_check
          %p634 = pneg %p79
        $region74: #{cnn_forward.1} parent=71 // pred_check_branch
          %636 = sbr.rel (%p634) target = $region76
        $region75: #{cnn_forward.1} parent=71 // pred_region
          %s637 = sand.u32 %s38, 1
          %s638 = scalar_lea.sflag [#allocation7], %s637
          %s639 = sand.u32 %s69, 1
          %s640 = smul.addr %s639, 2048
          %s641 = scalar_lea.vmem [#allocation6], %s640
          %643 = vsyncadd %s638, 0
          %s644 = smul.addr %s38, 256
          %s645 = smul.addr %s644, 8
          %s646 = scalar_lea.hbm %s1, %s645
          %s647 = sshll.u32 %s646, 4
          %s648 = int_to_ptr.hbm [resolvable:$true] %s647
          %s649 = sshll.u32 %s641, 4
          %s650 = int_to_ptr.vmem [resolvable:$true] %s649
          %655 = dma.hbm_to_vmem [thread:$0]  %s648, 32768, %s650, %s638, 512, 512, 32
        $region76: #{cnn_forward.1} parent=71 // pred_fallthru
          _
        // Predicated region
        $region77: #{cnn_forward.1} parent=71 // pred_check
          %p656 = pneg %p105
        $region78: #{cnn_forward.1} parent=71 // pred_check_branch
          %658 = sbr.rel (%p656) target = $region80
        $region79: #{cnn_forward.1} parent=71 // pred_region
          %s659 = sand.u32 %s38, 1
          %s660 = scalar_lea.sflag [#allocation7], %s659
          %s661 = sand.u32 %s95, 1
          %s662 = smul.addr %s661, 4
          %s663 = scalar_lea.vmem [#allocation8], %s662
          %665 = vsyncadd %s660, 0
          %s666 = smul.addr %s38, 4
          %s667 = scalar_lea.hbm %s2, %s666
          %s669 = sshll.u32 %s667, 4
          %s670 = int_to_ptr.hbm [resolvable:$true] %s669
          %s671 = sshll.u32 %s663, 4
          %s672 = int_to_ptr.vmem [resolvable:$true] %s671
          %674 = dma.hbm_to_vmem [thread:$0]  %s670, 64, %s672, %s660
        $region80: #{cnn_forward.1} parent=71 // pred_fallthru
          _
        // Predicated region
        $region81: #{cnn_forward.1} parent=71 // pred_check
          %p675 = pneg %p131
        $region82: #{cnn_forward.1} parent=71 // pred_check_branch
          %677 = sbr.rel (%p675) target = $region84
        $region83: #{cnn_forward.1} parent=71 // pred_region
          %s678 = sand.u32 %s38, 1
          %s679 = scalar_lea.sflag [#allocation10], %s678
          %s680 = sand.u32 %s121, 1
          %s681 = smul.addr %s680, 4
          %s682 = scalar_lea.vmem [#allocation9], %s681
          %684 = vsyncadd %s679, 0
          %s685 = smul.addr %s38, 4
          %s686 = scalar_lea.hbm %s3, %s685
          %s688 = sshll.u32 %s686, 4
          %s689 = int_to_ptr.hbm [resolvable:$true] %s688
          %s690 = sshll.u32 %s682, 4
          %s691 = int_to_ptr.vmem [resolvable:$true] %s690
          %693 = dma.hbm_to_vmem [thread:$0]  %s689, 64, %s691, %s679
        $region84: #{cnn_forward.1} parent=71 // pred_fallthru
          _
        // Predicated region
        $region85: #{cnn_forward.1} parent=71 // pred_check
          %p694 = pneg %p157
        $region86: #{cnn_forward.1} parent=71 // pred_check_branch
          %696 = sbr.rel (%p694) target = $region88
        $region87: #{cnn_forward.1} parent=71 // pred_region
          %s697 = sand.u32 %s38, 1
          %s698 = scalar_lea.sflag [#allocation10], %s697
          %s699 = sand.u32 %s147, 1
          %s700 = smul.addr %s699, 1024
          %s701 = scalar_lea.vmem [#allocation11], %s700
          %703 = vsyncadd %s698, 0
          %s704 = smul.addr %s38, 256
          %s705 = smul.addr %s704, 4
          %s706 = scalar_lea.hbm %s4, %s705
          %s707 = sshll.u32 %s706, 4
          %s708 = int_to_ptr.hbm [resolvable:$true] %s707
          %s709 = sshll.u32 %s701, 4
          %s710 = int_to_ptr.vmem [resolvable:$true] %s709
          %715 = dma.hbm_to_vmem [thread:$0]  %s708, 16384, %s710, %s698, 256, 256, 16
        $region88: #{cnn_forward.1} parent=71 // pred_fallthru
          _
      $region72: #{cnn_forward.1} parent=5 // pred_fallthru
        _
      %p716 = scmp.le.s32.totalorder 1, %s38
      %p717 = scmp.lt.s32.totalorder %s38, 3
      %p718 = pnand %p716, %p717
      %p719 = pneg %p718
      // Predicated region
      $region89: #{cnn_forward.1} parent=5 // pred_check
        _
      $region90: #{cnn_forward.1} parent=5 // pred_check_branch
        %721 = sbr.rel (%p718) target = $region92
      $region91: #{cnn_forward.1} parent=5 // pred_region
        %s722 = ssub.s32 %s38, 1
        // Predicated region
        $region93: #{cnn_forward.1} parent=91 // pred_check
          %p723 = pneg %p59
        $region94: #{cnn_forward.1} parent=91 // pred_check_branch
          %725 = sbr.rel (%p723) target = $region96
        $region95: #{cnn_forward.1} parent=91 // pred_region
          %727 = dma.done [#allocation4], 512
        $region96: #{cnn_forward.1} parent=91 // pred_fallthru
          _
        %s728 = sand.u32 %s43, 1
        %s729 = scalar_lea.sflag [#allocation7], %s728
        %s730 = sand.u32 %s72, 1
        %s731 = smul.addr %s730, 2048
        %s732 = scalar_lea.vmem [#allocation6], %s731
        // Predicated region
        $region97: #{cnn_forward.1} parent=91 // pred_check
          %p733 = pneg %p85
        $region98: #{cnn_forward.1} parent=91 // pred_check_branch
          %735 = sbr.rel (%p733) target = $region100
        $region99: #{cnn_forward.1} parent=91 // pred_region
          %737 = dma.done %s729, 32768
        $region100: #{cnn_forward.1} parent=91 // pred_fallthru
          _
        %s738 = sand.u32 %s43, 1
        %s739 = scalar_lea.sflag [#allocation7], %s738
        %s740 = sand.u32 %s98, 1
        %s741 = smul.addr %s740, 4
        %s742 = scalar_lea.vmem [#allocation8], %s741
        // Predicated region
        $region101: #{cnn_forward.1} parent=91 // pred_check
          %p743 = pneg %p111
        $region102: #{cnn_forward.1} parent=91 // pred_check_branch
          %745 = sbr.rel (%p743) target = $region104
        $region103: #{cnn_forward.1} parent=91 // pred_region
          %747 = dma.done %s739, 64
        $region104: #{cnn_forward.1} parent=91 // pred_fallthru
          _
        %s748 = sand.u32 %s43, 1
        %s749 = scalar_lea.sflag [#allocation10], %s748
        %s750 = sand.u32 %s124, 1
        %s751 = smul.addr %s750, 4
        %s752 = scalar_lea.vmem [#allocation9], %s751
        // Predicated region
        $region105: #{cnn_forward.1} parent=91 // pred_check
          %p753 = pneg %p137
        $region106: #{cnn_forward.1} parent=91 // pred_check_branch
          %755 = sbr.rel (%p753) target = $region108
        $region107: #{cnn_forward.1} parent=91 // pred_region
          %757 = dma.done %s749, 64
        $region108: #{cnn_forward.1} parent=91 // pred_fallthru
          _
        %s758 = sand.u32 %s43, 1
        %s759 = scalar_lea.sflag [#allocation10], %s758
        %s760 = sand.u32 %s150, 1
        %s761 = smul.addr %s760, 1024
        %s762 = scalar_lea.vmem [#allocation11], %s761
        // Predicated region
        $region109: #{cnn_forward.1} parent=91 // pred_check
          %p763 = pneg %p163
        $region110: #{cnn_forward.1} parent=91 // pred_check_branch
          %765 = sbr.rel (%p763) target = $region112
        $region111: #{cnn_forward.1} parent=91 // pred_region
          %767 = dma.done %s759, 16384
        $region112: #{cnn_forward.1} parent=91 // pred_fallthru
          _
        // Predicated region
        $region113: #{cnn_forward.1} parent=91 // pred_check
          %p768 = pneg %p184
        $region114: #{cnn_forward.1} parent=91 // pred_check_branch
          %770 = sbr.rel (%p768) target = $region116
        $region115: #{cnn_forward.1} parent=91 // pred_region
          %772 = dma.done [#allocation13], 64
        $region116: #{cnn_forward.1} parent=91 // pred_fallthru
          _
        // Predicated region
        $region117: #{cnn_forward.1} parent=91 // pred_check
          %p773 = pneg %p205
        $region118: #{cnn_forward.1} parent=91 // pred_check_branch
          %775 = sbr.rel (%p773) target = $region120
        $region119: #{cnn_forward.1} parent=91 // pred_region
          %777 = dma.done [#allocation13], 8192
        $region120: #{cnn_forward.1} parent=91 // pred_fallthru
          _
        // Predicated region
        $region121: #{cnn_forward.1} parent=91 // pred_check
          %p778 = pneg %p226
        $region122: #{cnn_forward.1} parent=91 // pred_check_branch
          %780 = sbr.rel (%p778) target = $region124
        $region123: #{cnn_forward.1} parent=91 // pred_region
          %782 = dma.done [#allocation16], 32
        $region124: #{cnn_forward.1} parent=91 // pred_fallthru
          _
        // Predicated region
        $region125: #{cnn_forward.1} parent=91 // pred_check
          %p783 = pneg %p247
        $region126: #{cnn_forward.1} parent=91 // pred_check_branch
          %785 = sbr.rel (%p783) target = $region128
        $region127: #{cnn_forward.1} parent=91 // pred_region
          %787 = dma.done [#allocation16], 4096
        $region128: #{cnn_forward.1} parent=91 // pred_fallthru
          _
        // Predicated region
        $region129: #{cnn_forward.1} parent=91 // pred_check
          %p788 = pneg %p268
        $region130: #{cnn_forward.1} parent=91 // pred_check_branch
          %790 = sbr.rel (%p788) target = $region132
        $region131: #{cnn_forward.1} parent=91 // pred_region
          %792 = dma.done [#allocation19], 32
        $region132: #{cnn_forward.1} parent=91 // pred_fallthru
          _
        // Predicated region
        $region133: #{cnn_forward.1} parent=91 // pred_check
          %p793 = pneg %p289
        $region134: #{cnn_forward.1} parent=91 // pred_check_branch
          %795 = sbr.rel (%p793) target = $region136
        $region135: #{cnn_forward.1} parent=91 // pred_region
          %797 = dma.done [#allocation19], 4096
        $region136: #{cnn_forward.1} parent=91 // pred_fallthru
          _
        // Predicated region
        $region137: #{cnn_forward.1} parent=91 // pred_check
          %p798 = pneg %p310
        $region138: #{cnn_forward.1} parent=91 // pred_check_branch
          %800 = sbr.rel (%p798) target = $region140
        $region139: #{cnn_forward.1} parent=91 // pred_region
          %802 = dma.done [#allocation22], 32
        $region140: #{cnn_forward.1} parent=91 // pred_fallthru
          _
        // Predicated region
        $region141: #{cnn_forward.1} parent=91 // pred_check
          %p803 = pneg %p331
        $region142: #{cnn_forward.1} parent=91 // pred_check_branch
          %805 = sbr.rel (%p803) target = $region144
        $region143: #{cnn_forward.1} parent=91 // pred_region
          %807 = dma.done [#allocation22], 4096
        $region144: #{cnn_forward.1} parent=91 // pred_fallthru
          _
        // Predicated region
        $region145: #{cnn_forward.1} parent=91 // pred_check
          %p808 = pneg %p352
        $region146: #{cnn_forward.1} parent=91 // pred_check_branch
          %810 = sbr.rel (%p808) target = $region148
        $region147: #{cnn_forward.1} parent=91 // pred_region
          %812 = dma.done [#allocation25], 32
        $region148: #{cnn_forward.1} parent=91 // pred_fallthru
          _
        // Predicated region
        $region149: #{cnn_forward.1} parent=91 // pred_check
          %p813 = pneg %p394
        $region150: #{cnn_forward.1} parent=91 // pred_check_branch
          %815 = sbr.rel (%p813) target = $region152
        $region151: #{cnn_forward.1} parent=91 // pred_region
          %817 = dma.done [#allocation25], 16
        $region152: #{cnn_forward.1} parent=91 // pred_fallthru
          _
        // Predicated region
        $region153: #{cnn_forward.1} parent=91 // pred_check
          %p818 = pneg %p436
        $region154: #{cnn_forward.1} parent=91 // pred_check_branch
          %820 = sbr.rel (%p818) target = $region156
        $region155: #{cnn_forward.1} parent=91 // pred_region
          %822 = dma.done [#allocation28], 16
        $region156: #{cnn_forward.1} parent=91 // pred_fallthru
          _
        %p823 = pneg %p59
        %p824 = pneg %p56
        %s825 = sand.u32 %s43, 1
        %s826 = scalar_lea.sflag [#allocation7], %s825
        %s827 = sand.u32 %s72, 1
        %s828 = smul.addr %s827, 2048
        %s829 = scalar_lea.vmem [#allocation6], %s828
        %p830 = pneg %p85
        %p831 = pneg %p82
        %s832 = sand.u32 %s43, 1
        %s833 = scalar_lea.sflag [#allocation7], %s832
        %s834 = sand.u32 %s98, 1
        %s835 = smul.addr %s834, 4
        %s836 = scalar_lea.vmem [#allocation8], %s835
        %p837 = pneg %p111
        %p838 = pneg %p108
        %s839 = sand.u32 %s43, 1
        %s840 = scalar_lea.sflag [#allocation10], %s839
        %s841 = sand.u32 %s124, 1
        %s842 = smul.addr %s841, 4
        %s843 = scalar_lea.vmem [#allocation9], %s842
        %p844 = pneg %p137
        %p845 = pneg %p134
        %s846 = sand.u32 %s43, 1
        %s847 = scalar_lea.sflag [#allocation10], %s846
        %s848 = sand.u32 %s150, 1
        %s849 = smul.addr %s848, 1024
        %s850 = scalar_lea.vmem [#allocation11], %s849
        %p851 = pneg %p163
        %p852 = pneg %p160
        %p853 = pneg %p184
        %p854 = pneg %p181
        %p855 = pneg %p205
        %p856 = pneg %p202
        %p857 = pneg %p226
        %p858 = pneg %p223
        %p859 = pneg %p247
        %p860 = pneg %p244
        %p861 = pneg %p268
        %p862 = pneg %p265
        %p863 = pneg %p289
        %p864 = pneg %p286
        %p865 = pneg %p310
        %p866 = pneg %p307
        %p867 = pneg %p331
        %p868 = pneg %p328
        %p869 = pneg %p352
        %p870 = pneg %p349
        %p871 = pneg %p373
        %p872 = pneg %p370
        %p873 = pneg %p394
        %p874 = pneg %p391
        %p875 = pneg %p415
        %p876 = pneg %p412
        %p877 = pneg %p436
        %p878 = pneg %p433
        %p879 = pneg %p457
        %p880 = pneg %p454
        %p882 = scmp.eq.s32.totalorder %s43, 0
        // Predicated region
        $region157: #{cnn_forward.1} parent=91 // pred_check
          %p883 = pneg %p882
        $region158: #{cnn_forward.1} parent=91 // pred_check_branch
          %885 = sbr.rel (%p883) target = $region160
        $region159: #{cnn_forward.1} parent=91 // pred_region
          %886 = vst [vmem:[#allocation2] sm:$0xff] 0.0
        $region160: #{cnn_forward.1} parent=91 // pred_fallthru
          _
        %v887 = vld [vmem:[%s732] sm:$0xff]
        %v888 = vld [vmem:[%s732 + $0x8] sm:$0xff]
        %v889 = vld [vmem:[%s732 + $0x10] sm:$0xff]
        %v890 = vld [vmem:[%s732 + $0x18] sm:$0xff]
        %v891 = vld [vmem:[%s732 + $0x20] sm:$0xff]
        %v892 = vld [vmem:[%s732 + $0x28] sm:$0xff]
        %v893 = vld [vmem:[%s732 + $0x30] sm:$0xff]
        %v894 = vld [vmem:[%s732 + $0x38] sm:$0xff]
        %v895 = vld [vmem:[%s732 + $0x40] sm:$0xff]
        %v896 = vld [vmem:[%s732 + $0x48] sm:$0xff]
        %v897 = vld [vmem:[%s732 + $0x50] sm:$0xff]
        %v898 = vld [vmem:[%s732 + $0x58] sm:$0xff]
        %v899 = vld [vmem:[%s732 + $0x60] sm:$0xff]
        %v900 = vld [vmem:[%s732 + $0x68] sm:$0xff]
        %v901 = vld [vmem:[%s732 + $0x70] sm:$0xff]
        %v902 = vld [vmem:[%s732 + $0x78] sm:$0xff]
        %v903 = vld [vmem:[%s732 + $0x80] sm:$0xff]
        %v904 = vld [vmem:[%s732 + $0x88] sm:$0xff]
        %v905 = vld [vmem:[%s732 + $0x90] sm:$0xff]
        %v906 = vld [vmem:[%s732 + $0x98] sm:$0xff]
        %v907 = vld [vmem:[%s732 + $0xa0] sm:$0xff]
        %v908 = vld [vmem:[%s732 + $0xa8] sm:$0xff]
        %v909 = vld [vmem:[%s732 + $0xb0] sm:$0xff]
        %v910 = vld [vmem:[%s732 + $0xb8] sm:$0xff]
        %v911 = vld [vmem:[%s732 + $0xc0] sm:$0xff]
        %v912 = vld [vmem:[%s732 + $0xc8] sm:$0xff]
        %v913 = vld [vmem:[%s732 + $0xd0] sm:$0xff]
        %v914 = vld [vmem:[%s732 + $0xd8] sm:$0xff]
        %v915 = vld [vmem:[%s732 + $0xe0] sm:$0xff]
        %v916 = vld [vmem:[%s732 + $0xe8] sm:$0xff]
        %v917 = vld [vmem:[%s732 + $0xf0] sm:$0xff]
        %v918 = vld [vmem:[%s732 + $0xf8] sm:$0xff]
        %v919 = vld [vmem:[%s732 + $0x100] sm:$0xff]
        %v920 = vld [vmem:[%s732 + $0x108] sm:$0xff]
        %v921 = vld [vmem:[%s732 + $0x110] sm:$0xff]
        %v922 = vld [vmem:[%s732 + $0x118] sm:$0xff]
        %v923 = vld [vmem:[%s732 + $0x120] sm:$0xff]
        %v924 = vld [vmem:[%s732 + $0x128] sm:$0xff]
        %v925 = vld [vmem:[%s732 + $0x130] sm:$0xff]
        %v926 = vld [vmem:[%s732 + $0x138] sm:$0xff]
        %v927 = vld [vmem:[%s732 + $0x140] sm:$0xff]
        %v928 = vld [vmem:[%s732 + $0x148] sm:$0xff]
        %v929 = vld [vmem:[%s732 + $0x150] sm:$0xff]
        %v930 = vld [vmem:[%s732 + $0x158] sm:$0xff]
        %v931 = vld [vmem:[%s732 + $0x160] sm:$0xff]
        %v932 = vld [vmem:[%s732 + $0x168] sm:$0xff]
        %v933 = vld [vmem:[%s732 + $0x170] sm:$0xff]
        %v934 = vld [vmem:[%s732 + $0x178] sm:$0xff]
        %v935 = vld [vmem:[%s732 + $0x180] sm:$0xff]
        %v936 = vld [vmem:[%s732 + $0x188] sm:$0xff]
        %v937 = vld [vmem:[%s732 + $0x190] sm:$0xff]
        %v938 = vld [vmem:[%s732 + $0x198] sm:$0xff]
        %v939 = vld [vmem:[%s732 + $0x1a0] sm:$0xff]
        %v940 = vld [vmem:[%s732 + $0x1a8] sm:$0xff]
        %v941 = vld [vmem:[%s732 + $0x1b0] sm:$0xff]
        %v942 = vld [vmem:[%s732 + $0x1b8] sm:$0xff]
        %v943 = vld [vmem:[%s732 + $0x1c0] sm:$0xff]
        %v944 = vld [vmem:[%s732 + $0x1c8] sm:$0xff]
        %v945 = vld [vmem:[%s732 + $0x1d0] sm:$0xff]
        %v946 = vld [vmem:[%s732 + $0x1d8] sm:$0xff]
        %v947 = vld [vmem:[%s732 + $0x1e0] sm:$0xff]
        %v948 = vld [vmem:[%s732 + $0x1e8] sm:$0xff]
        %v949 = vld [vmem:[%s732 + $0x1f0] sm:$0xff]
        %v950 = vld [vmem:[%s732 + $0x1f8] sm:$0xff]
        %v951 = vld [vmem:[%s732 + $0x200] sm:$0xff]
        %v952 = vld [vmem:[%s732 + $0x208] sm:$0xff]
        %v953 = vld [vmem:[%s732 + $0x210] sm:$0xff]
        %v954 = vld [vmem:[%s732 + $0x218] sm:$0xff]
        %v955 = vld [vmem:[%s732 + $0x220] sm:$0xff]
        %v956 = vld [vmem:[%s732 + $0x228] sm:$0xff]
        %v957 = vld [vmem:[%s732 + $0x230] sm:$0xff]
        %v958 = vld [vmem:[%s732 + $0x238] sm:$0xff]
        %v959 = vld [vmem:[%s732 + $0x240] sm:$0xff]
        %v960 = vld [vmem:[%s732 + $0x248] sm:$0xff]
        %v961 = vld [vmem:[%s732 + $0x250] sm:$0xff]
        %v962 = vld [vmem:[%s732 + $0x258] sm:$0xff]
        %v963 = vld [vmem:[%s732 + $0x260] sm:$0xff]
        %v964 = vld [vmem:[%s732 + $0x268] sm:$0xff]
        %v965 = vld [vmem:[%s732 + $0x270] sm:$0xff]
        %v966 = vld [vmem:[%s732 + $0x278] sm:$0xff]
        %v967 = vld [vmem:[%s732 + $0x280] sm:$0xff]
        %v968 = vld [vmem:[%s732 + $0x288] sm:$0xff]
        %v969 = vld [vmem:[%s732 + $0x290] sm:$0xff]
        %v970 = vld [vmem:[%s732 + $0x298] sm:$0xff]
        %v971 = vld [vmem:[%s732 + $0x2a0] sm:$0xff]
        %v972 = vld [vmem:[%s732 + $0x2a8] sm:$0xff]
        %v973 = vld [vmem:[%s732 + $0x2b0] sm:$0xff]
        %v974 = vld [vmem:[%s732 + $0x2b8] sm:$0xff]
        %v975 = vld [vmem:[%s732 + $0x2c0] sm:$0xff]
        %v976 = vld [vmem:[%s732 + $0x2c8] sm:$0xff]
        %v977 = vld [vmem:[%s732 + $0x2d0] sm:$0xff]
        %v978 = vld [vmem:[%s732 + $0x2d8] sm:$0xff]
        %v979 = vld [vmem:[%s732 + $0x2e0] sm:$0xff]
        %v980 = vld [vmem:[%s732 + $0x2e8] sm:$0xff]
        %v981 = vld [vmem:[%s732 + $0x2f0] sm:$0xff]
        %v982 = vld [vmem:[%s732 + $0x2f8] sm:$0xff]
        %v983 = vld [vmem:[%s732 + $0x300] sm:$0xff]
        %v984 = vld [vmem:[%s732 + $0x308] sm:$0xff]
        %v985 = vld [vmem:[%s732 + $0x310] sm:$0xff]
        %v986 = vld [vmem:[%s732 + $0x318] sm:$0xff]
        %v987 = vld [vmem:[%s732 + $0x320] sm:$0xff]
        %v988 = vld [vmem:[%s732 + $0x328] sm:$0xff]
        %v989 = vld [vmem:[%s732 + $0x330] sm:$0xff]
        %v990 = vld [vmem:[%s732 + $0x338] sm:$0xff]
        %v991 = vld [vmem:[%s732 + $0x340] sm:$0xff]
        %v992 = vld [vmem:[%s732 + $0x348] sm:$0xff]
        %v993 = vld [vmem:[%s732 + $0x350] sm:$0xff]
        %v994 = vld [vmem:[%s732 + $0x358] sm:$0xff]
        %v995 = vld [vmem:[%s732 + $0x360] sm:$0xff]
        %v996 = vld [vmem:[%s732 + $0x368] sm:$0xff]
        %v997 = vld [vmem:[%s732 + $0x370] sm:$0xff]
        %v998 = vld [vmem:[%s732 + $0x378] sm:$0xff]
        %v999 = vld [vmem:[%s732 + $0x380] sm:$0xff]
        %v1000 = vld [vmem:[%s732 + $0x388] sm:$0xff]
        %v1001 = vld [vmem:[%s732 + $0x390] sm:$0xff]
        %v1002 = vld [vmem:[%s732 + $0x398] sm:$0xff]
        %v1003 = vld [vmem:[%s732 + $0x3a0] sm:$0xff]
        %v1004 = vld [vmem:[%s732 + $0x3a8] sm:$0xff]
        %v1005 = vld [vmem:[%s732 + $0x3b0] sm:$0xff]
        %v1006 = vld [vmem:[%s732 + $0x3b8] sm:$0xff]
        %v1007 = vld [vmem:[%s732 + $0x3c0] sm:$0xff]
        %v1008 = vld [vmem:[%s732 + $0x3c8] sm:$0xff]
        %v1009 = vld [vmem:[%s732 + $0x3d0] sm:$0xff]
        %v1010 = vld [vmem:[%s732 + $0x3d8] sm:$0xff]
        %v1011 = vld [vmem:[%s732 + $0x3e0] sm:$0xff]
        %v1012 = vld [vmem:[%s732 + $0x3e8] sm:$0xff]
        %v1013 = vld [vmem:[%s732 + $0x3f0] sm:$0xff]
        %v1014 = vld [vmem:[%s732 + $0x3f8] sm:$0xff]
        %v1015 = vld [vmem:[%s732 + $0x400] sm:$0xff]
        %v1016 = vld [vmem:[%s732 + $0x408] sm:$0xff]
        %v1017 = vld [vmem:[%s732 + $0x410] sm:$0xff]
        %v1018 = vld [vmem:[%s732 + $0x418] sm:$0xff]
        %v1019 = vld [vmem:[%s732 + $0x420] sm:$0xff]
        %v1020 = vld [vmem:[%s732 + $0x428] sm:$0xff]
        %v1021 = vld [vmem:[%s732 + $0x430] sm:$0xff]
        %v1022 = vld [vmem:[%s732 + $0x438] sm:$0xff]
        %v1023 = vld [vmem:[%s732 + $0x440] sm:$0xff]
        %v1024 = vld [vmem:[%s732 + $0x448] sm:$0xff]
        %v1025 = vld [vmem:[%s732 + $0x450] sm:$0xff]
        %v1026 = vld [vmem:[%s732 + $0x458] sm:$0xff]
        %v1027 = vld [vmem:[%s732 + $0x460] sm:$0xff]
        %v1028 = vld [vmem:[%s732 + $0x468] sm:$0xff]
        %v1029 = vld [vmem:[%s732 + $0x470] sm:$0xff]
        %v1030 = vld [vmem:[%s732 + $0x478] sm:$0xff]
        %v1031 = vld [vmem:[%s732 + $0x480] sm:$0xff]
        %v1032 = vld [vmem:[%s732 + $0x488] sm:$0xff]
        %v1033 = vld [vmem:[%s732 + $0x490] sm:$0xff]
        %v1034 = vld [vmem:[%s732 + $0x498] sm:$0xff]
        %v1035 = vld [vmem:[%s732 + $0x4a0] sm:$0xff]
        %v1036 = vld [vmem:[%s732 + $0x4a8] sm:$0xff]
        %v1037 = vld [vmem:[%s732 + $0x4b0] sm:$0xff]
        %v1038 = vld [vmem:[%s732 + $0x4b8] sm:$0xff]
        %v1039 = vld [vmem:[%s732 + $0x4c0] sm:$0xff]
        %v1040 = vld [vmem:[%s732 + $0x4c8] sm:$0xff]
        %v1041 = vld [vmem:[%s732 + $0x4d0] sm:$0xff]
        %v1042 = vld [vmem:[%s732 + $0x4d8] sm:$0xff]
        %v1043 = vld [vmem:[%s732 + $0x4e0] sm:$0xff]
        %v1044 = vld [vmem:[%s732 + $0x4e8] sm:$0xff]
        %v1045 = vld [vmem:[%s732 + $0x4f0] sm:$0xff]
        %v1046 = vld [vmem:[%s732 + $0x4f8] sm:$0xff]
        %v1047 = vld [vmem:[%s732 + $0x500] sm:$0xff]
        %v1048 = vld [vmem:[%s732 + $0x508] sm:$0xff]
        %v1049 = vld [vmem:[%s732 + $0x510] sm:$0xff]
        %v1050 = vld [vmem:[%s732 + $0x518] sm:$0xff]
        %v1051 = vld [vmem:[%s732 + $0x520] sm:$0xff]
        %v1052 = vld [vmem:[%s732 + $0x528] sm:$0xff]
        %v1053 = vld [vmem:[%s732 + $0x530] sm:$0xff]
        %v1054 = vld [vmem:[%s732 + $0x538] sm:$0xff]
        %v1055 = vld [vmem:[%s732 + $0x540] sm:$0xff]
        %v1056 = vld [vmem:[%s732 + $0x548] sm:$0xff]
        %v1057 = vld [vmem:[%s732 + $0x550] sm:$0xff]
        %v1058 = vld [vmem:[%s732 + $0x558] sm:$0xff]
        %v1059 = vld [vmem:[%s732 + $0x560] sm:$0xff]
        %v1060 = vld [vmem:[%s732 + $0x568] sm:$0xff]
        %v1061 = vld [vmem:[%s732 + $0x570] sm:$0xff]
        %v1062 = vld [vmem:[%s732 + $0x578] sm:$0xff]
        %v1063 = vld [vmem:[%s732 + $0x580] sm:$0xff]
        %v1064 = vld [vmem:[%s732 + $0x588] sm:$0xff]
        %v1065 = vld [vmem:[%s732 + $0x590] sm:$0xff]
        %v1066 = vld [vmem:[%s732 + $0x598] sm:$0xff]
        %v1067 = vld [vmem:[%s732 + $0x5a0] sm:$0xff]
        %v1068 = vld [vmem:[%s732 + $0x5a8] sm:$0xff]
        %v1069 = vld [vmem:[%s732 + $0x5b0] sm:$0xff]
        %v1070 = vld [vmem:[%s732 + $0x5b8] sm:$0xff]
        %v1071 = vld [vmem:[%s732 + $0x5c0] sm:$0xff]
        %v1072 = vld [vmem:[%s732 + $0x5c8] sm:$0xff]
        %v1073 = vld [vmem:[%s732 + $0x5d0] sm:$0xff]
        %v1074 = vld [vmem:[%s732 + $0x5d8] sm:$0xff]
        %v1075 = vld [vmem:[%s732 + $0x5e0] sm:$0xff]
        %v1076 = vld [vmem:[%s732 + $0x5e8] sm:$0xff]
        %v1077 = vld [vmem:[%s732 + $0x5f0] sm:$0xff]
        %v1078 = vld [vmem:[%s732 + $0x5f8] sm:$0xff]
        %v1079 = vld [vmem:[%s732 + $0x600] sm:$0xff]
        %v1080 = vld [vmem:[%s732 + $0x608] sm:$0xff]
        %v1081 = vld [vmem:[%s732 + $0x610] sm:$0xff]
        %v1082 = vld [vmem:[%s732 + $0x618] sm:$0xff]
        %v1083 = vld [vmem:[%s732 + $0x620] sm:$0xff]
        %v1084 = vld [vmem:[%s732 + $0x628] sm:$0xff]
        %v1085 = vld [vmem:[%s732 + $0x630] sm:$0xff]
        %v1086 = vld [vmem:[%s732 + $0x638] sm:$0xff]
        %v1087 = vld [vmem:[%s732 + $0x640] sm:$0xff]
        %v1088 = vld [vmem:[%s732 + $0x648] sm:$0xff]
        %v1089 = vld [vmem:[%s732 + $0x650] sm:$0xff]
        %v1090 = vld [vmem:[%s732 + $0x658] sm:$0xff]
        %v1091 = vld [vmem:[%s732 + $0x660] sm:$0xff]
        %v1092 = vld [vmem:[%s732 + $0x668] sm:$0xff]
        %v1093 = vld [vmem:[%s732 + $0x670] sm:$0xff]
        %v1094 = vld [vmem:[%s732 + $0x678] sm:$0xff]
        %v1095 = vld [vmem:[%s732 + $0x680] sm:$0xff]
        %v1096 = vld [vmem:[%s732 + $0x688] sm:$0xff]
        %v1097 = vld [vmem:[%s732 + $0x690] sm:$0xff]
        %v1098 = vld [vmem:[%s732 + $0x698] sm:$0xff]
        %v1099 = vld [vmem:[%s732 + $0x6a0] sm:$0xff]
        %v1100 = vld [vmem:[%s732 + $0x6a8] sm:$0xff]
        %v1101 = vld [vmem:[%s732 + $0x6b0] sm:$0xff]
        %v1102 = vld [vmem:[%s732 + $0x6b8] sm:$0xff]
        %v1103 = vld [vmem:[%s732 + $0x6c0] sm:$0xff]
        %v1104 = vld [vmem:[%s732 + $0x6c8] sm:$0xff]
        %v1105 = vld [vmem:[%s732 + $0x6d0] sm:$0xff]
        %v1106 = vld [vmem:[%s732 + $0x6d8] sm:$0xff]
        %v1107 = vld [vmem:[%s732 + $0x6e0] sm:$0xff]
        %v1108 = vld [vmem:[%s732 + $0x6e8] sm:$0xff]
        %v1109 = vld [vmem:[%s732 + $0x6f0] sm:$0xff]
        %v1110 = vld [vmem:[%s732 + $0x6f8] sm:$0xff]
        %v1111 = vld [vmem:[%s732 + $0x700] sm:$0xff]
        %v1112 = vld [vmem:[%s732 + $0x708] sm:$0xff]
        %v1113 = vld [vmem:[%s732 + $0x710] sm:$0xff]
        %v1114 = vld [vmem:[%s732 + $0x718] sm:$0xff]
        %v1115 = vld [vmem:[%s732 + $0x720] sm:$0xff]
        %v1116 = vld [vmem:[%s732 + $0x728] sm:$0xff]
        %v1117 = vld [vmem:[%s732 + $0x730] sm:$0xff]
        %v1118 = vld [vmem:[%s732 + $0x738] sm:$0xff]
        %v1119 = vld [vmem:[%s732 + $0x740] sm:$0xff]
        %v1120 = vld [vmem:[%s732 + $0x748] sm:$0xff]
        %v1121 = vld [vmem:[%s732 + $0x750] sm:$0xff]
        %v1122 = vld [vmem:[%s732 + $0x758] sm:$0xff]
        %v1123 = vld [vmem:[%s732 + $0x760] sm:$0xff]
        %v1124 = vld [vmem:[%s732 + $0x768] sm:$0xff]
        %v1125 = vld [vmem:[%s732 + $0x770] sm:$0xff]
        %v1126 = vld [vmem:[%s732 + $0x778] sm:$0xff]
        %v1127 = vld [vmem:[%s732 + $0x780] sm:$0xff]
        %v1128 = vld [vmem:[%s732 + $0x788] sm:$0xff]
        %v1129 = vld [vmem:[%s732 + $0x790] sm:$0xff]
        %v1130 = vld [vmem:[%s732 + $0x798] sm:$0xff]
        %v1131 = vld [vmem:[%s732 + $0x7a0] sm:$0xff]
        %v1132 = vld [vmem:[%s732 + $0x7a8] sm:$0xff]
        %v1133 = vld [vmem:[%s732 + $0x7b0] sm:$0xff]
        %v1134 = vld [vmem:[%s732 + $0x7b8] sm:$0xff]
        %v1135 = vld [vmem:[%s732 + $0x7c0] sm:$0xff]
        %v1136 = vld [vmem:[%s732 + $0x7c8] sm:$0xff]
        %v1137 = vld [vmem:[%s732 + $0x7d0] sm:$0xff]
        %v1138 = vld [vmem:[%s732 + $0x7d8] sm:$0xff]
        %v1139 = vld [vmem:[%s732 + $0x7e0] sm:$0xff]
        %v1140 = vld [vmem:[%s732 + $0x7e8] sm:$0xff]
        %v1141 = vld [vmem:[%s732 + $0x7f0] sm:$0xff]
        %v1142 = vld [vmem:[%s732 + $0x7f8] sm:$0xff]
        %v1143 = vunpack.c.0.s8 %v887
        %v1144 = vunpack.c.0.s8 %v888
        %v1145 = vunpack.c.0.s8 %v889
        %v1146 = vunpack.c.0.s8 %v890
        %v1147 = vunpack.c.1.s8 %v887
        %v1148 = vunpack.c.1.s8 %v888
        %v1149 = vunpack.c.1.s8 %v889
        %v1150 = vunpack.c.1.s8 %v890
        %v1151 = vunpack.c.2.s8 %v887
        %v1152 = vunpack.c.2.s8 %v888
        %v1153 = vunpack.c.2.s8 %v889
        %v1154 = vunpack.c.2.s8 %v890
        %v1155 = vunpack.c.3.s8 %v887
        %v1156 = vunpack.c.3.s8 %v888
        %v1157 = vunpack.c.3.s8 %v889
        %v1158 = vunpack.c.3.s8 %v890
        %v1159 = vunpack.c.0.s8 %v891
        %v1160 = vunpack.c.0.s8 %v892
        %v1161 = vunpack.c.0.s8 %v893
        %v1162 = vunpack.c.0.s8 %v894
        %v1163 = vunpack.c.1.s8 %v891
        %v1164 = vunpack.c.1.s8 %v892
        %v1165 = vunpack.c.1.s8 %v893
        %v1166 = vunpack.c.1.s8 %v894
        %v1167 = vunpack.c.2.s8 %v891
        %v1168 = vunpack.c.2.s8 %v892
        %v1169 = vunpack.c.2.s8 %v893
        %v1170 = vunpack.c.2.s8 %v894
        %v1171 = vunpack.c.3.s8 %v891
        %v1172 = vunpack.c.3.s8 %v892
        %v1173 = vunpack.c.3.s8 %v893
        %v1174 = vunpack.c.3.s8 %v894
        %v1175 = vunpack.c.0.s8 %v895
        %v1176 = vunpack.c.0.s8 %v896
        %v1177 = vunpack.c.0.s8 %v897
        %v1178 = vunpack.c.0.s8 %v898
        %v1179 = vunpack.c.1.s8 %v895
        %v1180 = vunpack.c.1.s8 %v896
        %v1181 = vunpack.c.1.s8 %v897
        %v1182 = vunpack.c.1.s8 %v898
        %v1183 = vunpack.c.2.s8 %v895
        %v1184 = vunpack.c.2.s8 %v896
        %v1185 = vunpack.c.2.s8 %v897
        %v1186 = vunpack.c.2.s8 %v898
        %v1187 = vunpack.c.3.s8 %v895
        %v1188 = vunpack.c.3.s8 %v896
        %v1189 = vunpack.c.3.s8 %v897
        %v1190 = vunpack.c.3.s8 %v898
        %v1191 = vunpack.c.0.s8 %v899
        %v1192 = vunpack.c.0.s8 %v900
        %v1193 = vunpack.c.0.s8 %v901
        %v1194 = vunpack.c.0.s8 %v902
        %v1195 = vunpack.c.1.s8 %v899
        %v1196 = vunpack.c.1.s8 %v900
        %v1197 = vunpack.c.1.s8 %v901
        %v1198 = vunpack.c.1.s8 %v902
        %v1199 = vunpack.c.2.s8 %v899
        %v1200 = vunpack.c.2.s8 %v900
        %v1201 = vunpack.c.2.s8 %v901
        %v1202 = vunpack.c.2.s8 %v902
        %v1203 = vunpack.c.3.s8 %v899
        %v1204 = vunpack.c.3.s8 %v900
        %v1205 = vunpack.c.3.s8 %v901
        %v1206 = vunpack.c.3.s8 %v902
        %v1207 = vunpack.c.0.s8 %v903
        %v1208 = vunpack.c.0.s8 %v904
        %v1209 = vunpack.c.0.s8 %v905
        %v1210 = vunpack.c.0.s8 %v906
        %v1211 = vunpack.c.1.s8 %v903
        %v1212 = vunpack.c.1.s8 %v904
        %v1213 = vunpack.c.1.s8 %v905
        %v1214 = vunpack.c.1.s8 %v906
        %v1215 = vunpack.c.2.s8 %v903
        %v1216 = vunpack.c.2.s8 %v904
        %v1217 = vunpack.c.2.s8 %v905
        %v1218 = vunpack.c.2.s8 %v906
        %v1219 = vunpack.c.3.s8 %v903
        %v1220 = vunpack.c.3.s8 %v904
        %v1221 = vunpack.c.3.s8 %v905
        %v1222 = vunpack.c.3.s8 %v906
        %v1223 = vunpack.c.0.s8 %v907
        %v1224 = vunpack.c.0.s8 %v908
        %v1225 = vunpack.c.0.s8 %v909
        %v1226 = vunpack.c.0.s8 %v910
        %v1227 = vunpack.c.1.s8 %v907
        %v1228 = vunpack.c.1.s8 %v908
        %v1229 = vunpack.c.1.s8 %v909
        %v1230 = vunpack.c.1.s8 %v910
        %v1231 = vunpack.c.2.s8 %v907
        %v1232 = vunpack.c.2.s8 %v908
        %v1233 = vunpack.c.2.s8 %v909
        %v1234 = vunpack.c.2.s8 %v910
        %v1235 = vunpack.c.3.s8 %v907
        %v1236 = vunpack.c.3.s8 %v908
        %v1237 = vunpack.c.3.s8 %v909
        %v1238 = vunpack.c.3.s8 %v910
        %v1239 = vunpack.c.0.s8 %v911
        %v1240 = vunpack.c.0.s8 %v912
        %v1241 = vunpack.c.0.s8 %v913
        %v1242 = vunpack.c.0.s8 %v914
        %v1243 = vunpack.c.1.s8 %v911
        %v1244 = vunpack.c.1.s8 %v912
        %v1245 = vunpack.c.1.s8 %v913
        %v1246 = vunpack.c.1.s8 %v914
        %v1247 = vunpack.c.2.s8 %v911
        %v1248 = vunpack.c.2.s8 %v912
        %v1249 = vunpack.c.2.s8 %v913
        %v1250 = vunpack.c.2.s8 %v914
        %v1251 = vunpack.c.3.s8 %v911
        %v1252 = vunpack.c.3.s8 %v912
        %v1253 = vunpack.c.3.s8 %v913
        %v1254 = vunpack.c.3.s8 %v914
        %v1255 = vunpack.c.0.s8 %v915
        %v1256 = vunpack.c.0.s8 %v916
        %v1257 = vunpack.c.0.s8 %v917
        %v1258 = vunpack.c.0.s8 %v918
        %v1259 = vunpack.c.1.s8 %v915
        %v1260 = vunpack.c.1.s8 %v916
        %v1261 = vunpack.c.1.s8 %v917
        %v1262 = vunpack.c.1.s8 %v918
        %v1263 = vunpack.c.2.s8 %v915
        %v1264 = vunpack.c.2.s8 %v916
        %v1265 = vunpack.c.2.s8 %v917
        %v1266 = vunpack.c.2.s8 %v918
        %v1267 = vunpack.c.3.s8 %v915
        %v1268 = vunpack.c.3.s8 %v916
        %v1269 = vunpack.c.3.s8 %v917
        %v1270 = vunpack.c.3.s8 %v918
        %v1271 = vunpack.c.0.s8 %v919
        %v1272 = vunpack.c.0.s8 %v920
        %v1273 = vunpack.c.0.s8 %v921
        %v1274 = vunpack.c.0.s8 %v922
        %v1275 = vunpack.c.1.s8 %v919
        %v1276 = vunpack.c.1.s8 %v920
        %v1277 = vunpack.c.1.s8 %v921
        %v1278 = vunpack.c.1.s8 %v922
        %v1279 = vunpack.c.2.s8 %v919
        %v1280 = vunpack.c.2.s8 %v920
        %v1281 = vunpack.c.2.s8 %v921
        %v1282 = vunpack.c.2.s8 %v922
        %v1283 = vunpack.c.3.s8 %v919
        %v1284 = vunpack.c.3.s8 %v920
        %v1285 = vunpack.c.3.s8 %v921
        %v1286 = vunpack.c.3.s8 %v922
        %v1287 = vunpack.c.0.s8 %v923
        %v1288 = vunpack.c.0.s8 %v924
        %v1289 = vunpack.c.0.s8 %v925
        %v1290 = vunpack.c.0.s8 %v926
        %v1291 = vunpack.c.1.s8 %v923
        %v1292 = vunpack.c.1.s8 %v924
        %v1293 = vunpack.c.1.s8 %v925
        %v1294 = vunpack.c.1.s8 %v926
        %v1295 = vunpack.c.2.s8 %v923
        %v1296 = vunpack.c.2.s8 %v924
        %v1297 = vunpack.c.2.s8 %v925
        %v1298 = vunpack.c.2.s8 %v926
        %v1299 = vunpack.c.3.s8 %v923
        %v1300 = vunpack.c.3.s8 %v924
        %v1301 = vunpack.c.3.s8 %v925
        %v1302 = vunpack.c.3.s8 %v926
        %v1303 = vunpack.c.0.s8 %v927
        %v1304 = vunpack.c.0.s8 %v928
        %v1305 = vunpack.c.0.s8 %v929
        %v1306 = vunpack.c.0.s8 %v930
        %v1307 = vunpack.c.1.s8 %v927
        %v1308 = vunpack.c.1.s8 %v928
        %v1309 = vunpack.c.1.s8 %v929
        %v1310 = vunpack.c.1.s8 %v930
        %v1311 = vunpack.c.2.s8 %v927
        %v1312 = vunpack.c.2.s8 %v928
        %v1313 = vunpack.c.2.s8 %v929
        %v1314 = vunpack.c.2.s8 %v930
        %v1315 = vunpack.c.3.s8 %v927
        %v1316 = vunpack.c.3.s8 %v928
        %v1317 = vunpack.c.3.s8 %v929
        %v1318 = vunpack.c.3.s8 %v930
        %v1319 = vunpack.c.0.s8 %v931
        %v1320 = vunpack.c.0.s8 %v932
        %v1321 = vunpack.c.0.s8 %v933
        %v1322 = vunpack.c.0.s8 %v934
        %v1323 = vunpack.c.1.s8 %v931
        %v1324 = vunpack.c.1.s8 %v932
        %v1325 = vunpack.c.1.s8 %v933
        %v1326 = vunpack.c.1.s8 %v934
        %v1327 = vunpack.c.2.s8 %v931
        %v1328 = vunpack.c.2.s8 %v932
        %v1329 = vunpack.c.2.s8 %v933
        %v1330 = vunpack.c.2.s8 %v934
        %v1331 = vunpack.c.3.s8 %v931
        %v1332 = vunpack.c.3.s8 %v932
        %v1333 = vunpack.c.3.s8 %v933
        %v1334 = vunpack.c.3.s8 %v934
        %v1335 = vunpack.c.0.s8 %v935
        %v1336 = vunpack.c.0.s8 %v936
        %v1337 = vunpack.c.0.s8 %v937
        %v1338 = vunpack.c.0.s8 %v938
        %v1339 = vunpack.c.1.s8 %v935
        %v1340 = vunpack.c.1.s8 %v936
        %v1341 = vunpack.c.1.s8 %v937
        %v1342 = vunpack.c.1.s8 %v938
        %v1343 = vunpack.c.2.s8 %v935
        %v1344 = vunpack.c.2.s8 %v936
        %v1345 = vunpack.c.2.s8 %v937
        %v1346 = vunpack.c.2.s8 %v938
        %v1347 = vunpack.c.3.s8 %v935
        %v1348 = vunpack.c.3.s8 %v936
        %v1349 = vunpack.c.3.s8 %v937
        %v1350 = vunpack.c.3.s8 %v938
        %v1351 = vunpack.c.0.s8 %v939
        %v1352 = vunpack.c.0.s8 %v940
        %v1353 = vunpack.c.0.s8 %v941
        %v1354 = vunpack.c.0.s8 %v942
        %v1355 = vunpack.c.1.s8 %v939
        %v1356 = vunpack.c.1.s8 %v940
        %v1357 = vunpack.c.1.s8 %v941
        %v1358 = vunpack.c.1.s8 %v942
        %v1359 = vunpack.c.2.s8 %v939
        %v1360 = vunpack.c.2.s8 %v940
        %v1361 = vunpack.c.2.s8 %v941
        %v1362 = vunpack.c.2.s8 %v942
        %v1363 = vunpack.c.3.s8 %v939
        %v1364 = vunpack.c.3.s8 %v940
        %v1365 = vunpack.c.3.s8 %v941
        %v1366 = vunpack.c.3.s8 %v942
        %v1367 = vunpack.c.0.s8 %v943
        %v1368 = vunpack.c.0.s8 %v944
        %v1369 = vunpack.c.0.s8 %v945
        %v1370 = vunpack.c.0.s8 %v946
        %v1371 = vunpack.c.1.s8 %v943
        %v1372 = vunpack.c.1.s8 %v944
        %v1373 = vunpack.c.1.s8 %v945
        %v1374 = vunpack.c.1.s8 %v946
        %v1375 = vunpack.c.2.s8 %v943
        %v1376 = vunpack.c.2.s8 %v944
        %v1377 = vunpack.c.2.s8 %v945
        %v1378 = vunpack.c.2.s8 %v946
        %v1379 = vunpack.c.3.s8 %v943
        %v1380 = vunpack.c.3.s8 %v944
        %v1381 = vunpack.c.3.s8 %v945
        %v1382 = vunpack.c.3.s8 %v946
        %v1383 = vunpack.c.0.s8 %v947
        %v1384 = vunpack.c.0.s8 %v948
        %v1385 = vunpack.c.0.s8 %v949
        %v1386 = vunpack.c.0.s8 %v950
        %v1387 = vunpack.c.1.s8 %v947
        %v1388 = vunpack.c.1.s8 %v948
        %v1389 = vunpack.c.1.s8 %v949
        %v1390 = vunpack.c.1.s8 %v950
        %v1391 = vunpack.c.2.s8 %v947
        %v1392 = vunpack.c.2.s8 %v948
        %v1393 = vunpack.c.2.s8 %v949
        %v1394 = vunpack.c.2.s8 %v950
        %v1395 = vunpack.c.3.s8 %v947
        %v1396 = vunpack.c.3.s8 %v948
        %v1397 = vunpack.c.3.s8 %v949
        %v1398 = vunpack.c.3.s8 %v950
        %v1399 = vunpack.c.0.s8 %v951
        %v1400 = vunpack.c.0.s8 %v952
        %v1401 = vunpack.c.0.s8 %v953
        %v1402 = vunpack.c.0.s8 %v954
        %v1403 = vunpack.c.1.s8 %v951
        %v1404 = vunpack.c.1.s8 %v952
        %v1405 = vunpack.c.1.s8 %v953
        %v1406 = vunpack.c.1.s8 %v954
        %v1407 = vunpack.c.2.s8 %v951
        %v1408 = vunpack.c.2.s8 %v952
        %v1409 = vunpack.c.2.s8 %v953
        %v1410 = vunpack.c.2.s8 %v954
        %v1411 = vunpack.c.3.s8 %v951
        %v1412 = vunpack.c.3.s8 %v952
        %v1413 = vunpack.c.3.s8 %v953
        %v1414 = vunpack.c.3.s8 %v954
        %v1415 = vunpack.c.0.s8 %v955
        %v1416 = vunpack.c.0.s8 %v956
        %v1417 = vunpack.c.0.s8 %v957
        %v1418 = vunpack.c.0.s8 %v958
        %v1419 = vunpack.c.1.s8 %v955
        %v1420 = vunpack.c.1.s8 %v956
        %v1421 = vunpack.c.1.s8 %v957
        %v1422 = vunpack.c.1.s8 %v958
        %v1423 = vunpack.c.2.s8 %v955
        %v1424 = vunpack.c.2.s8 %v956
        %v1425 = vunpack.c.2.s8 %v957
        %v1426 = vunpack.c.2.s8 %v958
        %v1427 = vunpack.c.3.s8 %v955
        %v1428 = vunpack.c.3.s8 %v956
        %v1429 = vunpack.c.3.s8 %v957
        %v1430 = vunpack.c.3.s8 %v958
        %v1431 = vunpack.c.0.s8 %v959
        %v1432 = vunpack.c.0.s8 %v960
        %v1433 = vunpack.c.0.s8 %v961
        %v1434 = vunpack.c.0.s8 %v962
        %v1435 = vunpack.c.1.s8 %v959
        %v1436 = vunpack.c.1.s8 %v960
        %v1437 = vunpack.c.1.s8 %v961
        %v1438 = vunpack.c.1.s8 %v962
        %v1439 = vunpack.c.2.s8 %v959
        %v1440 = vunpack.c.2.s8 %v960
        %v1441 = vunpack.c.2.s8 %v961
        %v1442 = vunpack.c.2.s8 %v962
        %v1443 = vunpack.c.3.s8 %v959
        %v1444 = vunpack.c.3.s8 %v960
        %v1445 = vunpack.c.3.s8 %v961
        %v1446 = vunpack.c.3.s8 %v962
        %v1447 = vunpack.c.0.s8 %v963
        %v1448 = vunpack.c.0.s8 %v964
        %v1449 = vunpack.c.0.s8 %v965
        %v1450 = vunpack.c.0.s8 %v966
        %v1451 = vunpack.c.1.s8 %v963
        %v1452 = vunpack.c.1.s8 %v964
        %v1453 = vunpack.c.1.s8 %v965
        %v1454 = vunpack.c.1.s8 %v966
        %v1455 = vunpack.c.2.s8 %v963
        %v1456 = vunpack.c.2.s8 %v964
        %v1457 = vunpack.c.2.s8 %v965
        %v1458 = vunpack.c.2.s8 %v966
        %v1459 = vunpack.c.3.s8 %v963
        %v1460 = vunpack.c.3.s8 %v964
        %v1461 = vunpack.c.3.s8 %v965
        %v1462 = vunpack.c.3.s8 %v966
        %v1463 = vunpack.c.0.s8 %v967
        %v1464 = vunpack.c.0.s8 %v968
        %v1465 = vunpack.c.0.s8 %v969
        %v1466 = vunpack.c.0.s8 %v970
        %v1467 = vunpack.c.1.s8 %v967
        %v1468 = vunpack.c.1.s8 %v968
        %v1469 = vunpack.c.1.s8 %v969
        %v1470 = vunpack.c.1.s8 %v970
        %v1471 = vunpack.c.2.s8 %v967
        %v1472 = vunpack.c.2.s8 %v968
        %v1473 = vunpack.c.2.s8 %v969
        %v1474 = vunpack.c.2.s8 %v970
        %v1475 = vunpack.c.3.s8 %v967
        %v1476 = vunpack.c.3.s8 %v968
        %v1477 = vunpack.c.3.s8 %v969
        %v1478 = vunpack.c.3.s8 %v970
        %v1479 = vunpack.c.0.s8 %v971
        %v1480 = vunpack.c.0.s8 %v972
        %v1481 = vunpack.c.0.s8 %v973
        %v1482 = vunpack.c.0.s8 %v974
        %v1483 = vunpack.c.1.s8 %v971
        %v1484 = vunpack.c.1.s8 %v972
        %v1485 = vunpack.c.1.s8 %v973
        %v1486 = vunpack.c.1.s8 %v974
        %v1487 = vunpack.c.2.s8 %v971
        %v1488 = vunpack.c.2.s8 %v972
        %v1489 = vunpack.c.2.s8 %v973
        %v1490 = vunpack.c.2.s8 %v974
        %v1491 = vunpack.c.3.s8 %v971
        %v1492 = vunpack.c.3.s8 %v972
        %v1493 = vunpack.c.3.s8 %v973
        %v1494 = vunpack.c.3.s8 %v974
        %v1495 = vunpack.c.0.s8 %v975
        %v1496 = vunpack.c.0.s8 %v976
        %v1497 = vunpack.c.0.s8 %v977
        %v1498 = vunpack.c.0.s8 %v978
        %v1499 = vunpack.c.1.s8 %v975
        %v1500 = vunpack.c.1.s8 %v976
        %v1501 = vunpack.c.1.s8 %v977
        %v1502 = vunpack.c.1.s8 %v978
        %v1503 = vunpack.c.2.s8 %v975
        %v1504 = vunpack.c.2.s8 %v976
        %v1505 = vunpack.c.2.s8 %v977
        %v1506 = vunpack.c.2.s8 %v978
        %v1507 = vunpack.c.3.s8 %v975
        %v1508 = vunpack.c.3.s8 %v976
        %v1509 = vunpack.c.3.s8 %v977
        %v1510 = vunpack.c.3.s8 %v978
        %v1511 = vunpack.c.0.s8 %v979
        %v1512 = vunpack.c.0.s8 %v980
        %v1513 = vunpack.c.0.s8 %v981
        %v1514 = vunpack.c.0.s8 %v982
        %v1515 = vunpack.c.1.s8 %v979
        %v1516 = vunpack.c.1.s8 %v980
        %v1517 = vunpack.c.1.s8 %v981
        %v1518 = vunpack.c.1.s8 %v982
        %v1519 = vunpack.c.2.s8 %v979
        %v1520 = vunpack.c.2.s8 %v980
        %v1521 = vunpack.c.2.s8 %v981
        %v1522 = vunpack.c.2.s8 %v982
        %v1523 = vunpack.c.3.s8 %v979
        %v1524 = vunpack.c.3.s8 %v980
        %v1525 = vunpack.c.3.s8 %v981
        %v1526 = vunpack.c.3.s8 %v982
        %v1527 = vunpack.c.0.s8 %v983
        %v1528 = vunpack.c.0.s8 %v984
        %v1529 = vunpack.c.0.s8 %v985
        %v1530 = vunpack.c.0.s8 %v986
        %v1531 = vunpack.c.1.s8 %v983
        %v1532 = vunpack.c.1.s8 %v984
        %v1533 = vunpack.c.1.s8 %v985
        %v1534 = vunpack.c.1.s8 %v986
        %v1535 = vunpack.c.2.s8 %v983
        %v1536 = vunpack.c.2.s8 %v984
        %v1537 = vunpack.c.2.s8 %v985
        %v1538 = vunpack.c.2.s8 %v986
        %v1539 = vunpack.c.3.s8 %v983
        %v1540 = vunpack.c.3.s8 %v984
        %v1541 = vunpack.c.3.s8 %v985
        %v1542 = vunpack.c.3.s8 %v986
        %v1543 = vunpack.c.0.s8 %v987
        %v1544 = vunpack.c.0.s8 %v988
        %v1545 = vunpack.c.0.s8 %v989
        %v1546 = vunpack.c.0.s8 %v990
        %v1547 = vunpack.c.1.s8 %v987
        %v1548 = vunpack.c.1.s8 %v988
        %v1549 = vunpack.c.1.s8 %v989
        %v1550 = vunpack.c.1.s8 %v990
        %v1551 = vunpack.c.2.s8 %v987
        %v1552 = vunpack.c.2.s8 %v988
        %v1553 = vunpack.c.2.s8 %v989
        %v1554 = vunpack.c.2.s8 %v990
        %v1555 = vunpack.c.3.s8 %v987
        %v1556 = vunpack.c.3.s8 %v988
        %v1557 = vunpack.c.3.s8 %v989
        %v1558 = vunpack.c.3.s8 %v990
        %v1559 = vunpack.c.0.s8 %v991
        %v1560 = vunpack.c.0.s8 %v992
        %v1561 = vunpack.c.0.s8 %v993
        %v1562 = vunpack.c.0.s8 %v994
        %v1563 = vunpack.c.1.s8 %v991
        %v1564 = vunpack.c.1.s8 %v992
        %v1565 = vunpack.c.1.s8 %v993
        %v1566 = vunpack.c.1.s8 %v994
        %v1567 = vunpack.c.2.s8 %v991
        %v1568 = vunpack.c.2.s8 %v992
        %v1569 = vunpack.c.2.s8 %v993
        %v1570 = vunpack.c.2.s8 %v994
        %v1571 = vunpack.c.3.s8 %v991
        %v1572 = vunpack.c.3.s8 %v992
        %v1573 = vunpack.c.3.s8 %v993
        %v1574 = vunpack.c.3.s8 %v994
        %v1575 = vunpack.c.0.s8 %v995
        %v1576 = vunpack.c.0.s8 %v996
        %v1577 = vunpack.c.0.s8 %v997
        %v1578 = vunpack.c.0.s8 %v998
        %v1579 = vunpack.c.1.s8 %v995
        %v1580 = vunpack.c.1.s8 %v996
        %v1581 = vunpack.c.1.s8 %v997
        %v1582 = vunpack.c.1.s8 %v998
        %v1583 = vunpack.c.2.s8 %v995
        %v1584 = vunpack.c.2.s8 %v996
        %v1585 = vunpack.c.2.s8 %v997
        %v1586 = vunpack.c.2.s8 %v998
        %v1587 = vunpack.c.3.s8 %v995
        %v1588 = vunpack.c.3.s8 %v996
        %v1589 = vunpack.c.3.s8 %v997
        %v1590 = vunpack.c.3.s8 %v998
        %v1591 = vunpack.c.0.s8 %v999
        %v1592 = vunpack.c.0.s8 %v1000
        %v1593 = vunpack.c.0.s8 %v1001
        %v1594 = vunpack.c.0.s8 %v1002
        %v1595 = vunpack.c.1.s8 %v999
        %v1596 = vunpack.c.1.s8 %v1000
        %v1597 = vunpack.c.1.s8 %v1001
        %v1598 = vunpack.c.1.s8 %v1002
        %v1599 = vunpack.c.2.s8 %v999
        %v1600 = vunpack.c.2.s8 %v1000
        %v1601 = vunpack.c.2.s8 %v1001
        %v1602 = vunpack.c.2.s8 %v1002
        %v1603 = vunpack.c.3.s8 %v999
        %v1604 = vunpack.c.3.s8 %v1000
        %v1605 = vunpack.c.3.s8 %v1001
        %v1606 = vunpack.c.3.s8 %v1002
        %v1607 = vunpack.c.0.s8 %v1003
        %v1608 = vunpack.c.0.s8 %v1004
        %v1609 = vunpack.c.0.s8 %v1005
        %v1610 = vunpack.c.0.s8 %v1006
        %v1611 = vunpack.c.1.s8 %v1003
        %v1612 = vunpack.c.1.s8 %v1004
        %v1613 = vunpack.c.1.s8 %v1005
        %v1614 = vunpack.c.1.s8 %v1006
        %v1615 = vunpack.c.2.s8 %v1003
        %v1616 = vunpack.c.2.s8 %v1004
        %v1617 = vunpack.c.2.s8 %v1005
        %v1618 = vunpack.c.2.s8 %v1006
        %v1619 = vunpack.c.3.s8 %v1003
        %v1620 = vunpack.c.3.s8 %v1004
        %v1621 = vunpack.c.3.s8 %v1005
        %v1622 = vunpack.c.3.s8 %v1006
        %v1623 = vunpack.c.0.s8 %v1007
        %v1624 = vunpack.c.0.s8 %v1008
        %v1625 = vunpack.c.0.s8 %v1009
        %v1626 = vunpack.c.0.s8 %v1010
        %v1627 = vunpack.c.1.s8 %v1007
        %v1628 = vunpack.c.1.s8 %v1008
        %v1629 = vunpack.c.1.s8 %v1009
        %v1630 = vunpack.c.1.s8 %v1010
        %v1631 = vunpack.c.2.s8 %v1007
        %v1632 = vunpack.c.2.s8 %v1008
        %v1633 = vunpack.c.2.s8 %v1009
        %v1634 = vunpack.c.2.s8 %v1010
        %v1635 = vunpack.c.3.s8 %v1007
        %v1636 = vunpack.c.3.s8 %v1008
        %v1637 = vunpack.c.3.s8 %v1009
        %v1638 = vunpack.c.3.s8 %v1010
        %v1639 = vunpack.c.0.s8 %v1011
        %v1640 = vunpack.c.0.s8 %v1012
        %v1641 = vunpack.c.0.s8 %v1013
        %v1642 = vunpack.c.0.s8 %v1014
        %v1643 = vunpack.c.1.s8 %v1011
        %v1644 = vunpack.c.1.s8 %v1012
        %v1645 = vunpack.c.1.s8 %v1013
        %v1646 = vunpack.c.1.s8 %v1014
        %v1647 = vunpack.c.2.s8 %v1011
        %v1648 = vunpack.c.2.s8 %v1012
        %v1649 = vunpack.c.2.s8 %v1013
        %v1650 = vunpack.c.2.s8 %v1014
        %v1651 = vunpack.c.3.s8 %v1011
        %v1652 = vunpack.c.3.s8 %v1012
        %v1653 = vunpack.c.3.s8 %v1013
        %v1654 = vunpack.c.3.s8 %v1014
        %v1655 = vunpack.c.0.s8 %v1015
        %v1656 = vunpack.c.0.s8 %v1016
        %v1657 = vunpack.c.0.s8 %v1017
        %v1658 = vunpack.c.0.s8 %v1018
        %v1659 = vunpack.c.1.s8 %v1015
        %v1660 = vunpack.c.1.s8 %v1016
        %v1661 = vunpack.c.1.s8 %v1017
        %v1662 = vunpack.c.1.s8 %v1018
        %v1663 = vunpack.c.2.s8 %v1015
        %v1664 = vunpack.c.2.s8 %v1016
        %v1665 = vunpack.c.2.s8 %v1017
        %v1666 = vunpack.c.2.s8 %v1018
        %v1667 = vunpack.c.3.s8 %v1015
        %v1668 = vunpack.c.3.s8 %v1016
        %v1669 = vunpack.c.3.s8 %v1017
        %v1670 = vunpack.c.3.s8 %v1018
        %v1671 = vunpack.c.0.s8 %v1019
        %v1672 = vunpack.c.0.s8 %v1020
        %v1673 = vunpack.c.0.s8 %v1021
        %v1674 = vunpack.c.0.s8 %v1022
        %v1675 = vunpack.c.1.s8 %v1019
        %v1676 = vunpack.c.1.s8 %v1020
        %v1677 = vunpack.c.1.s8 %v1021
        %v1678 = vunpack.c.1.s8 %v1022
        %v1679 = vunpack.c.2.s8 %v1019
        %v1680 = vunpack.c.2.s8 %v1020
        %v1681 = vunpack.c.2.s8 %v1021
        %v1682 = vunpack.c.2.s8 %v1022
        %v1683 = vunpack.c.3.s8 %v1019
        %v1684 = vunpack.c.3.s8 %v1020
        %v1685 = vunpack.c.3.s8 %v1021
        %v1686 = vunpack.c.3.s8 %v1022
        %v1687 = vunpack.c.0.s8 %v1023
        %v1688 = vunpack.c.0.s8 %v1024
        %v1689 = vunpack.c.0.s8 %v1025
        %v1690 = vunpack.c.0.s8 %v1026
        %v1691 = vunpack.c.1.s8 %v1023
        %v1692 = vunpack.c.1.s8 %v1024
        %v1693 = vunpack.c.1.s8 %v1025
        %v1694 = vunpack.c.1.s8 %v1026
        %v1695 = vunpack.c.2.s8 %v1023
        %v1696 = vunpack.c.2.s8 %v1024
        %v1697 = vunpack.c.2.s8 %v1025
        %v1698 = vunpack.c.2.s8 %v1026
        %v1699 = vunpack.c.3.s8 %v1023
        %v1700 = vunpack.c.3.s8 %v1024
        %v1701 = vunpack.c.3.s8 %v1025
        %v1702 = vunpack.c.3.s8 %v1026
        %v1703 = vunpack.c.0.s8 %v1027
        %v1704 = vunpack.c.0.s8 %v1028
        %v1705 = vunpack.c.0.s8 %v1029
        %v1706 = vunpack.c.0.s8 %v1030
        %v1707 = vunpack.c.1.s8 %v1027
        %v1708 = vunpack.c.1.s8 %v1028
        %v1709 = vunpack.c.1.s8 %v1029
        %v1710 = vunpack.c.1.s8 %v1030
        %v1711 = vunpack.c.2.s8 %v1027
        %v1712 = vunpack.c.2.s8 %v1028
        %v1713 = vunpack.c.2.s8 %v1029
        %v1714 = vunpack.c.2.s8 %v1030
        %v1715 = vunpack.c.3.s8 %v1027
        %v1716 = vunpack.c.3.s8 %v1028
        %v1717 = vunpack.c.3.s8 %v1029
        %v1718 = vunpack.c.3.s8 %v1030
        %v1719 = vunpack.c.0.s8 %v1031
        %v1720 = vunpack.c.0.s8 %v1032
        %v1721 = vunpack.c.0.s8 %v1033
        %v1722 = vunpack.c.0.s8 %v1034
        %v1723 = vunpack.c.1.s8 %v1031
        %v1724 = vunpack.c.1.s8 %v1032
        %v1725 = vunpack.c.1.s8 %v1033
        %v1726 = vunpack.c.1.s8 %v1034
        %v1727 = vunpack.c.2.s8 %v1031
        %v1728 = vunpack.c.2.s8 %v1032
        %v1729 = vunpack.c.2.s8 %v1033
        %v1730 = vunpack.c.2.s8 %v1034
        %v1731 = vunpack.c.3.s8 %v1031
        %v1732 = vunpack.c.3.s8 %v1032
        %v1733 = vunpack.c.3.s8 %v1033
        %v1734 = vunpack.c.3.s8 %v1034
        %v1735 = vunpack.c.0.s8 %v1035
        %v1736 = vunpack.c.0.s8 %v1036
        %v1737 = vunpack.c.0.s8 %v1037
        %v1738 = vunpack.c.0.s8 %v1038
        %v1739 = vunpack.c.1.s8 %v1035
        %v1740 = vunpack.c.1.s8 %v1036
        %v1741 = vunpack.c.1.s8 %v1037
        %v1742 = vunpack.c.1.s8 %v1038
        %v1743 = vunpack.c.2.s8 %v1035
        %v1744 = vunpack.c.2.s8 %v1036
        %v1745 = vunpack.c.2.s8 %v1037
        %v1746 = vunpack.c.2.s8 %v1038
        %v1747 = vunpack.c.3.s8 %v1035
        %v1748 = vunpack.c.3.s8 %v1036
        %v1749 = vunpack.c.3.s8 %v1037
        %v1750 = vunpack.c.3.s8 %v1038
        %v1751 = vunpack.c.0.s8 %v1039
        %v1752 = vunpack.c.0.s8 %v1040
        %v1753 = vunpack.c.0.s8 %v1041
        %v1754 = vunpack.c.0.s8 %v1042
        %v1755 = vunpack.c.1.s8 %v1039
        %v1756 = vunpack.c.1.s8 %v1040
        %v1757 = vunpack.c.1.s8 %v1041
        %v1758 = vunpack.c.1.s8 %v1042
        %v1759 = vunpack.c.2.s8 %v1039
        %v1760 = vunpack.c.2.s8 %v1040
        %v1761 = vunpack.c.2.s8 %v1041
        %v1762 = vunpack.c.2.s8 %v1042
        %v1763 = vunpack.c.3.s8 %v1039
        %v1764 = vunpack.c.3.s8 %v1040
        %v1765 = vunpack.c.3.s8 %v1041
        %v1766 = vunpack.c.3.s8 %v1042
        %v1767 = vunpack.c.0.s8 %v1043
        %v1768 = vunpack.c.0.s8 %v1044
        %v1769 = vunpack.c.0.s8 %v1045
        %v1770 = vunpack.c.0.s8 %v1046
        %v1771 = vunpack.c.1.s8 %v1043
        %v1772 = vunpack.c.1.s8 %v1044
        %v1773 = vunpack.c.1.s8 %v1045
        %v1774 = vunpack.c.1.s8 %v1046
        %v1775 = vunpack.c.2.s8 %v1043
        %v1776 = vunpack.c.2.s8 %v1044
        %v1777 = vunpack.c.2.s8 %v1045
        %v1778 = vunpack.c.2.s8 %v1046
        %v1779 = vunpack.c.3.s8 %v1043
        %v1780 = vunpack.c.3.s8 %v1044
        %v1781 = vunpack.c.3.s8 %v1045
        %v1782 = vunpack.c.3.s8 %v1046
        %v1783 = vunpack.c.0.s8 %v1047
        %v1784 = vunpack.c.0.s8 %v1048
        %v1785 = vunpack.c.0.s8 %v1049
        %v1786 = vunpack.c.0.s8 %v1050
        %v1787 = vunpack.c.1.s8 %v1047
        %v1788 = vunpack.c.1.s8 %v1048
        %v1789 = vunpack.c.1.s8 %v1049
        %v1790 = vunpack.c.1.s8 %v1050
        %v1791 = vunpack.c.2.s8 %v1047
        %v1792 = vunpack.c.2.s8 %v1048
        %v1793 = vunpack.c.2.s8 %v1049
        %v1794 = vunpack.c.2.s8 %v1050
        %v1795 = vunpack.c.3.s8 %v1047
        %v1796 = vunpack.c.3.s8 %v1048
        %v1797 = vunpack.c.3.s8 %v1049
        %v1798 = vunpack.c.3.s8 %v1050
        %v1799 = vunpack.c.0.s8 %v1051
        %v1800 = vunpack.c.0.s8 %v1052
        %v1801 = vunpack.c.0.s8 %v1053
        %v1802 = vunpack.c.0.s8 %v1054
        %v1803 = vunpack.c.1.s8 %v1051
        %v1804 = vunpack.c.1.s8 %v1052
        %v1805 = vunpack.c.1.s8 %v1053
        %v1806 = vunpack.c.1.s8 %v1054
        %v1807 = vunpack.c.2.s8 %v1051
        %v1808 = vunpack.c.2.s8 %v1052
        %v1809 = vunpack.c.2.s8 %v1053
        %v1810 = vunpack.c.2.s8 %v1054
        %v1811 = vunpack.c.3.s8 %v1051
        %v1812 = vunpack.c.3.s8 %v1052
        %v1813 = vunpack.c.3.s8 %v1053
        %v1814 = vunpack.c.3.s8 %v1054
        %v1815 = vunpack.c.0.s8 %v1055
        %v1816 = vunpack.c.0.s8 %v1056
        %v1817 = vunpack.c.0.s8 %v1057
        %v1818 = vunpack.c.0.s8 %v1058
        %v1819 = vunpack.c.1.s8 %v1055
        %v1820 = vunpack.c.1.s8 %v1056
        %v1821 = vunpack.c.1.s8 %v1057
        %v1822 = vunpack.c.1.s8 %v1058
        %v1823 = vunpack.c.2.s8 %v1055
        %v1824 = vunpack.c.2.s8 %v1056
        %v1825 = vunpack.c.2.s8 %v1057
        %v1826 = vunpack.c.2.s8 %v1058
        %v1827 = vunpack.c.3.s8 %v1055
        %v1828 = vunpack.c.3.s8 %v1056
        %v1829 = vunpack.c.3.s8 %v1057
        %v1830 = vunpack.c.3.s8 %v1058
        %v1831 = vunpack.c.0.s8 %v1059
        %v1832 = vunpack.c.0.s8 %v1060
        %v1833 = vunpack.c.0.s8 %v1061
        %v1834 = vunpack.c.0.s8 %v1062
        %v1835 = vunpack.c.1.s8 %v1059
        %v1836 = vunpack.c.1.s8 %v1060
        %v1837 = vunpack.c.1.s8 %v1061
        %v1838 = vunpack.c.1.s8 %v1062
        %v1839 = vunpack.c.2.s8 %v1059
        %v1840 = vunpack.c.2.s8 %v1060
        %v1841 = vunpack.c.2.s8 %v1061
        %v1842 = vunpack.c.2.s8 %v1062
        %v1843 = vunpack.c.3.s8 %v1059
        %v1844 = vunpack.c.3.s8 %v1060
        %v1845 = vunpack.c.3.s8 %v1061
        %v1846 = vunpack.c.3.s8 %v1062
        %v1847 = vunpack.c.0.s8 %v1063
        %v1848 = vunpack.c.0.s8 %v1064
        %v1849 = vunpack.c.0.s8 %v1065
        %v1850 = vunpack.c.0.s8 %v1066
        %v1851 = vunpack.c.1.s8 %v1063
        %v1852 = vunpack.c.1.s8 %v1064
        %v1853 = vunpack.c.1.s8 %v1065
        %v1854 = vunpack.c.1.s8 %v1066
        %v1855 = vunpack.c.2.s8 %v1063
        %v1856 = vunpack.c.2.s8 %v1064
        %v1857 = vunpack.c.2.s8 %v1065
        %v1858 = vunpack.c.2.s8 %v1066
        %v1859 = vunpack.c.3.s8 %v1063
        %v1860 = vunpack.c.3.s8 %v1064
        %v1861 = vunpack.c.3.s8 %v1065
        %v1862 = vunpack.c.3.s8 %v1066
        %v1863 = vunpack.c.0.s8 %v1067
        %v1864 = vunpack.c.0.s8 %v1068
        %v1865 = vunpack.c.0.s8 %v1069
        %v1866 = vunpack.c.0.s8 %v1070
        %v1867 = vunpack.c.1.s8 %v1067
        %v1868 = vunpack.c.1.s8 %v1068
        %v1869 = vunpack.c.1.s8 %v1069
        %v1870 = vunpack.c.1.s8 %v1070
        %v1871 = vunpack.c.2.s8 %v1067
        %v1872 = vunpack.c.2.s8 %v1068
        %v1873 = vunpack.c.2.s8 %v1069
        %v1874 = vunpack.c.2.s8 %v1070
        %v1875 = vunpack.c.3.s8 %v1067
        %v1876 = vunpack.c.3.s8 %v1068
        %v1877 = vunpack.c.3.s8 %v1069
        %v1878 = vunpack.c.3.s8 %v1070
        %v1879 = vunpack.c.0.s8 %v1071
        %v1880 = vunpack.c.0.s8 %v1072
        %v1881 = vunpack.c.0.s8 %v1073
        %v1882 = vunpack.c.0.s8 %v1074
        %v1883 = vunpack.c.1.s8 %v1071
        %v1884 = vunpack.c.1.s8 %v1072
        %v1885 = vunpack.c.1.s8 %v1073
        %v1886 = vunpack.c.1.s8 %v1074
        %v1887 = vunpack.c.2.s8 %v1071
        %v1888 = vunpack.c.2.s8 %v1072
        %v1889 = vunpack.c.2.s8 %v1073
        %v1890 = vunpack.c.2.s8 %v1074
        %v1891 = vunpack.c.3.s8 %v1071
        %v1892 = vunpack.c.3.s8 %v1072
        %v1893 = vunpack.c.3.s8 %v1073
        %v1894 = vunpack.c.3.s8 %v1074
        %v1895 = vunpack.c.0.s8 %v1075
        %v1896 = vunpack.c.0.s8 %v1076
        %v1897 = vunpack.c.0.s8 %v1077
        %v1898 = vunpack.c.0.s8 %v1078
        %v1899 = vunpack.c.1.s8 %v1075
        %v1900 = vunpack.c.1.s8 %v1076
        %v1901 = vunpack.c.1.s8 %v1077
        %v1902 = vunpack.c.1.s8 %v1078
        %v1903 = vunpack.c.2.s8 %v1075
        %v1904 = vunpack.c.2.s8 %v1076
        %v1905 = vunpack.c.2.s8 %v1077
        %v1906 = vunpack.c.2.s8 %v1078
        %v1907 = vunpack.c.3.s8 %v1075
        %v1908 = vunpack.c.3.s8 %v1076
        %v1909 = vunpack.c.3.s8 %v1077
        %v1910 = vunpack.c.3.s8 %v1078
        %v1911 = vunpack.c.0.s8 %v1079
        %v1912 = vunpack.c.0.s8 %v1080
        %v1913 = vunpack.c.0.s8 %v1081
        %v1914 = vunpack.c.0.s8 %v1082
        %v1915 = vunpack.c.1.s8 %v1079
        %v1916 = vunpack.c.1.s8 %v1080
        %v1917 = vunpack.c.1.s8 %v1081
        %v1918 = vunpack.c.1.s8 %v1082
        %v1919 = vunpack.c.2.s8 %v1079
        %v1920 = vunpack.c.2.s8 %v1080
        %v1921 = vunpack.c.2.s8 %v1081
        %v1922 = vunpack.c.2.s8 %v1082
        %v1923 = vunpack.c.3.s8 %v1079
        %v1924 = vunpack.c.3.s8 %v1080
        %v1925 = vunpack.c.3.s8 %v1081
        %v1926 = vunpack.c.3.s8 %v1082
        %v1927 = vunpack.c.0.s8 %v1083
        %v1928 = vunpack.c.0.s8 %v1084
        %v1929 = vunpack.c.0.s8 %v1085
        %v1930 = vunpack.c.0.s8 %v1086
        %v1931 = vunpack.c.1.s8 %v1083
        %v1932 = vunpack.c.1.s8 %v1084
        %v1933 = vunpack.c.1.s8 %v1085
        %v1934 = vunpack.c.1.s8 %v1086
        %v1935 = vunpack.c.2.s8 %v1083
        %v1936 = vunpack.c.2.s8 %v1084
        %v1937 = vunpack.c.2.s8 %v1085
        %v1938 = vunpack.c.2.s8 %v1086
        %v1939 = vunpack.c.3.s8 %v1083
        %v1940 = vunpack.c.3.s8 %v1084
        %v1941 = vunpack.c.3.s8 %v1085
        %v1942 = vunpack.c.3.s8 %v1086
        %v1943 = vunpack.c.0.s8 %v1087
        %v1944 = vunpack.c.0.s8 %v1088
        %v1945 = vunpack.c.0.s8 %v1089
        %v1946 = vunpack.c.0.s8 %v1090
        %v1947 = vunpack.c.1.s8 %v1087
        %v1948 = vunpack.c.1.s8 %v1088
        %v1949 = vunpack.c.1.s8 %v1089
        %v1950 = vunpack.c.1.s8 %v1090
        %v1951 = vunpack.c.2.s8 %v1087
        %v1952 = vunpack.c.2.s8 %v1088
        %v1953 = vunpack.c.2.s8 %v1089
        %v1954 = vunpack.c.2.s8 %v1090
        %v1955 = vunpack.c.3.s8 %v1087
        %v1956 = vunpack.c.3.s8 %v1088
        %v1957 = vunpack.c.3.s8 %v1089
        %v1958 = vunpack.c.3.s8 %v1090
        %v1959 = vunpack.c.0.s8 %v1091
        %v1960 = vunpack.c.0.s8 %v1092
        %v1961 = vunpack.c.0.s8 %v1093
        %v1962 = vunpack.c.0.s8 %v1094
        %v1963 = vunpack.c.1.s8 %v1091
        %v1964 = vunpack.c.1.s8 %v1092
        %v1965 = vunpack.c.1.s8 %v1093
        %v1966 = vunpack.c.1.s8 %v1094
        %v1967 = vunpack.c.2.s8 %v1091
        %v1968 = vunpack.c.2.s8 %v1092
        %v1969 = vunpack.c.2.s8 %v1093
        %v1970 = vunpack.c.2.s8 %v1094
        %v1971 = vunpack.c.3.s8 %v1091
        %v1972 = vunpack.c.3.s8 %v1092
        %v1973 = vunpack.c.3.s8 %v1093
        %v1974 = vunpack.c.3.s8 %v1094
        %v1975 = vunpack.c.0.s8 %v1095
        %v1976 = vunpack.c.0.s8 %v1096
        %v1977 = vunpack.c.0.s8 %v1097
        %v1978 = vunpack.c.0.s8 %v1098
        %v1979 = vunpack.c.1.s8 %v1095
        %v1980 = vunpack.c.1.s8 %v1096
        %v1981 = vunpack.c.1.s8 %v1097
        %v1982 = vunpack.c.1.s8 %v1098
        %v1983 = vunpack.c.2.s8 %v1095
        %v1984 = vunpack.c.2.s8 %v1096
        %v1985 = vunpack.c.2.s8 %v1097
        %v1986 = vunpack.c.2.s8 %v1098
        %v1987 = vunpack.c.3.s8 %v1095
        %v1988 = vunpack.c.3.s8 %v1096
        %v1989 = vunpack.c.3.s8 %v1097
        %v1990 = vunpack.c.3.s8 %v1098
        %v1991 = vunpack.c.0.s8 %v1099
        %v1992 = vunpack.c.0.s8 %v1100
        %v1993 = vunpack.c.0.s8 %v1101
        %v1994 = vunpack.c.0.s8 %v1102
        %v1995 = vunpack.c.1.s8 %v1099
        %v1996 = vunpack.c.1.s8 %v1100
        %v1997 = vunpack.c.1.s8 %v1101
        %v1998 = vunpack.c.1.s8 %v1102
        %v1999 = vunpack.c.2.s8 %v1099
        %v2000 = vunpack.c.2.s8 %v1100
        %v2001 = vunpack.c.2.s8 %v1101
        %v2002 = vunpack.c.2.s8 %v1102
        %v2003 = vunpack.c.3.s8 %v1099
        %v2004 = vunpack.c.3.s8 %v1100
        %v2005 = vunpack.c.3.s8 %v1101
        %v2006 = vunpack.c.3.s8 %v1102
        %v2007 = vunpack.c.0.s8 %v1103
        %v2008 = vunpack.c.0.s8 %v1104
        %v2009 = vunpack.c.0.s8 %v1105
        %v2010 = vunpack.c.0.s8 %v1106
        %v2011 = vunpack.c.1.s8 %v1103
        %v2012 = vunpack.c.1.s8 %v1104
        %v2013 = vunpack.c.1.s8 %v1105
        %v2014 = vunpack.c.1.s8 %v1106
        %v2015 = vunpack.c.2.s8 %v1103
        %v2016 = vunpack.c.2.s8 %v1104
        %v2017 = vunpack.c.2.s8 %v1105
        %v2018 = vunpack.c.2.s8 %v1106
        %v2019 = vunpack.c.3.s8 %v1103
        %v2020 = vunpack.c.3.s8 %v1104
        %v2021 = vunpack.c.3.s8 %v1105
        %v2022 = vunpack.c.3.s8 %v1106
        %v2023 = vunpack.c.0.s8 %v1107
        %v2024 = vunpack.c.0.s8 %v1108
        %v2025 = vunpack.c.0.s8 %v1109
        %v2026 = vunpack.c.0.s8 %v1110
        %v2027 = vunpack.c.1.s8 %v1107
        %v2028 = vunpack.c.1.s8 %v1108
        %v2029 = vunpack.c.1.s8 %v1109
        %v2030 = vunpack.c.1.s8 %v1110
        %v2031 = vunpack.c.2.s8 %v1107
        %v2032 = vunpack.c.2.s8 %v1108
        %v2033 = vunpack.c.2.s8 %v1109
        %v2034 = vunpack.c.2.s8 %v1110
        %v2035 = vunpack.c.3.s8 %v1107
        %v2036 = vunpack.c.3.s8 %v1108
        %v2037 = vunpack.c.3.s8 %v1109
        %v2038 = vunpack.c.3.s8 %v1110
        %v2039 = vunpack.c.0.s8 %v1111
        %v2040 = vunpack.c.0.s8 %v1112
        %v2041 = vunpack.c.0.s8 %v1113
        %v2042 = vunpack.c.0.s8 %v1114
        %v2043 = vunpack.c.1.s8 %v1111
        %v2044 = vunpack.c.1.s8 %v1112
        %v2045 = vunpack.c.1.s8 %v1113
        %v2046 = vunpack.c.1.s8 %v1114
        %v2047 = vunpack.c.2.s8 %v1111
        %v2048 = vunpack.c.2.s8 %v1112
        %v2049 = vunpack.c.2.s8 %v1113
        %v2050 = vunpack.c.2.s8 %v1114
        %v2051 = vunpack.c.3.s8 %v1111
        %v2052 = vunpack.c.3.s8 %v1112
        %v2053 = vunpack.c.3.s8 %v1113
        %v2054 = vunpack.c.3.s8 %v1114
        %v2055 = vunpack.c.0.s8 %v1115
        %v2056 = vunpack.c.0.s8 %v1116
        %v2057 = vunpack.c.0.s8 %v1117
        %v2058 = vunpack.c.0.s8 %v1118
        %v2059 = vunpack.c.1.s8 %v1115
        %v2060 = vunpack.c.1.s8 %v1116
        %v2061 = vunpack.c.1.s8 %v1117
        %v2062 = vunpack.c.1.s8 %v1118
        %v2063 = vunpack.c.2.s8 %v1115
        %v2064 = vunpack.c.2.s8 %v1116
        %v2065 = vunpack.c.2.s8 %v1117
        %v2066 = vunpack.c.2.s8 %v1118
        %v2067 = vunpack.c.3.s8 %v1115
        %v2068 = vunpack.c.3.s8 %v1116
        %v2069 = vunpack.c.3.s8 %v1117
        %v2070 = vunpack.c.3.s8 %v1118
        %v2071 = vunpack.c.0.s8 %v1119
        %v2072 = vunpack.c.0.s8 %v1120
        %v2073 = vunpack.c.0.s8 %v1121
        %v2074 = vunpack.c.0.s8 %v1122
        %v2075 = vunpack.c.1.s8 %v1119
        %v2076 = vunpack.c.1.s8 %v1120
        %v2077 = vunpack.c.1.s8 %v1121
        %v2078 = vunpack.c.1.s8 %v1122
        %v2079 = vunpack.c.2.s8 %v1119
        %v2080 = vunpack.c.2.s8 %v1120
        %v2081 = vunpack.c.2.s8 %v1121
        %v2082 = vunpack.c.2.s8 %v1122
        %v2083 = vunpack.c.3.s8 %v1119
        %v2084 = vunpack.c.3.s8 %v1120
        %v2085 = vunpack.c.3.s8 %v1121
        %v2086 = vunpack.c.3.s8 %v1122
        %v2087 = vunpack.c.0.s8 %v1123
        %v2088 = vunpack.c.0.s8 %v1124
        %v2089 = vunpack.c.0.s8 %v1125
        %v2090 = vunpack.c.0.s8 %v1126
        %v2091 = vunpack.c.1.s8 %v1123
        %v2092 = vunpack.c.1.s8 %v1124
        %v2093 = vunpack.c.1.s8 %v1125
        %v2094 = vunpack.c.1.s8 %v1126
        %v2095 = vunpack.c.2.s8 %v1123
        %v2096 = vunpack.c.2.s8 %v1124
        %v2097 = vunpack.c.2.s8 %v1125
        %v2098 = vunpack.c.2.s8 %v1126
        %v2099 = vunpack.c.3.s8 %v1123
        %v2100 = vunpack.c.3.s8 %v1124
        %v2101 = vunpack.c.3.s8 %v1125
        %v2102 = vunpack.c.3.s8 %v1126
        %v2103 = vunpack.c.0.s8 %v1127
        %v2104 = vunpack.c.0.s8 %v1128
        %v2105 = vunpack.c.0.s8 %v1129
        %v2106 = vunpack.c.0.s8 %v1130
        %v2107 = vunpack.c.1.s8 %v1127
        %v2108 = vunpack.c.1.s8 %v1128
        %v2109 = vunpack.c.1.s8 %v1129
        %v2110 = vunpack.c.1.s8 %v1130
        %v2111 = vunpack.c.2.s8 %v1127
        %v2112 = vunpack.c.2.s8 %v1128
        %v2113 = vunpack.c.2.s8 %v1129
        %v2114 = vunpack.c.2.s8 %v1130
        %v2115 = vunpack.c.3.s8 %v1127
        %v2116 = vunpack.c.3.s8 %v1128
        %v2117 = vunpack.c.3.s8 %v1129
        %v2118 = vunpack.c.3.s8 %v1130
        %v2119 = vunpack.c.0.s8 %v1131
        %v2120 = vunpack.c.0.s8 %v1132
        %v2121 = vunpack.c.0.s8 %v1133
        %v2122 = vunpack.c.0.s8 %v1134
        %v2123 = vunpack.c.1.s8 %v1131
        %v2124 = vunpack.c.1.s8 %v1132
        %v2125 = vunpack.c.1.s8 %v1133
        %v2126 = vunpack.c.1.s8 %v1134
        %v2127 = vunpack.c.2.s8 %v1131
        %v2128 = vunpack.c.2.s8 %v1132
        %v2129 = vunpack.c.2.s8 %v1133
        %v2130 = vunpack.c.2.s8 %v1134
        %v2131 = vunpack.c.3.s8 %v1131
        %v2132 = vunpack.c.3.s8 %v1132
        %v2133 = vunpack.c.3.s8 %v1133
        %v2134 = vunpack.c.3.s8 %v1134
        %v2135 = vunpack.c.0.s8 %v1135
        %v2136 = vunpack.c.0.s8 %v1136
        %v2137 = vunpack.c.0.s8 %v1137
        %v2138 = vunpack.c.0.s8 %v1138
        %v2139 = vunpack.c.1.s8 %v1135
        %v2140 = vunpack.c.1.s8 %v1136
        %v2141 = vunpack.c.1.s8 %v1137
        %v2142 = vunpack.c.1.s8 %v1138
        %v2143 = vunpack.c.2.s8 %v1135
        %v2144 = vunpack.c.2.s8 %v1136
        %v2145 = vunpack.c.2.s8 %v1137
        %v2146 = vunpack.c.2.s8 %v1138
        %v2147 = vunpack.c.3.s8 %v1135
        %v2148 = vunpack.c.3.s8 %v1136
        %v2149 = vunpack.c.3.s8 %v1137
        %v2150 = vunpack.c.3.s8 %v1138
        %v2151 = vunpack.c.0.s8 %v1139
        %v2152 = vunpack.c.0.s8 %v1140
        %v2153 = vunpack.c.0.s8 %v1141
        %v2154 = vunpack.c.0.s8 %v1142
        %v2155 = vunpack.c.1.s8 %v1139
        %v2156 = vunpack.c.1.s8 %v1140
        %v2157 = vunpack.c.1.s8 %v1141
        %v2158 = vunpack.c.1.s8 %v1142
        %v2159 = vunpack.c.2.s8 %v1139
        %v2160 = vunpack.c.2.s8 %v1140
        %v2161 = vunpack.c.2.s8 %v1141
        %v2162 = vunpack.c.2.s8 %v1142
        %v2163 = vunpack.c.3.s8 %v1139
        %v2164 = vunpack.c.3.s8 %v1140
        %v2165 = vunpack.c.3.s8 %v1141
        %v2166 = vunpack.c.3.s8 %v1142
        %v2167 = vcvt.s32.f32 %v1143
        %v2168 = vcvt.s32.f32 %v1144
        %v2169 = vcvt.s32.f32 %v1145
        %v2170 = vcvt.s32.f32 %v1146
        %v2171 = vcvt.s32.f32 %v1147
        %v2172 = vcvt.s32.f32 %v1148
        %v2173 = vcvt.s32.f32 %v1149
        %v2174 = vcvt.s32.f32 %v1150
        %v2175 = vcvt.s32.f32 %v1151
        %v2176 = vcvt.s32.f32 %v1152
        %v2177 = vcvt.s32.f32 %v1153
        %v2178 = vcvt.s32.f32 %v1154
        %v2179 = vcvt.s32.f32 %v1155
        %v2180 = vcvt.s32.f32 %v1156
        %v2181 = vcvt.s32.f32 %v1157
        %v2182 = vcvt.s32.f32 %v1158
        %v2183 = vcvt.s32.f32 %v1159
        %v2184 = vcvt.s32.f32 %v1160
        %v2185 = vcvt.s32.f32 %v1161
        %v2186 = vcvt.s32.f32 %v1162
        %v2187 = vcvt.s32.f32 %v1163
        %v2188 = vcvt.s32.f32 %v1164
        %v2189 = vcvt.s32.f32 %v1165
        %v2190 = vcvt.s32.f32 %v1166
        %v2191 = vcvt.s32.f32 %v1167
        %v2192 = vcvt.s32.f32 %v1168
        %v2193 = vcvt.s32.f32 %v1169
        %v2194 = vcvt.s32.f32 %v1170
        %v2195 = vcvt.s32.f32 %v1171
        %v2196 = vcvt.s32.f32 %v1172
        %v2197 = vcvt.s32.f32 %v1173
        %v2198 = vcvt.s32.f32 %v1174
        %v2199 = vcvt.s32.f32 %v1175
        %v2200 = vcvt.s32.f32 %v1176
        %v2201 = vcvt.s32.f32 %v1177
        %v2202 = vcvt.s32.f32 %v1178
        %v2203 = vcvt.s32.f32 %v1179
        %v2204 = vcvt.s32.f32 %v1180
        %v2205 = vcvt.s32.f32 %v1181
        %v2206 = vcvt.s32.f32 %v1182
        %v2207 = vcvt.s32.f32 %v1183
        %v2208 = vcvt.s32.f32 %v1184
        %v2209 = vcvt.s32.f32 %v1185
        %v2210 = vcvt.s32.f32 %v1186
        %v2211 = vcvt.s32.f32 %v1187
        %v2212 = vcvt.s32.f32 %v1188
        %v2213 = vcvt.s32.f32 %v1189
        %v2214 = vcvt.s32.f32 %v1190
        %v2215 = vcvt.s32.f32 %v1191
        %v2216 = vcvt.s32.f32 %v1192
        %v2217 = vcvt.s32.f32 %v1193
        %v2218 = vcvt.s32.f32 %v1194
        %v2219 = vcvt.s32.f32 %v1195
        %v2220 = vcvt.s32.f32 %v1196
        %v2221 = vcvt.s32.f32 %v1197
        %v2222 = vcvt.s32.f32 %v1198
        %v2223 = vcvt.s32.f32 %v1199
        %v2224 = vcvt.s32.f32 %v1200
        %v2225 = vcvt.s32.f32 %v1201
        %v2226 = vcvt.s32.f32 %v1202
        %v2227 = vcvt.s32.f32 %v1203
        %v2228 = vcvt.s32.f32 %v1204
        %v2229 = vcvt.s32.f32 %v1205
        %v2230 = vcvt.s32.f32 %v1206
        %v2231 = vcvt.s32.f32 %v1207
        %v2232 = vcvt.s32.f32 %v1208
        %v2233 = vcvt.s32.f32 %v1209
        %v2234 = vcvt.s32.f32 %v1210
        %v2235 = vcvt.s32.f32 %v1211
        %v2236 = vcvt.s32.f32 %v1212
        %v2237 = vcvt.s32.f32 %v1213
        %v2238 = vcvt.s32.f32 %v1214
        %v2239 = vcvt.s32.f32 %v1215
        %v2240 = vcvt.s32.f32 %v1216
        %v2241 = vcvt.s32.f32 %v1217
        %v2242 = vcvt.s32.f32 %v1218
        %v2243 = vcvt.s32.f32 %v1219
        %v2244 = vcvt.s32.f32 %v1220
        %v2245 = vcvt.s32.f32 %v1221
        %v2246 = vcvt.s32.f32 %v1222
        %v2247 = vcvt.s32.f32 %v1223
        %v2248 = vcvt.s32.f32 %v1224
        %v2249 = vcvt.s32.f32 %v1225
        %v2250 = vcvt.s32.f32 %v1226
        %v2251 = vcvt.s32.f32 %v1227
        %v2252 = vcvt.s32.f32 %v1228
        %v2253 = vcvt.s32.f32 %v1229
        %v2254 = vcvt.s32.f32 %v1230
        %v2255 = vcvt.s32.f32 %v1231
        %v2256 = vcvt.s32.f32 %v1232
        %v2257 = vcvt.s32.f32 %v1233
        %v2258 = vcvt.s32.f32 %v1234
        %v2259 = vcvt.s32.f32 %v1235
        %v2260 = vcvt.s32.f32 %v1236
        %v2261 = vcvt.s32.f32 %v1237
        %v2262 = vcvt.s32.f32 %v1238
        %v2263 = vcvt.s32.f32 %v1239
        %v2264 = vcvt.s32.f32 %v1240
        %v2265 = vcvt.s32.f32 %v1241
        %v2266 = vcvt.s32.f32 %v1242
        %v2267 = vcvt.s32.f32 %v1243
        %v2268 = vcvt.s32.f32 %v1244
        %v2269 = vcvt.s32.f32 %v1245
        %v2270 = vcvt.s32.f32 %v1246
        %v2271 = vcvt.s32.f32 %v1247
        %v2272 = vcvt.s32.f32 %v1248
        %v2273 = vcvt.s32.f32 %v1249
        %v2274 = vcvt.s32.f32 %v1250
        %v2275 = vcvt.s32.f32 %v1251
        %v2276 = vcvt.s32.f32 %v1252
        %v2277 = vcvt.s32.f32 %v1253
        %v2278 = vcvt.s32.f32 %v1254
        %v2279 = vcvt.s32.f32 %v1255
        %v2280 = vcvt.s32.f32 %v1256
        %v2281 = vcvt.s32.f32 %v1257
        %v2282 = vcvt.s32.f32 %v1258
        %v2283 = vcvt.s32.f32 %v1259
        %v2284 = vcvt.s32.f32 %v1260
        %v2285 = vcvt.s32.f32 %v1261
        %v2286 = vcvt.s32.f32 %v1262
        %v2287 = vcvt.s32.f32 %v1263
        %v2288 = vcvt.s32.f32 %v1264
        %v2289 = vcvt.s32.f32 %v1265
        %v2290 = vcvt.s32.f32 %v1266
        %v2291 = vcvt.s32.f32 %v1267
        %v2292 = vcvt.s32.f32 %v1268
        %v2293 = vcvt.s32.f32 %v1269
        %v2294 = vcvt.s32.f32 %v1270
        %v2295 = vcvt.s32.f32 %v1271
        %v2296 = vcvt.s32.f32 %v1272
        %v2297 = vcvt.s32.f32 %v1273
        %v2298 = vcvt.s32.f32 %v1274
        %v2299 = vcvt.s32.f32 %v1275
        %v2300 = vcvt.s32.f32 %v1276
        %v2301 = vcvt.s32.f32 %v1277
        %v2302 = vcvt.s32.f32 %v1278
        %v2303 = vcvt.s32.f32 %v1279
        %v2304 = vcvt.s32.f32 %v1280
        %v2305 = vcvt.s32.f32 %v1281
        %v2306 = vcvt.s32.f32 %v1282
        %v2307 = vcvt.s32.f32 %v1283
        %v2308 = vcvt.s32.f32 %v1284
        %v2309 = vcvt.s32.f32 %v1285
        %v2310 = vcvt.s32.f32 %v1286
        %v2311 = vcvt.s32.f32 %v1287
        %v2312 = vcvt.s32.f32 %v1288
        %v2313 = vcvt.s32.f32 %v1289
        %v2314 = vcvt.s32.f32 %v1290
        %v2315 = vcvt.s32.f32 %v1291
        %v2316 = vcvt.s32.f32 %v1292
        %v2317 = vcvt.s32.f32 %v1293
        %v2318 = vcvt.s32.f32 %v1294
        %v2319 = vcvt.s32.f32 %v1295
        %v2320 = vcvt.s32.f32 %v1296
        %v2321 = vcvt.s32.f32 %v1297
        %v2322 = vcvt.s32.f32 %v1298
        %v2323 = vcvt.s32.f32 %v1299
        %v2324 = vcvt.s32.f32 %v1300
        %v2325 = vcvt.s32.f32 %v1301
        %v2326 = vcvt.s32.f32 %v1302
        %v2327 = vcvt.s32.f32 %v1303
        %v2328 = vcvt.s32.f32 %v1304
        %v2329 = vcvt.s32.f32 %v1305
        %v2330 = vcvt.s32.f32 %v1306
        %v2331 = vcvt.s32.f32 %v1307
        %v2332 = vcvt.s32.f32 %v1308
        %v2333 = vcvt.s32.f32 %v1309
        %v2334 = vcvt.s32.f32 %v1310
        %v2335 = vcvt.s32.f32 %v1311
        %v2336 = vcvt.s32.f32 %v1312
        %v2337 = vcvt.s32.f32 %v1313
        %v2338 = vcvt.s32.f32 %v1314
        %v2339 = vcvt.s32.f32 %v1315
        %v2340 = vcvt.s32.f32 %v1316
        %v2341 = vcvt.s32.f32 %v1317
        %v2342 = vcvt.s32.f32 %v1318
        %v2343 = vcvt.s32.f32 %v1319
        %v2344 = vcvt.s32.f32 %v1320
        %v2345 = vcvt.s32.f32 %v1321
        %v2346 = vcvt.s32.f32 %v1322
        %v2347 = vcvt.s32.f32 %v1323
        %v2348 = vcvt.s32.f32 %v1324
        %v2349 = vcvt.s32.f32 %v1325
        %v2350 = vcvt.s32.f32 %v1326
        %v2351 = vcvt.s32.f32 %v1327
        %v2352 = vcvt.s32.f32 %v1328
        %v2353 = vcvt.s32.f32 %v1329
        %v2354 = vcvt.s32.f32 %v1330
        %v2355 = vcvt.s32.f32 %v1331
        %v2356 = vcvt.s32.f32 %v1332
        %v2357 = vcvt.s32.f32 %v1333
        %v2358 = vcvt.s32.f32 %v1334
        %v2359 = vcvt.s32.f32 %v1335
        %v2360 = vcvt.s32.f32 %v1336
        %v2361 = vcvt.s32.f32 %v1337
        %v2362 = vcvt.s32.f32 %v1338
        %v2363 = vcvt.s32.f32 %v1339
        %v2364 = vcvt.s32.f32 %v1340
        %v2365 = vcvt.s32.f32 %v1341
        %v2366 = vcvt.s32.f32 %v1342
        %v2367 = vcvt.s32.f32 %v1343
        %v2368 = vcvt.s32.f32 %v1344
        %v2369 = vcvt.s32.f32 %v1345
        %v2370 = vcvt.s32.f32 %v1346
        %v2371 = vcvt.s32.f32 %v1347
        %v2372 = vcvt.s32.f32 %v1348
        %v2373 = vcvt.s32.f32 %v1349
        %v2374 = vcvt.s32.f32 %v1350
        %v2375 = vcvt.s32.f32 %v1351
        %v2376 = vcvt.s32.f32 %v1352
        %v2377 = vcvt.s32.f32 %v1353
        %v2378 = vcvt.s32.f32 %v1354
        %v2379 = vcvt.s32.f32 %v1355
        %v2380 = vcvt.s32.f32 %v1356
        %v2381 = vcvt.s32.f32 %v1357
        %v2382 = vcvt.s32.f32 %v1358
        %v2383 = vcvt.s32.f32 %v1359
        %v2384 = vcvt.s32.f32 %v1360
        %v2385 = vcvt.s32.f32 %v1361
        %v2386 = vcvt.s32.f32 %v1362
        %v2387 = vcvt.s32.f32 %v1363
        %v2388 = vcvt.s32.f32 %v1364
        %v2389 = vcvt.s32.f32 %v1365
        %v2390 = vcvt.s32.f32 %v1366
        %v2391 = vcvt.s32.f32 %v1367
        %v2392 = vcvt.s32.f32 %v1368
        %v2393 = vcvt.s32.f32 %v1369
        %v2394 = vcvt.s32.f32 %v1370
        %v2395 = vcvt.s32.f32 %v1371
        %v2396 = vcvt.s32.f32 %v1372
        %v2397 = vcvt.s32.f32 %v1373
        %v2398 = vcvt.s32.f32 %v1374
        %v2399 = vcvt.s32.f32 %v1375
        %v2400 = vcvt.s32.f32 %v1376
        %v2401 = vcvt.s32.f32 %v1377
        %v2402 = vcvt.s32.f32 %v1378
        %v2403 = vcvt.s32.f32 %v1379
        %v2404 = vcvt.s32.f32 %v1380
        %v2405 = vcvt.s32.f32 %v1381
        %v2406 = vcvt.s32.f32 %v1382
        %v2407 = vcvt.s32.f32 %v1383
        %v2408 = vcvt.s32.f32 %v1384
        %v2409 = vcvt.s32.f32 %v1385
        %v2410 = vcvt.s32.f32 %v1386
        %v2411 = vcvt.s32.f32 %v1387
        %v2412 = vcvt.s32.f32 %v1388
        %v2413 = vcvt.s32.f32 %v1389
        %v2414 = vcvt.s32.f32 %v1390
        %v2415 = vcvt.s32.f32 %v1391
        %v2416 = vcvt.s32.f32 %v1392
        %v2417 = vcvt.s32.f32 %v1393
        %v2418 = vcvt.s32.f32 %v1394
        %v2419 = vcvt.s32.f32 %v1395
        %v2420 = vcvt.s32.f32 %v1396
        %v2421 = vcvt.s32.f32 %v1397
        %v2422 = vcvt.s32.f32 %v1398
        %v2423 = vcvt.s32.f32 %v1399
        %v2424 = vcvt.s32.f32 %v1400
        %v2425 = vcvt.s32.f32 %v1401
        %v2426 = vcvt.s32.f32 %v1402
        %v2427 = vcvt.s32.f32 %v1403
        %v2428 = vcvt.s32.f32 %v1404
        %v2429 = vcvt.s32.f32 %v1405
        %v2430 = vcvt.s32.f32 %v1406
        %v2431 = vcvt.s32.f32 %v1407
        %v2432 = vcvt.s32.f32 %v1408
        %v2433 = vcvt.s32.f32 %v1409
        %v2434 = vcvt.s32.f32 %v1410
        %v2435 = vcvt.s32.f32 %v1411
        %v2436 = vcvt.s32.f32 %v1412
        %v2437 = vcvt.s32.f32 %v1413
        %v2438 = vcvt.s32.f32 %v1414
        %v2439 = vcvt.s32.f32 %v1415
        %v2440 = vcvt.s32.f32 %v1416
        %v2441 = vcvt.s32.f32 %v1417
        %v2442 = vcvt.s32.f32 %v1418
        %v2443 = vcvt.s32.f32 %v1419
        %v2444 = vcvt.s32.f32 %v1420
        %v2445 = vcvt.s32.f32 %v1421
        %v2446 = vcvt.s32.f32 %v1422
        %v2447 = vcvt.s32.f32 %v1423
        %v2448 = vcvt.s32.f32 %v1424
        %v2449 = vcvt.s32.f32 %v1425
        %v2450 = vcvt.s32.f32 %v1426
        %v2451 = vcvt.s32.f32 %v1427
        %v2452 = vcvt.s32.f32 %v1428
        %v2453 = vcvt.s32.f32 %v1429
        %v2454 = vcvt.s32.f32 %v1430
        %v2455 = vcvt.s32.f32 %v1431
        %v2456 = vcvt.s32.f32 %v1432
        %v2457 = vcvt.s32.f32 %v1433
        %v2458 = vcvt.s32.f32 %v1434
        %v2459 = vcvt.s32.f32 %v1435
        %v2460 = vcvt.s32.f32 %v1436
        %v2461 = vcvt.s32.f32 %v1437
        %v2462 = vcvt.s32.f32 %v1438
        %v2463 = vcvt.s32.f32 %v1439
        %v2464 = vcvt.s32.f32 %v1440
        %v2465 = vcvt.s32.f32 %v1441
        %v2466 = vcvt.s32.f32 %v1442
        %v2467 = vcvt.s32.f32 %v1443
        %v2468 = vcvt.s32.f32 %v1444
        %v2469 = vcvt.s32.f32 %v1445
        %v2470 = vcvt.s32.f32 %v1446
        %v2471 = vcvt.s32.f32 %v1447
        %v2472 = vcvt.s32.f32 %v1448
        %v2473 = vcvt.s32.f32 %v1449
        %v2474 = vcvt.s32.f32 %v1450
        %v2475 = vcvt.s32.f32 %v1451
        %v2476 = vcvt.s32.f32 %v1452
        %v2477 = vcvt.s32.f32 %v1453
        %v2478 = vcvt.s32.f32 %v1454
        %v2479 = vcvt.s32.f32 %v1455
        %v2480 = vcvt.s32.f32 %v1456
        %v2481 = vcvt.s32.f32 %v1457
        %v2482 = vcvt.s32.f32 %v1458
        %v2483 = vcvt.s32.f32 %v1459
        %v2484 = vcvt.s32.f32 %v1460
        %v2485 = vcvt.s32.f32 %v1461
        %v2486 = vcvt.s32.f32 %v1462
        %v2487 = vcvt.s32.f32 %v1463
        %v2488 = vcvt.s32.f32 %v1464
        %v2489 = vcvt.s32.f32 %v1465
        %v2490 = vcvt.s32.f32 %v1466
        %v2491 = vcvt.s32.f32 %v1467
        %v2492 = vcvt.s32.f32 %v1468
        %v2493 = vcvt.s32.f32 %v1469
        %v2494 = vcvt.s32.f32 %v1470
        %v2495 = vcvt.s32.f32 %v1471
        %v2496 = vcvt.s32.f32 %v1472
        %v2497 = vcvt.s32.f32 %v1473
        %v2498 = vcvt.s32.f32 %v1474
        %v2499 = vcvt.s32.f32 %v1475
        %v2500 = vcvt.s32.f32 %v1476
        %v2501 = vcvt.s32.f32 %v1477
        %v2502 = vcvt.s32.f32 %v1478
        %v2503 = vcvt.s32.f32 %v1479
        %v2504 = vcvt.s32.f32 %v1480
        %v2505 = vcvt.s32.f32 %v1481
        %v2506 = vcvt.s32.f32 %v1482
        %v2507 = vcvt.s32.f32 %v1483
        %v2508 = vcvt.s32.f32 %v1484
        %v2509 = vcvt.s32.f32 %v1485
        %v2510 = vcvt.s32.f32 %v1486
        %v2511 = vcvt.s32.f32 %v1487
        %v2512 = vcvt.s32.f32 %v1488
        %v2513 = vcvt.s32.f32 %v1489
        %v2514 = vcvt.s32.f32 %v1490
        %v2515 = vcvt.s32.f32 %v1491
        %v2516 = vcvt.s32.f32 %v1492
        %v2517 = vcvt.s32.f32 %v1493
        %v2518 = vcvt.s32.f32 %v1494
        %v2519 = vcvt.s32.f32 %v1495
        %v2520 = vcvt.s32.f32 %v1496
        %v2521 = vcvt.s32.f32 %v1497
        %v2522 = vcvt.s32.f32 %v1498
        %v2523 = vcvt.s32.f32 %v1499
        %v2524 = vcvt.s32.f32 %v1500
        %v2525 = vcvt.s32.f32 %v1501
        %v2526 = vcvt.s32.f32 %v1502
        %v2527 = vcvt.s32.f32 %v1503
        %v2528 = vcvt.s32.f32 %v1504
        %v2529 = vcvt.s32.f32 %v1505
        %v2530 = vcvt.s32.f32 %v1506
        %v2531 = vcvt.s32.f32 %v1507
        %v2532 = vcvt.s32.f32 %v1508
        %v2533 = vcvt.s32.f32 %v1509
        %v2534 = vcvt.s32.f32 %v1510
        %v2535 = vcvt.s32.f32 %v1511
        %v2536 = vcvt.s32.f32 %v1512
        %v2537 = vcvt.s32.f32 %v1513
        %v2538 = vcvt.s32.f32 %v1514
        %v2539 = vcvt.s32.f32 %v1515
        %v2540 = vcvt.s32.f32 %v1516
        %v2541 = vcvt.s32.f32 %v1517
        %v2542 = vcvt.s32.f32 %v1518
        %v2543 = vcvt.s32.f32 %v1519
        %v2544 = vcvt.s32.f32 %v1520
        %v2545 = vcvt.s32.f32 %v1521
        %v2546 = vcvt.s32.f32 %v1522
        %v2547 = vcvt.s32.f32 %v1523
        %v2548 = vcvt.s32.f32 %v1524
        %v2549 = vcvt.s32.f32 %v1525
        %v2550 = vcvt.s32.f32 %v1526
        %v2551 = vcvt.s32.f32 %v1527
        %v2552 = vcvt.s32.f32 %v1528
        %v2553 = vcvt.s32.f32 %v1529
        %v2554 = vcvt.s32.f32 %v1530
        %v2555 = vcvt.s32.f32 %v1531
        %v2556 = vcvt.s32.f32 %v1532
        %v2557 = vcvt.s32.f32 %v1533
        %v2558 = vcvt.s32.f32 %v1534
        %v2559 = vcvt.s32.f32 %v1535
        %v2560 = vcvt.s32.f32 %v1536
        %v2561 = vcvt.s32.f32 %v1537
        %v2562 = vcvt.s32.f32 %v1538
        %v2563 = vcvt.s32.f32 %v1539
        %v2564 = vcvt.s32.f32 %v1540
        %v2565 = vcvt.s32.f32 %v1541
        %v2566 = vcvt.s32.f32 %v1542
        %v2567 = vcvt.s32.f32 %v1543
        %v2568 = vcvt.s32.f32 %v1544
        %v2569 = vcvt.s32.f32 %v1545
        %v2570 = vcvt.s32.f32 %v1546
        %v2571 = vcvt.s32.f32 %v1547
        %v2572 = vcvt.s32.f32 %v1548
        %v2573 = vcvt.s32.f32 %v1549
        %v2574 = vcvt.s32.f32 %v1550
        %v2575 = vcvt.s32.f32 %v1551
        %v2576 = vcvt.s32.f32 %v1552
        %v2577 = vcvt.s32.f32 %v1553
        %v2578 = vcvt.s32.f32 %v1554
        %v2579 = vcvt.s32.f32 %v1555
        %v2580 = vcvt.s32.f32 %v1556
        %v2581 = vcvt.s32.f32 %v1557
        %v2582 = vcvt.s32.f32 %v1558
        %v2583 = vcvt.s32.f32 %v1559
        %v2584 = vcvt.s32.f32 %v1560
        %v2585 = vcvt.s32.f32 %v1561
        %v2586 = vcvt.s32.f32 %v1562
        %v2587 = vcvt.s32.f32 %v1563
        %v2588 = vcvt.s32.f32 %v1564
        %v2589 = vcvt.s32.f32 %v1565
        %v2590 = vcvt.s32.f32 %v1566
        %v2591 = vcvt.s32.f32 %v1567
        %v2592 = vcvt.s32.f32 %v1568
        %v2593 = vcvt.s32.f32 %v1569
        %v2594 = vcvt.s32.f32 %v1570
        %v2595 = vcvt.s32.f32 %v1571
        %v2596 = vcvt.s32.f32 %v1572
        %v2597 = vcvt.s32.f32 %v1573
        %v2598 = vcvt.s32.f32 %v1574
        %v2599 = vcvt.s32.f32 %v1575
        %v2600 = vcvt.s32.f32 %v1576
        %v2601 = vcvt.s32.f32 %v1577
        %v2602 = vcvt.s32.f32 %v1578
        %v2603 = vcvt.s32.f32 %v1579
        %v2604 = vcvt.s32.f32 %v1580
        %v2605 = vcvt.s32.f32 %v1581
        %v2606 = vcvt.s32.f32 %v1582
        %v2607 = vcvt.s32.f32 %v1583
        %v2608 = vcvt.s32.f32 %v1584
        %v2609 = vcvt.s32.f32 %v1585
        %v2610 = vcvt.s32.f32 %v1586
        %v2611 = vcvt.s32.f32 %v1587
        %v2612 = vcvt.s32.f32 %v1588
        %v2613 = vcvt.s32.f32 %v1589
        %v2614 = vcvt.s32.f32 %v1590
        %v2615 = vcvt.s32.f32 %v1591
        %v2616 = vcvt.s32.f32 %v1592
        %v2617 = vcvt.s32.f32 %v1593
        %v2618 = vcvt.s32.f32 %v1594
        %v2619 = vcvt.s32.f32 %v1595
        %v2620 = vcvt.s32.f32 %v1596
        %v2621 = vcvt.s32.f32 %v1597
        %v2622 = vcvt.s32.f32 %v1598
        %v2623 = vcvt.s32.f32 %v1599
        %v2624 = vcvt.s32.f32 %v1600
        %v2625 = vcvt.s32.f32 %v1601
        %v2626 = vcvt.s32.f32 %v1602
        %v2627 = vcvt.s32.f32 %v1603
        %v2628 = vcvt.s32.f32 %v1604
        %v2629 = vcvt.s32.f32 %v1605
        %v2630 = vcvt.s32.f32 %v1606
        %v2631 = vcvt.s32.f32 %v1607
        %v2632 = vcvt.s32.f32 %v1608
        %v2633 = vcvt.s32.f32 %v1609
        %v2634 = vcvt.s32.f32 %v1610
        %v2635 = vcvt.s32.f32 %v1611
        %v2636 = vcvt.s32.f32 %v1612
        %v2637 = vcvt.s32.f32 %v1613
        %v2638 = vcvt.s32.f32 %v1614
        %v2639 = vcvt.s32.f32 %v1615
        %v2640 = vcvt.s32.f32 %v1616
        %v2641 = vcvt.s32.f32 %v1617
        %v2642 = vcvt.s32.f32 %v1618
        %v2643 = vcvt.s32.f32 %v1619
        %v2644 = vcvt.s32.f32 %v1620
        %v2645 = vcvt.s32.f32 %v1621
        %v2646 = vcvt.s32.f32 %v1622
        %v2647 = vcvt.s32.f32 %v1623
        %v2648 = vcvt.s32.f32 %v1624
        %v2649 = vcvt.s32.f32 %v1625
        %v2650 = vcvt.s32.f32 %v1626
        %v2651 = vcvt.s32.f32 %v1627
        %v2652 = vcvt.s32.f32 %v1628
        %v2653 = vcvt.s32.f32 %v1629
        %v2654 = vcvt.s32.f32 %v1630
        %v2655 = vcvt.s32.f32 %v1631
        %v2656 = vcvt.s32.f32 %v1632
        %v2657 = vcvt.s32.f32 %v1633
        %v2658 = vcvt.s32.f32 %v1634
        %v2659 = vcvt.s32.f32 %v1635
        %v2660 = vcvt.s32.f32 %v1636
        %v2661 = vcvt.s32.f32 %v1637
        %v2662 = vcvt.s32.f32 %v1638
        %v2663 = vcvt.s32.f32 %v1639
        %v2664 = vcvt.s32.f32 %v1640
        %v2665 = vcvt.s32.f32 %v1641
        %v2666 = vcvt.s32.f32 %v1642
        %v2667 = vcvt.s32.f32 %v1643
        %v2668 = vcvt.s32.f32 %v1644
        %v2669 = vcvt.s32.f32 %v1645
        %v2670 = vcvt.s32.f32 %v1646
        %v2671 = vcvt.s32.f32 %v1647
        %v2672 = vcvt.s32.f32 %v1648
        %v2673 = vcvt.s32.f32 %v1649
        %v2674 = vcvt.s32.f32 %v1650
        %v2675 = vcvt.s32.f32 %v1651
        %v2676 = vcvt.s32.f32 %v1652
        %v2677 = vcvt.s32.f32 %v1653
        %v2678 = vcvt.s32.f32 %v1654
        %v2679 = vcvt.s32.f32 %v1655
        %v2680 = vcvt.s32.f32 %v1656
        %v2681 = vcvt.s32.f32 %v1657
        %v2682 = vcvt.s32.f32 %v1658
        %v2683 = vcvt.s32.f32 %v1659
        %v2684 = vcvt.s32.f32 %v1660
        %v2685 = vcvt.s32.f32 %v1661
        %v2686 = vcvt.s32.f32 %v1662
        %v2687 = vcvt.s32.f32 %v1663
        %v2688 = vcvt.s32.f32 %v1664
        %v2689 = vcvt.s32.f32 %v1665
        %v2690 = vcvt.s32.f32 %v1666
        %v2691 = vcvt.s32.f32 %v1667
        %v2692 = vcvt.s32.f32 %v1668
        %v2693 = vcvt.s32.f32 %v1669
        %v2694 = vcvt.s32.f32 %v1670
        %v2695 = vcvt.s32.f32 %v1671
        %v2696 = vcvt.s32.f32 %v1672
        %v2697 = vcvt.s32.f32 %v1673
        %v2698 = vcvt.s32.f32 %v1674
        %v2699 = vcvt.s32.f32 %v1675
        %v2700 = vcvt.s32.f32 %v1676
        %v2701 = vcvt.s32.f32 %v1677
        %v2702 = vcvt.s32.f32 %v1678
        %v2703 = vcvt.s32.f32 %v1679
        %v2704 = vcvt.s32.f32 %v1680
        %v2705 = vcvt.s32.f32 %v1681
        %v2706 = vcvt.s32.f32 %v1682
        %v2707 = vcvt.s32.f32 %v1683
        %v2708 = vcvt.s32.f32 %v1684
        %v2709 = vcvt.s32.f32 %v1685
        %v2710 = vcvt.s32.f32 %v1686
        %v2711 = vcvt.s32.f32 %v1687
        %v2712 = vcvt.s32.f32 %v1688
        %v2713 = vcvt.s32.f32 %v1689
        %v2714 = vcvt.s32.f32 %v1690
        %v2715 = vcvt.s32.f32 %v1691
        %v2716 = vcvt.s32.f32 %v1692
        %v2717 = vcvt.s32.f32 %v1693
        %v2718 = vcvt.s32.f32 %v1694
        %v2719 = vcvt.s32.f32 %v1695
        %v2720 = vcvt.s32.f32 %v1696
        %v2721 = vcvt.s32.f32 %v1697
        %v2722 = vcvt.s32.f32 %v1698
        %v2723 = vcvt.s32.f32 %v1699
        %v2724 = vcvt.s32.f32 %v1700
        %v2725 = vcvt.s32.f32 %v1701
        %v2726 = vcvt.s32.f32 %v1702
        %v2727 = vcvt.s32.f32 %v1703
        %v2728 = vcvt.s32.f32 %v1704
        %v2729 = vcvt.s32.f32 %v1705
        %v2730 = vcvt.s32.f32 %v1706
        %v2731 = vcvt.s32.f32 %v1707
        %v2732 = vcvt.s32.f32 %v1708
        %v2733 = vcvt.s32.f32 %v1709
        %v2734 = vcvt.s32.f32 %v1710
        %v2735 = vcvt.s32.f32 %v1711
        %v2736 = vcvt.s32.f32 %v1712
        %v2737 = vcvt.s32.f32 %v1713
        %v2738 = vcvt.s32.f32 %v1714
        %v2739 = vcvt.s32.f32 %v1715
        %v2740 = vcvt.s32.f32 %v1716
        %v2741 = vcvt.s32.f32 %v1717
        %v2742 = vcvt.s32.f32 %v1718
        %v2743 = vcvt.s32.f32 %v1719
        %v2744 = vcvt.s32.f32 %v1720
        %v2745 = vcvt.s32.f32 %v1721
        %v2746 = vcvt.s32.f32 %v1722
        %v2747 = vcvt.s32.f32 %v1723
        %v2748 = vcvt.s32.f32 %v1724
        %v2749 = vcvt.s32.f32 %v1725
        %v2750 = vcvt.s32.f32 %v1726
        %v2751 = vcvt.s32.f32 %v1727
        %v2752 = vcvt.s32.f32 %v1728
        %v2753 = vcvt.s32.f32 %v1729
        %v2754 = vcvt.s32.f32 %v1730
        %v2755 = vcvt.s32.f32 %v1731
        %v2756 = vcvt.s32.f32 %v1732
        %v2757 = vcvt.s32.f32 %v1733
        %v2758 = vcvt.s32.f32 %v1734
        %v2759 = vcvt.s32.f32 %v1735
        %v2760 = vcvt.s32.f32 %v1736
        %v2761 = vcvt.s32.f32 %v1737
        %v2762 = vcvt.s32.f32 %v1738
        %v2763 = vcvt.s32.f32 %v1739
        %v2764 = vcvt.s32.f32 %v1740
        %v2765 = vcvt.s32.f32 %v1741
        %v2766 = vcvt.s32.f32 %v1742
        %v2767 = vcvt.s32.f32 %v1743
        %v2768 = vcvt.s32.f32 %v1744
        %v2769 = vcvt.s32.f32 %v1745
        %v2770 = vcvt.s32.f32 %v1746
        %v2771 = vcvt.s32.f32 %v1747
        %v2772 = vcvt.s32.f32 %v1748
        %v2773 = vcvt.s32.f32 %v1749
        %v2774 = vcvt.s32.f32 %v1750
        %v2775 = vcvt.s32.f32 %v1751
        %v2776 = vcvt.s32.f32 %v1752
        %v2777 = vcvt.s32.f32 %v1753
        %v2778 = vcvt.s32.f32 %v1754
        %v2779 = vcvt.s32.f32 %v1755
        %v2780 = vcvt.s32.f32 %v1756
        %v2781 = vcvt.s32.f32 %v1757
        %v2782 = vcvt.s32.f32 %v1758
        %v2783 = vcvt.s32.f32 %v1759
        %v2784 = vcvt.s32.f32 %v1760
        %v2785 = vcvt.s32.f32 %v1761
        %v2786 = vcvt.s32.f32 %v1762
        %v2787 = vcvt.s32.f32 %v1763
        %v2788 = vcvt.s32.f32 %v1764
        %v2789 = vcvt.s32.f32 %v1765
        %v2790 = vcvt.s32.f32 %v1766
        %v2791 = vcvt.s32.f32 %v1767
        %v2792 = vcvt.s32.f32 %v1768
        %v2793 = vcvt.s32.f32 %v1769
        %v2794 = vcvt.s32.f32 %v1770
        %v2795 = vcvt.s32.f32 %v1771
        %v2796 = vcvt.s32.f32 %v1772
        %v2797 = vcvt.s32.f32 %v1773
        %v2798 = vcvt.s32.f32 %v1774
        %v2799 = vcvt.s32.f32 %v1775
        %v2800 = vcvt.s32.f32 %v1776
        %v2801 = vcvt.s32.f32 %v1777
        %v2802 = vcvt.s32.f32 %v1778
        %v2803 = vcvt.s32.f32 %v1779
        %v2804 = vcvt.s32.f32 %v1780
        %v2805 = vcvt.s32.f32 %v1781
        %v2806 = vcvt.s32.f32 %v1782
        %v2807 = vcvt.s32.f32 %v1783
        %v2808 = vcvt.s32.f32 %v1784
        %v2809 = vcvt.s32.f32 %v1785
        %v2810 = vcvt.s32.f32 %v1786
        %v2811 = vcvt.s32.f32 %v1787
        %v2812 = vcvt.s32.f32 %v1788
        %v2813 = vcvt.s32.f32 %v1789
        %v2814 = vcvt.s32.f32 %v1790
        %v2815 = vcvt.s32.f32 %v1791
        %v2816 = vcvt.s32.f32 %v1792
        %v2817 = vcvt.s32.f32 %v1793
        %v2818 = vcvt.s32.f32 %v1794
        %v2819 = vcvt.s32.f32 %v1795
        %v2820 = vcvt.s32.f32 %v1796
        %v2821 = vcvt.s32.f32 %v1797
        %v2822 = vcvt.s32.f32 %v1798
        %v2823 = vcvt.s32.f32 %v1799
        %v2824 = vcvt.s32.f32 %v1800
        %v2825 = vcvt.s32.f32 %v1801
        %v2826 = vcvt.s32.f32 %v1802
        %v2827 = vcvt.s32.f32 %v1803
        %v2828 = vcvt.s32.f32 %v1804
        %v2829 = vcvt.s32.f32 %v1805
        %v2830 = vcvt.s32.f32 %v1806
        %v2831 = vcvt.s32.f32 %v1807
        %v2832 = vcvt.s32.f32 %v1808
        %v2833 = vcvt.s32.f32 %v1809
        %v2834 = vcvt.s32.f32 %v1810
        %v2835 = vcvt.s32.f32 %v1811
        %v2836 = vcvt.s32.f32 %v1812
        %v2837 = vcvt.s32.f32 %v1813
        %v2838 = vcvt.s32.f32 %v1814
        %v2839 = vcvt.s32.f32 %v1815
        %v2840 = vcvt.s32.f32 %v1816
        %v2841 = vcvt.s32.f32 %v1817
        %v2842 = vcvt.s32.f32 %v1818
        %v2843 = vcvt.s32.f32 %v1819
        %v2844 = vcvt.s32.f32 %v1820
        %v2845 = vcvt.s32.f32 %v1821
        %v2846 = vcvt.s32.f32 %v1822
        %v2847 = vcvt.s32.f32 %v1823
        %v2848 = vcvt.s32.f32 %v1824
        %v2849 = vcvt.s32.f32 %v1825
        %v2850 = vcvt.s32.f32 %v1826
        %v2851 = vcvt.s32.f32 %v1827
        %v2852 = vcvt.s32.f32 %v1828
        %v2853 = vcvt.s32.f32 %v1829
        %v2854 = vcvt.s32.f32 %v1830
        %v2855 = vcvt.s32.f32 %v1831
        %v2856 = vcvt.s32.f32 %v1832
        %v2857 = vcvt.s32.f32 %v1833
        %v2858 = vcvt.s32.f32 %v1834
        %v2859 = vcvt.s32.f32 %v1835
        %v2860 = vcvt.s32.f32 %v1836
        %v2861 = vcvt.s32.f32 %v1837
        %v2862 = vcvt.s32.f32 %v1838
        %v2863 = vcvt.s32.f32 %v1839
        %v2864 = vcvt.s32.f32 %v1840
        %v2865 = vcvt.s32.f32 %v1841
        %v2866 = vcvt.s32.f32 %v1842
        %v2867 = vcvt.s32.f32 %v1843
        %v2868 = vcvt.s32.f32 %v1844
        %v2869 = vcvt.s32.f32 %v1845
        %v2870 = vcvt.s32.f32 %v1846
        %v2871 = vcvt.s32.f32 %v1847
        %v2872 = vcvt.s32.f32 %v1848
        %v2873 = vcvt.s32.f32 %v1849
        %v2874 = vcvt.s32.f32 %v1850
        %v2875 = vcvt.s32.f32 %v1851
        %v2876 = vcvt.s32.f32 %v1852
        %v2877 = vcvt.s32.f32 %v1853
        %v2878 = vcvt.s32.f32 %v1854
        %v2879 = vcvt.s32.f32 %v1855
        %v2880 = vcvt.s32.f32 %v1856
        %v2881 = vcvt.s32.f32 %v1857
        %v2882 = vcvt.s32.f32 %v1858
        %v2883 = vcvt.s32.f32 %v1859
        %v2884 = vcvt.s32.f32 %v1860
        %v2885 = vcvt.s32.f32 %v1861
        %v2886 = vcvt.s32.f32 %v1862
        %v2887 = vcvt.s32.f32 %v1863
        %v2888 = vcvt.s32.f32 %v1864
        %v2889 = vcvt.s32.f32 %v1865
        %v2890 = vcvt.s32.f32 %v1866
        %v2891 = vcvt.s32.f32 %v1867
        %v2892 = vcvt.s32.f32 %v1868
        %v2893 = vcvt.s32.f32 %v1869
        %v2894 = vcvt.s32.f32 %v1870
        %v2895 = vcvt.s32.f32 %v1871
        %v2896 = vcvt.s32.f32 %v1872
        %v2897 = vcvt.s32.f32 %v1873
        %v2898 = vcvt.s32.f32 %v1874
        %v2899 = vcvt.s32.f32 %v1875
        %v2900 = vcvt.s32.f32 %v1876
        %v2901 = vcvt.s32.f32 %v1877
        %v2902 = vcvt.s32.f32 %v1878
        %v2903 = vcvt.s32.f32 %v1879
        %v2904 = vcvt.s32.f32 %v1880
        %v2905 = vcvt.s32.f32 %v1881
        %v2906 = vcvt.s32.f32 %v1882
        %v2907 = vcvt.s32.f32 %v1883
        %v2908 = vcvt.s32.f32 %v1884
        %v2909 = vcvt.s32.f32 %v1885
        %v2910 = vcvt.s32.f32 %v1886
        %v2911 = vcvt.s32.f32 %v1887
        %v2912 = vcvt.s32.f32 %v1888
        %v2913 = vcvt.s32.f32 %v1889
        %v2914 = vcvt.s32.f32 %v1890
        %v2915 = vcvt.s32.f32 %v1891
        %v2916 = vcvt.s32.f32 %v1892
        %v2917 = vcvt.s32.f32 %v1893
        %v2918 = vcvt.s32.f32 %v1894
        %v2919 = vcvt.s32.f32 %v1895
        %v2920 = vcvt.s32.f32 %v1896
        %v2921 = vcvt.s32.f32 %v1897
        %v2922 = vcvt.s32.f32 %v1898
        %v2923 = vcvt.s32.f32 %v1899
        %v2924 = vcvt.s32.f32 %v1900
        %v2925 = vcvt.s32.f32 %v1901
        %v2926 = vcvt.s32.f32 %v1902
        %v2927 = vcvt.s32.f32 %v1903
        %v2928 = vcvt.s32.f32 %v1904
        %v2929 = vcvt.s32.f32 %v1905
        %v2930 = vcvt.s32.f32 %v1906
        %v2931 = vcvt.s32.f32 %v1907
        %v2932 = vcvt.s32.f32 %v1908
        %v2933 = vcvt.s32.f32 %v1909
        %v2934 = vcvt.s32.f32 %v1910
        %v2935 = vcvt.s32.f32 %v1911
        %v2936 = vcvt.s32.f32 %v1912
        %v2937 = vcvt.s32.f32 %v1913
        %v2938 = vcvt.s32.f32 %v1914
        %v2939 = vcvt.s32.f32 %v1915
        %v2940 = vcvt.s32.f32 %v1916
        %v2941 = vcvt.s32.f32 %v1917
        %v2942 = vcvt.s32.f32 %v1918
        %v2943 = vcvt.s32.f32 %v1919
        %v2944 = vcvt.s32.f32 %v1920
        %v2945 = vcvt.s32.f32 %v1921
        %v2946 = vcvt.s32.f32 %v1922
        %v2947 = vcvt.s32.f32 %v1923
        %v2948 = vcvt.s32.f32 %v1924
        %v2949 = vcvt.s32.f32 %v1925
        %v2950 = vcvt.s32.f32 %v1926
        %v2951 = vcvt.s32.f32 %v1927
        %v2952 = vcvt.s32.f32 %v1928
        %v2953 = vcvt.s32.f32 %v1929
        %v2954 = vcvt.s32.f32 %v1930
        %v2955 = vcvt.s32.f32 %v1931
        %v2956 = vcvt.s32.f32 %v1932
        %v2957 = vcvt.s32.f32 %v1933
        %v2958 = vcvt.s32.f32 %v1934
        %v2959 = vcvt.s32.f32 %v1935
        %v2960 = vcvt.s32.f32 %v1936
        %v2961 = vcvt.s32.f32 %v1937
        %v2962 = vcvt.s32.f32 %v1938
        %v2963 = vcvt.s32.f32 %v1939
        %v2964 = vcvt.s32.f32 %v1940
        %v2965 = vcvt.s32.f32 %v1941
        %v2966 = vcvt.s32.f32 %v1942
        %v2967 = vcvt.s32.f32 %v1943
        %v2968 = vcvt.s32.f32 %v1944
        %v2969 = vcvt.s32.f32 %v1945
        %v2970 = vcvt.s32.f32 %v1946
        %v2971 = vcvt.s32.f32 %v1947
        %v2972 = vcvt.s32.f32 %v1948
        %v2973 = vcvt.s32.f32 %v1949
        %v2974 = vcvt.s32.f32 %v1950
        %v2975 = vcvt.s32.f32 %v1951
        %v2976 = vcvt.s32.f32 %v1952
        %v2977 = vcvt.s32.f32 %v1953
        %v2978 = vcvt.s32.f32 %v1954
        %v2979 = vcvt.s32.f32 %v1955
        %v2980 = vcvt.s32.f32 %v1956
        %v2981 = vcvt.s32.f32 %v1957
        %v2982 = vcvt.s32.f32 %v1958
        %v2983 = vcvt.s32.f32 %v1959
        %v2984 = vcvt.s32.f32 %v1960
        %v2985 = vcvt.s32.f32 %v1961
        %v2986 = vcvt.s32.f32 %v1962
        %v2987 = vcvt.s32.f32 %v1963
        %v2988 = vcvt.s32.f32 %v1964
        %v2989 = vcvt.s32.f32 %v1965
        %v2990 = vcvt.s32.f32 %v1966
        %v2991 = vcvt.s32.f32 %v1967
        %v2992 = vcvt.s32.f32 %v1968
        %v2993 = vcvt.s32.f32 %v1969
        %v2994 = vcvt.s32.f32 %v1970
        %v2995 = vcvt.s32.f32 %v1971
        %v2996 = vcvt.s32.f32 %v1972
        %v2997 = vcvt.s32.f32 %v1973
        %v2998 = vcvt.s32.f32 %v1974
        %v2999 = vcvt.s32.f32 %v1975
        %v3000 = vcvt.s32.f32 %v1976
        %v3001 = vcvt.s32.f32 %v1977
        %v3002 = vcvt.s32.f32 %v1978
        %v3003 = vcvt.s32.f32 %v1979
        %v3004 = vcvt.s32.f32 %v1980
        %v3005 = vcvt.s32.f32 %v1981
        %v3006 = vcvt.s32.f32 %v1982
        %v3007 = vcvt.s32.f32 %v1983
        %v3008 = vcvt.s32.f32 %v1984
        %v3009 = vcvt.s32.f32 %v1985
        %v3010 = vcvt.s32.f32 %v1986
        %v3011 = vcvt.s32.f32 %v1987
        %v3012 = vcvt.s32.f32 %v1988
        %v3013 = vcvt.s32.f32 %v1989
        %v3014 = vcvt.s32.f32 %v1990
        %v3015 = vcvt.s32.f32 %v1991
        %v3016 = vcvt.s32.f32 %v1992
        %v3017 = vcvt.s32.f32 %v1993
        %v3018 = vcvt.s32.f32 %v1994
        %v3019 = vcvt.s32.f32 %v1995
        %v3020 = vcvt.s32.f32 %v1996
        %v3021 = vcvt.s32.f32 %v1997
        %v3022 = vcvt.s32.f32 %v1998
        %v3023 = vcvt.s32.f32 %v1999
        %v3024 = vcvt.s32.f32 %v2000
        %v3025 = vcvt.s32.f32 %v2001
        %v3026 = vcvt.s32.f32 %v2002
        %v3027 = vcvt.s32.f32 %v2003
        %v3028 = vcvt.s32.f32 %v2004
        %v3029 = vcvt.s32.f32 %v2005
        %v3030 = vcvt.s32.f32 %v2006
        %v3031 = vcvt.s32.f32 %v2007
        %v3032 = vcvt.s32.f32 %v2008
        %v3033 = vcvt.s32.f32 %v2009
        %v3034 = vcvt.s32.f32 %v2010
        %v3035 = vcvt.s32.f32 %v2011
        %v3036 = vcvt.s32.f32 %v2012
        %v3037 = vcvt.s32.f32 %v2013
        %v3038 = vcvt.s32.f32 %v2014
        %v3039 = vcvt.s32.f32 %v2015
        %v3040 = vcvt.s32.f32 %v2016
        %v3041 = vcvt.s32.f32 %v2017
        %v3042 = vcvt.s32.f32 %v2018
        %v3043 = vcvt.s32.f32 %v2019
        %v3044 = vcvt.s32.f32 %v2020
        %v3045 = vcvt.s32.f32 %v2021
        %v3046 = vcvt.s32.f32 %v2022
        %v3047 = vcvt.s32.f32 %v2023
        %v3048 = vcvt.s32.f32 %v2024
        %v3049 = vcvt.s32.f32 %v2025
        %v3050 = vcvt.s32.f32 %v2026
        %v3051 = vcvt.s32.f32 %v2027
        %v3052 = vcvt.s32.f32 %v2028
        %v3053 = vcvt.s32.f32 %v2029
        %v3054 = vcvt.s32.f32 %v2030
        %v3055 = vcvt.s32.f32 %v2031
        %v3056 = vcvt.s32.f32 %v2032
        %v3057 = vcvt.s32.f32 %v2033
        %v3058 = vcvt.s32.f32 %v2034
        %v3059 = vcvt.s32.f32 %v2035
        %v3060 = vcvt.s32.f32 %v2036
        %v3061 = vcvt.s32.f32 %v2037
        %v3062 = vcvt.s32.f32 %v2038
        %v3063 = vcvt.s32.f32 %v2039
        %v3064 = vcvt.s32.f32 %v2040
        %v3065 = vcvt.s32.f32 %v2041
        %v3066 = vcvt.s32.f32 %v2042
        %v3067 = vcvt.s32.f32 %v2043
        %v3068 = vcvt.s32.f32 %v2044
        %v3069 = vcvt.s32.f32 %v2045
        %v3070 = vcvt.s32.f32 %v2046
        %v3071 = vcvt.s32.f32 %v2047
        %v3072 = vcvt.s32.f32 %v2048
        %v3073 = vcvt.s32.f32 %v2049
        %v3074 = vcvt.s32.f32 %v2050
        %v3075 = vcvt.s32.f32 %v2051
        %v3076 = vcvt.s32.f32 %v2052
        %v3077 = vcvt.s32.f32 %v2053
        %v3078 = vcvt.s32.f32 %v2054
        %v3079 = vcvt.s32.f32 %v2055
        %v3080 = vcvt.s32.f32 %v2056
        %v3081 = vcvt.s32.f32 %v2057
        %v3082 = vcvt.s32.f32 %v2058
        %v3083 = vcvt.s32.f32 %v2059
        %v3084 = vcvt.s32.f32 %v2060
        %v3085 = vcvt.s32.f32 %v2061
        %v3086 = vcvt.s32.f32 %v2062
        %v3087 = vcvt.s32.f32 %v2063
        %v3088 = vcvt.s32.f32 %v2064
        %v3089 = vcvt.s32.f32 %v2065
        %v3090 = vcvt.s32.f32 %v2066
        %v3091 = vcvt.s32.f32 %v2067
        %v3092 = vcvt.s32.f32 %v2068
        %v3093 = vcvt.s32.f32 %v2069
        %v3094 = vcvt.s32.f32 %v2070
        %v3095 = vcvt.s32.f32 %v2071
        %v3096 = vcvt.s32.f32 %v2072
        %v3097 = vcvt.s32.f32 %v2073
        %v3098 = vcvt.s32.f32 %v2074
        %v3099 = vcvt.s32.f32 %v2075
        %v3100 = vcvt.s32.f32 %v2076
        %v3101 = vcvt.s32.f32 %v2077
        %v3102 = vcvt.s32.f32 %v2078
        %v3103 = vcvt.s32.f32 %v2079
        %v3104 = vcvt.s32.f32 %v2080
        %v3105 = vcvt.s32.f32 %v2081
        %v3106 = vcvt.s32.f32 %v2082
        %v3107 = vcvt.s32.f32 %v2083
        %v3108 = vcvt.s32.f32 %v2084
        %v3109 = vcvt.s32.f32 %v2085
        %v3110 = vcvt.s32.f32 %v2086
        %v3111 = vcvt.s32.f32 %v2087
        %v3112 = vcvt.s32.f32 %v2088
        %v3113 = vcvt.s32.f32 %v2089
        %v3114 = vcvt.s32.f32 %v2090
        %v3115 = vcvt.s32.f32 %v2091
        %v3116 = vcvt.s32.f32 %v2092
        %v3117 = vcvt.s32.f32 %v2093
        %v3118 = vcvt.s32.f32 %v2094
        %v3119 = vcvt.s32.f32 %v2095
        %v3120 = vcvt.s32.f32 %v2096
        %v3121 = vcvt.s32.f32 %v2097
        %v3122 = vcvt.s32.f32 %v2098
        %v3123 = vcvt.s32.f32 %v2099
        %v3124 = vcvt.s32.f32 %v2100
        %v3125 = vcvt.s32.f32 %v2101
        %v3126 = vcvt.s32.f32 %v2102
        %v3127 = vcvt.s32.f32 %v2103
        %v3128 = vcvt.s32.f32 %v2104
        %v3129 = vcvt.s32.f32 %v2105
        %v3130 = vcvt.s32.f32 %v2106
        %v3131 = vcvt.s32.f32 %v2107
        %v3132 = vcvt.s32.f32 %v2108
        %v3133 = vcvt.s32.f32 %v2109
        %v3134 = vcvt.s32.f32 %v2110
        %v3135 = vcvt.s32.f32 %v2111
        %v3136 = vcvt.s32.f32 %v2112
        %v3137 = vcvt.s32.f32 %v2113
        %v3138 = vcvt.s32.f32 %v2114
        %v3139 = vcvt.s32.f32 %v2115
        %v3140 = vcvt.s32.f32 %v2116
        %v3141 = vcvt.s32.f32 %v2117
        %v3142 = vcvt.s32.f32 %v2118
        %v3143 = vcvt.s32.f32 %v2119
        %v3144 = vcvt.s32.f32 %v2120
        %v3145 = vcvt.s32.f32 %v2121
        %v3146 = vcvt.s32.f32 %v2122
        %v3147 = vcvt.s32.f32 %v2123
        %v3148 = vcvt.s32.f32 %v2124
        %v3149 = vcvt.s32.f32 %v2125
        %v3150 = vcvt.s32.f32 %v2126
        %v3151 = vcvt.s32.f32 %v2127
        %v3152 = vcvt.s32.f32 %v2128
        %v3153 = vcvt.s32.f32 %v2129
        %v3154 = vcvt.s32.f32 %v2130
        %v3155 = vcvt.s32.f32 %v2131
        %v3156 = vcvt.s32.f32 %v2132
        %v3157 = vcvt.s32.f32 %v2133
        %v3158 = vcvt.s32.f32 %v2134
        %v3159 = vcvt.s32.f32 %v2135
        %v3160 = vcvt.s32.f32 %v2136
        %v3161 = vcvt.s32.f32 %v2137
        %v3162 = vcvt.s32.f32 %v2138
        %v3163 = vcvt.s32.f32 %v2139
        %v3164 = vcvt.s32.f32 %v2140
        %v3165 = vcvt.s32.f32 %v2141
        %v3166 = vcvt.s32.f32 %v2142
        %v3167 = vcvt.s32.f32 %v2143
        %v3168 = vcvt.s32.f32 %v2144
        %v3169 = vcvt.s32.f32 %v2145
        %v3170 = vcvt.s32.f32 %v2146
        %v3171 = vcvt.s32.f32 %v2147
        %v3172 = vcvt.s32.f32 %v2148
        %v3173 = vcvt.s32.f32 %v2149
        %v3174 = vcvt.s32.f32 %v2150
        %v3175 = vcvt.s32.f32 %v2151
        %v3176 = vcvt.s32.f32 %v2152
        %v3177 = vcvt.s32.f32 %v2153
        %v3178 = vcvt.s32.f32 %v2154
        %v3179 = vcvt.s32.f32 %v2155
        %v3180 = vcvt.s32.f32 %v2156
        %v3181 = vcvt.s32.f32 %v2157
        %v3182 = vcvt.s32.f32 %v2158
        %v3183 = vcvt.s32.f32 %v2159
        %v3184 = vcvt.s32.f32 %v2160
        %v3185 = vcvt.s32.f32 %v2161
        %v3186 = vcvt.s32.f32 %v2162
        %v3187 = vcvt.s32.f32 %v2163
        %v3188 = vcvt.s32.f32 %v2164
        %v3189 = vcvt.s32.f32 %v2165
        %v3190 = vcvt.s32.f32 %v2166
        %v3191 = vpack.c.bf16 %v2171, %v2167
        %v3192 = vpack.c.bf16 %v2172, %v2168
        %v3193 = vpack.c.bf16 %v2173, %v2169
        %v3194 = vpack.c.bf16 %v2174, %v2170
        %v3195 = vpack.c.bf16 %v2179, %v2175
        %v3196 = vpack.c.bf16 %v2180, %v2176
        %v3197 = vpack.c.bf16 %v2181, %v2177
        %v3198 = vpack.c.bf16 %v2182, %v2178
        %v3199 = vpack.c.bf16 %v2187, %v2183
        %v3200 = vpack.c.bf16 %v2188, %v2184
        %v3201 = vpack.c.bf16 %v2189, %v2185
        %v3202 = vpack.c.bf16 %v2190, %v2186
        %v3203 = vpack.c.bf16 %v2195, %v2191
        %v3204 = vpack.c.bf16 %v2196, %v2192
        %v3205 = vpack.c.bf16 %v2197, %v2193
        %v3206 = vpack.c.bf16 %v2198, %v2194
        %v3207 = vpack.c.bf16 %v2203, %v2199
        %v3208 = vpack.c.bf16 %v2204, %v2200
        %v3209 = vpack.c.bf16 %v2205, %v2201
        %v3210 = vpack.c.bf16 %v2206, %v2202
        %v3211 = vpack.c.bf16 %v2211, %v2207
        %v3212 = vpack.c.bf16 %v2212, %v2208
        %v3213 = vpack.c.bf16 %v2213, %v2209
        %v3214 = vpack.c.bf16 %v2214, %v2210
        %v3215 = vpack.c.bf16 %v2219, %v2215
        %v3216 = vpack.c.bf16 %v2220, %v2216
        %v3217 = vpack.c.bf16 %v2221, %v2217
        %v3218 = vpack.c.bf16 %v2222, %v2218
        %v3219 = vpack.c.bf16 %v2227, %v2223
        %v3220 = vpack.c.bf16 %v2228, %v2224
        %v3221 = vpack.c.bf16 %v2229, %v2225
        %v3222 = vpack.c.bf16 %v2230, %v2226
        %v3223 = vpack.c.bf16 %v2235, %v2231
        %v3224 = vpack.c.bf16 %v2236, %v2232
        %v3225 = vpack.c.bf16 %v2237, %v2233
        %v3226 = vpack.c.bf16 %v2238, %v2234
        %v3227 = vpack.c.bf16 %v2243, %v2239
        %v3228 = vpack.c.bf16 %v2244, %v2240
        %v3229 = vpack.c.bf16 %v2245, %v2241
        %v3230 = vpack.c.bf16 %v2246, %v2242
        %v3231 = vpack.c.bf16 %v2251, %v2247
        %v3232 = vpack.c.bf16 %v2252, %v2248
        %v3233 = vpack.c.bf16 %v2253, %v2249
        %v3234 = vpack.c.bf16 %v2254, %v2250
        %v3235 = vpack.c.bf16 %v2259, %v2255
        %v3236 = vpack.c.bf16 %v2260, %v2256
        %v3237 = vpack.c.bf16 %v2261, %v2257
        %v3238 = vpack.c.bf16 %v2262, %v2258
        %v3239 = vpack.c.bf16 %v2267, %v2263
        %v3240 = vpack.c.bf16 %v2268, %v2264
        %v3241 = vpack.c.bf16 %v2269, %v2265
        %v3242 = vpack.c.bf16 %v2270, %v2266
        %v3243 = vpack.c.bf16 %v2275, %v2271
        %v3244 = vpack.c.bf16 %v2276, %v2272
        %v3245 = vpack.c.bf16 %v2277, %v2273
        %v3246 = vpack.c.bf16 %v2278, %v2274
        %v3247 = vpack.c.bf16 %v2283, %v2279
        %v3248 = vpack.c.bf16 %v2284, %v2280
        %v3249 = vpack.c.bf16 %v2285, %v2281
        %v3250 = vpack.c.bf16 %v2286, %v2282
        %v3251 = vpack.c.bf16 %v2291, %v2287
        %v3252 = vpack.c.bf16 %v2292, %v2288
        %v3253 = vpack.c.bf16 %v2293, %v2289
        %v3254 = vpack.c.bf16 %v2294, %v2290
        %v3255 = vpack.c.bf16 %v2299, %v2295
        %v3256 = vpack.c.bf16 %v2300, %v2296
        %v3257 = vpack.c.bf16 %v2301, %v2297
        %v3258 = vpack.c.bf16 %v2302, %v2298
        %v3259 = vpack.c.bf16 %v2307, %v2303
        %v3260 = vpack.c.bf16 %v2308, %v2304
        %v3261 = vpack.c.bf16 %v2309, %v2305
        %v3262 = vpack.c.bf16 %v2310, %v2306
        %v3263 = vpack.c.bf16 %v2315, %v2311
        %v3264 = vpack.c.bf16 %v2316, %v2312
        %v3265 = vpack.c.bf16 %v2317, %v2313
        %v3266 = vpack.c.bf16 %v2318, %v2314
        %v3267 = vpack.c.bf16 %v2323, %v2319
        %v3268 = vpack.c.bf16 %v2324, %v2320
        %v3269 = vpack.c.bf16 %v2325, %v2321
        %v3270 = vpack.c.bf16 %v2326, %v2322
        %v3271 = vpack.c.bf16 %v2331, %v2327
        %v3272 = vpack.c.bf16 %v2332, %v2328
        %v3273 = vpack.c.bf16 %v2333, %v2329
        %v3274 = vpack.c.bf16 %v2334, %v2330
        %v3275 = vpack.c.bf16 %v2339, %v2335
        %v3276 = vpack.c.bf16 %v2340, %v2336
        %v3277 = vpack.c.bf16 %v2341, %v2337
        %v3278 = vpack.c.bf16 %v2342, %v2338
        %v3279 = vpack.c.bf16 %v2347, %v2343
        %v3280 = vpack.c.bf16 %v2348, %v2344
        %v3281 = vpack.c.bf16 %v2349, %v2345
        %v3282 = vpack.c.bf16 %v2350, %v2346
        %v3283 = vpack.c.bf16 %v2355, %v2351
        %v3284 = vpack.c.bf16 %v2356, %v2352
        %v3285 = vpack.c.bf16 %v2357, %v2353
        %v3286 = vpack.c.bf16 %v2358, %v2354
        %v3287 = vpack.c.bf16 %v2363, %v2359
        %v3288 = vpack.c.bf16 %v2364, %v2360
        %v3289 = vpack.c.bf16 %v2365, %v2361
        %v3290 = vpack.c.bf16 %v2366, %v2362
        %v3291 = vpack.c.bf16 %v2371, %v2367
        %v3292 = vpack.c.bf16 %v2372, %v2368
        %v3293 = vpack.c.bf16 %v2373, %v2369
        %v3294 = vpack.c.bf16 %v2374, %v2370
        %v3295 = vpack.c.bf16 %v2379, %v2375
        %v3296 = vpack.c.bf16 %v2380, %v2376
        %v3297 = vpack.c.bf16 %v2381, %v2377
        %v3298 = vpack.c.bf16 %v2382, %v2378
        %v3299 = vpack.c.bf16 %v2387, %v2383
        %v3300 = vpack.c.bf16 %v2388, %v2384
        %v3301 = vpack.c.bf16 %v2389, %v2385
        %v3302 = vpack.c.bf16 %v2390, %v2386
        %v3303 = vpack.c.bf16 %v2395, %v2391
        %v3304 = vpack.c.bf16 %v2396, %v2392
        %v3305 = vpack.c.bf16 %v2397, %v2393
        %v3306 = vpack.c.bf16 %v2398, %v2394
        %v3307 = vpack.c.bf16 %v2403, %v2399
        %v3308 = vpack.c.bf16 %v2404, %v2400
        %v3309 = vpack.c.bf16 %v2405, %v2401
        %v3310 = vpack.c.bf16 %v2406, %v2402
        %v3311 = vpack.c.bf16 %v2411, %v2407
        %v3312 = vpack.c.bf16 %v2412, %v2408
        %v3313 = vpack.c.bf16 %v2413, %v2409
        %v3314 = vpack.c.bf16 %v2414, %v2410
        %v3315 = vpack.c.bf16 %v2419, %v2415
        %v3316 = vpack.c.bf16 %v2420, %v2416
        %v3317 = vpack.c.bf16 %v2421, %v2417
        %v3318 = vpack.c.bf16 %v2422, %v2418
        %v3319 = vpack.c.bf16 %v2427, %v2423
        %v3320 = vpack.c.bf16 %v2428, %v2424
        %v3321 = vpack.c.bf16 %v2429, %v2425
        %v3322 = vpack.c.bf16 %v2430, %v2426
        %v3323 = vpack.c.bf16 %v2435, %v2431
        %v3324 = vpack.c.bf16 %v2436, %v2432
        %v3325 = vpack.c.bf16 %v2437, %v2433
        %v3326 = vpack.c.bf16 %v2438, %v2434
        %v3327 = vpack.c.bf16 %v2443, %v2439
        %v3328 = vpack.c.bf16 %v2444, %v2440
        %v3329 = vpack.c.bf16 %v2445, %v2441
        %v3330 = vpack.c.bf16 %v2446, %v2442
        %v3331 = vpack.c.bf16 %v2451, %v2447
        %v3332 = vpack.c.bf16 %v2452, %v2448
        %v3333 = vpack.c.bf16 %v2453, %v2449
        %v3334 = vpack.c.bf16 %v2454, %v2450
        %v3335 = vpack.c.bf16 %v2459, %v2455
        %v3336 = vpack.c.bf16 %v2460, %v2456
        %v3337 = vpack.c.bf16 %v2461, %v2457
        %v3338 = vpack.c.bf16 %v2462, %v2458
        %v3339 = vpack.c.bf16 %v2467, %v2463
        %v3340 = vpack.c.bf16 %v2468, %v2464
        %v3341 = vpack.c.bf16 %v2469, %v2465
        %v3342 = vpack.c.bf16 %v2470, %v2466
        %v3343 = vpack.c.bf16 %v2475, %v2471
        %v3344 = vpack.c.bf16 %v2476, %v2472
        %v3345 = vpack.c.bf16 %v2477, %v2473
        %v3346 = vpack.c.bf16 %v2478, %v2474
        %v3347 = vpack.c.bf16 %v2483, %v2479
        %v3348 = vpack.c.bf16 %v2484, %v2480
        %v3349 = vpack.c.bf16 %v2485, %v2481
        %v3350 = vpack.c.bf16 %v2486, %v2482
        %v3351 = vpack.c.bf16 %v2491, %v2487
        %v3352 = vpack.c.bf16 %v2492, %v2488
        %v3353 = vpack.c.bf16 %v2493, %v2489
        %v3354 = vpack.c.bf16 %v2494, %v2490
        %v3355 = vpack.c.bf16 %v2499, %v2495
        %v3356 = vpack.c.bf16 %v2500, %v2496
        %v3357 = vpack.c.bf16 %v2501, %v2497
        %v3358 = vpack.c.bf16 %v2502, %v2498
        %v3359 = vpack.c.bf16 %v2507, %v2503
        %v3360 = vpack.c.bf16 %v2508, %v2504
        %v3361 = vpack.c.bf16 %v2509, %v2505
        %v3362 = vpack.c.bf16 %v2510, %v2506
        %v3363 = vpack.c.bf16 %v2515, %v2511
        %v3364 = vpack.c.bf16 %v2516, %v2512
        %v3365 = vpack.c.bf16 %v2517, %v2513
        %v3366 = vpack.c.bf16 %v2518, %v2514
        %v3367 = vpack.c.bf16 %v2523, %v2519
        %v3368 = vpack.c.bf16 %v2524, %v2520
        %v3369 = vpack.c.bf16 %v2525, %v2521
        %v3370 = vpack.c.bf16 %v2526, %v2522
        %v3371 = vpack.c.bf16 %v2531, %v2527
        %v3372 = vpack.c.bf16 %v2532, %v2528
        %v3373 = vpack.c.bf16 %v2533, %v2529
        %v3374 = vpack.c.bf16 %v2534, %v2530
        %v3375 = vpack.c.bf16 %v2539, %v2535
        %v3376 = vpack.c.bf16 %v2540, %v2536
        %v3377 = vpack.c.bf16 %v2541, %v2537
        %v3378 = vpack.c.bf16 %v2542, %v2538
        %v3379 = vpack.c.bf16 %v2547, %v2543
        %v3380 = vpack.c.bf16 %v2548, %v2544
        %v3381 = vpack.c.bf16 %v2549, %v2545
        %v3382 = vpack.c.bf16 %v2550, %v2546
        %v3383 = vpack.c.bf16 %v2555, %v2551
        %v3384 = vpack.c.bf16 %v2556, %v2552
        %v3385 = vpack.c.bf16 %v2557, %v2553
        %v3386 = vpack.c.bf16 %v2558, %v2554
        %v3387 = vpack.c.bf16 %v2563, %v2559
        %v3388 = vpack.c.bf16 %v2564, %v2560
        %v3389 = vpack.c.bf16 %v2565, %v2561
        %v3390 = vpack.c.bf16 %v2566, %v2562
        %v3391 = vpack.c.bf16 %v2571, %v2567
        %v3392 = vpack.c.bf16 %v2572, %v2568
        %v3393 = vpack.c.bf16 %v2573, %v2569
        %v3394 = vpack.c.bf16 %v2574, %v2570
        %v3395 = vpack.c.bf16 %v2579, %v2575
        %v3396 = vpack.c.bf16 %v2580, %v2576
        %v3397 = vpack.c.bf16 %v2581, %v2577
        %v3398 = vpack.c.bf16 %v2582, %v2578
        %v3399 = vpack.c.bf16 %v2587, %v2583
        %v3400 = vpack.c.bf16 %v2588, %v2584
        %v3401 = vpack.c.bf16 %v2589, %v2585
        %v3402 = vpack.c.bf16 %v2590, %v2586
        %v3403 = vpack.c.bf16 %v2595, %v2591
        %v3404 = vpack.c.bf16 %v2596, %v2592
        %v3405 = vpack.c.bf16 %v2597, %v2593
        %v3406 = vpack.c.bf16 %v2598, %v2594
        %v3407 = vpack.c.bf16 %v2603, %v2599
        %v3408 = vpack.c.bf16 %v2604, %v2600
        %v3409 = vpack.c.bf16 %v2605, %v2601
        %v3410 = vpack.c.bf16 %v2606, %v2602
        %v3411 = vpack.c.bf16 %v2611, %v2607
        %v3412 = vpack.c.bf16 %v2612, %v2608
        %v3413 = vpack.c.bf16 %v2613, %v2609
        %v3414 = vpack.c.bf16 %v2614, %v2610
        %v3415 = vpack.c.bf16 %v2619, %v2615
        %v3416 = vpack.c.bf16 %v2620, %v2616
        %v3417 = vpack.c.bf16 %v2621, %v2617
        %v3418 = vpack.c.bf16 %v2622, %v2618
        %v3419 = vpack.c.bf16 %v2627, %v2623
        %v3420 = vpack.c.bf16 %v2628, %v2624
        %v3421 = vpack.c.bf16 %v2629, %v2625
        %v3422 = vpack.c.bf16 %v2630, %v2626
        %v3423 = vpack.c.bf16 %v2635, %v2631
        %v3424 = vpack.c.bf16 %v2636, %v2632
        %v3425 = vpack.c.bf16 %v2637, %v2633
        %v3426 = vpack.c.bf16 %v2638, %v2634
        %v3427 = vpack.c.bf16 %v2643, %v2639
        %v3428 = vpack.c.bf16 %v2644, %v2640
        %v3429 = vpack.c.bf16 %v2645, %v2641
        %v3430 = vpack.c.bf16 %v2646, %v2642
        %v3431 = vpack.c.bf16 %v2651, %v2647
        %v3432 = vpack.c.bf16 %v2652, %v2648
        %v3433 = vpack.c.bf16 %v2653, %v2649
        %v3434 = vpack.c.bf16 %v2654, %v2650
        %v3435 = vpack.c.bf16 %v2659, %v2655
        %v3436 = vpack.c.bf16 %v2660, %v2656
        %v3437 = vpack.c.bf16 %v2661, %v2657
        %v3438 = vpack.c.bf16 %v2662, %v2658
        %v3439 = vpack.c.bf16 %v2667, %v2663
        %v3440 = vpack.c.bf16 %v2668, %v2664
        %v3441 = vpack.c.bf16 %v2669, %v2665
        %v3442 = vpack.c.bf16 %v2670, %v2666
        %v3443 = vpack.c.bf16 %v2675, %v2671
        %v3444 = vpack.c.bf16 %v2676, %v2672
        %v3445 = vpack.c.bf16 %v2677, %v2673
        %v3446 = vpack.c.bf16 %v2678, %v2674
        %v3447 = vpack.c.bf16 %v2683, %v2679
        %v3448 = vpack.c.bf16 %v2684, %v2680
        %v3449 = vpack.c.bf16 %v2685, %v2681
        %v3450 = vpack.c.bf16 %v2686, %v2682
        %v3451 = vpack.c.bf16 %v2691, %v2687
        %v3452 = vpack.c.bf16 %v2692, %v2688
        %v3453 = vpack.c.bf16 %v2693, %v2689
        %v3454 = vpack.c.bf16 %v2694, %v2690
        %v3455 = vpack.c.bf16 %v2699, %v2695
        %v3456 = vpack.c.bf16 %v2700, %v2696
        %v3457 = vpack.c.bf16 %v2701, %v2697
        %v3458 = vpack.c.bf16 %v2702, %v2698
        %v3459 = vpack.c.bf16 %v2707, %v2703
        %v3460 = vpack.c.bf16 %v2708, %v2704
        %v3461 = vpack.c.bf16 %v2709, %v2705
        %v3462 = vpack.c.bf16 %v2710, %v2706
        %v3463 = vpack.c.bf16 %v2715, %v2711
        %v3464 = vpack.c.bf16 %v2716, %v2712
        %v3465 = vpack.c.bf16 %v2717, %v2713
        %v3466 = vpack.c.bf16 %v2718, %v2714
        %v3467 = vpack.c.bf16 %v2723, %v2719
        %v3468 = vpack.c.bf16 %v2724, %v2720
        %v3469 = vpack.c.bf16 %v2725, %v2721
        %v3470 = vpack.c.bf16 %v2726, %v2722
        %v3471 = vpack.c.bf16 %v2731, %v2727
        %v3472 = vpack.c.bf16 %v2732, %v2728
        %v3473 = vpack.c.bf16 %v2733, %v2729
        %v3474 = vpack.c.bf16 %v2734, %v2730
        %v3475 = vpack.c.bf16 %v2739, %v2735
        %v3476 = vpack.c.bf16 %v2740, %v2736
        %v3477 = vpack.c.bf16 %v2741, %v2737
        %v3478 = vpack.c.bf16 %v2742, %v2738
        %v3479 = vpack.c.bf16 %v2747, %v2743
        %v3480 = vpack.c.bf16 %v2748, %v2744
        %v3481 = vpack.c.bf16 %v2749, %v2745
        %v3482 = vpack.c.bf16 %v2750, %v2746
        %v3483 = vpack.c.bf16 %v2755, %v2751
        %v3484 = vpack.c.bf16 %v2756, %v2752
        %v3485 = vpack.c.bf16 %v2757, %v2753
        %v3486 = vpack.c.bf16 %v2758, %v2754
        %v3487 = vpack.c.bf16 %v2763, %v2759
        %v3488 = vpack.c.bf16 %v2764, %v2760
        %v3489 = vpack.c.bf16 %v2765, %v2761
        %v3490 = vpack.c.bf16 %v2766, %v2762
        %v3491 = vpack.c.bf16 %v2771, %v2767
        %v3492 = vpack.c.bf16 %v2772, %v2768
        %v3493 = vpack.c.bf16 %v2773, %v2769
        %v3494 = vpack.c.bf16 %v2774, %v2770
        %v3495 = vpack.c.bf16 %v2779, %v2775
        %v3496 = vpack.c.bf16 %v2780, %v2776
        %v3497 = vpack.c.bf16 %v2781, %v2777
        %v3498 = vpack.c.bf16 %v2782, %v2778
        %v3499 = vpack.c.bf16 %v2787, %v2783
        %v3500 = vpack.c.bf16 %v2788, %v2784
        %v3501 = vpack.c.bf16 %v2789, %v2785
        %v3502 = vpack.c.bf16 %v2790, %v2786
        %v3503 = vpack.c.bf16 %v2795, %v2791
        %v3504 = vpack.c.bf16 %v2796, %v2792
        %v3505 = vpack.c.bf16 %v2797, %v2793
        %v3506 = vpack.c.bf16 %v2798, %v2794
        %v3507 = vpack.c.bf16 %v2803, %v2799
        %v3508 = vpack.c.bf16 %v2804, %v2800
        %v3509 = vpack.c.bf16 %v2805, %v2801
        %v3510 = vpack.c.bf16 %v2806, %v2802
        %v3511 = vpack.c.bf16 %v2811, %v2807
        %v3512 = vpack.c.bf16 %v2812, %v2808
        %v3513 = vpack.c.bf16 %v2813, %v2809
        %v3514 = vpack.c.bf16 %v2814, %v2810
        %v3515 = vpack.c.bf16 %v2819, %v2815
        %v3516 = vpack.c.bf16 %v2820, %v2816
        %v3517 = vpack.c.bf16 %v2821, %v2817
        %v3518 = vpack.c.bf16 %v2822, %v2818
        %v3519 = vpack.c.bf16 %v2827, %v2823
        %v3520 = vpack.c.bf16 %v2828, %v2824
        %v3521 = vpack.c.bf16 %v2829, %v2825
        %v3522 = vpack.c.bf16 %v2830, %v2826
        %v3523 = vpack.c.bf16 %v2835, %v2831
        %v3524 = vpack.c.bf16 %v2836, %v2832
        %v3525 = vpack.c.bf16 %v2837, %v2833
        %v3526 = vpack.c.bf16 %v2838, %v2834
        %v3527 = vpack.c.bf16 %v2843, %v2839
        %v3528 = vpack.c.bf16 %v2844, %v2840
        %v3529 = vpack.c.bf16 %v2845, %v2841
        %v3530 = vpack.c.bf16 %v2846, %v2842
        %v3531 = vpack.c.bf16 %v2851, %v2847
        %v3532 = vpack.c.bf16 %v2852, %v2848
        %v3533 = vpack.c.bf16 %v2853, %v2849
        %v3534 = vpack.c.bf16 %v2854, %v2850
        %v3535 = vpack.c.bf16 %v2859, %v2855
        %v3536 = vpack.c.bf16 %v2860, %v2856
        %v3537 = vpack.c.bf16 %v2861, %v2857
        %v3538 = vpack.c.bf16 %v2862, %v2858
        %v3539 = vpack.c.bf16 %v2867, %v2863
        %v3540 = vpack.c.bf16 %v2868, %v2864
        %v3541 = vpack.c.bf16 %v2869, %v2865
        %v3542 = vpack.c.bf16 %v2870, %v2866
        %v3543 = vpack.c.bf16 %v2875, %v2871
        %v3544 = vpack.c.bf16 %v2876, %v2872
        %v3545 = vpack.c.bf16 %v2877, %v2873
        %v3546 = vpack.c.bf16 %v2878, %v2874
        %v3547 = vpack.c.bf16 %v2883, %v2879
        %v3548 = vpack.c.bf16 %v2884, %v2880
        %v3549 = vpack.c.bf16 %v2885, %v2881
        %v3550 = vpack.c.bf16 %v2886, %v2882
        %v3551 = vpack.c.bf16 %v2891, %v2887
        %v3552 = vpack.c.bf16 %v2892, %v2888
        %v3553 = vpack.c.bf16 %v2893, %v2889
        %v3554 = vpack.c.bf16 %v2894, %v2890
        %v3555 = vpack.c.bf16 %v2899, %v2895
        %v3556 = vpack.c.bf16 %v2900, %v2896
        %v3557 = vpack.c.bf16 %v2901, %v2897
        %v3558 = vpack.c.bf16 %v2902, %v2898
        %v3559 = vpack.c.bf16 %v2907, %v2903
        %v3560 = vpack.c.bf16 %v2908, %v2904
        %v3561 = vpack.c.bf16 %v2909, %v2905
        %v3562 = vpack.c.bf16 %v2910, %v2906
        %v3563 = vpack.c.bf16 %v2915, %v2911
        %v3564 = vpack.c.bf16 %v2916, %v2912
        %v3565 = vpack.c.bf16 %v2917, %v2913
        %v3566 = vpack.c.bf16 %v2918, %v2914
        %v3567 = vpack.c.bf16 %v2923, %v2919
        %v3568 = vpack.c.bf16 %v2924, %v2920
        %v3569 = vpack.c.bf16 %v2925, %v2921
        %v3570 = vpack.c.bf16 %v2926, %v2922
        %v3571 = vpack.c.bf16 %v2931, %v2927
        %v3572 = vpack.c.bf16 %v2932, %v2928
        %v3573 = vpack.c.bf16 %v2933, %v2929
        %v3574 = vpack.c.bf16 %v2934, %v2930
        %v3575 = vpack.c.bf16 %v2939, %v2935
        %v3576 = vpack.c.bf16 %v2940, %v2936
        %v3577 = vpack.c.bf16 %v2941, %v2937
        %v3578 = vpack.c.bf16 %v2942, %v2938
        %v3579 = vpack.c.bf16 %v2947, %v2943
        %v3580 = vpack.c.bf16 %v2948, %v2944
        %v3581 = vpack.c.bf16 %v2949, %v2945
        %v3582 = vpack.c.bf16 %v2950, %v2946
        %v3583 = vpack.c.bf16 %v2955, %v2951
        %v3584 = vpack.c.bf16 %v2956, %v2952
        %v3585 = vpack.c.bf16 %v2957, %v2953
        %v3586 = vpack.c.bf16 %v2958, %v2954
        %v3587 = vpack.c.bf16 %v2963, %v2959
        %v3588 = vpack.c.bf16 %v2964, %v2960
        %v3589 = vpack.c.bf16 %v2965, %v2961
        %v3590 = vpack.c.bf16 %v2966, %v2962
        %v3591 = vpack.c.bf16 %v2971, %v2967
        %v3592 = vpack.c.bf16 %v2972, %v2968
        %v3593 = vpack.c.bf16 %v2973, %v2969
        %v3594 = vpack.c.bf16 %v2974, %v2970
        %v3595 = vpack.c.bf16 %v2979, %v2975
        %v3596 = vpack.c.bf16 %v2980, %v2976
        %v3597 = vpack.c.bf16 %v2981, %v2977
        %v3598 = vpack.c.bf16 %v2982, %v2978
        %v3599 = vpack.c.bf16 %v2987, %v2983
        %v3600 = vpack.c.bf16 %v2988, %v2984
        %v3601 = vpack.c.bf16 %v2989, %v2985
        %v3602 = vpack.c.bf16 %v2990, %v2986
        %v3603 = vpack.c.bf16 %v2995, %v2991
        %v3604 = vpack.c.bf16 %v2996, %v2992
        %v3605 = vpack.c.bf16 %v2997, %v2993
        %v3606 = vpack.c.bf16 %v2998, %v2994
        %v3607 = vpack.c.bf16 %v3003, %v2999
        %v3608 = vpack.c.bf16 %v3004, %v3000
        %v3609 = vpack.c.bf16 %v3005, %v3001
        %v3610 = vpack.c.bf16 %v3006, %v3002
        %v3611 = vpack.c.bf16 %v3011, %v3007
        %v3612 = vpack.c.bf16 %v3012, %v3008
        %v3613 = vpack.c.bf16 %v3013, %v3009
        %v3614 = vpack.c.bf16 %v3014, %v3010
        %v3615 = vpack.c.bf16 %v3019, %v3015
        %v3616 = vpack.c.bf16 %v3020, %v3016
        %v3617 = vpack.c.bf16 %v3021, %v3017
        %v3618 = vpack.c.bf16 %v3022, %v3018
        %v3619 = vpack.c.bf16 %v3027, %v3023
        %v3620 = vpack.c.bf16 %v3028, %v3024
        %v3621 = vpack.c.bf16 %v3029, %v3025
        %v3622 = vpack.c.bf16 %v3030, %v3026
        %v3623 = vpack.c.bf16 %v3035, %v3031
        %v3624 = vpack.c.bf16 %v3036, %v3032
        %v3625 = vpack.c.bf16 %v3037, %v3033
        %v3626 = vpack.c.bf16 %v3038, %v3034
        %v3627 = vpack.c.bf16 %v3043, %v3039
        %v3628 = vpack.c.bf16 %v3044, %v3040
        %v3629 = vpack.c.bf16 %v3045, %v3041
        %v3630 = vpack.c.bf16 %v3046, %v3042
        %v3631 = vpack.c.bf16 %v3051, %v3047
        %v3632 = vpack.c.bf16 %v3052, %v3048
        %v3633 = vpack.c.bf16 %v3053, %v3049
        %v3634 = vpack.c.bf16 %v3054, %v3050
        %v3635 = vpack.c.bf16 %v3059, %v3055
        %v3636 = vpack.c.bf16 %v3060, %v3056
        %v3637 = vpack.c.bf16 %v3061, %v3057
        %v3638 = vpack.c.bf16 %v3062, %v3058
        %v3639 = vpack.c.bf16 %v3067, %v3063
        %v3640 = vpack.c.bf16 %v3068, %v3064
        %v3641 = vpack.c.bf16 %v3069, %v3065
        %v3642 = vpack.c.bf16 %v3070, %v3066
        %v3643 = vpack.c.bf16 %v3075, %v3071
        %v3644 = vpack.c.bf16 %v3076, %v3072
        %v3645 = vpack.c.bf16 %v3077, %v3073
        %v3646 = vpack.c.bf16 %v3078, %v3074
        %v3647 = vpack.c.bf16 %v3083, %v3079
        %v3648 = vpack.c.bf16 %v3084, %v3080
        %v3649 = vpack.c.bf16 %v3085, %v3081
        %v3650 = vpack.c.bf16 %v3086, %v3082
        %v3651 = vpack.c.bf16 %v3091, %v3087
        %v3652 = vpack.c.bf16 %v3092, %v3088
        %v3653 = vpack.c.bf16 %v3093, %v3089
        %v3654 = vpack.c.bf16 %v3094, %v3090
        %v3655 = vpack.c.bf16 %v3099, %v3095
        %v3656 = vpack.c.bf16 %v3100, %v3096
        %v3657 = vpack.c.bf16 %v3101, %v3097
        %v3658 = vpack.c.bf16 %v3102, %v3098
        %v3659 = vpack.c.bf16 %v3107, %v3103
        %v3660 = vpack.c.bf16 %v3108, %v3104
        %v3661 = vpack.c.bf16 %v3109, %v3105
        %v3662 = vpack.c.bf16 %v3110, %v3106
        %v3663 = vpack.c.bf16 %v3115, %v3111
        %v3664 = vpack.c.bf16 %v3116, %v3112
        %v3665 = vpack.c.bf16 %v3117, %v3113
        %v3666 = vpack.c.bf16 %v3118, %v3114
        %v3667 = vpack.c.bf16 %v3123, %v3119
        %v3668 = vpack.c.bf16 %v3124, %v3120
        %v3669 = vpack.c.bf16 %v3125, %v3121
        %v3670 = vpack.c.bf16 %v3126, %v3122
        %v3671 = vpack.c.bf16 %v3131, %v3127
        %v3672 = vpack.c.bf16 %v3132, %v3128
        %v3673 = vpack.c.bf16 %v3133, %v3129
        %v3674 = vpack.c.bf16 %v3134, %v3130
        %v3675 = vpack.c.bf16 %v3139, %v3135
        %v3676 = vpack.c.bf16 %v3140, %v3136
        %v3677 = vpack.c.bf16 %v3141, %v3137
        %v3678 = vpack.c.bf16 %v3142, %v3138
        %v3679 = vpack.c.bf16 %v3147, %v3143
        %v3680 = vpack.c.bf16 %v3148, %v3144
        %v3681 = vpack.c.bf16 %v3149, %v3145
        %v3682 = vpack.c.bf16 %v3150, %v3146
        %v3683 = vpack.c.bf16 %v3155, %v3151
        %v3684 = vpack.c.bf16 %v3156, %v3152
        %v3685 = vpack.c.bf16 %v3157, %v3153
        %v3686 = vpack.c.bf16 %v3158, %v3154
        %v3687 = vpack.c.bf16 %v3163, %v3159
        %v3688 = vpack.c.bf16 %v3164, %v3160
        %v3689 = vpack.c.bf16 %v3165, %v3161
        %v3690 = vpack.c.bf16 %v3166, %v3162
        %v3691 = vpack.c.bf16 %v3171, %v3167
        %v3692 = vpack.c.bf16 %v3172, %v3168
        %v3693 = vpack.c.bf16 %v3173, %v3169
        %v3694 = vpack.c.bf16 %v3174, %v3170
        %v3695 = vpack.c.bf16 %v3179, %v3175
        %v3696 = vpack.c.bf16 %v3180, %v3176
        %v3697 = vpack.c.bf16 %v3181, %v3177
        %v3698 = vpack.c.bf16 %v3182, %v3178
        %v3699 = vpack.c.bf16 %v3187, %v3183
        %v3700 = vpack.c.bf16 %v3188, %v3184
        %v3701 = vpack.c.bf16 %v3189, %v3185
        %v3702 = vpack.c.bf16 %v3190, %v3186
        %v3703 = vld [vmem:[#allocation3] sm:$0xff]
        %v3704 = vld [vmem:[#allocation3 + $0x8] sm:$0xff]
        %v3705 = vld [vmem:[#allocation3 + $0x10] sm:$0xff]
        %v3706 = vld [vmem:[#allocation3 + $0x18] sm:$0xff]
        %3711 = vst [vmem:[#allocation1] ss:$4 sm:$0xff] %v3703
        %s3712 = scalar_lea.vmem [#allocation1], 32
        %3713 = vst [vmem:[%s3712] ss:$4 sm:$0xff] %v3704
        %v3714 = vld.sshfl [vmem:[#allocation1] sm:$0xff pattern:$0x73625140]
        %v3715 = vld.sshfl [vmem:[#allocation1 + $0x8] sm:$0xff pattern:$0x73625140]
        %v3716 = vld.sshfl [vmem:[#allocation1 + $0x10] sm:$0xff pattern:$0x73625140]
        %v3717 = vld.sshfl [vmem:[#allocation1 + $0x18] sm:$0xff pattern:$0x73625140]
        %v3718 = vld.sshfl [vmem:[#allocation1 + $0x20] sm:$0xff pattern:$0x73625140]
        %v3719 = vld.sshfl [vmem:[#allocation1 + $0x28] sm:$0xff pattern:$0x73625140]
        %v3720 = vld.sshfl [vmem:[#allocation1 + $0x30] sm:$0xff pattern:$0x73625140]
        %v3721 = vld.sshfl [vmem:[#allocation1 + $0x38] sm:$0xff pattern:$0x73625140]
        %3722 = vst [vmem:[#allocation1] ss:$4 sm:$0xff] %v3705
        %3723 = vst [vmem:[%s3712] ss:$4 sm:$0xff] %v3706
        %v3724 = vld.sshfl [vmem:[#allocation1] sm:$0xff pattern:$0x73625140]
        %v3725 = vld.sshfl [vmem:[#allocation1 + $0x8] sm:$0xff pattern:$0x73625140]
        %v3726 = vld.sshfl [vmem:[#allocation1 + $0x10] sm:$0xff pattern:$0x73625140]
        %v3727 = vld.sshfl [vmem:[#allocation1 + $0x18] sm:$0xff pattern:$0x73625140]
        %v3728 = vld.sshfl [vmem:[#allocation1 + $0x20] sm:$0xff pattern:$0x73625140]
        %v3729 = vld.sshfl [vmem:[#allocation1 + $0x28] sm:$0xff pattern:$0x73625140]
        %v3730 = vld.sshfl [vmem:[#allocation1 + $0x30] sm:$0xff pattern:$0x73625140]
        %v3731 = vld.sshfl [vmem:[#allocation1 + $0x38] sm:$0xff pattern:$0x73625140]
        %v3748 = vpack.c.bf16 %v3714, %v3714
        %v3749 = vpack.c.bf16 %v3715, %v3715
        %v3750 = vpack.c.bf16 %v3716, %v3716
        %v3751 = vpack.c.bf16 %v3717, %v3717
        %v3752 = vpack.c.bf16 %v3718, %v3718
        %v3753 = vpack.c.bf16 %v3719, %v3719
        %v3754 = vpack.c.bf16 %v3720, %v3720
        %v3755 = vpack.c.bf16 %v3721, %v3721
        %v3756 = vpack.c.bf16 %v3724, %v3724
        %v3757 = vpack.c.bf16 %v3725, %v3725
        %v3758 = vpack.c.bf16 %v3726, %v3726
        %v3759 = vpack.c.bf16 %v3727, %v3727
        %v3760 = vpack.c.bf16 %v3728, %v3728
        %v3761 = vpack.c.bf16 %v3729, %v3729
        %v3762 = vpack.c.bf16 %v3730, %v3730
        %v3763 = vpack.c.bf16 %v3731, %v3731
        %3764 = vmatpush.bf16.msra.mxu0 %v3219
        %3765 = vmatpush.bf16.msra.mxu0 %v3215
        %3766 = vmatpush.bf16.msra.mxu0 %v3211
        %3767 = vmatpush.bf16.msra.mxu0 %v3207
        %3768 = vmatpush.bf16.msra.mxu0 %v3203
        %3769 = vmatpush.bf16.msra.mxu0 %v3199
        %3770 = vmatpush.bf16.msra.mxu0 %v3195
        %3771 = vmatpush.bf16.msra.mxu0 %v3191
        %3772 = vmatmul.bf16.gmra.mxu0 %v3748
        %v3773 = vpop.f32.mrf.mxu0
        %v3774 = vadd.f32 0.0, %v3773
        %v3775 = vpop.f32.mrf.mxu0
        %3776 = vdwg.mxu0
        %3777 = vmatpush.bf16.msra.mxu0 %v3251
        %3778 = vmatpush.bf16.msra.mxu0 %v3247
        %3779 = vmatpush.bf16.msra.mxu0 %v3243
        %3780 = vmatpush.bf16.msra.mxu0 %v3239
        %3781 = vmatpush.bf16.msra.mxu0 %v3235
        %3782 = vmatpush.bf16.msra.mxu0 %v3231
        %3783 = vmatpush.bf16.msra.mxu0 %v3227
        %3784 = vmatpush.bf16.msra.mxu0 %v3223
        %3785 = vmatmul.bf16.gmra.mxu0 %v3749
        %v3786 = vpop.f32.mrf.mxu0
        %v3787 = vadd.f32 %v3774, %v3786
        %v3788 = vpop.f32.mrf.mxu0
        %3789 = vdwg.mxu0
        %3790 = vmatpush.bf16.msra.mxu0 %v3283
        %3791 = vmatpush.bf16.msra.mxu0 %v3279
        %3792 = vmatpush.bf16.msra.mxu0 %v3275
        %3793 = vmatpush.bf16.msra.mxu0 %v3271
        %3794 = vmatpush.bf16.msra.mxu0 %v3267
        %3795 = vmatpush.bf16.msra.mxu0 %v3263
        %3796 = vmatpush.bf16.msra.mxu0 %v3259
        %3797 = vmatpush.bf16.msra.mxu0 %v3255
        %3798 = vmatmul.bf16.gmra.mxu0 %v3750
        %v3799 = vpop.f32.mrf.mxu0
        %v3800 = vadd.f32 %v3787, %v3799
        %v3801 = vpop.f32.mrf.mxu0
        %3802 = vdwg.mxu0
        %3803 = vmatpush.bf16.msra.mxu0 %v3315
        %3804 = vmatpush.bf16.msra.mxu0 %v3311
        %3805 = vmatpush.bf16.msra.mxu0 %v3307
        %3806 = vmatpush.bf16.msra.mxu0 %v3303
        %3807 = vmatpush.bf16.msra.mxu0 %v3299
        %3808 = vmatpush.bf16.msra.mxu0 %v3295
        %3809 = vmatpush.bf16.msra.mxu0 %v3291
        %3810 = vmatpush.bf16.msra.mxu0 %v3287
        %3811 = vmatmul.bf16.gmra.mxu0 %v3751
        %v3812 = vpop.f32.mrf.mxu0
        %v3813 = vadd.f32 %v3800, %v3812
        %v3814 = vpop.f32.mrf.mxu0
        %3815 = vdwg.mxu0
        %3816 = vmatpush.bf16.msra.mxu0 %v3347
        %3817 = vmatpush.bf16.msra.mxu0 %v3343
        %3818 = vmatpush.bf16.msra.mxu0 %v3339
        %3819 = vmatpush.bf16.msra.mxu0 %v3335
        %3820 = vmatpush.bf16.msra.mxu0 %v3331
        %3821 = vmatpush.bf16.msra.mxu0 %v3327
        %3822 = vmatpush.bf16.msra.mxu0 %v3323
        %3823 = vmatpush.bf16.msra.mxu0 %v3319
        %3824 = vmatmul.bf16.gmra.mxu0 %v3752
        %v3825 = vpop.f32.mrf.mxu0
        %v3826 = vadd.f32 %v3813, %v3825
        %v3827 = vpop.f32.mrf.mxu0
        %3828 = vdwg.mxu0
        %3829 = vmatpush.bf16.msra.mxu0 %v3379
        %3830 = vmatpush.bf16.msra.mxu0 %v3375
        %3831 = vmatpush.bf16.msra.mxu0 %v3371
        %3832 = vmatpush.bf16.msra.mxu0 %v3367
        %3833 = vmatpush.bf16.msra.mxu0 %v3363
        %3834 = vmatpush.bf16.msra.mxu0 %v3359
        %3835 = vmatpush.bf16.msra.mxu0 %v3355
        %3836 = vmatpush.bf16.msra.mxu0 %v3351
        %3837 = vmatmul.bf16.gmra.mxu0 %v3753
        %v3838 = vpop.f32.mrf.mxu0
        %v3839 = vadd.f32 %v3826, %v3838
        %v3840 = vpop.f32.mrf.mxu0
        %3841 = vdwg.mxu0
        %3842 = vmatpush.bf16.msra.mxu0 %v3411
        %3843 = vmatpush.bf16.msra.mxu0 %v3407
        %3844 = vmatpush.bf16.msra.mxu0 %v3403
        %3845 = vmatpush.bf16.msra.mxu0 %v3399
        %3846 = vmatpush.bf16.msra.mxu0 %v3395
        %3847 = vmatpush.bf16.msra.mxu0 %v3391
        %3848 = vmatpush.bf16.msra.mxu0 %v3387
        %3849 = vmatpush.bf16.msra.mxu0 %v3383
        %3850 = vmatmul.bf16.gmra.mxu0 %v3754
        %v3851 = vpop.f32.mrf.mxu0
        %v3852 = vadd.f32 %v3839, %v3851
        %v3853 = vpop.f32.mrf.mxu0
        %3854 = vdwg.mxu0
        %3855 = vmatpush.bf16.msra.mxu0 %v3443
        %3856 = vmatpush.bf16.msra.mxu0 %v3439
        %3857 = vmatpush.bf16.msra.mxu0 %v3435
        %3858 = vmatpush.bf16.msra.mxu0 %v3431
        %3859 = vmatpush.bf16.msra.mxu0 %v3427
        %3860 = vmatpush.bf16.msra.mxu0 %v3423
        %3861 = vmatpush.bf16.msra.mxu0 %v3419
        %3862 = vmatpush.bf16.msra.mxu0 %v3415
        %3863 = vmatmul.bf16.gmra.mxu0 %v3755
        %v3864 = vpop.f32.mrf.mxu0
        %v3865 = vadd.f32 %v3852, %v3864
        %v3866 = vpop.f32.mrf.mxu0
        %3867 = vdwg.mxu0
        %3868 = vmatpush.bf16.msra.mxu0 %v3475
        %3869 = vmatpush.bf16.msra.mxu0 %v3471
        %3870 = vmatpush.bf16.msra.mxu0 %v3467
        %3871 = vmatpush.bf16.msra.mxu0 %v3463
        %3872 = vmatpush.bf16.msra.mxu0 %v3459
        %3873 = vmatpush.bf16.msra.mxu0 %v3455
        %3874 = vmatpush.bf16.msra.mxu0 %v3451
        %3875 = vmatpush.bf16.msra.mxu0 %v3447
        %3876 = vmatmul.bf16.gmra.mxu0 %v3756
        %v3877 = vpop.f32.mrf.mxu0
        %v3878 = vadd.f32 %v3865, %v3877
        %v3879 = vpop.f32.mrf.mxu0
        %3880 = vdwg.mxu0
        %3881 = vmatpush.bf16.msra.mxu0 %v3507
        %3882 = vmatpush.bf16.msra.mxu0 %v3503
        %3883 = vmatpush.bf16.msra.mxu0 %v3499
        %3884 = vmatpush.bf16.msra.mxu0 %v3495
        %3885 = vmatpush.bf16.msra.mxu0 %v3491
        %3886 = vmatpush.bf16.msra.mxu0 %v3487
        %3887 = vmatpush.bf16.msra.mxu0 %v3483
        %3888 = vmatpush.bf16.msra.mxu0 %v3479
        %3889 = vmatmul.bf16.gmra.mxu0 %v3757
        %v3890 = vpop.f32.mrf.mxu0
        %v3891 = vadd.f32 %v3878, %v3890
        %v3892 = vpop.f32.mrf.mxu0
        %3893 = vdwg.mxu0
        %3894 = vmatpush.bf16.msra.mxu0 %v3539
        %3895 = vmatpush.bf16.msra.mxu0 %v3535
        %3896 = vmatpush.bf16.msra.mxu0 %v3531
        %3897 = vmatpush.bf16.msra.mxu0 %v3527
        %3898 = vmatpush.bf16.msra.mxu0 %v3523
        %3899 = vmatpush.bf16.msra.mxu0 %v3519
        %3900 = vmatpush.bf16.msra.mxu0 %v3515
        %3901 = vmatpush.bf16.msra.mxu0 %v3511
        %3902 = vmatmul.bf16.gmra.mxu0 %v3758
        %v3903 = vpop.f32.mrf.mxu0
        %v3904 = vadd.f32 %v3891, %v3903
        %v3905 = vpop.f32.mrf.mxu0
        %3906 = vdwg.mxu0
        %3907 = vmatpush.bf16.msra.mxu0 %v3571
        %3908 = vmatpush.bf16.msra.mxu0 %v3567
        %3909 = vmatpush.bf16.msra.mxu0 %v3563
        %3910 = vmatpush.bf16.msra.mxu0 %v3559
        %3911 = vmatpush.bf16.msra.mxu0 %v3555
        %3912 = vmatpush.bf16.msra.mxu0 %v3551
        %3913 = vmatpush.bf16.msra.mxu0 %v3547
        %3914 = vmatpush.bf16.msra.mxu0 %v3543
        %3915 = vmatmul.bf16.gmra.mxu0 %v3759
        %v3916 = vpop.f32.mrf.mxu0
        %v3917 = vadd.f32 %v3904, %v3916
        %v3918 = vpop.f32.mrf.mxu0
        %3919 = vdwg.mxu0
        %3920 = vmatpush.bf16.msra.mxu0 %v3603
        %3921 = vmatpush.bf16.msra.mxu0 %v3599
        %3922 = vmatpush.bf16.msra.mxu0 %v3595
        %3923 = vmatpush.bf16.msra.mxu0 %v3591
        %3924 = vmatpush.bf16.msra.mxu0 %v3587
        %3925 = vmatpush.bf16.msra.mxu0 %v3583
        %3926 = vmatpush.bf16.msra.mxu0 %v3579
        %3927 = vmatpush.bf16.msra.mxu0 %v3575
        %3928 = vmatmul.bf16.gmra.mxu0 %v3760
        %v3929 = vpop.f32.mrf.mxu0
        %v3930 = vadd.f32 %v3917, %v3929
        %v3931 = vpop.f32.mrf.mxu0
        %3932 = vdwg.mxu0
        %3933 = vmatpush.bf16.msra.mxu0 %v3635
        %3934 = vmatpush.bf16.msra.mxu0 %v3631
        %3935 = vmatpush.bf16.msra.mxu0 %v3627
        %3936 = vmatpush.bf16.msra.mxu0 %v3623
        %3937 = vmatpush.bf16.msra.mxu0 %v3619
        %3938 = vmatpush.bf16.msra.mxu0 %v3615
        %3939 = vmatpush.bf16.msra.mxu0 %v3611
        %3940 = vmatpush.bf16.msra.mxu0 %v3607
        %3941 = vmatmul.bf16.gmra.mxu0 %v3761
        %v3942 = vpop.f32.mrf.mxu0
        %v3943 = vadd.f32 %v3930, %v3942
        %v3944 = vpop.f32.mrf.mxu0
        %3945 = vdwg.mxu0
        %3946 = vmatpush.bf16.msra.mxu0 %v3667
        %3947 = vmatpush.bf16.msra.mxu0 %v3663
        %3948 = vmatpush.bf16.msra.mxu0 %v3659
        %3949 = vmatpush.bf16.msra.mxu0 %v3655
        %3950 = vmatpush.bf16.msra.mxu0 %v3651
        %3951 = vmatpush.bf16.msra.mxu0 %v3647
        %3952 = vmatpush.bf16.msra.mxu0 %v3643
        %3953 = vmatpush.bf16.msra.mxu0 %v3639
        %3954 = vmatmul.bf16.gmra.mxu0 %v3762
        %v3955 = vpop.f32.mrf.mxu0
        %v3956 = vadd.f32 %v3943, %v3955
        %v3957 = vpop.f32.mrf.mxu0
        %3958 = vdwg.mxu0
        %3959 = vmatpush.bf16.msra.mxu0 %v3699
        %3960 = vmatpush.bf16.msra.mxu0 %v3695
        %3961 = vmatpush.bf16.msra.mxu0 %v3691
        %3962 = vmatpush.bf16.msra.mxu0 %v3687
        %3963 = vmatpush.bf16.msra.mxu0 %v3683
        %3964 = vmatpush.bf16.msra.mxu0 %v3679
        %3965 = vmatpush.bf16.msra.mxu0 %v3675
        %3966 = vmatpush.bf16.msra.mxu0 %v3671
        %3967 = vmatmul.bf16.gmra.mxu0 %v3763
        %v3968 = vpop.f32.mrf.mxu0
        %v3969 = vadd.f32 %v3956, %v3968
        %v3970 = vpop.f32.mrf.mxu0
        %3971 = vdwg.mxu0
        %3972 = vmatpush.bf16.msra.mxu0 %v3220
        %3973 = vmatpush.bf16.msra.mxu0 %v3216
        %3974 = vmatpush.bf16.msra.mxu0 %v3212
        %3975 = vmatpush.bf16.msra.mxu0 %v3208
        %3976 = vmatpush.bf16.msra.mxu0 %v3204
        %3977 = vmatpush.bf16.msra.mxu0 %v3200
        %3978 = vmatpush.bf16.msra.mxu0 %v3196
        %3979 = vmatpush.bf16.msra.mxu0 %v3192
        %3980 = vmatmul.bf16.gmra.mxu0 %v3748
        %v3981 = vpop.f32.mrf.mxu0
        %v3982 = vadd.f32 0.0, %v3981
        %v3983 = vpop.f32.mrf.mxu0
        %3984 = vdwg.mxu0
        %3985 = vmatpush.bf16.msra.mxu0 %v3252
        %3986 = vmatpush.bf16.msra.mxu0 %v3248
        %3987 = vmatpush.bf16.msra.mxu0 %v3244
        %3988 = vmatpush.bf16.msra.mxu0 %v3240
        %3989 = vmatpush.bf16.msra.mxu0 %v3236
        %3990 = vmatpush.bf16.msra.mxu0 %v3232
        %3991 = vmatpush.bf16.msra.mxu0 %v3228
        %3992 = vmatpush.bf16.msra.mxu0 %v3224
        %3993 = vmatmul.bf16.gmra.mxu0 %v3749
        %v3994 = vpop.f32.mrf.mxu0
        %v3995 = vadd.f32 %v3982, %v3994
        %v3996 = vpop.f32.mrf.mxu0
        %3997 = vdwg.mxu0
        %3998 = vmatpush.bf16.msra.mxu0 %v3284
        %3999 = vmatpush.bf16.msra.mxu0 %v3280
        %4000 = vmatpush.bf16.msra.mxu0 %v3276
        %4001 = vmatpush.bf16.msra.mxu0 %v3272
        %4002 = vmatpush.bf16.msra.mxu0 %v3268
        %4003 = vmatpush.bf16.msra.mxu0 %v3264
        %4004 = vmatpush.bf16.msra.mxu0 %v3260
        %4005 = vmatpush.bf16.msra.mxu0 %v3256
        %4006 = vmatmul.bf16.gmra.mxu0 %v3750
        %v4007 = vpop.f32.mrf.mxu0
        %v4008 = vadd.f32 %v3995, %v4007
        %v4009 = vpop.f32.mrf.mxu0
        %4010 = vdwg.mxu0
        %4011 = vmatpush.bf16.msra.mxu0 %v3316
        %4012 = vmatpush.bf16.msra.mxu0 %v3312
        %4013 = vmatpush.bf16.msra.mxu0 %v3308
        %4014 = vmatpush.bf16.msra.mxu0 %v3304
        %4015 = vmatpush.bf16.msra.mxu0 %v3300
        %4016 = vmatpush.bf16.msra.mxu0 %v3296
        %4017 = vmatpush.bf16.msra.mxu0 %v3292
        %4018 = vmatpush.bf16.msra.mxu0 %v3288
        %4019 = vmatmul.bf16.gmra.mxu0 %v3751
        %v4020 = vpop.f32.mrf.mxu0
        %v4021 = vadd.f32 %v4008, %v4020
        %v4022 = vpop.f32.mrf.mxu0
        %4023 = vdwg.mxu0
        %4024 = vmatpush.bf16.msra.mxu0 %v3348
        %4025 = vmatpush.bf16.msra.mxu0 %v3344
        %4026 = vmatpush.bf16.msra.mxu0 %v3340
        %4027 = vmatpush.bf16.msra.mxu0 %v3336
        %4028 = vmatpush.bf16.msra.mxu0 %v3332
        %4029 = vmatpush.bf16.msra.mxu0 %v3328
        %4030 = vmatpush.bf16.msra.mxu0 %v3324
        %4031 = vmatpush.bf16.msra.mxu0 %v3320
        %4032 = vmatmul.bf16.gmra.mxu0 %v3752
        %v4033 = vpop.f32.mrf.mxu0
        %v4034 = vadd.f32 %v4021, %v4033
        %v4035 = vpop.f32.mrf.mxu0
        %4036 = vdwg.mxu0
        %4037 = vmatpush.bf16.msra.mxu0 %v3380
        %4038 = vmatpush.bf16.msra.mxu0 %v3376
        %4039 = vmatpush.bf16.msra.mxu0 %v3372
        %4040 = vmatpush.bf16.msra.mxu0 %v3368
        %4041 = vmatpush.bf16.msra.mxu0 %v3364
        %4042 = vmatpush.bf16.msra.mxu0 %v3360
        %4043 = vmatpush.bf16.msra.mxu0 %v3356
        %4044 = vmatpush.bf16.msra.mxu0 %v3352
        %4045 = vmatmul.bf16.gmra.mxu0 %v3753
        %v4046 = vpop.f32.mrf.mxu0
        %v4047 = vadd.f32 %v4034, %v4046
        %v4048 = vpop.f32.mrf.mxu0
        %4049 = vdwg.mxu0
        %4050 = vmatpush.bf16.msra.mxu0 %v3412
        %4051 = vmatpush.bf16.msra.mxu0 %v3408
        %4052 = vmatpush.bf16.msra.mxu0 %v3404
        %4053 = vmatpush.bf16.msra.mxu0 %v3400
        %4054 = vmatpush.bf16.msra.mxu0 %v3396
        %4055 = vmatpush.bf16.msra.mxu0 %v3392
        %4056 = vmatpush.bf16.msra.mxu0 %v3388
        %4057 = vmatpush.bf16.msra.mxu0 %v3384
        %4058 = vmatmul.bf16.gmra.mxu0 %v3754
        %v4059 = vpop.f32.mrf.mxu0
        %v4060 = vadd.f32 %v4047, %v4059
        %v4061 = vpop.f32.mrf.mxu0
        %4062 = vdwg.mxu0
        %4063 = vmatpush.bf16.msra.mxu0 %v3444
        %4064 = vmatpush.bf16.msra.mxu0 %v3440
        %4065 = vmatpush.bf16.msra.mxu0 %v3436
        %4066 = vmatpush.bf16.msra.mxu0 %v3432
        %4067 = vmatpush.bf16.msra.mxu0 %v3428
        %4068 = vmatpush.bf16.msra.mxu0 %v3424
        %4069 = vmatpush.bf16.msra.mxu0 %v3420
        %4070 = vmatpush.bf16.msra.mxu0 %v3416
        %4071 = vmatmul.bf16.gmra.mxu0 %v3755
        %v4072 = vpop.f32.mrf.mxu0
        %v4073 = vadd.f32 %v4060, %v4072
        %v4074 = vpop.f32.mrf.mxu0
        %4075 = vdwg.mxu0
        %4076 = vmatpush.bf16.msra.mxu0 %v3476
        %4077 = vmatpush.bf16.msra.mxu0 %v3472
        %4078 = vmatpush.bf16.msra.mxu0 %v3468
        %4079 = vmatpush.bf16.msra.mxu0 %v3464
        %4080 = vmatpush.bf16.msra.mxu0 %v3460
        %4081 = vmatpush.bf16.msra.mxu0 %v3456
        %4082 = vmatpush.bf16.msra.mxu0 %v3452
        %4083 = vmatpush.bf16.msra.mxu0 %v3448
        %4084 = vmatmul.bf16.gmra.mxu0 %v3756
        %v4085 = vpop.f32.mrf.mxu0
        %v4086 = vadd.f32 %v4073, %v4085
        %v4087 = vpop.f32.mrf.mxu0
        %4088 = vdwg.mxu0
        %4089 = vmatpush.bf16.msra.mxu0 %v3508
        %4090 = vmatpush.bf16.msra.mxu0 %v3504
        %4091 = vmatpush.bf16.msra.mxu0 %v3500
        %4092 = vmatpush.bf16.msra.mxu0 %v3496
        %4093 = vmatpush.bf16.msra.mxu0 %v3492
        %4094 = vmatpush.bf16.msra.mxu0 %v3488
        %4095 = vmatpush.bf16.msra.mxu0 %v3484
        %4096 = vmatpush.bf16.msra.mxu0 %v3480
        %4097 = vmatmul.bf16.gmra.mxu0 %v3757
        %v4098 = vpop.f32.mrf.mxu0
        %v4099 = vadd.f32 %v4086, %v4098
        %v4100 = vpop.f32.mrf.mxu0
        %4101 = vdwg.mxu0
        %4102 = vmatpush.bf16.msra.mxu0 %v3540
        %4103 = vmatpush.bf16.msra.mxu0 %v3536
        %4104 = vmatpush.bf16.msra.mxu0 %v3532
        %4105 = vmatpush.bf16.msra.mxu0 %v3528
        %4106 = vmatpush.bf16.msra.mxu0 %v3524
        %4107 = vmatpush.bf16.msra.mxu0 %v3520
        %4108 = vmatpush.bf16.msra.mxu0 %v3516
        %4109 = vmatpush.bf16.msra.mxu0 %v3512
        %4110 = vmatmul.bf16.gmra.mxu0 %v3758
        %v4111 = vpop.f32.mrf.mxu0
        %v4112 = vadd.f32 %v4099, %v4111
        %v4113 = vpop.f32.mrf.mxu0
        %4114 = vdwg.mxu0
        %4115 = vmatpush.bf16.msra.mxu0 %v3572
        %4116 = vmatpush.bf16.msra.mxu0 %v3568
        %4117 = vmatpush.bf16.msra.mxu0 %v3564
        %4118 = vmatpush.bf16.msra.mxu0 %v3560
        %4119 = vmatpush.bf16.msra.mxu0 %v3556
        %4120 = vmatpush.bf16.msra.mxu0 %v3552
        %4121 = vmatpush.bf16.msra.mxu0 %v3548
        %4122 = vmatpush.bf16.msra.mxu0 %v3544
        %4123 = vmatmul.bf16.gmra.mxu0 %v3759
        %v4124 = vpop.f32.mrf.mxu0
        %v4125 = vadd.f32 %v4112, %v4124
        %v4126 = vpop.f32.mrf.mxu0
        %4127 = vdwg.mxu0
        %4128 = vmatpush.bf16.msra.mxu0 %v3604
        %4129 = vmatpush.bf16.msra.mxu0 %v3600
        %4130 = vmatpush.bf16.msra.mxu0 %v3596
        %4131 = vmatpush.bf16.msra.mxu0 %v3592
        %4132 = vmatpush.bf16.msra.mxu0 %v3588
        %4133 = vmatpush.bf16.msra.mxu0 %v3584
        %4134 = vmatpush.bf16.msra.mxu0 %v3580
        %4135 = vmatpush.bf16.msra.mxu0 %v3576
        %4136 = vmatmul.bf16.gmra.mxu0 %v3760
        %v4137 = vpop.f32.mrf.mxu0
        %v4138 = vadd.f32 %v4125, %v4137
        %v4139 = vpop.f32.mrf.mxu0
        %4140 = vdwg.mxu0
        %4141 = vmatpush.bf16.msra.mxu0 %v3636
        %4142 = vmatpush.bf16.msra.mxu0 %v3632
        %4143 = vmatpush.bf16.msra.mxu0 %v3628
        %4144 = vmatpush.bf16.msra.mxu0 %v3624
        %4145 = vmatpush.bf16.msra.mxu0 %v3620
        %4146 = vmatpush.bf16.msra.mxu0 %v3616
        %4147 = vmatpush.bf16.msra.mxu0 %v3612
        %4148 = vmatpush.bf16.msra.mxu0 %v3608
        %4149 = vmatmul.bf16.gmra.mxu0 %v3761
        %v4150 = vpop.f32.mrf.mxu0
        %v4151 = vadd.f32 %v4138, %v4150
        %v4152 = vpop.f32.mrf.mxu0
        %4153 = vdwg.mxu0
        %4154 = vmatpush.bf16.msra.mxu0 %v3668
        %4155 = vmatpush.bf16.msra.mxu0 %v3664
        %4156 = vmatpush.bf16.msra.mxu0 %v3660
        %4157 = vmatpush.bf16.msra.mxu0 %v3656
        %4158 = vmatpush.bf16.msra.mxu0 %v3652
        %4159 = vmatpush.bf16.msra.mxu0 %v3648
        %4160 = vmatpush.bf16.msra.mxu0 %v3644
        %4161 = vmatpush.bf16.msra.mxu0 %v3640
        %4162 = vmatmul.bf16.gmra.mxu0 %v3762
        %v4163 = vpop.f32.mrf.mxu0
        %v4164 = vadd.f32 %v4151, %v4163
        %v4165 = vpop.f32.mrf.mxu0
        %4166 = vdwg.mxu0
        %4167 = vmatpush.bf16.msra.mxu0 %v3700
        %4168 = vmatpush.bf16.msra.mxu0 %v3696
        %4169 = vmatpush.bf16.msra.mxu0 %v3692
        %4170 = vmatpush.bf16.msra.mxu0 %v3688
        %4171 = vmatpush.bf16.msra.mxu0 %v3684
        %4172 = vmatpush.bf16.msra.mxu0 %v3680
        %4173 = vmatpush.bf16.msra.mxu0 %v3676
        %4174 = vmatpush.bf16.msra.mxu0 %v3672
        %4175 = vmatmul.bf16.gmra.mxu0 %v3763
        %v4176 = vpop.f32.mrf.mxu0
        %v4177 = vadd.f32 %v4164, %v4176
        %v4178 = vpop.f32.mrf.mxu0
        %4179 = vdwg.mxu0
        %4180 = vmatpush.bf16.msra.mxu0 %v3221
        %4181 = vmatpush.bf16.msra.mxu0 %v3217
        %4182 = vmatpush.bf16.msra.mxu0 %v3213
        %4183 = vmatpush.bf16.msra.mxu0 %v3209
        %4184 = vmatpush.bf16.msra.mxu0 %v3205
        %4185 = vmatpush.bf16.msra.mxu0 %v3201
        %4186 = vmatpush.bf16.msra.mxu0 %v3197
        %4187 = vmatpush.bf16.msra.mxu0 %v3193
        %4188 = vmatmul.bf16.gmra.mxu0 %v3748
        %v4189 = vpop.f32.mrf.mxu0
        %v4190 = vadd.f32 0.0, %v4189
        %v4191 = vpop.f32.mrf.mxu0
        %4192 = vdwg.mxu0
        %4193 = vmatpush.bf16.msra.mxu0 %v3253
        %4194 = vmatpush.bf16.msra.mxu0 %v3249
        %4195 = vmatpush.bf16.msra.mxu0 %v3245
        %4196 = vmatpush.bf16.msra.mxu0 %v3241
        %4197 = vmatpush.bf16.msra.mxu0 %v3237
        %4198 = vmatpush.bf16.msra.mxu0 %v3233
        %4199 = vmatpush.bf16.msra.mxu0 %v3229
        %4200 = vmatpush.bf16.msra.mxu0 %v3225
        %4201 = vmatmul.bf16.gmra.mxu0 %v3749
        %v4202 = vpop.f32.mrf.mxu0
        %v4203 = vadd.f32 %v4190, %v4202
        %v4204 = vpop.f32.mrf.mxu0
        %4205 = vdwg.mxu0
        %4206 = vmatpush.bf16.msra.mxu0 %v3285
        %4207 = vmatpush.bf16.msra.mxu0 %v3281
        %4208 = vmatpush.bf16.msra.mxu0 %v3277
        %4209 = vmatpush.bf16.msra.mxu0 %v3273
        %4210 = vmatpush.bf16.msra.mxu0 %v3269
        %4211 = vmatpush.bf16.msra.mxu0 %v3265
        %4212 = vmatpush.bf16.msra.mxu0 %v3261
        %4213 = vmatpush.bf16.msra.mxu0 %v3257
        %4214 = vmatmul.bf16.gmra.mxu0 %v3750
        %v4215 = vpop.f32.mrf.mxu0
        %v4216 = vadd.f32 %v4203, %v4215
        %v4217 = vpop.f32.mrf.mxu0
        %4218 = vdwg.mxu0
        %4219 = vmatpush.bf16.msra.mxu0 %v3317
        %4220 = vmatpush.bf16.msra.mxu0 %v3313
        %4221 = vmatpush.bf16.msra.mxu0 %v3309
        %4222 = vmatpush.bf16.msra.mxu0 %v3305
        %4223 = vmatpush.bf16.msra.mxu0 %v3301
        %4224 = vmatpush.bf16.msra.mxu0 %v3297
        %4225 = vmatpush.bf16.msra.mxu0 %v3293
        %4226 = vmatpush.bf16.msra.mxu0 %v3289
        %4227 = vmatmul.bf16.gmra.mxu0 %v3751
        %v4228 = vpop.f32.mrf.mxu0
        %v4229 = vadd.f32 %v4216, %v4228
        %v4230 = vpop.f32.mrf.mxu0
        %4231 = vdwg.mxu0
        %4232 = vmatpush.bf16.msra.mxu0 %v3349
        %4233 = vmatpush.bf16.msra.mxu0 %v3345
        %4234 = vmatpush.bf16.msra.mxu0 %v3341
        %4235 = vmatpush.bf16.msra.mxu0 %v3337
        %4236 = vmatpush.bf16.msra.mxu0 %v3333
        %4237 = vmatpush.bf16.msra.mxu0 %v3329
        %4238 = vmatpush.bf16.msra.mxu0 %v3325
        %4239 = vmatpush.bf16.msra.mxu0 %v3321
        %4240 = vmatmul.bf16.gmra.mxu0 %v3752
        %v4241 = vpop.f32.mrf.mxu0
        %v4242 = vadd.f32 %v4229, %v4241
        %v4243 = vpop.f32.mrf.mxu0
        %4244 = vdwg.mxu0
        %4245 = vmatpush.bf16.msra.mxu0 %v3381
        %4246 = vmatpush.bf16.msra.mxu0 %v3377
        %4247 = vmatpush.bf16.msra.mxu0 %v3373
        %4248 = vmatpush.bf16.msra.mxu0 %v3369
        %4249 = vmatpush.bf16.msra.mxu0 %v3365
        %4250 = vmatpush.bf16.msra.mxu0 %v3361
        %4251 = vmatpush.bf16.msra.mxu0 %v3357
        %4252 = vmatpush.bf16.msra.mxu0 %v3353
        %4253 = vmatmul.bf16.gmra.mxu0 %v3753
        %v4254 = vpop.f32.mrf.mxu0
        %v4255 = vadd.f32 %v4242, %v4254
        %v4256 = vpop.f32.mrf.mxu0
        %4257 = vdwg.mxu0
        %4258 = vmatpush.bf16.msra.mxu0 %v3413
        %4259 = vmatpush.bf16.msra.mxu0 %v3409
        %4260 = vmatpush.bf16.msra.mxu0 %v3405
        %4261 = vmatpush.bf16.msra.mxu0 %v3401
        %4262 = vmatpush.bf16.msra.mxu0 %v3397
        %4263 = vmatpush.bf16.msra.mxu0 %v3393
        %4264 = vmatpush.bf16.msra.mxu0 %v3389
        %4265 = vmatpush.bf16.msra.mxu0 %v3385
        %4266 = vmatmul.bf16.gmra.mxu0 %v3754
        %v4267 = vpop.f32.mrf.mxu0
        %v4268 = vadd.f32 %v4255, %v4267
        %v4269 = vpop.f32.mrf.mxu0
        %4270 = vdwg.mxu0
        %4271 = vmatpush.bf16.msra.mxu0 %v3445
        %4272 = vmatpush.bf16.msra.mxu0 %v3441
        %4273 = vmatpush.bf16.msra.mxu0 %v3437
        %4274 = vmatpush.bf16.msra.mxu0 %v3433
        %4275 = vmatpush.bf16.msra.mxu0 %v3429
        %4276 = vmatpush.bf16.msra.mxu0 %v3425
        %4277 = vmatpush.bf16.msra.mxu0 %v3421
        %4278 = vmatpush.bf16.msra.mxu0 %v3417
        %4279 = vmatmul.bf16.gmra.mxu0 %v3755
        %v4280 = vpop.f32.mrf.mxu0
        %v4281 = vadd.f32 %v4268, %v4280
        %v4282 = vpop.f32.mrf.mxu0
        %4283 = vdwg.mxu0
        %4284 = vmatpush.bf16.msra.mxu0 %v3477
        %4285 = vmatpush.bf16.msra.mxu0 %v3473
        %4286 = vmatpush.bf16.msra.mxu0 %v3469
        %4287 = vmatpush.bf16.msra.mxu0 %v3465
        %4288 = vmatpush.bf16.msra.mxu0 %v3461
        %4289 = vmatpush.bf16.msra.mxu0 %v3457
        %4290 = vmatpush.bf16.msra.mxu0 %v3453
        %4291 = vmatpush.bf16.msra.mxu0 %v3449
        %4292 = vmatmul.bf16.gmra.mxu0 %v3756
        %v4293 = vpop.f32.mrf.mxu0
        %v4294 = vadd.f32 %v4281, %v4293
        %v4295 = vpop.f32.mrf.mxu0
        %4296 = vdwg.mxu0
        %4297 = vmatpush.bf16.msra.mxu0 %v3509
        %4298 = vmatpush.bf16.msra.mxu0 %v3505
        %4299 = vmatpush.bf16.msra.mxu0 %v3501
        %4300 = vmatpush.bf16.msra.mxu0 %v3497
        %4301 = vmatpush.bf16.msra.mxu0 %v3493
        %4302 = vmatpush.bf16.msra.mxu0 %v3489
        %4303 = vmatpush.bf16.msra.mxu0 %v3485
        %4304 = vmatpush.bf16.msra.mxu0 %v3481
        %4305 = vmatmul.bf16.gmra.mxu0 %v3757
        %v4306 = vpop.f32.mrf.mxu0
        %v4307 = vadd.f32 %v4294, %v4306
        %v4308 = vpop.f32.mrf.mxu0
        %4309 = vdwg.mxu0
        %4310 = vmatpush.bf16.msra.mxu0 %v3541
        %4311 = vmatpush.bf16.msra.mxu0 %v3537
        %4312 = vmatpush.bf16.msra.mxu0 %v3533
        %4313 = vmatpush.bf16.msra.mxu0 %v3529
        %4314 = vmatpush.bf16.msra.mxu0 %v3525
        %4315 = vmatpush.bf16.msra.mxu0 %v3521
        %4316 = vmatpush.bf16.msra.mxu0 %v3517
        %4317 = vmatpush.bf16.msra.mxu0 %v3513
        %4318 = vmatmul.bf16.gmra.mxu0 %v3758
        %v4319 = vpop.f32.mrf.mxu0
        %v4320 = vadd.f32 %v4307, %v4319
        %v4321 = vpop.f32.mrf.mxu0
        %4322 = vdwg.mxu0
        %4323 = vmatpush.bf16.msra.mxu0 %v3573
        %4324 = vmatpush.bf16.msra.mxu0 %v3569
        %4325 = vmatpush.bf16.msra.mxu0 %v3565
        %4326 = vmatpush.bf16.msra.mxu0 %v3561
        %4327 = vmatpush.bf16.msra.mxu0 %v3557
        %4328 = vmatpush.bf16.msra.mxu0 %v3553
        %4329 = vmatpush.bf16.msra.mxu0 %v3549
        %4330 = vmatpush.bf16.msra.mxu0 %v3545
        %4331 = vmatmul.bf16.gmra.mxu0 %v3759
        %v4332 = vpop.f32.mrf.mxu0
        %v4333 = vadd.f32 %v4320, %v4332
        %v4334 = vpop.f32.mrf.mxu0
        %4335 = vdwg.mxu0
        %4336 = vmatpush.bf16.msra.mxu0 %v3605
        %4337 = vmatpush.bf16.msra.mxu0 %v3601
        %4338 = vmatpush.bf16.msra.mxu0 %v3597
        %4339 = vmatpush.bf16.msra.mxu0 %v3593
        %4340 = vmatpush.bf16.msra.mxu0 %v3589
        %4341 = vmatpush.bf16.msra.mxu0 %v3585
        %4342 = vmatpush.bf16.msra.mxu0 %v3581
        %4343 = vmatpush.bf16.msra.mxu0 %v3577
        %4344 = vmatmul.bf16.gmra.mxu0 %v3760
        %v4345 = vpop.f32.mrf.mxu0
        %v4346 = vadd.f32 %v4333, %v4345
        %v4347 = vpop.f32.mrf.mxu0
        %4348 = vdwg.mxu0
        %4349 = vmatpush.bf16.msra.mxu0 %v3637
        %4350 = vmatpush.bf16.msra.mxu0 %v3633
        %4351 = vmatpush.bf16.msra.mxu0 %v3629
        %4352 = vmatpush.bf16.msra.mxu0 %v3625
        %4353 = vmatpush.bf16.msra.mxu0 %v3621
        %4354 = vmatpush.bf16.msra.mxu0 %v3617
        %4355 = vmatpush.bf16.msra.mxu0 %v3613
        %4356 = vmatpush.bf16.msra.mxu0 %v3609
        %4357 = vmatmul.bf16.gmra.mxu0 %v3761
        %v4358 = vpop.f32.mrf.mxu0
        %v4359 = vadd.f32 %v4346, %v4358
        %v4360 = vpop.f32.mrf.mxu0
        %4361 = vdwg.mxu0
        %4362 = vmatpush.bf16.msra.mxu0 %v3669
        %4363 = vmatpush.bf16.msra.mxu0 %v3665
        %4364 = vmatpush.bf16.msra.mxu0 %v3661
        %4365 = vmatpush.bf16.msra.mxu0 %v3657
        %4366 = vmatpush.bf16.msra.mxu0 %v3653
        %4367 = vmatpush.bf16.msra.mxu0 %v3649
        %4368 = vmatpush.bf16.msra.mxu0 %v3645
        %4369 = vmatpush.bf16.msra.mxu0 %v3641
        %4370 = vmatmul.bf16.gmra.mxu0 %v3762
        %v4371 = vpop.f32.mrf.mxu0
        %v4372 = vadd.f32 %v4359, %v4371
        %v4373 = vpop.f32.mrf.mxu0
        %4374 = vdwg.mxu0
        %4375 = vmatpush.bf16.msra.mxu0 %v3701
        %4376 = vmatpush.bf16.msra.mxu0 %v3697
        %4377 = vmatpush.bf16.msra.mxu0 %v3693
        %4378 = vmatpush.bf16.msra.mxu0 %v3689
        %4379 = vmatpush.bf16.msra.mxu0 %v3685
        %4380 = vmatpush.bf16.msra.mxu0 %v3681
        %4381 = vmatpush.bf16.msra.mxu0 %v3677
        %4382 = vmatpush.bf16.msra.mxu0 %v3673
        %4383 = vmatmul.bf16.gmra.mxu0 %v3763
        %v4384 = vpop.f32.mrf.mxu0
        %v4385 = vadd.f32 %v4372, %v4384
        %v4386 = vpop.f32.mrf.mxu0
        %4387 = vdwg.mxu0
        %4388 = vmatpush.bf16.msra.mxu0 %v3222
        %4389 = vmatpush.bf16.msra.mxu0 %v3218
        %4390 = vmatpush.bf16.msra.mxu0 %v3214
        %4391 = vmatpush.bf16.msra.mxu0 %v3210
        %4392 = vmatpush.bf16.msra.mxu0 %v3206
        %4393 = vmatpush.bf16.msra.mxu0 %v3202
        %4394 = vmatpush.bf16.msra.mxu0 %v3198
        %4395 = vmatpush.bf16.msra.mxu0 %v3194
        %4396 = vmatmul.bf16.gmra.mxu0 %v3748
        %v4397 = vpop.f32.mrf.mxu0
        %v4398 = vadd.f32 0.0, %v4397
        %v4399 = vpop.f32.mrf.mxu0
        %4400 = vdwg.mxu0
        %4401 = vmatpush.bf16.msra.mxu0 %v3254
        %4402 = vmatpush.bf16.msra.mxu0 %v3250
        %4403 = vmatpush.bf16.msra.mxu0 %v3246
        %4404 = vmatpush.bf16.msra.mxu0 %v3242
        %4405 = vmatpush.bf16.msra.mxu0 %v3238
        %4406 = vmatpush.bf16.msra.mxu0 %v3234
        %4407 = vmatpush.bf16.msra.mxu0 %v3230
        %4408 = vmatpush.bf16.msra.mxu0 %v3226
        %4409 = vmatmul.bf16.gmra.mxu0 %v3749
        %v4410 = vpop.f32.mrf.mxu0
        %v4411 = vadd.f32 %v4398, %v4410
        %v4412 = vpop.f32.mrf.mxu0
        %4413 = vdwg.mxu0
        %4414 = vmatpush.bf16.msra.mxu0 %v3286
        %4415 = vmatpush.bf16.msra.mxu0 %v3282
        %4416 = vmatpush.bf16.msra.mxu0 %v3278
        %4417 = vmatpush.bf16.msra.mxu0 %v3274
        %4418 = vmatpush.bf16.msra.mxu0 %v3270
        %4419 = vmatpush.bf16.msra.mxu0 %v3266
        %4420 = vmatpush.bf16.msra.mxu0 %v3262
        %4421 = vmatpush.bf16.msra.mxu0 %v3258
        %4422 = vmatmul.bf16.gmra.mxu0 %v3750
        %v4423 = vpop.f32.mrf.mxu0
        %v4424 = vadd.f32 %v4411, %v4423
        %v4425 = vpop.f32.mrf.mxu0
        %4426 = vdwg.mxu0
        %4427 = vmatpush.bf16.msra.mxu0 %v3318
        %4428 = vmatpush.bf16.msra.mxu0 %v3314
        %4429 = vmatpush.bf16.msra.mxu0 %v3310
        %4430 = vmatpush.bf16.msra.mxu0 %v3306
        %4431 = vmatpush.bf16.msra.mxu0 %v3302
        %4432 = vmatpush.bf16.msra.mxu0 %v3298
        %4433 = vmatpush.bf16.msra.mxu0 %v3294
        %4434 = vmatpush.bf16.msra.mxu0 %v3290
        %4435 = vmatmul.bf16.gmra.mxu0 %v3751
        %v4436 = vpop.f32.mrf.mxu0
        %v4437 = vadd.f32 %v4424, %v4436
        %v4438 = vpop.f32.mrf.mxu0
        %4439 = vdwg.mxu0
        %4440 = vmatpush.bf16.msra.mxu0 %v3350
        %4441 = vmatpush.bf16.msra.mxu0 %v3346
        %4442 = vmatpush.bf16.msra.mxu0 %v3342
        %4443 = vmatpush.bf16.msra.mxu0 %v3338
        %4444 = vmatpush.bf16.msra.mxu0 %v3334
        %4445 = vmatpush.bf16.msra.mxu0 %v3330
        %4446 = vmatpush.bf16.msra.mxu0 %v3326
        %4447 = vmatpush.bf16.msra.mxu0 %v3322
        %4448 = vmatmul.bf16.gmra.mxu0 %v3752
        %v4449 = vpop.f32.mrf.mxu0
        %v4450 = vadd.f32 %v4437, %v4449
        %v4451 = vpop.f32.mrf.mxu0
        %4452 = vdwg.mxu0
        %4453 = vmatpush.bf16.msra.mxu0 %v3382
        %4454 = vmatpush.bf16.msra.mxu0 %v3378
        %4455 = vmatpush.bf16.msra.mxu0 %v3374
        %4456 = vmatpush.bf16.msra.mxu0 %v3370
        %4457 = vmatpush.bf16.msra.mxu0 %v3366
        %4458 = vmatpush.bf16.msra.mxu0 %v3362
        %4459 = vmatpush.bf16.msra.mxu0 %v3358
        %4460 = vmatpush.bf16.msra.mxu0 %v3354
        %4461 = vmatmul.bf16.gmra.mxu0 %v3753
        %v4462 = vpop.f32.mrf.mxu0
        %v4463 = vadd.f32 %v4450, %v4462
        %v4464 = vpop.f32.mrf.mxu0
        %4465 = vdwg.mxu0
        %4466 = vmatpush.bf16.msra.mxu0 %v3414
        %4467 = vmatpush.bf16.msra.mxu0 %v3410
        %4468 = vmatpush.bf16.msra.mxu0 %v3406
        %4469 = vmatpush.bf16.msra.mxu0 %v3402
        %4470 = vmatpush.bf16.msra.mxu0 %v3398
        %4471 = vmatpush.bf16.msra.mxu0 %v3394
        %4472 = vmatpush.bf16.msra.mxu0 %v3390
        %4473 = vmatpush.bf16.msra.mxu0 %v3386
        %4474 = vmatmul.bf16.gmra.mxu0 %v3754
        %v4475 = vpop.f32.mrf.mxu0
        %v4476 = vadd.f32 %v4463, %v4475
        %v4477 = vpop.f32.mrf.mxu0
        %4478 = vdwg.mxu0
        %4479 = vmatpush.bf16.msra.mxu0 %v3446
        %4480 = vmatpush.bf16.msra.mxu0 %v3442
        %4481 = vmatpush.bf16.msra.mxu0 %v3438
        %4482 = vmatpush.bf16.msra.mxu0 %v3434
        %4483 = vmatpush.bf16.msra.mxu0 %v3430
        %4484 = vmatpush.bf16.msra.mxu0 %v3426
        %4485 = vmatpush.bf16.msra.mxu0 %v3422
        %4486 = vmatpush.bf16.msra.mxu0 %v3418
        %4487 = vmatmul.bf16.gmra.mxu0 %v3755
        %v4488 = vpop.f32.mrf.mxu0
        %v4489 = vadd.f32 %v4476, %v4488
        %v4490 = vpop.f32.mrf.mxu0
        %4491 = vdwg.mxu0
        %4492 = vmatpush.bf16.msra.mxu0 %v3478
        %4493 = vmatpush.bf16.msra.mxu0 %v3474
        %4494 = vmatpush.bf16.msra.mxu0 %v3470
        %4495 = vmatpush.bf16.msra.mxu0 %v3466
        %4496 = vmatpush.bf16.msra.mxu0 %v3462
        %4497 = vmatpush.bf16.msra.mxu0 %v3458
        %4498 = vmatpush.bf16.msra.mxu0 %v3454
        %4499 = vmatpush.bf16.msra.mxu0 %v3450
        %4500 = vmatmul.bf16.gmra.mxu0 %v3756
        %v4501 = vpop.f32.mrf.mxu0
        %v4502 = vadd.f32 %v4489, %v4501
        %v4503 = vpop.f32.mrf.mxu0
        %4504 = vdwg.mxu0
        %4505 = vmatpush.bf16.msra.mxu0 %v3510
        %4506 = vmatpush.bf16.msra.mxu0 %v3506
        %4507 = vmatpush.bf16.msra.mxu0 %v3502
        %4508 = vmatpush.bf16.msra.mxu0 %v3498
        %4509 = vmatpush.bf16.msra.mxu0 %v3494
        %4510 = vmatpush.bf16.msra.mxu0 %v3490
        %4511 = vmatpush.bf16.msra.mxu0 %v3486
        %4512 = vmatpush.bf16.msra.mxu0 %v3482
        %4513 = vmatmul.bf16.gmra.mxu0 %v3757
        %v4514 = vpop.f32.mrf.mxu0
        %v4515 = vadd.f32 %v4502, %v4514
        %v4516 = vpop.f32.mrf.mxu0
        %4517 = vdwg.mxu0
        %4518 = vmatpush.bf16.msra.mxu0 %v3542
        %4519 = vmatpush.bf16.msra.mxu0 %v3538
        %4520 = vmatpush.bf16.msra.mxu0 %v3534
        %4521 = vmatpush.bf16.msra.mxu0 %v3530
        %4522 = vmatpush.bf16.msra.mxu0 %v3526
        %4523 = vmatpush.bf16.msra.mxu0 %v3522
        %4524 = vmatpush.bf16.msra.mxu0 %v3518
        %4525 = vmatpush.bf16.msra.mxu0 %v3514
        %4526 = vmatmul.bf16.gmra.mxu0 %v3758
        %v4527 = vpop.f32.mrf.mxu0
        %v4528 = vadd.f32 %v4515, %v4527
        %v4529 = vpop.f32.mrf.mxu0
        %4530 = vdwg.mxu0
        %4531 = vmatpush.bf16.msra.mxu0 %v3574
        %4532 = vmatpush.bf16.msra.mxu0 %v3570
        %4533 = vmatpush.bf16.msra.mxu0 %v3566
        %4534 = vmatpush.bf16.msra.mxu0 %v3562
        %4535 = vmatpush.bf16.msra.mxu0 %v3558
        %4536 = vmatpush.bf16.msra.mxu0 %v3554
        %4537 = vmatpush.bf16.msra.mxu0 %v3550
        %4538 = vmatpush.bf16.msra.mxu0 %v3546
        %4539 = vmatmul.bf16.gmra.mxu0 %v3759
        %v4540 = vpop.f32.mrf.mxu0
        %v4541 = vadd.f32 %v4528, %v4540
        %v4542 = vpop.f32.mrf.mxu0
        %4543 = vdwg.mxu0
        %4544 = vmatpush.bf16.msra.mxu0 %v3606
        %4545 = vmatpush.bf16.msra.mxu0 %v3602
        %4546 = vmatpush.bf16.msra.mxu0 %v3598
        %4547 = vmatpush.bf16.msra.mxu0 %v3594
        %4548 = vmatpush.bf16.msra.mxu0 %v3590
        %4549 = vmatpush.bf16.msra.mxu0 %v3586
        %4550 = vmatpush.bf16.msra.mxu0 %v3582
        %4551 = vmatpush.bf16.msra.mxu0 %v3578
        %4552 = vmatmul.bf16.gmra.mxu0 %v3760
        %v4553 = vpop.f32.mrf.mxu0
        %v4554 = vadd.f32 %v4541, %v4553
        %v4555 = vpop.f32.mrf.mxu0
        %4556 = vdwg.mxu0
        %4557 = vmatpush.bf16.msra.mxu0 %v3638
        %4558 = vmatpush.bf16.msra.mxu0 %v3634
        %4559 = vmatpush.bf16.msra.mxu0 %v3630
        %4560 = vmatpush.bf16.msra.mxu0 %v3626
        %4561 = vmatpush.bf16.msra.mxu0 %v3622
        %4562 = vmatpush.bf16.msra.mxu0 %v3618
        %4563 = vmatpush.bf16.msra.mxu0 %v3614
        %4564 = vmatpush.bf16.msra.mxu0 %v3610
        %4565 = vmatmul.bf16.gmra.mxu0 %v3761
        %v4566 = vpop.f32.mrf.mxu0
        %v4567 = vadd.f32 %v4554, %v4566
        %v4568 = vpop.f32.mrf.mxu0
        %4569 = vdwg.mxu0
        %4570 = vmatpush.bf16.msra.mxu0 %v3670
        %4571 = vmatpush.bf16.msra.mxu0 %v3666
        %4572 = vmatpush.bf16.msra.mxu0 %v3662
        %4573 = vmatpush.bf16.msra.mxu0 %v3658
        %4574 = vmatpush.bf16.msra.mxu0 %v3654
        %4575 = vmatpush.bf16.msra.mxu0 %v3650
        %4576 = vmatpush.bf16.msra.mxu0 %v3646
        %4577 = vmatpush.bf16.msra.mxu0 %v3642
        %4578 = vmatmul.bf16.gmra.mxu0 %v3762
        %v4579 = vpop.f32.mrf.mxu0
        %v4580 = vadd.f32 %v4567, %v4579
        %v4581 = vpop.f32.mrf.mxu0
        %4582 = vdwg.mxu0
        %4583 = vmatpush.bf16.msra.mxu0 %v3702
        %4584 = vmatpush.bf16.msra.mxu0 %v3698
        %4585 = vmatpush.bf16.msra.mxu0 %v3694
        %4586 = vmatpush.bf16.msra.mxu0 %v3690
        %4587 = vmatpush.bf16.msra.mxu0 %v3686
        %4588 = vmatpush.bf16.msra.mxu0 %v3682
        %4589 = vmatpush.bf16.msra.mxu0 %v3678
        %4590 = vmatpush.bf16.msra.mxu0 %v3674
        %4591 = vmatmul.bf16.gmra.mxu0 %v3763
        %v4592 = vpop.f32.mrf.mxu0
        %v4593 = vadd.f32 %v4580, %v4592
        %v4594 = vpop.f32.mrf.mxu0
        %4595 = vdwg.mxu0
        %v4596 = vld [vmem:[%s742] sm:$0xf]
        %v4598 = vperm.slane %v4596, 0
        %v4599 = vperm.slane %v4596, 1
        %v4600 = vperm.slane %v4596, 2
        %v4601 = vperm.slane %v4596, 3
        %v4606 = vmul.f32 %v3969, %v4598
        %v4607 = vmul.f32 %v4177, %v4599
        %v4608 = vmul.f32 %v4385, %v4600
        %v4609 = vmul.f32 %v4593, %v4601
        %v4610 = vld [vmem:[%s752] sm:$0xf]
        %v4612 = vperm.slane %v4610, 0
        %v4613 = vperm.slane %v4610, 1
        %v4614 = vperm.slane %v4610, 2
        %v4615 = vperm.slane %v4610, 3
        %v4620 = vadd.f32 %v4606, %v4612
        %v4621 = vadd.f32 %v4607, %v4613
        %v4622 = vadd.f32 %v4608, %v4614
        %v4623 = vadd.f32 %v4609, %v4615
        %v4624 = vmax.f32 %v4620, 0.0
        %v4625 = vmax.f32 %v4621, 0.0
        %v4626 = vmax.f32 %v4622, 0.0
        %v4627 = vmax.f32 %v4623, 0.0
        %v4628 = vld [vmem:[#allocation2] sm:$0xff]
        %v4629 = vpack.c.bf16 %v4624, %v4624
        %v4630 = vpack.c.bf16 %v4625, %v4625
        %v4631 = vpack.c.bf16 %v4626, %v4626
        %v4632 = vpack.c.bf16 %v4627, %v4627
        %v4633 = vld [vmem:[%s762] sm:$0xff]
        %v4634 = vld [vmem:[%s762 + $0x8] sm:$0xff]
        %v4635 = vld [vmem:[%s762 + $0x10] sm:$0xff]
        %v4636 = vld [vmem:[%s762 + $0x18] sm:$0xff]
        %v4637 = vld [vmem:[%s762 + $0x20] sm:$0xff]
        %v4638 = vld [vmem:[%s762 + $0x28] sm:$0xff]
        %v4639 = vld [vmem:[%s762 + $0x30] sm:$0xff]
        %v4640 = vld [vmem:[%s762 + $0x38] sm:$0xff]
        %v4641 = vld [vmem:[%s762 + $0x40] sm:$0xff]
        %v4642 = vld [vmem:[%s762 + $0x48] sm:$0xff]
        %v4643 = vld [vmem:[%s762 + $0x50] sm:$0xff]
        %v4644 = vld [vmem:[%s762 + $0x58] sm:$0xff]
        %v4645 = vld [vmem:[%s762 + $0x60] sm:$0xff]
        %v4646 = vld [vmem:[%s762 + $0x68] sm:$0xff]
        %v4647 = vld [vmem:[%s762 + $0x70] sm:$0xff]
        %v4648 = vld [vmem:[%s762 + $0x78] sm:$0xff]
        %v4649 = vld [vmem:[%s762 + $0x80] sm:$0xff]
        %v4650 = vld [vmem:[%s762 + $0x88] sm:$0xff]
        %v4651 = vld [vmem:[%s762 + $0x90] sm:$0xff]
        %v4652 = vld [vmem:[%s762 + $0x98] sm:$0xff]
        %v4653 = vld [vmem:[%s762 + $0xa0] sm:$0xff]
        %v4654 = vld [vmem:[%s762 + $0xa8] sm:$0xff]
        %v4655 = vld [vmem:[%s762 + $0xb0] sm:$0xff]
        %v4656 = vld [vmem:[%s762 + $0xb8] sm:$0xff]
        %v4657 = vld [vmem:[%s762 + $0xc0] sm:$0xff]
        %v4658 = vld [vmem:[%s762 + $0xc8] sm:$0xff]
        %v4659 = vld [vmem:[%s762 + $0xd0] sm:$0xff]
        %v4660 = vld [vmem:[%s762 + $0xd8] sm:$0xff]
        %v4661 = vld [vmem:[%s762 + $0xe0] sm:$0xff]
        %v4662 = vld [vmem:[%s762 + $0xe8] sm:$0xff]
        %v4663 = vld [vmem:[%s762 + $0xf0] sm:$0xff]
        %v4664 = vld [vmem:[%s762 + $0xf8] sm:$0xff]
        %v4665 = vld [vmem:[%s762 + $0x100] sm:$0xff]
        %v4666 = vld [vmem:[%s762 + $0x108] sm:$0xff]
        %v4667 = vld [vmem:[%s762 + $0x110] sm:$0xff]
        %v4668 = vld [vmem:[%s762 + $0x118] sm:$0xff]
        %v4669 = vld [vmem:[%s762 + $0x120] sm:$0xff]
        %v4670 = vld [vmem:[%s762 + $0x128] sm:$0xff]
        %v4671 = vld [vmem:[%s762 + $0x130] sm:$0xff]
        %v4672 = vld [vmem:[%s762 + $0x138] sm:$0xff]
        %v4673 = vld [vmem:[%s762 + $0x140] sm:$0xff]
        %v4674 = vld [vmem:[%s762 + $0x148] sm:$0xff]
        %v4675 = vld [vmem:[%s762 + $0x150] sm:$0xff]
        %v4676 = vld [vmem:[%s762 + $0x158] sm:$0xff]
        %v4677 = vld [vmem:[%s762 + $0x160] sm:$0xff]
        %v4678 = vld [vmem:[%s762 + $0x168] sm:$0xff]
        %v4679 = vld [vmem:[%s762 + $0x170] sm:$0xff]
        %v4680 = vld [vmem:[%s762 + $0x178] sm:$0xff]
        %v4681 = vld [vmem:[%s762 + $0x180] sm:$0xff]
        %v4682 = vld [vmem:[%s762 + $0x188] sm:$0xff]
        %v4683 = vld [vmem:[%s762 + $0x190] sm:$0xff]
        %v4684 = vld [vmem:[%s762 + $0x198] sm:$0xff]
        %v4685 = vld [vmem:[%s762 + $0x1a0] sm:$0xff]
        %v4686 = vld [vmem:[%s762 + $0x1a8] sm:$0xff]
        %v4687 = vld [vmem:[%s762 + $0x1b0] sm:$0xff]
        %v4688 = vld [vmem:[%s762 + $0x1b8] sm:$0xff]
        %v4689 = vld [vmem:[%s762 + $0x1c0] sm:$0xff]
        %v4690 = vld [vmem:[%s762 + $0x1c8] sm:$0xff]
        %v4691 = vld [vmem:[%s762 + $0x1d0] sm:$0xff]
        %v4692 = vld [vmem:[%s762 + $0x1d8] sm:$0xff]
        %v4693 = vld [vmem:[%s762 + $0x1e0] sm:$0xff]
        %v4694 = vld [vmem:[%s762 + $0x1e8] sm:$0xff]
        %v4695 = vld [vmem:[%s762 + $0x1f0] sm:$0xff]
        %v4696 = vld [vmem:[%s762 + $0x1f8] sm:$0xff]
        %v4697 = vld [vmem:[%s762 + $0x200] sm:$0xff]
        %v4698 = vld [vmem:[%s762 + $0x208] sm:$0xff]
        %v4699 = vld [vmem:[%s762 + $0x210] sm:$0xff]
        %v4700 = vld [vmem:[%s762 + $0x218] sm:$0xff]
        %v4701 = vld [vmem:[%s762 + $0x220] sm:$0xff]
        %v4702 = vld [vmem:[%s762 + $0x228] sm:$0xff]
        %v4703 = vld [vmem:[%s762 + $0x230] sm:$0xff]
        %v4704 = vld [vmem:[%s762 + $0x238] sm:$0xff]
        %v4705 = vld [vmem:[%s762 + $0x240] sm:$0xff]
        %v4706 = vld [vmem:[%s762 + $0x248] sm:$0xff]
        %v4707 = vld [vmem:[%s762 + $0x250] sm:$0xff]
        %v4708 = vld [vmem:[%s762 + $0x258] sm:$0xff]
        %v4709 = vld [vmem:[%s762 + $0x260] sm:$0xff]
        %v4710 = vld [vmem:[%s762 + $0x268] sm:$0xff]
        %v4711 = vld [vmem:[%s762 + $0x270] sm:$0xff]
        %v4712 = vld [vmem:[%s762 + $0x278] sm:$0xff]
        %v4713 = vld [vmem:[%s762 + $0x280] sm:$0xff]
        %v4714 = vld [vmem:[%s762 + $0x288] sm:$0xff]
        %v4715 = vld [vmem:[%s762 + $0x290] sm:$0xff]
        %v4716 = vld [vmem:[%s762 + $0x298] sm:$0xff]
        %v4717 = vld [vmem:[%s762 + $0x2a0] sm:$0xff]
        %v4718 = vld [vmem:[%s762 + $0x2a8] sm:$0xff]
        %v4719 = vld [vmem:[%s762 + $0x2b0] sm:$0xff]
        %v4720 = vld [vmem:[%s762 + $0x2b8] sm:$0xff]
        %v4721 = vld [vmem:[%s762 + $0x2c0] sm:$0xff]
        %v4722 = vld [vmem:[%s762 + $0x2c8] sm:$0xff]
        %v4723 = vld [vmem:[%s762 + $0x2d0] sm:$0xff]
        %v4724 = vld [vmem:[%s762 + $0x2d8] sm:$0xff]
        %v4725 = vld [vmem:[%s762 + $0x2e0] sm:$0xff]
        %v4726 = vld [vmem:[%s762 + $0x2e8] sm:$0xff]
        %v4727 = vld [vmem:[%s762 + $0x2f0] sm:$0xff]
        %v4728 = vld [vmem:[%s762 + $0x2f8] sm:$0xff]
        %v4729 = vld [vmem:[%s762 + $0x300] sm:$0xff]
        %v4730 = vld [vmem:[%s762 + $0x308] sm:$0xff]
        %v4731 = vld [vmem:[%s762 + $0x310] sm:$0xff]
        %v4732 = vld [vmem:[%s762 + $0x318] sm:$0xff]
        %v4733 = vld [vmem:[%s762 + $0x320] sm:$0xff]
        %v4734 = vld [vmem:[%s762 + $0x328] sm:$0xff]
        %v4735 = vld [vmem:[%s762 + $0x330] sm:$0xff]
        %v4736 = vld [vmem:[%s762 + $0x338] sm:$0xff]
        %v4737 = vld [vmem:[%s762 + $0x340] sm:$0xff]
        %v4738 = vld [vmem:[%s762 + $0x348] sm:$0xff]
        %v4739 = vld [vmem:[%s762 + $0x350] sm:$0xff]
        %v4740 = vld [vmem:[%s762 + $0x358] sm:$0xff]
        %v4741 = vld [vmem:[%s762 + $0x360] sm:$0xff]
        %v4742 = vld [vmem:[%s762 + $0x368] sm:$0xff]
        %v4743 = vld [vmem:[%s762 + $0x370] sm:$0xff]
        %v4744 = vld [vmem:[%s762 + $0x378] sm:$0xff]
        %v4745 = vld [vmem:[%s762 + $0x380] sm:$0xff]
        %v4746 = vld [vmem:[%s762 + $0x388] sm:$0xff]
        %v4747 = vld [vmem:[%s762 + $0x390] sm:$0xff]
        %v4748 = vld [vmem:[%s762 + $0x398] sm:$0xff]
        %v4749 = vld [vmem:[%s762 + $0x3a0] sm:$0xff]
        %v4750 = vld [vmem:[%s762 + $0x3a8] sm:$0xff]
        %v4751 = vld [vmem:[%s762 + $0x3b0] sm:$0xff]
        %v4752 = vld [vmem:[%s762 + $0x3b8] sm:$0xff]
        %v4753 = vld [vmem:[%s762 + $0x3c0] sm:$0xff]
        %v4754 = vld [vmem:[%s762 + $0x3c8] sm:$0xff]
        %v4755 = vld [vmem:[%s762 + $0x3d0] sm:$0xff]
        %v4756 = vld [vmem:[%s762 + $0x3d8] sm:$0xff]
        %v4757 = vld [vmem:[%s762 + $0x3e0] sm:$0xff]
        %v4758 = vld [vmem:[%s762 + $0x3e8] sm:$0xff]
        %v4759 = vld [vmem:[%s762 + $0x3f0] sm:$0xff]
        %v4760 = vld [vmem:[%s762 + $0x3f8] sm:$0xff]
        %v4889 = vunpack.c.l.b16 %v4633
        %v4890 = vunpack.c.h.b16 %v4633
        %v4891 = vunpack.c.l.b16 %v4634
        %v4892 = vunpack.c.h.b16 %v4634
        %v4893 = vunpack.c.l.b16 %v4635
        %v4894 = vunpack.c.h.b16 %v4635
        %v4895 = vunpack.c.l.b16 %v4636
        %v4896 = vunpack.c.h.b16 %v4636
        %v4897 = vunpack.c.l.b16 %v4637
        %v4898 = vunpack.c.h.b16 %v4637
        %v4899 = vunpack.c.l.b16 %v4638
        %v4900 = vunpack.c.h.b16 %v4638
        %v4901 = vunpack.c.l.b16 %v4639
        %v4902 = vunpack.c.h.b16 %v4639
        %v4903 = vunpack.c.l.b16 %v4640
        %v4904 = vunpack.c.h.b16 %v4640
        %v4905 = vunpack.c.l.b16 %v4641
        %v4906 = vunpack.c.h.b16 %v4641
        %v4907 = vunpack.c.l.b16 %v4642
        %v4908 = vunpack.c.h.b16 %v4642
        %v4909 = vunpack.c.l.b16 %v4643
        %v4910 = vunpack.c.h.b16 %v4643
        %v4911 = vunpack.c.l.b16 %v4644
        %v4912 = vunpack.c.h.b16 %v4644
        %v4913 = vunpack.c.l.b16 %v4645
        %v4914 = vunpack.c.h.b16 %v4645
        %v4915 = vunpack.c.l.b16 %v4646
        %v4916 = vunpack.c.h.b16 %v4646
        %v4917 = vunpack.c.l.b16 %v4647
        %v4918 = vunpack.c.h.b16 %v4647
        %v4919 = vunpack.c.l.b16 %v4648
        %v4920 = vunpack.c.h.b16 %v4648
        %v4921 = vunpack.c.l.b16 %v4649
        %v4922 = vunpack.c.h.b16 %v4649
        %v4923 = vunpack.c.l.b16 %v4650
        %v4924 = vunpack.c.h.b16 %v4650
        %v4925 = vunpack.c.l.b16 %v4651
        %v4926 = vunpack.c.h.b16 %v4651
        %v4927 = vunpack.c.l.b16 %v4652
        %v4928 = vunpack.c.h.b16 %v4652
        %v4929 = vunpack.c.l.b16 %v4653
        %v4930 = vunpack.c.h.b16 %v4653
        %v4931 = vunpack.c.l.b16 %v4654
        %v4932 = vunpack.c.h.b16 %v4654
        %v4933 = vunpack.c.l.b16 %v4655
        %v4934 = vunpack.c.h.b16 %v4655
        %v4935 = vunpack.c.l.b16 %v4656
        %v4936 = vunpack.c.h.b16 %v4656
        %v4937 = vunpack.c.l.b16 %v4657
        %v4938 = vunpack.c.h.b16 %v4657
        %v4939 = vunpack.c.l.b16 %v4658
        %v4940 = vunpack.c.h.b16 %v4658
        %v4941 = vunpack.c.l.b16 %v4659
        %v4942 = vunpack.c.h.b16 %v4659
        %v4943 = vunpack.c.l.b16 %v4660
        %v4944 = vunpack.c.h.b16 %v4660
        %v4945 = vunpack.c.l.b16 %v4661
        %v4946 = vunpack.c.h.b16 %v4661
        %v4947 = vunpack.c.l.b16 %v4662
        %v4948 = vunpack.c.h.b16 %v4662
        %v4949 = vunpack.c.l.b16 %v4663
        %v4950 = vunpack.c.h.b16 %v4663
        %v4951 = vunpack.c.l.b16 %v4664
        %v4952 = vunpack.c.h.b16 %v4664
        %v4953 = vunpack.c.l.b16 %v4665
        %v4954 = vunpack.c.h.b16 %v4665
        %v4955 = vunpack.c.l.b16 %v4666
        %v4956 = vunpack.c.h.b16 %v4666
        %v4957 = vunpack.c.l.b16 %v4667
        %v4958 = vunpack.c.h.b16 %v4667
        %v4959 = vunpack.c.l.b16 %v4668
        %v4960 = vunpack.c.h.b16 %v4668
        %v4961 = vunpack.c.l.b16 %v4669
        %v4962 = vunpack.c.h.b16 %v4669
        %v4963 = vunpack.c.l.b16 %v4670
        %v4964 = vunpack.c.h.b16 %v4670
        %v4965 = vunpack.c.l.b16 %v4671
        %v4966 = vunpack.c.h.b16 %v4671
        %v4967 = vunpack.c.l.b16 %v4672
        %v4968 = vunpack.c.h.b16 %v4672
        %v4969 = vunpack.c.l.b16 %v4673
        %v4970 = vunpack.c.h.b16 %v4673
        %v4971 = vunpack.c.l.b16 %v4674
        %v4972 = vunpack.c.h.b16 %v4674
        %v4973 = vunpack.c.l.b16 %v4675
        %v4974 = vunpack.c.h.b16 %v4675
        %v4975 = vunpack.c.l.b16 %v4676
        %v4976 = vunpack.c.h.b16 %v4676
        %v4977 = vunpack.c.l.b16 %v4677
        %v4978 = vunpack.c.h.b16 %v4677
        %v4979 = vunpack.c.l.b16 %v4678
        %v4980 = vunpack.c.h.b16 %v4678
        %v4981 = vunpack.c.l.b16 %v4679
        %v4982 = vunpack.c.h.b16 %v4679
        %v4983 = vunpack.c.l.b16 %v4680
        %v4984 = vunpack.c.h.b16 %v4680
        %v4985 = vunpack.c.l.b16 %v4681
        %v4986 = vunpack.c.h.b16 %v4681
        %v4987 = vunpack.c.l.b16 %v4682
        %v4988 = vunpack.c.h.b16 %v4682
        %v4989 = vunpack.c.l.b16 %v4683
        %v4990 = vunpack.c.h.b16 %v4683
        %v4991 = vunpack.c.l.b16 %v4684
        %v4992 = vunpack.c.h.b16 %v4684
        %v4993 = vunpack.c.l.b16 %v4685
        %v4994 = vunpack.c.h.b16 %v4685
        %v4995 = vunpack.c.l.b16 %v4686
        %v4996 = vunpack.c.h.b16 %v4686
        %v4997 = vunpack.c.l.b16 %v4687
        %v4998 = vunpack.c.h.b16 %v4687
        %v4999 = vunpack.c.l.b16 %v4688
        %v5000 = vunpack.c.h.b16 %v4688
        %v5001 = vunpack.c.l.b16 %v4689
        %v5002 = vunpack.c.h.b16 %v4689
        %v5003 = vunpack.c.l.b16 %v4690
        %v5004 = vunpack.c.h.b16 %v4690
        %v5005 = vunpack.c.l.b16 %v4691
        %v5006 = vunpack.c.h.b16 %v4691
        %v5007 = vunpack.c.l.b16 %v4692
        %v5008 = vunpack.c.h.b16 %v4692
        %v5009 = vunpack.c.l.b16 %v4693
        %v5010 = vunpack.c.h.b16 %v4693
        %v5011 = vunpack.c.l.b16 %v4694
        %v5012 = vunpack.c.h.b16 %v4694
        %v5013 = vunpack.c.l.b16 %v4695
        %v5014 = vunpack.c.h.b16 %v4695
        %v5015 = vunpack.c.l.b16 %v4696
        %v5016 = vunpack.c.h.b16 %v4696
        %v5017 = vunpack.c.l.b16 %v4697
        %v5018 = vunpack.c.h.b16 %v4697
        %v5019 = vunpack.c.l.b16 %v4698
        %v5020 = vunpack.c.h.b16 %v4698
        %v5021 = vunpack.c.l.b16 %v4699
        %v5022 = vunpack.c.h.b16 %v4699
        %v5023 = vunpack.c.l.b16 %v4700
        %v5024 = vunpack.c.h.b16 %v4700
        %v5025 = vunpack.c.l.b16 %v4701
        %v5026 = vunpack.c.h.b16 %v4701
        %v5027 = vunpack.c.l.b16 %v4702
        %v5028 = vunpack.c.h.b16 %v4702
        %v5029 = vunpack.c.l.b16 %v4703
        %v5030 = vunpack.c.h.b16 %v4703
        %v5031 = vunpack.c.l.b16 %v4704
        %v5032 = vunpack.c.h.b16 %v4704
        %v5033 = vunpack.c.l.b16 %v4705
        %v5034 = vunpack.c.h.b16 %v4705
        %v5035 = vunpack.c.l.b16 %v4706
        %v5036 = vunpack.c.h.b16 %v4706
        %v5037 = vunpack.c.l.b16 %v4707
        %v5038 = vunpack.c.h.b16 %v4707
        %v5039 = vunpack.c.l.b16 %v4708
        %v5040 = vunpack.c.h.b16 %v4708
        %v5041 = vunpack.c.l.b16 %v4709
        %v5042 = vunpack.c.h.b16 %v4709
        %v5043 = vunpack.c.l.b16 %v4710
        %v5044 = vunpack.c.h.b16 %v4710
        %v5045 = vunpack.c.l.b16 %v4711
        %v5046 = vunpack.c.h.b16 %v4711
        %v5047 = vunpack.c.l.b16 %v4712
        %v5048 = vunpack.c.h.b16 %v4712
        %v5049 = vunpack.c.l.b16 %v4713
        %v5050 = vunpack.c.h.b16 %v4713
        %v5051 = vunpack.c.l.b16 %v4714
        %v5052 = vunpack.c.h.b16 %v4714
        %v5053 = vunpack.c.l.b16 %v4715
        %v5054 = vunpack.c.h.b16 %v4715
        %v5055 = vunpack.c.l.b16 %v4716
        %v5056 = vunpack.c.h.b16 %v4716
        %v5057 = vunpack.c.l.b16 %v4717
        %v5058 = vunpack.c.h.b16 %v4717
        %v5059 = vunpack.c.l.b16 %v4718
        %v5060 = vunpack.c.h.b16 %v4718
        %v5061 = vunpack.c.l.b16 %v4719
        %v5062 = vunpack.c.h.b16 %v4719
        %v5063 = vunpack.c.l.b16 %v4720
        %v5064 = vunpack.c.h.b16 %v4720
        %v5065 = vunpack.c.l.b16 %v4721
        %v5066 = vunpack.c.h.b16 %v4721
        %v5067 = vunpack.c.l.b16 %v4722
        %v5068 = vunpack.c.h.b16 %v4722
        %v5069 = vunpack.c.l.b16 %v4723
        %v5070 = vunpack.c.h.b16 %v4723
        %v5071 = vunpack.c.l.b16 %v4724
        %v5072 = vunpack.c.h.b16 %v4724
        %v5073 = vunpack.c.l.b16 %v4725
        %v5074 = vunpack.c.h.b16 %v4725
        %v5075 = vunpack.c.l.b16 %v4726
        %v5076 = vunpack.c.h.b16 %v4726
        %v5077 = vunpack.c.l.b16 %v4727
        %v5078 = vunpack.c.h.b16 %v4727
        %v5079 = vunpack.c.l.b16 %v4728
        %v5080 = vunpack.c.h.b16 %v4728
        %v5081 = vunpack.c.l.b16 %v4729
        %v5082 = vunpack.c.h.b16 %v4729
        %v5083 = vunpack.c.l.b16 %v4730
        %v5084 = vunpack.c.h.b16 %v4730
        %v5085 = vunpack.c.l.b16 %v4731
        %v5086 = vunpack.c.h.b16 %v4731
        %v5087 = vunpack.c.l.b16 %v4732
        %v5088 = vunpack.c.h.b16 %v4732
        %v5089 = vunpack.c.l.b16 %v4733
        %v5090 = vunpack.c.h.b16 %v4733
        %v5091 = vunpack.c.l.b16 %v4734
        %v5092 = vunpack.c.h.b16 %v4734
        %v5093 = vunpack.c.l.b16 %v4735
        %v5094 = vunpack.c.h.b16 %v4735
        %v5095 = vunpack.c.l.b16 %v4736
        %v5096 = vunpack.c.h.b16 %v4736
        %v5097 = vunpack.c.l.b16 %v4737
        %v5098 = vunpack.c.h.b16 %v4737
        %v5099 = vunpack.c.l.b16 %v4738
        %v5100 = vunpack.c.h.b16 %v4738
        %v5101 = vunpack.c.l.b16 %v4739
        %v5102 = vunpack.c.h.b16 %v4739
        %v5103 = vunpack.c.l.b16 %v4740
        %v5104 = vunpack.c.h.b16 %v4740
        %v5105 = vunpack.c.l.b16 %v4741
        %v5106 = vunpack.c.h.b16 %v4741
        %v5107 = vunpack.c.l.b16 %v4742
        %v5108 = vunpack.c.h.b16 %v4742
        %v5109 = vunpack.c.l.b16 %v4743
        %v5110 = vunpack.c.h.b16 %v4743
        %v5111 = vunpack.c.l.b16 %v4744
        %v5112 = vunpack.c.h.b16 %v4744
        %v5113 = vunpack.c.l.b16 %v4745
        %v5114 = vunpack.c.h.b16 %v4745
        %v5115 = vunpack.c.l.b16 %v4746
        %v5116 = vunpack.c.h.b16 %v4746
        %v5117 = vunpack.c.l.b16 %v4747
        %v5118 = vunpack.c.h.b16 %v4747
        %v5119 = vunpack.c.l.b16 %v4748
        %v5120 = vunpack.c.h.b16 %v4748
        %v5121 = vunpack.c.l.b16 %v4749
        %v5122 = vunpack.c.h.b16 %v4749
        %v5123 = vunpack.c.l.b16 %v4750
        %v5124 = vunpack.c.h.b16 %v4750
        %v5125 = vunpack.c.l.b16 %v4751
        %v5126 = vunpack.c.h.b16 %v4751
        %v5127 = vunpack.c.l.b16 %v4752
        %v5128 = vunpack.c.h.b16 %v4752
        %v5129 = vunpack.c.l.b16 %v4753
        %v5130 = vunpack.c.h.b16 %v4753
        %v5131 = vunpack.c.l.b16 %v4754
        %v5132 = vunpack.c.h.b16 %v4754
        %v5133 = vunpack.c.l.b16 %v4755
        %v5134 = vunpack.c.h.b16 %v4755
        %v5135 = vunpack.c.l.b16 %v4756
        %v5136 = vunpack.c.h.b16 %v4756
        %v5137 = vunpack.c.l.b16 %v4757
        %v5138 = vunpack.c.h.b16 %v4757
        %v5139 = vunpack.c.l.b16 %v4758
        %v5140 = vunpack.c.h.b16 %v4758
        %v5141 = vunpack.c.l.b16 %v4759
        %v5142 = vunpack.c.h.b16 %v4759
        %v5143 = vunpack.c.l.b16 %v4760
        %v5144 = vunpack.c.h.b16 %v4760
        %v5145 = vpack.c.b16 %v4893, %v4889
        %v5146 = vpack.c.b16 %v4894, %v4890
        %v5147 = vpack.c.b16 %v4895, %v4891
        %v5148 = vpack.c.b16 %v4896, %v4892
        %v5149 = vpack.c.b16 %v4901, %v4897
        %v5150 = vpack.c.b16 %v4902, %v4898
        %v5151 = vpack.c.b16 %v4903, %v4899
        %v5152 = vpack.c.b16 %v4904, %v4900
        %v5153 = vpack.c.b16 %v4909, %v4905
        %v5154 = vpack.c.b16 %v4910, %v4906
        %v5155 = vpack.c.b16 %v4911, %v4907
        %v5156 = vpack.c.b16 %v4912, %v4908
        %v5157 = vpack.c.b16 %v4917, %v4913
        %v5158 = vpack.c.b16 %v4918, %v4914
        %v5159 = vpack.c.b16 %v4919, %v4915
        %v5160 = vpack.c.b16 %v4920, %v4916
        %v5161 = vpack.c.b16 %v4925, %v4921
        %v5162 = vpack.c.b16 %v4926, %v4922
        %v5163 = vpack.c.b16 %v4927, %v4923
        %v5164 = vpack.c.b16 %v4928, %v4924
        %v5165 = vpack.c.b16 %v4933, %v4929
        %v5166 = vpack.c.b16 %v4934, %v4930
        %v5167 = vpack.c.b16 %v4935, %v4931
        %v5168 = vpack.c.b16 %v4936, %v4932
        %v5169 = vpack.c.b16 %v4941, %v4937
        %v5170 = vpack.c.b16 %v4942, %v4938
        %v5171 = vpack.c.b16 %v4943, %v4939
        %v5172 = vpack.c.b16 %v4944, %v4940
        %v5173 = vpack.c.b16 %v4949, %v4945
        %v5174 = vpack.c.b16 %v4950, %v4946
        %v5175 = vpack.c.b16 %v4951, %v4947
        %v5176 = vpack.c.b16 %v4952, %v4948
        %v5177 = vpack.c.b16 %v4957, %v4953
        %v5178 = vpack.c.b16 %v4958, %v4954
        %v5179 = vpack.c.b16 %v4959, %v4955
        %v5180 = vpack.c.b16 %v4960, %v4956
        %v5181 = vpack.c.b16 %v4965, %v4961
        %v5182 = vpack.c.b16 %v4966, %v4962
        %v5183 = vpack.c.b16 %v4967, %v4963
        %v5184 = vpack.c.b16 %v4968, %v4964
        %v5185 = vpack.c.b16 %v4973, %v4969
        %v5186 = vpack.c.b16 %v4974, %v4970
        %v5187 = vpack.c.b16 %v4975, %v4971
        %v5188 = vpack.c.b16 %v4976, %v4972
        %v5189 = vpack.c.b16 %v4981, %v4977
        %v5190 = vpack.c.b16 %v4982, %v4978
        %v5191 = vpack.c.b16 %v4983, %v4979
        %v5192 = vpack.c.b16 %v4984, %v4980
        %v5193 = vpack.c.b16 %v4989, %v4985
        %v5194 = vpack.c.b16 %v4990, %v4986
        %v5195 = vpack.c.b16 %v4991, %v4987
        %v5196 = vpack.c.b16 %v4992, %v4988
        %v5197 = vpack.c.b16 %v4997, %v4993
        %v5198 = vpack.c.b16 %v4998, %v4994
        %v5199 = vpack.c.b16 %v4999, %v4995
        %v5200 = vpack.c.b16 %v5000, %v4996
        %v5201 = vpack.c.b16 %v5005, %v5001
        %v5202 = vpack.c.b16 %v5006, %v5002
        %v5203 = vpack.c.b16 %v5007, %v5003
        %v5204 = vpack.c.b16 %v5008, %v5004
        %v5205 = vpack.c.b16 %v5013, %v5009
        %v5206 = vpack.c.b16 %v5014, %v5010
        %v5207 = vpack.c.b16 %v5015, %v5011
        %v5208 = vpack.c.b16 %v5016, %v5012
        %v5209 = vpack.c.b16 %v5021, %v5017
        %v5210 = vpack.c.b16 %v5022, %v5018
        %v5211 = vpack.c.b16 %v5023, %v5019
        %v5212 = vpack.c.b16 %v5024, %v5020
        %v5213 = vpack.c.b16 %v5029, %v5025
        %v5214 = vpack.c.b16 %v5030, %v5026
        %v5215 = vpack.c.b16 %v5031, %v5027
        %v5216 = vpack.c.b16 %v5032, %v5028
        %v5217 = vpack.c.b16 %v5037, %v5033
        %v5218 = vpack.c.b16 %v5038, %v5034
        %v5219 = vpack.c.b16 %v5039, %v5035
        %v5220 = vpack.c.b16 %v5040, %v5036
        %v5221 = vpack.c.b16 %v5045, %v5041
        %v5222 = vpack.c.b16 %v5046, %v5042
        %v5223 = vpack.c.b16 %v5047, %v5043
        %v5224 = vpack.c.b16 %v5048, %v5044
        %v5225 = vpack.c.b16 %v5053, %v5049
        %v5226 = vpack.c.b16 %v5054, %v5050
        %v5227 = vpack.c.b16 %v5055, %v5051
        %v5228 = vpack.c.b16 %v5056, %v5052
        %v5229 = vpack.c.b16 %v5061, %v5057
        %v5230 = vpack.c.b16 %v5062, %v5058
        %v5231 = vpack.c.b16 %v5063, %v5059
        %v5232 = vpack.c.b16 %v5064, %v5060
        %v5233 = vpack.c.b16 %v5069, %v5065
        %v5234 = vpack.c.b16 %v5070, %v5066
        %v5235 = vpack.c.b16 %v5071, %v5067
        %v5236 = vpack.c.b16 %v5072, %v5068
        %v5237 = vpack.c.b16 %v5077, %v5073
        %v5238 = vpack.c.b16 %v5078, %v5074
        %v5239 = vpack.c.b16 %v5079, %v5075
        %v5240 = vpack.c.b16 %v5080, %v5076
        %v5241 = vpack.c.b16 %v5085, %v5081
        %v5242 = vpack.c.b16 %v5086, %v5082
        %v5243 = vpack.c.b16 %v5087, %v5083
        %v5244 = vpack.c.b16 %v5088, %v5084
        %v5245 = vpack.c.b16 %v5093, %v5089
        %v5246 = vpack.c.b16 %v5094, %v5090
        %v5247 = vpack.c.b16 %v5095, %v5091
        %v5248 = vpack.c.b16 %v5096, %v5092
        %v5249 = vpack.c.b16 %v5101, %v5097
        %v5250 = vpack.c.b16 %v5102, %v5098
        %v5251 = vpack.c.b16 %v5103, %v5099
        %v5252 = vpack.c.b16 %v5104, %v5100
        %v5253 = vpack.c.b16 %v5109, %v5105
        %v5254 = vpack.c.b16 %v5110, %v5106
        %v5255 = vpack.c.b16 %v5111, %v5107
        %v5256 = vpack.c.b16 %v5112, %v5108
        %v5257 = vpack.c.b16 %v5117, %v5113
        %v5258 = vpack.c.b16 %v5118, %v5114
        %v5259 = vpack.c.b16 %v5119, %v5115
        %v5260 = vpack.c.b16 %v5120, %v5116
        %v5261 = vpack.c.b16 %v5125, %v5121
        %v5262 = vpack.c.b16 %v5126, %v5122
        %v5263 = vpack.c.b16 %v5127, %v5123
        %v5264 = vpack.c.b16 %v5128, %v5124
        %v5265 = vpack.c.b16 %v5133, %v5129
        %v5266 = vpack.c.b16 %v5134, %v5130
        %v5267 = vpack.c.b16 %v5135, %v5131
        %v5268 = vpack.c.b16 %v5136, %v5132
        %v5269 = vpack.c.b16 %v5141, %v5137
        %v5270 = vpack.c.b16 %v5142, %v5138
        %v5271 = vpack.c.b16 %v5143, %v5139
        %v5272 = vpack.c.b16 %v5144, %v5140
        %5401 = vmatpush.bf16.msra.mxu0 %v5173
        %5402 = vmatpush.bf16.msra.mxu0 %v5169
        %5403 = vmatpush.bf16.msra.mxu0 %v5165
        %5404 = vmatpush.bf16.msra.mxu0 %v5161
        %5405 = vmatpush.bf16.msra.mxu0 %v5157
        %5406 = vmatpush.bf16.msra.mxu0 %v5153
        %5407 = vmatpush.bf16.msra.mxu0 %v5149
        %5408 = vmatpush.bf16.msra.mxu0 %v5145
        %5409 = vmatmul.bf16.gmra.mxu0 %v4629
        %v5410 = vpop.f32.mrf.mxu0
        %v5411 = vadd.f32 0.0, %v5410
        %v5412 = vpop.f32.mrf.mxu0
        %5413 = vdwg.mxu0
        %5414 = vmatpush.bf16.msra.mxu0 %v5205
        %5415 = vmatpush.bf16.msra.mxu0 %v5201
        %5416 = vmatpush.bf16.msra.mxu0 %v5197
        %5417 = vmatpush.bf16.msra.mxu0 %v5193
        %5418 = vmatpush.bf16.msra.mxu0 %v5189
        %5419 = vmatpush.bf16.msra.mxu0 %v5185
        %5420 = vmatpush.bf16.msra.mxu0 %v5181
        %5421 = vmatpush.bf16.msra.mxu0 %v5177
        %5422 = vmatmul.bf16.gmra.mxu0 %v4630
        %v5423 = vpop.f32.mrf.mxu0
        %v5424 = vadd.f32 %v5411, %v5423
        %v5425 = vpop.f32.mrf.mxu0
        %5426 = vdwg.mxu0
        %5427 = vmatpush.bf16.msra.mxu0 %v5237
        %5428 = vmatpush.bf16.msra.mxu0 %v5233
        %5429 = vmatpush.bf16.msra.mxu0 %v5229
        %5430 = vmatpush.bf16.msra.mxu0 %v5225
        %5431 = vmatpush.bf16.msra.mxu0 %v5221
        %5432 = vmatpush.bf16.msra.mxu0 %v5217
        %5433 = vmatpush.bf16.msra.mxu0 %v5213
        %5434 = vmatpush.bf16.msra.mxu0 %v5209
        %5435 = vmatmul.bf16.gmra.mxu0 %v4631
        %v5436 = vpop.f32.mrf.mxu0
        %v5437 = vadd.f32 %v5424, %v5436
        %v5438 = vpop.f32.mrf.mxu0
        %5439 = vdwg.mxu0
        %5440 = vmatpush.bf16.msra.mxu0 %v5269
        %5441 = vmatpush.bf16.msra.mxu0 %v5265
        %5442 = vmatpush.bf16.msra.mxu0 %v5261
        %5443 = vmatpush.bf16.msra.mxu0 %v5257
        %5444 = vmatpush.bf16.msra.mxu0 %v5253
        %5445 = vmatpush.bf16.msra.mxu0 %v5249
        %5446 = vmatpush.bf16.msra.mxu0 %v5245
        %5447 = vmatpush.bf16.msra.mxu0 %v5241
        %5448 = vmatmul.bf16.gmra.mxu0 %v4632
        %v5449 = vpop.f32.mrf.mxu0
        %v5450 = vadd.f32 %v5437, %v5449
        %v5451 = vpop.f32.mrf.mxu0
        %5452 = vdwg.mxu0
        %5453 = vmatpush.bf16.msra.mxu0 %v5174
        %5454 = vmatpush.bf16.msra.mxu0 %v5170
        %5455 = vmatpush.bf16.msra.mxu0 %v5166
        %5456 = vmatpush.bf16.msra.mxu0 %v5162
        %5457 = vmatpush.bf16.msra.mxu0 %v5158
        %5458 = vmatpush.bf16.msra.mxu0 %v5154
        %5459 = vmatpush.bf16.msra.mxu0 %v5150
        %5460 = vmatpush.bf16.msra.mxu0 %v5146
        %5461 = vmatmul.bf16.gmra.mxu0 %v4629
        %v5462 = vpop.f32.mrf.mxu0
        %v5463 = vadd.f32 0.0, %v5462
        %v5464 = vpop.f32.mrf.mxu0
        %5465 = vdwg.mxu0
        %5466 = vmatpush.bf16.msra.mxu0 %v5206
        %5467 = vmatpush.bf16.msra.mxu0 %v5202
        %5468 = vmatpush.bf16.msra.mxu0 %v5198
        %5469 = vmatpush.bf16.msra.mxu0 %v5194
        %5470 = vmatpush.bf16.msra.mxu0 %v5190
        %5471 = vmatpush.bf16.msra.mxu0 %v5186
        %5472 = vmatpush.bf16.msra.mxu0 %v5182
        %5473 = vmatpush.bf16.msra.mxu0 %v5178
        %5474 = vmatmul.bf16.gmra.mxu0 %v4630
        %v5475 = vpop.f32.mrf.mxu0
        %v5476 = vadd.f32 %v5463, %v5475
        %v5477 = vpop.f32.mrf.mxu0
        %5478 = vdwg.mxu0
        %5479 = vmatpush.bf16.msra.mxu0 %v5238
        %5480 = vmatpush.bf16.msra.mxu0 %v5234
        %5481 = vmatpush.bf16.msra.mxu0 %v5230
        %5482 = vmatpush.bf16.msra.mxu0 %v5226
        %5483 = vmatpush.bf16.msra.mxu0 %v5222
        %5484 = vmatpush.bf16.msra.mxu0 %v5218
        %5485 = vmatpush.bf16.msra.mxu0 %v5214
        %5486 = vmatpush.bf16.msra.mxu0 %v5210
        %5487 = vmatmul.bf16.gmra.mxu0 %v4631
        %v5488 = vpop.f32.mrf.mxu0
        %v5489 = vadd.f32 %v5476, %v5488
        %v5490 = vpop.f32.mrf.mxu0
        %5491 = vdwg.mxu0
        %5492 = vmatpush.bf16.msra.mxu0 %v5270
        %5493 = vmatpush.bf16.msra.mxu0 %v5266
        %5494 = vmatpush.bf16.msra.mxu0 %v5262
        %5495 = vmatpush.bf16.msra.mxu0 %v5258
        %5496 = vmatpush.bf16.msra.mxu0 %v5254
        %5497 = vmatpush.bf16.msra.mxu0 %v5250
        %5498 = vmatpush.bf16.msra.mxu0 %v5246
        %5499 = vmatpush.bf16.msra.mxu0 %v5242
        %5500 = vmatmul.bf16.gmra.mxu0 %v4632
        %v5501 = vpop.f32.mrf.mxu0
        %v5502 = vadd.f32 %v5489, %v5501
        %v5503 = vpop.f32.mrf.mxu0
        %5504 = vdwg.mxu0
        %5505 = vmatpush.bf16.msra.mxu0 %v5175
        %5506 = vmatpush.bf16.msra.mxu0 %v5171
        %5507 = vmatpush.bf16.msra.mxu0 %v5167
        %5508 = vmatpush.bf16.msra.mxu0 %v5163
        %5509 = vmatpush.bf16.msra.mxu0 %v5159
        %5510 = vmatpush.bf16.msra.mxu0 %v5155
        %5511 = vmatpush.bf16.msra.mxu0 %v5151
        %5512 = vmatpush.bf16.msra.mxu0 %v5147
        %5513 = vmatmul.bf16.gmra.mxu0 %v4629
        %v5514 = vpop.f32.mrf.mxu0
        %v5515 = vadd.f32 0.0, %v5514
        %v5516 = vpop.f32.mrf.mxu0
        %5517 = vdwg.mxu0
        %5518 = vmatpush.bf16.msra.mxu0 %v5207
        %5519 = vmatpush.bf16.msra.mxu0 %v5203
        %5520 = vmatpush.bf16.msra.mxu0 %v5199
        %5521 = vmatpush.bf16.msra.mxu0 %v5195
        %5522 = vmatpush.bf16.msra.mxu0 %v5191
        %5523 = vmatpush.bf16.msra.mxu0 %v5187
        %5524 = vmatpush.bf16.msra.mxu0 %v5183
        %5525 = vmatpush.bf16.msra.mxu0 %v5179
        %5526 = vmatmul.bf16.gmra.mxu0 %v4630
        %v5527 = vpop.f32.mrf.mxu0
        %v5528 = vadd.f32 %v5515, %v5527
        %v5529 = vpop.f32.mrf.mxu0
        %5530 = vdwg.mxu0
        %5531 = vmatpush.bf16.msra.mxu0 %v5239
        %5532 = vmatpush.bf16.msra.mxu0 %v5235
        %5533 = vmatpush.bf16.msra.mxu0 %v5231
        %5534 = vmatpush.bf16.msra.mxu0 %v5227
        %5535 = vmatpush.bf16.msra.mxu0 %v5223
        %5536 = vmatpush.bf16.msra.mxu0 %v5219
        %5537 = vmatpush.bf16.msra.mxu0 %v5215
        %5538 = vmatpush.bf16.msra.mxu0 %v5211
        %5539 = vmatmul.bf16.gmra.mxu0 %v4631
        %v5540 = vpop.f32.mrf.mxu0
        %v5541 = vadd.f32 %v5528, %v5540
        %v5542 = vpop.f32.mrf.mxu0
        %5543 = vdwg.mxu0
        %5544 = vmatpush.bf16.msra.mxu0 %v5271
        %5545 = vmatpush.bf16.msra.mxu0 %v5267
        %5546 = vmatpush.bf16.msra.mxu0 %v5263
        %5547 = vmatpush.bf16.msra.mxu0 %v5259
        %5548 = vmatpush.bf16.msra.mxu0 %v5255
        %5549 = vmatpush.bf16.msra.mxu0 %v5251
        %5550 = vmatpush.bf16.msra.mxu0 %v5247
        %5551 = vmatpush.bf16.msra.mxu0 %v5243
        %5552 = vmatmul.bf16.gmra.mxu0 %v4632
        %v5553 = vpop.f32.mrf.mxu0
        %v5554 = vadd.f32 %v5541, %v5553
        %v5555 = vpop.f32.mrf.mxu0
        %5556 = vdwg.mxu0
        %5557 = vmatpush.bf16.msra.mxu0 %v5176
        %5558 = vmatpush.bf16.msra.mxu0 %v5172
        %5559 = vmatpush.bf16.msra.mxu0 %v5168
        %5560 = vmatpush.bf16.msra.mxu0 %v5164
        %5561 = vmatpush.bf16.msra.mxu0 %v5160
        %5562 = vmatpush.bf16.msra.mxu0 %v5156
        %5563 = vmatpush.bf16.msra.mxu0 %v5152
        %5564 = vmatpush.bf16.msra.mxu0 %v5148
        %5565 = vmatmul.bf16.gmra.mxu0 %v4629
        %v5566 = vpop.f32.mrf.mxu0
        %v5567 = vadd.f32 0.0, %v5566
        %v5568 = vpop.f32.mrf.mxu0
        %5569 = vdwg.mxu0
        %5570 = vmatpush.bf16.msra.mxu0 %v5208
        %5571 = vmatpush.bf16.msra.mxu0 %v5204
        %5572 = vmatpush.bf16.msra.mxu0 %v5200
        %5573 = vmatpush.bf16.msra.mxu0 %v5196
        %5574 = vmatpush.bf16.msra.mxu0 %v5192
        %5575 = vmatpush.bf16.msra.mxu0 %v5188
        %5576 = vmatpush.bf16.msra.mxu0 %v5184
        %5577 = vmatpush.bf16.msra.mxu0 %v5180
        %5578 = vmatmul.bf16.gmra.mxu0 %v4630
        %v5579 = vpop.f32.mrf.mxu0
        %v5580 = vadd.f32 %v5567, %v5579
        %v5581 = vpop.f32.mrf.mxu0
        %5582 = vdwg.mxu0
        %5583 = vmatpush.bf16.msra.mxu0 %v5240
        %5584 = vmatpush.bf16.msra.mxu0 %v5236
        %5585 = vmatpush.bf16.msra.mxu0 %v5232
        %5586 = vmatpush.bf16.msra.mxu0 %v5228
        %5587 = vmatpush.bf16.msra.mxu0 %v5224
        %5588 = vmatpush.bf16.msra.mxu0 %v5220
        %5589 = vmatpush.bf16.msra.mxu0 %v5216
        %5590 = vmatpush.bf16.msra.mxu0 %v5212
        %5591 = vmatmul.bf16.gmra.mxu0 %v4631
        %v5592 = vpop.f32.mrf.mxu0
        %v5593 = vadd.f32 %v5580, %v5592
        %v5594 = vpop.f32.mrf.mxu0
        %5595 = vdwg.mxu0
        %5596 = vmatpush.bf16.msra.mxu0 %v5272
        %5597 = vmatpush.bf16.msra.mxu0 %v5268
        %5598 = vmatpush.bf16.msra.mxu0 %v5264
        %5599 = vmatpush.bf16.msra.mxu0 %v5260
        %5600 = vmatpush.bf16.msra.mxu0 %v5256
        %5601 = vmatpush.bf16.msra.mxu0 %v5252
        %5602 = vmatpush.bf16.msra.mxu0 %v5248
        %5603 = vmatpush.bf16.msra.mxu0 %v5244
        %5604 = vmatmul.bf16.gmra.mxu0 %v4632
        %v5605 = vpop.f32.mrf.mxu0
        %v5606 = vadd.f32 %v5593, %v5605
        %v5607 = vpop.f32.mrf.mxu0
        %5608 = vdwg.mxu0
        %v5613 = vrot.slane %v5502, 6
        %v5614 = vrot.slane %v5554, 4
        %v5615 = vrot.slane %v5606, 2
        %vm5616 = vcmask 1041408
        %v5617 = vsel %vm5616, %v5450, %v5613
        %vm5618 = vcmask 1045508
        %v5619 = vsel %vm5618, %v5614, %v5615
        %vm5620 = vcmask 1043456
        %v5621 = vsel %vm5620, %v5617, %v5619
        %v5623 = vadd.f32 %v4628, %v5621
        %5624 = vst [vmem:[#allocation2] sm:$0xff] %v5623
        %p5625 = scmp.eq.s32.totalorder %s43, 1
        // Predicated region
        $region161: #{cnn_forward.1} parent=91 // pred_check
          %p5626 = pneg %p5625
        $region162: #{cnn_forward.1} parent=91 // pred_check_branch
          %5628 = sbr.rel (%p5626) target = $region164
        $region163: #{cnn_forward.1} parent=91 // pred_region
          %v5629 = vld [vmem:[#allocation2] sm:$0xff]
          %v5630 = vld [vmem:[#allocation12] sm:$0xf]
          %v5632 = vperm.slane %v5630, 0
          %v5633 = vperm.slane %v5630, 1
          %v5634 = vperm.slane %v5630, 2
          %v5635 = vperm.slane %v5630, 3
          %v5636 = vrot.slane %v5633, 6
          %v5637 = vrot.slane %v5634, 4
          %v5638 = vrot.slane %v5635, 2
          %v5639 = vsel %vm5616, %v5632, %v5636
          %v5640 = vsel %vm5618, %v5637, %v5638
          %v5641 = vsel %vm5620, %v5639, %v5640
          %v5643 = vadd.f32 %v5629, %v5641
          %v5644 = vmax.f32 %v5643, 0.0
          %5646 = vst [vmem:[#allocation1] ss:$4 sm:$0xff] %v5644
          %v5647 = vld.sshfl [vmem:[#allocation1] sm:$0xff pattern:$0x73625140]
          %v5648 = vld.sshfl [vmem:[#allocation1 + $0x8] sm:$0xff pattern:$0x73625140]
          %v5649 = vld.sshfl [vmem:[#allocation1 + $0x10] sm:$0xff pattern:$0x73625140]
          %v5650 = vld.sshfl [vmem:[#allocation1 + $0x18] sm:$0xff pattern:$0x73625140]
          %v5655 = vpack.c.bf16 %v5647, %v5647
          %v5656 = vpack.c.bf16 %v5648, %v5648
          %v5657 = vpack.c.bf16 %v5649, %v5649
          %v5658 = vpack.c.bf16 %v5650, %v5650
          %v5659 = vld [vmem:[#allocation14] sm:$0xff]
          %v5660 = vld [vmem:[#allocation14 + $0x8] sm:$0xff]
          %v5661 = vld [vmem:[#allocation14 + $0x10] sm:$0xff]
          %v5662 = vld [vmem:[#allocation14 + $0x18] sm:$0xff]
          %v5663 = vld [vmem:[#allocation14 + $0x20] sm:$0xff]
          %v5664 = vld [vmem:[#allocation14 + $0x28] sm:$0xff]
          %v5665 = vld [vmem:[#allocation14 + $0x30] sm:$0xff]
          %v5666 = vld [vmem:[#allocation14 + $0x38] sm:$0xff]
          %v5667 = vld [vmem:[#allocation14 + $0x40] sm:$0xff]
          %v5668 = vld [vmem:[#allocation14 + $0x48] sm:$0xff]
          %v5669 = vld [vmem:[#allocation14 + $0x50] sm:$0xff]
          %v5670 = vld [vmem:[#allocation14 + $0x58] sm:$0xff]
          %v5671 = vld [vmem:[#allocation14 + $0x60] sm:$0xff]
          %v5672 = vld [vmem:[#allocation14 + $0x68] sm:$0xff]
          %v5673 = vld [vmem:[#allocation14 + $0x70] sm:$0xff]
          %v5674 = vld [vmem:[#allocation14 + $0x78] sm:$0xff]
          %v5675 = vld [vmem:[#allocation14 + $0x80] sm:$0xff]
          %v5676 = vld [vmem:[#allocation14 + $0x88] sm:$0xff]
          %v5677 = vld [vmem:[#allocation14 + $0x90] sm:$0xff]
          %v5678 = vld [vmem:[#allocation14 + $0x98] sm:$0xff]
          %v5679 = vld [vmem:[#allocation14 + $0xa0] sm:$0xff]
          %v5680 = vld [vmem:[#allocation14 + $0xa8] sm:$0xff]
          %v5681 = vld [vmem:[#allocation14 + $0xb0] sm:$0xff]
          %v5682 = vld [vmem:[#allocation14 + $0xb8] sm:$0xff]
          %v5683 = vld [vmem:[#allocation14 + $0xc0] sm:$0xff]
          %v5684 = vld [vmem:[#allocation14 + $0xc8] sm:$0xff]
          %v5685 = vld [vmem:[#allocation14 + $0xd0] sm:$0xff]
          %v5686 = vld [vmem:[#allocation14 + $0xd8] sm:$0xff]
          %v5687 = vld [vmem:[#allocation14 + $0xe0] sm:$0xff]
          %v5688 = vld [vmem:[#allocation14 + $0xe8] sm:$0xff]
          %v5689 = vld [vmem:[#allocation14 + $0xf0] sm:$0xff]
          %v5690 = vld [vmem:[#allocation14 + $0xf8] sm:$0xff]
          %v5691 = vld [vmem:[#allocation14 + $0x100] sm:$0xff]
          %v5692 = vld [vmem:[#allocation14 + $0x108] sm:$0xff]
          %v5693 = vld [vmem:[#allocation14 + $0x110] sm:$0xff]
          %v5694 = vld [vmem:[#allocation14 + $0x118] sm:$0xff]
          %v5695 = vld [vmem:[#allocation14 + $0x120] sm:$0xff]
          %v5696 = vld [vmem:[#allocation14 + $0x128] sm:$0xff]
          %v5697 = vld [vmem:[#allocation14 + $0x130] sm:$0xff]
          %v5698 = vld [vmem:[#allocation14 + $0x138] sm:$0xff]
          %v5699 = vld [vmem:[#allocation14 + $0x140] sm:$0xff]
          %v5700 = vld [vmem:[#allocation14 + $0x148] sm:$0xff]
          %v5701 = vld [vmem:[#allocation14 + $0x150] sm:$0xff]
          %v5702 = vld [vmem:[#allocation14 + $0x158] sm:$0xff]
          %v5703 = vld [vmem:[#allocation14 + $0x160] sm:$0xff]
          %v5704 = vld [vmem:[#allocation14 + $0x168] sm:$0xff]
          %v5705 = vld [vmem:[#allocation14 + $0x170] sm:$0xff]
          %v5706 = vld [vmem:[#allocation14 + $0x178] sm:$0xff]
          %v5707 = vld [vmem:[#allocation14 + $0x180] sm:$0xff]
          %v5708 = vld [vmem:[#allocation14 + $0x188] sm:$0xff]
          %v5709 = vld [vmem:[#allocation14 + $0x190] sm:$0xff]
          %v5710 = vld [vmem:[#allocation14 + $0x198] sm:$0xff]
          %v5711 = vld [vmem:[#allocation14 + $0x1a0] sm:$0xff]
          %v5712 = vld [vmem:[#allocation14 + $0x1a8] sm:$0xff]
          %v5713 = vld [vmem:[#allocation14 + $0x1b0] sm:$0xff]
          %v5714 = vld [vmem:[#allocation14 + $0x1b8] sm:$0xff]
          %v5715 = vld [vmem:[#allocation14 + $0x1c0] sm:$0xff]
          %v5716 = vld [vmem:[#allocation14 + $0x1c8] sm:$0xff]
          %v5717 = vld [vmem:[#allocation14 + $0x1d0] sm:$0xff]
          %v5718 = vld [vmem:[#allocation14 + $0x1d8] sm:$0xff]
          %v5719 = vld [vmem:[#allocation14 + $0x1e0] sm:$0xff]
          %v5720 = vld [vmem:[#allocation14 + $0x1e8] sm:$0xff]
          %v5721 = vld [vmem:[#allocation14 + $0x1f0] sm:$0xff]
          %v5722 = vld [vmem:[#allocation14 + $0x1f8] sm:$0xff]
          %v5723 = vld [vmem:[#allocation15] sm:$0x3]
          %v5725 = vperm.slane %v5723, 0
          %v5726 = vperm.slane %v5723, 1
          %v5793 = vunpack.c.l.b16 %v5659
          %v5794 = vunpack.c.h.b16 %v5659
          %v5795 = vunpack.c.l.b16 %v5660
          %v5796 = vunpack.c.h.b16 %v5660
          %v5797 = vunpack.c.l.b16 %v5661
          %v5798 = vunpack.c.h.b16 %v5661
          %v5799 = vunpack.c.l.b16 %v5662
          %v5800 = vunpack.c.h.b16 %v5662
          %v5801 = vunpack.c.l.b16 %v5663
          %v5802 = vunpack.c.h.b16 %v5663
          %v5803 = vunpack.c.l.b16 %v5664
          %v5804 = vunpack.c.h.b16 %v5664
          %v5805 = vunpack.c.l.b16 %v5665
          %v5806 = vunpack.c.h.b16 %v5665
          %v5807 = vunpack.c.l.b16 %v5666
          %v5808 = vunpack.c.h.b16 %v5666
          %v5809 = vunpack.c.l.b16 %v5667
          %v5810 = vunpack.c.h.b16 %v5667
          %v5811 = vunpack.c.l.b16 %v5668
          %v5812 = vunpack.c.h.b16 %v5668
          %v5813 = vunpack.c.l.b16 %v5669
          %v5814 = vunpack.c.h.b16 %v5669
          %v5815 = vunpack.c.l.b16 %v5670
          %v5816 = vunpack.c.h.b16 %v5670
          %v5817 = vunpack.c.l.b16 %v5671
          %v5818 = vunpack.c.h.b16 %v5671
          %v5819 = vunpack.c.l.b16 %v5672
          %v5820 = vunpack.c.h.b16 %v5672
          %v5821 = vunpack.c.l.b16 %v5673
          %v5822 = vunpack.c.h.b16 %v5673
          %v5823 = vunpack.c.l.b16 %v5674
          %v5824 = vunpack.c.h.b16 %v5674
          %v5825 = vunpack.c.l.b16 %v5675
          %v5826 = vunpack.c.h.b16 %v5675
          %v5827 = vunpack.c.l.b16 %v5676
          %v5828 = vunpack.c.h.b16 %v5676
          %v5829 = vunpack.c.l.b16 %v5677
          %v5830 = vunpack.c.h.b16 %v5677
          %v5831 = vunpack.c.l.b16 %v5678
          %v5832 = vunpack.c.h.b16 %v5678
          %v5833 = vunpack.c.l.b16 %v5679
          %v5834 = vunpack.c.h.b16 %v5679
          %v5835 = vunpack.c.l.b16 %v5680
          %v5836 = vunpack.c.h.b16 %v5680
          %v5837 = vunpack.c.l.b16 %v5681
          %v5838 = vunpack.c.h.b16 %v5681
          %v5839 = vunpack.c.l.b16 %v5682
          %v5840 = vunpack.c.h.b16 %v5682
          %v5841 = vunpack.c.l.b16 %v5683
          %v5842 = vunpack.c.h.b16 %v5683
          %v5843 = vunpack.c.l.b16 %v5684
          %v5844 = vunpack.c.h.b16 %v5684
          %v5845 = vunpack.c.l.b16 %v5685
          %v5846 = vunpack.c.h.b16 %v5685
          %v5847 = vunpack.c.l.b16 %v5686
          %v5848 = vunpack.c.h.b16 %v5686
          %v5849 = vunpack.c.l.b16 %v5687
          %v5850 = vunpack.c.h.b16 %v5687
          %v5851 = vunpack.c.l.b16 %v5688
          %v5852 = vunpack.c.h.b16 %v5688
          %v5853 = vunpack.c.l.b16 %v5689
          %v5854 = vunpack.c.h.b16 %v5689
          %v5855 = vunpack.c.l.b16 %v5690
          %v5856 = vunpack.c.h.b16 %v5690
          %v5857 = vunpack.c.l.b16 %v5691
          %v5858 = vunpack.c.h.b16 %v5691
          %v5859 = vunpack.c.l.b16 %v5692
          %v5860 = vunpack.c.h.b16 %v5692
          %v5861 = vunpack.c.l.b16 %v5693
          %v5862 = vunpack.c.h.b16 %v5693
          %v5863 = vunpack.c.l.b16 %v5694
          %v5864 = vunpack.c.h.b16 %v5694
          %v5865 = vunpack.c.l.b16 %v5695
          %v5866 = vunpack.c.h.b16 %v5695
          %v5867 = vunpack.c.l.b16 %v5696
          %v5868 = vunpack.c.h.b16 %v5696
          %v5869 = vunpack.c.l.b16 %v5697
          %v5870 = vunpack.c.h.b16 %v5697
          %v5871 = vunpack.c.l.b16 %v5698
          %v5872 = vunpack.c.h.b16 %v5698
          %v5873 = vunpack.c.l.b16 %v5699
          %v5874 = vunpack.c.h.b16 %v5699
          %v5875 = vunpack.c.l.b16 %v5700
          %v5876 = vunpack.c.h.b16 %v5700
          %v5877 = vunpack.c.l.b16 %v5701
          %v5878 = vunpack.c.h.b16 %v5701
          %v5879 = vunpack.c.l.b16 %v5702
          %v5880 = vunpack.c.h.b16 %v5702
          %v5881 = vunpack.c.l.b16 %v5703
          %v5882 = vunpack.c.h.b16 %v5703
          %v5883 = vunpack.c.l.b16 %v5704
          %v5884 = vunpack.c.h.b16 %v5704
          %v5885 = vunpack.c.l.b16 %v5705
          %v5886 = vunpack.c.h.b16 %v5705
          %v5887 = vunpack.c.l.b16 %v5706
          %v5888 = vunpack.c.h.b16 %v5706
          %v5889 = vunpack.c.l.b16 %v5707
          %v5890 = vunpack.c.h.b16 %v5707
          %v5891 = vunpack.c.l.b16 %v5708
          %v5892 = vunpack.c.h.b16 %v5708
          %v5893 = vunpack.c.l.b16 %v5709
          %v5894 = vunpack.c.h.b16 %v5709
          %v5895 = vunpack.c.l.b16 %v5710
          %v5896 = vunpack.c.h.b16 %v5710
          %v5897 = vunpack.c.l.b16 %v5711
          %v5898 = vunpack.c.h.b16 %v5711
          %v5899 = vunpack.c.l.b16 %v5712
          %v5900 = vunpack.c.h.b16 %v5712
          %v5901 = vunpack.c.l.b16 %v5713
          %v5902 = vunpack.c.h.b16 %v5713
          %v5903 = vunpack.c.l.b16 %v5714
          %v5904 = vunpack.c.h.b16 %v5714
          %v5905 = vunpack.c.l.b16 %v5715
          %v5906 = vunpack.c.h.b16 %v5715
          %v5907 = vunpack.c.l.b16 %v5716
          %v5908 = vunpack.c.h.b16 %v5716
          %v5909 = vunpack.c.l.b16 %v5717
          %v5910 = vunpack.c.h.b16 %v5717
          %v5911 = vunpack.c.l.b16 %v5718
          %v5912 = vunpack.c.h.b16 %v5718
          %v5913 = vunpack.c.l.b16 %v5719
          %v5914 = vunpack.c.h.b16 %v5719
          %v5915 = vunpack.c.l.b16 %v5720
          %v5916 = vunpack.c.h.b16 %v5720
          %v5917 = vunpack.c.l.b16 %v5721
          %v5918 = vunpack.c.h.b16 %v5721
          %v5919 = vunpack.c.l.b16 %v5722
          %v5920 = vunpack.c.h.b16 %v5722
          %v5921 = vpack.c.b16 %v5795, %v5793
          %v5922 = vpack.c.b16 %v5796, %v5794
          %v5923 = vpack.c.b16 %v5799, %v5797
          %v5924 = vpack.c.b16 %v5800, %v5798
          %v5925 = vpack.c.b16 %v5803, %v5801
          %v5926 = vpack.c.b16 %v5804, %v5802
          %v5927 = vpack.c.b16 %v5807, %v5805
          %v5928 = vpack.c.b16 %v5808, %v5806
          %v5929 = vpack.c.b16 %v5811, %v5809
          %v5930 = vpack.c.b16 %v5812, %v5810
          %v5931 = vpack.c.b16 %v5815, %v5813
          %v5932 = vpack.c.b16 %v5816, %v5814
          %v5933 = vpack.c.b16 %v5819, %v5817
          %v5934 = vpack.c.b16 %v5820, %v5818
          %v5935 = vpack.c.b16 %v5823, %v5821
          %v5936 = vpack.c.b16 %v5824, %v5822
          %v5937 = vpack.c.b16 %v5827, %v5825
          %v5938 = vpack.c.b16 %v5828, %v5826
          %v5939 = vpack.c.b16 %v5831, %v5829
          %v5940 = vpack.c.b16 %v5832, %v5830
          %v5941 = vpack.c.b16 %v5835, %v5833
          %v5942 = vpack.c.b16 %v5836, %v5834
          %v5943 = vpack.c.b16 %v5839, %v5837
          %v5944 = vpack.c.b16 %v5840, %v5838
          %v5945 = vpack.c.b16 %v5843, %v5841
          %v5946 = vpack.c.b16 %v5844, %v5842
          %v5947 = vpack.c.b16 %v5847, %v5845
          %v5948 = vpack.c.b16 %v5848, %v5846
          %v5949 = vpack.c.b16 %v5851, %v5849
          %v5950 = vpack.c.b16 %v5852, %v5850
          %v5951 = vpack.c.b16 %v5855, %v5853
          %v5952 = vpack.c.b16 %v5856, %v5854
          %v5953 = vpack.c.b16 %v5859, %v5857
          %v5954 = vpack.c.b16 %v5860, %v5858
          %v5955 = vpack.c.b16 %v5863, %v5861
          %v5956 = vpack.c.b16 %v5864, %v5862
          %v5957 = vpack.c.b16 %v5867, %v5865
          %v5958 = vpack.c.b16 %v5868, %v5866
          %v5959 = vpack.c.b16 %v5871, %v5869
          %v5960 = vpack.c.b16 %v5872, %v5870
          %v5961 = vpack.c.b16 %v5875, %v5873
          %v5962 = vpack.c.b16 %v5876, %v5874
          %v5963 = vpack.c.b16 %v5879, %v5877
          %v5964 = vpack.c.b16 %v5880, %v5878
          %v5965 = vpack.c.b16 %v5883, %v5881
          %v5966 = vpack.c.b16 %v5884, %v5882
          %v5967 = vpack.c.b16 %v5887, %v5885
          %v5968 = vpack.c.b16 %v5888, %v5886
          %v5969 = vpack.c.b16 %v5891, %v5889
          %v5970 = vpack.c.b16 %v5892, %v5890
          %v5971 = vpack.c.b16 %v5895, %v5893
          %v5972 = vpack.c.b16 %v5896, %v5894
          %v5973 = vpack.c.b16 %v5899, %v5897
          %v5974 = vpack.c.b16 %v5900, %v5898
          %v5975 = vpack.c.b16 %v5903, %v5901
          %v5976 = vpack.c.b16 %v5904, %v5902
          %v5977 = vpack.c.b16 %v5907, %v5905
          %v5978 = vpack.c.b16 %v5908, %v5906
          %v5979 = vpack.c.b16 %v5911, %v5909
          %v5980 = vpack.c.b16 %v5912, %v5910
          %v5981 = vpack.c.b16 %v5915, %v5913
          %v5982 = vpack.c.b16 %v5916, %v5914
          %v5983 = vpack.c.b16 %v5919, %v5917
          %v5984 = vpack.c.b16 %v5920, %v5918
          %6049 = vmatpush.bf16.msra.mxu0 %v5935
          %6050 = vmatpush.bf16.msra.mxu0 %v5933
          %6051 = vmatpush.bf16.msra.mxu0 %v5931
          %6052 = vmatpush.bf16.msra.mxu0 %v5929
          %6053 = vmatpush.bf16.msra.mxu0 %v5927
          %6054 = vmatpush.bf16.msra.mxu0 %v5925
          %6055 = vmatpush.bf16.msra.mxu0 %v5923
          %6056 = vmatpush.bf16.msra.mxu0 %v5921
          %6057 = vmatmul.bf16.gmra.mxu0 %v5655
          %v6058 = vpop.f32.mrf.mxu0
          %v6059 = vadd.f32 %v5725, %v6058
          %v6060 = vpop.f32.mrf.mxu0
          %6061 = vdwg.mxu0
          %6062 = vmatpush.bf16.msra.mxu0 %v5951
          %6063 = vmatpush.bf16.msra.mxu0 %v5949
          %6064 = vmatpush.bf16.msra.mxu0 %v5947
          %6065 = vmatpush.bf16.msra.mxu0 %v5945
          %6066 = vmatpush.bf16.msra.mxu0 %v5943
          %6067 = vmatpush.bf16.msra.mxu0 %v5941
          %6068 = vmatpush.bf16.msra.mxu0 %v5939
          %6069 = vmatpush.bf16.msra.mxu0 %v5937
          %6070 = vmatmul.bf16.gmra.mxu0 %v5656
          %v6071 = vpop.f32.mrf.mxu0
          %v6072 = vadd.f32 %v6059, %v6071
          %v6073 = vpop.f32.mrf.mxu0
          %6074 = vdwg.mxu0
          %6075 = vmatpush.bf16.msra.mxu0 %v5967
          %6076 = vmatpush.bf16.msra.mxu0 %v5965
          %6077 = vmatpush.bf16.msra.mxu0 %v5963
          %6078 = vmatpush.bf16.msra.mxu0 %v5961
          %6079 = vmatpush.bf16.msra.mxu0 %v5959
          %6080 = vmatpush.bf16.msra.mxu0 %v5957
          %6081 = vmatpush.bf16.msra.mxu0 %v5955
          %6082 = vmatpush.bf16.msra.mxu0 %v5953
          %6083 = vmatmul.bf16.gmra.mxu0 %v5657
          %v6084 = vpop.f32.mrf.mxu0
          %v6085 = vadd.f32 %v6072, %v6084
          %v6086 = vpop.f32.mrf.mxu0
          %6087 = vdwg.mxu0
          %6088 = vmatpush.bf16.msra.mxu0 %v5983
          %6089 = vmatpush.bf16.msra.mxu0 %v5981
          %6090 = vmatpush.bf16.msra.mxu0 %v5979
          %6091 = vmatpush.bf16.msra.mxu0 %v5977
          %6092 = vmatpush.bf16.msra.mxu0 %v5975
          %6093 = vmatpush.bf16.msra.mxu0 %v5973
          %6094 = vmatpush.bf16.msra.mxu0 %v5971
          %6095 = vmatpush.bf16.msra.mxu0 %v5969
          %6096 = vmatmul.bf16.gmra.mxu0 %v5658
          %v6097 = vpop.f32.mrf.mxu0
          %v6098 = vadd.f32 %v6085, %v6097
          %v6099 = vpop.f32.mrf.mxu0
          %6100 = vdwg.mxu0
          %6101 = vmatpush.bf16.msra.mxu0 %v5936
          %6102 = vmatpush.bf16.msra.mxu0 %v5934
          %6103 = vmatpush.bf16.msra.mxu0 %v5932
          %6104 = vmatpush.bf16.msra.mxu0 %v5930
          %6105 = vmatpush.bf16.msra.mxu0 %v5928
          %6106 = vmatpush.bf16.msra.mxu0 %v5926
          %6107 = vmatpush.bf16.msra.mxu0 %v5924
          %6108 = vmatpush.bf16.msra.mxu0 %v5922
          %6109 = vmatmul.bf16.gmra.mxu0 %v5655
          %v6110 = vpop.f32.mrf.mxu0
          %v6111 = vadd.f32 %v5726, %v6110
          %v6112 = vpop.f32.mrf.mxu0
          %6113 = vdwg.mxu0
          %6114 = vmatpush.bf16.msra.mxu0 %v5952
          %6115 = vmatpush.bf16.msra.mxu0 %v5950
          %6116 = vmatpush.bf16.msra.mxu0 %v5948
          %6117 = vmatpush.bf16.msra.mxu0 %v5946
          %6118 = vmatpush.bf16.msra.mxu0 %v5944
          %6119 = vmatpush.bf16.msra.mxu0 %v5942
          %6120 = vmatpush.bf16.msra.mxu0 %v5940
          %6121 = vmatpush.bf16.msra.mxu0 %v5938
          %6122 = vmatmul.bf16.gmra.mxu0 %v5656
          %v6123 = vpop.f32.mrf.mxu0
          %v6124 = vadd.f32 %v6111, %v6123
          %v6125 = vpop.f32.mrf.mxu0
          %6126 = vdwg.mxu0
          %6127 = vmatpush.bf16.msra.mxu0 %v5968
          %6128 = vmatpush.bf16.msra.mxu0 %v5966
          %6129 = vmatpush.bf16.msra.mxu0 %v5964
          %6130 = vmatpush.bf16.msra.mxu0 %v5962
          %6131 = vmatpush.bf16.msra.mxu0 %v5960
          %6132 = vmatpush.bf16.msra.mxu0 %v5958
          %6133 = vmatpush.bf16.msra.mxu0 %v5956
          %6134 = vmatpush.bf16.msra.mxu0 %v5954
          %6135 = vmatmul.bf16.gmra.mxu0 %v5657
          %v6136 = vpop.f32.mrf.mxu0
          %v6137 = vadd.f32 %v6124, %v6136
          %v6138 = vpop.f32.mrf.mxu0
          %6139 = vdwg.mxu0
          %6140 = vmatpush.bf16.msra.mxu0 %v5984
          %6141 = vmatpush.bf16.msra.mxu0 %v5982
          %6142 = vmatpush.bf16.msra.mxu0 %v5980
          %6143 = vmatpush.bf16.msra.mxu0 %v5978
          %6144 = vmatpush.bf16.msra.mxu0 %v5976
          %6145 = vmatpush.bf16.msra.mxu0 %v5974
          %6146 = vmatpush.bf16.msra.mxu0 %v5972
          %6147 = vmatpush.bf16.msra.mxu0 %v5970
          %6148 = vmatmul.bf16.gmra.mxu0 %v5658
          %v6149 = vpop.f32.mrf.mxu0
          %v6150 = vadd.f32 %v6137, %v6149
          %v6151 = vpop.f32.mrf.mxu0
          %6152 = vdwg.mxu0
          %v6153 = vmax.f32 %v6098, 0.0
          %v6154 = vmax.f32 %v6150, 0.0
          %v6155 = vpack.c.bf16 %v6153, %v6153
          %v6156 = vpack.c.bf16 %v6154, %v6154
          %v6157 = vld [vmem:[#allocation17] sm:$0xff]
          %v6158 = vld [vmem:[#allocation17 + $0x8] sm:$0xff]
          %v6159 = vld [vmem:[#allocation17 + $0x10] sm:$0xff]
          %v6160 = vld [vmem:[#allocation17 + $0x18] sm:$0xff]
          %v6161 = vld [vmem:[#allocation17 + $0x20] sm:$0xff]
          %v6162 = vld [vmem:[#allocation17 + $0x28] sm:$0xff]
          %v6163 = vld [vmem:[#allocation17 + $0x30] sm:$0xff]
          %v6164 = vld [vmem:[#allocation17 + $0x38] sm:$0xff]
          %v6165 = vld [vmem:[#allocation17 + $0x40] sm:$0xff]
          %v6166 = vld [vmem:[#allocation17 + $0x48] sm:$0xff]
          %v6167 = vld [vmem:[#allocation17 + $0x50] sm:$0xff]
          %v6168 = vld [vmem:[#allocation17 + $0x58] sm:$0xff]
          %v6169 = vld [vmem:[#allocation17 + $0x60] sm:$0xff]
          %v6170 = vld [vmem:[#allocation17 + $0x68] sm:$0xff]
          %v6171 = vld [vmem:[#allocation17 + $0x70] sm:$0xff]
          %v6172 = vld [vmem:[#allocation17 + $0x78] sm:$0xff]
          %v6173 = vld [vmem:[#allocation17 + $0x80] sm:$0xff]
          %v6174 = vld [vmem:[#allocation17 + $0x88] sm:$0xff]
          %v6175 = vld [vmem:[#allocation17 + $0x90] sm:$0xff]
          %v6176 = vld [vmem:[#allocation17 + $0x98] sm:$0xff]
          %v6177 = vld [vmem:[#allocation17 + $0xa0] sm:$0xff]
          %v6178 = vld [vmem:[#allocation17 + $0xa8] sm:$0xff]
          %v6179 = vld [vmem:[#allocation17 + $0xb0] sm:$0xff]
          %v6180 = vld [vmem:[#allocation17 + $0xb8] sm:$0xff]
          %v6181 = vld [vmem:[#allocation17 + $0xc0] sm:$0xff]
          %v6182 = vld [vmem:[#allocation17 + $0xc8] sm:$0xff]
          %v6183 = vld [vmem:[#allocation17 + $0xd0] sm:$0xff]
          %v6184 = vld [vmem:[#allocation17 + $0xd8] sm:$0xff]
          %v6185 = vld [vmem:[#allocation17 + $0xe0] sm:$0xff]
          %v6186 = vld [vmem:[#allocation17 + $0xe8] sm:$0xff]
          %v6187 = vld [vmem:[#allocation17 + $0xf0] sm:$0xff]
          %v6188 = vld [vmem:[#allocation17 + $0xf8] sm:$0xff]
          %v6189 = vld [vmem:[#allocation18] sm:$0x3]
          %v6191 = vperm.slane %v6189, 0
          %v6192 = vperm.slane %v6189, 1
          %v6227 = vunpack.c.l.b16 %v6157
          %v6228 = vunpack.c.h.b16 %v6157
          %v6229 = vunpack.c.l.b16 %v6158
          %v6230 = vunpack.c.h.b16 %v6158
          %v6231 = vunpack.c.l.b16 %v6159
          %v6232 = vunpack.c.h.b16 %v6159
          %v6233 = vunpack.c.l.b16 %v6160
          %v6234 = vunpack.c.h.b16 %v6160
          %v6235 = vunpack.c.l.b16 %v6161
          %v6236 = vunpack.c.h.b16 %v6161
          %v6237 = vunpack.c.l.b16 %v6162
          %v6238 = vunpack.c.h.b16 %v6162
          %v6239 = vunpack.c.l.b16 %v6163
          %v6240 = vunpack.c.h.b16 %v6163
          %v6241 = vunpack.c.l.b16 %v6164
          %v6242 = vunpack.c.h.b16 %v6164
          %v6243 = vunpack.c.l.b16 %v6165
          %v6244 = vunpack.c.h.b16 %v6165
          %v6245 = vunpack.c.l.b16 %v6166
          %v6246 = vunpack.c.h.b16 %v6166
          %v6247 = vunpack.c.l.b16 %v6167
          %v6248 = vunpack.c.h.b16 %v6167
          %v6249 = vunpack.c.l.b16 %v6168
          %v6250 = vunpack.c.h.b16 %v6168
          %v6251 = vunpack.c.l.b16 %v6169
          %v6252 = vunpack.c.h.b16 %v6169
          %v6253 = vunpack.c.l.b16 %v6170
          %v6254 = vunpack.c.h.b16 %v6170
          %v6255 = vunpack.c.l.b16 %v6171
          %v6256 = vunpack.c.h.b16 %v6171
          %v6257 = vunpack.c.l.b16 %v6172
          %v6258 = vunpack.c.h.b16 %v6172
          %v6259 = vunpack.c.l.b16 %v6173
          %v6260 = vunpack.c.h.b16 %v6173
          %v6261 = vunpack.c.l.b16 %v6174
          %v6262 = vunpack.c.h.b16 %v6174
          %v6263 = vunpack.c.l.b16 %v6175
          %v6264 = vunpack.c.h.b16 %v6175
          %v6265 = vunpack.c.l.b16 %v6176
          %v6266 = vunpack.c.h.b16 %v6176
          %v6267 = vunpack.c.l.b16 %v6177
          %v6268 = vunpack.c.h.b16 %v6177
          %v6269 = vunpack.c.l.b16 %v6178
          %v6270 = vunpack.c.h.b16 %v6178
          %v6271 = vunpack.c.l.b16 %v6179
          %v6272 = vunpack.c.h.b16 %v6179
          %v6273 = vunpack.c.l.b16 %v6180
          %v6274 = vunpack.c.h.b16 %v6180
          %v6275 = vunpack.c.l.b16 %v6181
          %v6276 = vunpack.c.h.b16 %v6181
          %v6277 = vunpack.c.l.b16 %v6182
          %v6278 = vunpack.c.h.b16 %v6182
          %v6279 = vunpack.c.l.b16 %v6183
          %v6280 = vunpack.c.h.b16 %v6183
          %v6281 = vunpack.c.l.b16 %v6184
          %v6282 = vunpack.c.h.b16 %v6184
          %v6283 = vunpack.c.l.b16 %v6185
          %v6284 = vunpack.c.h.b16 %v6185
          %v6285 = vunpack.c.l.b16 %v6186
          %v6286 = vunpack.c.h.b16 %v6186
          %v6287 = vunpack.c.l.b16 %v6187
          %v6288 = vunpack.c.h.b16 %v6187
          %v6289 = vunpack.c.l.b16 %v6188
          %v6290 = vunpack.c.h.b16 %v6188
          %v6291 = vpack.c.b16 %v6229, %v6227
          %v6292 = vpack.c.b16 %v6230, %v6228
          %v6293 = vpack.c.b16 %v6233, %v6231
          %v6294 = vpack.c.b16 %v6234, %v6232
          %v6295 = vpack.c.b16 %v6237, %v6235
          %v6296 = vpack.c.b16 %v6238, %v6236
          %v6297 = vpack.c.b16 %v6241, %v6239
          %v6298 = vpack.c.b16 %v6242, %v6240
          %v6299 = vpack.c.b16 %v6245, %v6243
          %v6300 = vpack.c.b16 %v6246, %v6244
          %v6301 = vpack.c.b16 %v6249, %v6247
          %v6302 = vpack.c.b16 %v6250, %v6248
          %v6303 = vpack.c.b16 %v6253, %v6251
          %v6304 = vpack.c.b16 %v6254, %v6252
          %v6305 = vpack.c.b16 %v6257, %v6255
          %v6306 = vpack.c.b16 %v6258, %v6256
          %v6307 = vpack.c.b16 %v6261, %v6259
          %v6308 = vpack.c.b16 %v6262, %v6260
          %v6309 = vpack.c.b16 %v6265, %v6263
          %v6310 = vpack.c.b16 %v6266, %v6264
          %v6311 = vpack.c.b16 %v6269, %v6267
          %v6312 = vpack.c.b16 %v6270, %v6268
          %v6313 = vpack.c.b16 %v6273, %v6271
          %v6314 = vpack.c.b16 %v6274, %v6272
          %v6315 = vpack.c.b16 %v6277, %v6275
          %v6316 = vpack.c.b16 %v6278, %v6276
          %v6317 = vpack.c.b16 %v6281, %v6279
          %v6318 = vpack.c.b16 %v6282, %v6280
          %v6319 = vpack.c.b16 %v6285, %v6283
          %v6320 = vpack.c.b16 %v6286, %v6284
          %v6321 = vpack.c.b16 %v6289, %v6287
          %v6322 = vpack.c.b16 %v6290, %v6288
          %6355 = vmatpush.bf16.msra.mxu0 %v6305
          %6356 = vmatpush.bf16.msra.mxu0 %v6303
          %6357 = vmatpush.bf16.msra.mxu0 %v6301
          %6358 = vmatpush.bf16.msra.mxu0 %v6299
          %6359 = vmatpush.bf16.msra.mxu0 %v6297
          %6360 = vmatpush.bf16.msra.mxu0 %v6295
          %6361 = vmatpush.bf16.msra.mxu0 %v6293
          %6362 = vmatpush.bf16.msra.mxu0 %v6291
          %6363 = vmatmul.bf16.gmra.mxu0 %v6155
          %v6364 = vpop.f32.mrf.mxu0
          %v6365 = vadd.f32 %v6191, %v6364
          %v6366 = vpop.f32.mrf.mxu0
          %6367 = vdwg.mxu0
          %6368 = vmatpush.bf16.msra.mxu0 %v6321
          %6369 = vmatpush.bf16.msra.mxu0 %v6319
          %6370 = vmatpush.bf16.msra.mxu0 %v6317
          %6371 = vmatpush.bf16.msra.mxu0 %v6315
          %6372 = vmatpush.bf16.msra.mxu0 %v6313
          %6373 = vmatpush.bf16.msra.mxu0 %v6311
          %6374 = vmatpush.bf16.msra.mxu0 %v6309
          %6375 = vmatpush.bf16.msra.mxu0 %v6307
          %6376 = vmatmul.bf16.gmra.mxu0 %v6156
          %v6377 = vpop.f32.mrf.mxu0
          %v6378 = vadd.f32 %v6365, %v6377
          %v6379 = vpop.f32.mrf.mxu0
          %6380 = vdwg.mxu0
          %6381 = vmatpush.bf16.msra.mxu0 %v6306
          %6382 = vmatpush.bf16.msra.mxu0 %v6304
          %6383 = vmatpush.bf16.msra.mxu0 %v6302
          %6384 = vmatpush.bf16.msra.mxu0 %v6300
          %6385 = vmatpush.bf16.msra.mxu0 %v6298
          %6386 = vmatpush.bf16.msra.mxu0 %v6296
          %6387 = vmatpush.bf16.msra.mxu0 %v6294
          %6388 = vmatpush.bf16.msra.mxu0 %v6292
          %6389 = vmatmul.bf16.gmra.mxu0 %v6155
          %v6390 = vpop.f32.mrf.mxu0
          %v6391 = vadd.f32 %v6192, %v6390
          %v6392 = vpop.f32.mrf.mxu0
          %6393 = vdwg.mxu0
          %6394 = vmatpush.bf16.msra.mxu0 %v6322
          %6395 = vmatpush.bf16.msra.mxu0 %v6320
          %6396 = vmatpush.bf16.msra.mxu0 %v6318
          %6397 = vmatpush.bf16.msra.mxu0 %v6316
          %6398 = vmatpush.bf16.msra.mxu0 %v6314
          %6399 = vmatpush.bf16.msra.mxu0 %v6312
          %6400 = vmatpush.bf16.msra.mxu0 %v6310
          %6401 = vmatpush.bf16.msra.mxu0 %v6308
          %6402 = vmatmul.bf16.gmra.mxu0 %v6156
          %v6403 = vpop.f32.mrf.mxu0
          %v6404 = vadd.f32 %v6391, %v6403
          %v6405 = vpop.f32.mrf.mxu0
          %6406 = vdwg.mxu0
          %v6407 = vmax.f32 %v6378, 0.0
          %v6408 = vmax.f32 %v6404, 0.0
          %v6409 = vpack.c.bf16 %v6407, %v6407
          %v6410 = vpack.c.bf16 %v6408, %v6408
          %v6411 = vld [vmem:[#allocation20] sm:$0xff]
          %v6412 = vld [vmem:[#allocation20 + $0x8] sm:$0xff]
          %v6413 = vld [vmem:[#allocation20 + $0x10] sm:$0xff]
          %v6414 = vld [vmem:[#allocation20 + $0x18] sm:$0xff]
          %v6415 = vld [vmem:[#allocation20 + $0x20] sm:$0xff]
          %v6416 = vld [vmem:[#allocation20 + $0x28] sm:$0xff]
          %v6417 = vld [vmem:[#allocation20 + $0x30] sm:$0xff]
          %v6418 = vld [vmem:[#allocation20 + $0x38] sm:$0xff]
          %v6419 = vld [vmem:[#allocation20 + $0x40] sm:$0xff]
          %v6420 = vld [vmem:[#allocation20 + $0x48] sm:$0xff]
          %v6421 = vld [vmem:[#allocation20 + $0x50] sm:$0xff]
          %v6422 = vld [vmem:[#allocation20 + $0x58] sm:$0xff]
          %v6423 = vld [vmem:[#allocation20 + $0x60] sm:$0xff]
          %v6424 = vld [vmem:[#allocation20 + $0x68] sm:$0xff]
          %v6425 = vld [vmem:[#allocation20 + $0x70] sm:$0xff]
          %v6426 = vld [vmem:[#allocation20 + $0x78] sm:$0xff]
          %v6427 = vld [vmem:[#allocation20 + $0x80] sm:$0xff]
          %v6428 = vld [vmem:[#allocation20 + $0x88] sm:$0xff]
          %v6429 = vld [vmem:[#allocation20 + $0x90] sm:$0xff]
          %v6430 = vld [vmem:[#allocation20 + $0x98] sm:$0xff]
          %v6431 = vld [vmem:[#allocation20 + $0xa0] sm:$0xff]
          %v6432 = vld [vmem:[#allocation20 + $0xa8] sm:$0xff]
          %v6433 = vld [vmem:[#allocation20 + $0xb0] sm:$0xff]
          %v6434 = vld [vmem:[#allocation20 + $0xb8] sm:$0xff]
          %v6435 = vld [vmem:[#allocation20 + $0xc0] sm:$0xff]
          %v6436 = vld [vmem:[#allocation20 + $0xc8] sm:$0xff]
          %v6437 = vld [vmem:[#allocation20 + $0xd0] sm:$0xff]
          %v6438 = vld [vmem:[#allocation20 + $0xd8] sm:$0xff]
          %v6439 = vld [vmem:[#allocation20 + $0xe0] sm:$0xff]
          %v6440 = vld [vmem:[#allocation20 + $0xe8] sm:$0xff]
          %v6441 = vld [vmem:[#allocation20 + $0xf0] sm:$0xff]
          %v6442 = vld [vmem:[#allocation20 + $0xf8] sm:$0xff]
          %v6443 = vld [vmem:[#allocation21] sm:$0x3]
          %v6445 = vperm.slane %v6443, 0
          %v6446 = vperm.slane %v6443, 1
          %v6481 = vunpack.c.l.b16 %v6411
          %v6482 = vunpack.c.h.b16 %v6411
          %v6483 = vunpack.c.l.b16 %v6412
          %v6484 = vunpack.c.h.b16 %v6412
          %v6485 = vunpack.c.l.b16 %v6413
          %v6486 = vunpack.c.h.b16 %v6413
          %v6487 = vunpack.c.l.b16 %v6414
          %v6488 = vunpack.c.h.b16 %v6414
          %v6489 = vunpack.c.l.b16 %v6415
          %v6490 = vunpack.c.h.b16 %v6415
          %v6491 = vunpack.c.l.b16 %v6416
          %v6492 = vunpack.c.h.b16 %v6416
          %v6493 = vunpack.c.l.b16 %v6417
          %v6494 = vunpack.c.h.b16 %v6417
          %v6495 = vunpack.c.l.b16 %v6418
          %v6496 = vunpack.c.h.b16 %v6418
          %v6497 = vunpack.c.l.b16 %v6419
          %v6498 = vunpack.c.h.b16 %v6419
          %v6499 = vunpack.c.l.b16 %v6420
          %v6500 = vunpack.c.h.b16 %v6420
          %v6501 = vunpack.c.l.b16 %v6421
          %v6502 = vunpack.c.h.b16 %v6421
          %v6503 = vunpack.c.l.b16 %v6422
          %v6504 = vunpack.c.h.b16 %v6422
          %v6505 = vunpack.c.l.b16 %v6423
          %v6506 = vunpack.c.h.b16 %v6423
          %v6507 = vunpack.c.l.b16 %v6424
          %v6508 = vunpack.c.h.b16 %v6424
          %v6509 = vunpack.c.l.b16 %v6425
          %v6510 = vunpack.c.h.b16 %v6425
          %v6511 = vunpack.c.l.b16 %v6426
          %v6512 = vunpack.c.h.b16 %v6426
          %v6513 = vunpack.c.l.b16 %v6427
          %v6514 = vunpack.c.h.b16 %v6427
          %v6515 = vunpack.c.l.b16 %v6428
          %v6516 = vunpack.c.h.b16 %v6428
          %v6517 = vunpack.c.l.b16 %v6429
          %v6518 = vunpack.c.h.b16 %v6429
          %v6519 = vunpack.c.l.b16 %v6430
          %v6520 = vunpack.c.h.b16 %v6430
          %v6521 = vunpack.c.l.b16 %v6431
          %v6522 = vunpack.c.h.b16 %v6431
          %v6523 = vunpack.c.l.b16 %v6432
          %v6524 = vunpack.c.h.b16 %v6432
          %v6525 = vunpack.c.l.b16 %v6433
          %v6526 = vunpack.c.h.b16 %v6433
          %v6527 = vunpack.c.l.b16 %v6434
          %v6528 = vunpack.c.h.b16 %v6434
          %v6529 = vunpack.c.l.b16 %v6435
          %v6530 = vunpack.c.h.b16 %v6435
          %v6531 = vunpack.c.l.b16 %v6436
          %v6532 = vunpack.c.h.b16 %v6436
          %v6533 = vunpack.c.l.b16 %v6437
          %v6534 = vunpack.c.h.b16 %v6437
          %v6535 = vunpack.c.l.b16 %v6438
          %v6536 = vunpack.c.h.b16 %v6438
          %v6537 = vunpack.c.l.b16 %v6439
          %v6538 = vunpack.c.h.b16 %v6439
          %v6539 = vunpack.c.l.b16 %v6440
          %v6540 = vunpack.c.h.b16 %v6440
          %v6541 = vunpack.c.l.b16 %v6441
          %v6542 = vunpack.c.h.b16 %v6441
          %v6543 = vunpack.c.l.b16 %v6442
          %v6544 = vunpack.c.h.b16 %v6442
          %v6545 = vpack.c.b16 %v6483, %v6481
          %v6546 = vpack.c.b16 %v6484, %v6482
          %v6547 = vpack.c.b16 %v6487, %v6485
          %v6548 = vpack.c.b16 %v6488, %v6486
          %v6549 = vpack.c.b16 %v6491, %v6489
          %v6550 = vpack.c.b16 %v6492, %v6490
          %v6551 = vpack.c.b16 %v6495, %v6493
          %v6552 = vpack.c.b16 %v6496, %v6494
          %v6553 = vpack.c.b16 %v6499, %v6497
          %v6554 = vpack.c.b16 %v6500, %v6498
          %v6555 = vpack.c.b16 %v6503, %v6501
          %v6556 = vpack.c.b16 %v6504, %v6502
          %v6557 = vpack.c.b16 %v6507, %v6505
          %v6558 = vpack.c.b16 %v6508, %v6506
          %v6559 = vpack.c.b16 %v6511, %v6509
          %v6560 = vpack.c.b16 %v6512, %v6510
          %v6561 = vpack.c.b16 %v6515, %v6513
          %v6562 = vpack.c.b16 %v6516, %v6514
          %v6563 = vpack.c.b16 %v6519, %v6517
          %v6564 = vpack.c.b16 %v6520, %v6518
          %v6565 = vpack.c.b16 %v6523, %v6521
          %v6566 = vpack.c.b16 %v6524, %v6522
          %v6567 = vpack.c.b16 %v6527, %v6525
          %v6568 = vpack.c.b16 %v6528, %v6526
          %v6569 = vpack.c.b16 %v6531, %v6529
          %v6570 = vpack.c.b16 %v6532, %v6530
          %v6571 = vpack.c.b16 %v6535, %v6533
          %v6572 = vpack.c.b16 %v6536, %v6534
          %v6573 = vpack.c.b16 %v6539, %v6537
          %v6574 = vpack.c.b16 %v6540, %v6538
          %v6575 = vpack.c.b16 %v6543, %v6541
          %v6576 = vpack.c.b16 %v6544, %v6542
          %6609 = vmatpush.bf16.msra.mxu0 %v6559
          %6610 = vmatpush.bf16.msra.mxu0 %v6557
          %6611 = vmatpush.bf16.msra.mxu0 %v6555
          %6612 = vmatpush.bf16.msra.mxu0 %v6553
          %6613 = vmatpush.bf16.msra.mxu0 %v6551
          %6614 = vmatpush.bf16.msra.mxu0 %v6549
          %6615 = vmatpush.bf16.msra.mxu0 %v6547
          %6616 = vmatpush.bf16.msra.mxu0 %v6545
          %6617 = vmatmul.bf16.gmra.mxu0 %v6409
          %v6618 = vpop.f32.mrf.mxu0
          %v6619 = vadd.f32 %v6445, %v6618
          %v6620 = vpop.f32.mrf.mxu0
          %6621 = vdwg.mxu0
          %6622 = vmatpush.bf16.msra.mxu0 %v6575
          %6623 = vmatpush.bf16.msra.mxu0 %v6573
          %6624 = vmatpush.bf16.msra.mxu0 %v6571
          %6625 = vmatpush.bf16.msra.mxu0 %v6569
          %6626 = vmatpush.bf16.msra.mxu0 %v6567
          %6627 = vmatpush.bf16.msra.mxu0 %v6565
          %6628 = vmatpush.bf16.msra.mxu0 %v6563
          %6629 = vmatpush.bf16.msra.mxu0 %v6561
          %6630 = vmatmul.bf16.gmra.mxu0 %v6410
          %v6631 = vpop.f32.mrf.mxu0
          %v6632 = vadd.f32 %v6619, %v6631
          %v6633 = vpop.f32.mrf.mxu0
          %6634 = vdwg.mxu0
          %6635 = vmatpush.bf16.msra.mxu0 %v6560
          %6636 = vmatpush.bf16.msra.mxu0 %v6558
          %6637 = vmatpush.bf16.msra.mxu0 %v6556
          %6638 = vmatpush.bf16.msra.mxu0 %v6554
          %6639 = vmatpush.bf16.msra.mxu0 %v6552
          %6640 = vmatpush.bf16.msra.mxu0 %v6550
          %6641 = vmatpush.bf16.msra.mxu0 %v6548
          %6642 = vmatpush.bf16.msra.mxu0 %v6546
          %6643 = vmatmul.bf16.gmra.mxu0 %v6409
          %v6644 = vpop.f32.mrf.mxu0
          %v6645 = vadd.f32 %v6446, %v6644
          %v6646 = vpop.f32.mrf.mxu0
          %6647 = vdwg.mxu0
          %6648 = vmatpush.bf16.msra.mxu0 %v6576
          %6649 = vmatpush.bf16.msra.mxu0 %v6574
          %6650 = vmatpush.bf16.msra.mxu0 %v6572
          %6651 = vmatpush.bf16.msra.mxu0 %v6570
          %6652 = vmatpush.bf16.msra.mxu0 %v6568
          %6653 = vmatpush.bf16.msra.mxu0 %v6566
          %6654 = vmatpush.bf16.msra.mxu0 %v6564
          %6655 = vmatpush.bf16.msra.mxu0 %v6562
          %6656 = vmatmul.bf16.gmra.mxu0 %v6410
          %v6657 = vpop.f32.mrf.mxu0
          %v6658 = vadd.f32 %v6645, %v6657
          %v6659 = vpop.f32.mrf.mxu0
          %6660 = vdwg.mxu0
          %v6661 = vmax.f32 %v6632, 0.0
          %v6662 = vmax.f32 %v6658, 0.0
          %v6663 = vpack.c.bf16 %v6661, %v6661
          %v6664 = vpack.c.bf16 %v6662, %v6662
          %v6665 = vld [vmem:[#allocation23] sm:$0xff]
          %v6666 = vld [vmem:[#allocation23 + $0x8] sm:$0xff]
          %v6667 = vld [vmem:[#allocation23 + $0x10] sm:$0xff]
          %v6668 = vld [vmem:[#allocation23 + $0x18] sm:$0xff]
          %v6669 = vld [vmem:[#allocation23 + $0x20] sm:$0xff]
          %v6670 = vld [vmem:[#allocation23 + $0x28] sm:$0xff]
          %v6671 = vld [vmem:[#allocation23 + $0x30] sm:$0xff]
          %v6672 = vld [vmem:[#allocation23 + $0x38] sm:$0xff]
          %v6673 = vld [vmem:[#allocation23 + $0x40] sm:$0xff]
          %v6674 = vld [vmem:[#allocation23 + $0x48] sm:$0xff]
          %v6675 = vld [vmem:[#allocation23 + $0x50] sm:$0xff]
          %v6676 = vld [vmem:[#allocation23 + $0x58] sm:$0xff]
          %v6677 = vld [vmem:[#allocation23 + $0x60] sm:$0xff]
          %v6678 = vld [vmem:[#allocation23 + $0x68] sm:$0xff]
          %v6679 = vld [vmem:[#allocation23 + $0x70] sm:$0xff]
          %v6680 = vld [vmem:[#allocation23 + $0x78] sm:$0xff]
          %v6681 = vld [vmem:[#allocation23 + $0x80] sm:$0xff]
          %v6682 = vld [vmem:[#allocation23 + $0x88] sm:$0xff]
          %v6683 = vld [vmem:[#allocation23 + $0x90] sm:$0xff]
          %v6684 = vld [vmem:[#allocation23 + $0x98] sm:$0xff]
          %v6685 = vld [vmem:[#allocation23 + $0xa0] sm:$0xff]
          %v6686 = vld [vmem:[#allocation23 + $0xa8] sm:$0xff]
          %v6687 = vld [vmem:[#allocation23 + $0xb0] sm:$0xff]
          %v6688 = vld [vmem:[#allocation23 + $0xb8] sm:$0xff]
          %v6689 = vld [vmem:[#allocation23 + $0xc0] sm:$0xff]
          %v6690 = vld [vmem:[#allocation23 + $0xc8] sm:$0xff]
          %v6691 = vld [vmem:[#allocation23 + $0xd0] sm:$0xff]
          %v6692 = vld [vmem:[#allocation23 + $0xd8] sm:$0xff]
          %v6693 = vld [vmem:[#allocation23 + $0xe0] sm:$0xff]
          %v6694 = vld [vmem:[#allocation23 + $0xe8] sm:$0xff]
          %v6695 = vld [vmem:[#allocation23 + $0xf0] sm:$0xff]
          %v6696 = vld [vmem:[#allocation23 + $0xf8] sm:$0xff]
          %v6697 = vld [vmem:[#allocation24] sm:$0x3]
          %v6699 = vperm.slane %v6697, 0
          %v6700 = vperm.slane %v6697, 1
          %v6735 = vunpack.c.l.b16 %v6665
          %v6736 = vunpack.c.h.b16 %v6665
          %v6737 = vunpack.c.l.b16 %v6666
          %v6738 = vunpack.c.h.b16 %v6666
          %v6739 = vunpack.c.l.b16 %v6667
          %v6740 = vunpack.c.h.b16 %v6667
          %v6741 = vunpack.c.l.b16 %v6668
          %v6742 = vunpack.c.h.b16 %v6668
          %v6743 = vunpack.c.l.b16 %v6669
          %v6744 = vunpack.c.h.b16 %v6669
          %v6745 = vunpack.c.l.b16 %v6670
          %v6746 = vunpack.c.h.b16 %v6670
          %v6747 = vunpack.c.l.b16 %v6671
          %v6748 = vunpack.c.h.b16 %v6671
          %v6749 = vunpack.c.l.b16 %v6672
          %v6750 = vunpack.c.h.b16 %v6672
          %v6751 = vunpack.c.l.b16 %v6673
          %v6752 = vunpack.c.h.b16 %v6673
          %v6753 = vunpack.c.l.b16 %v6674
          %v6754 = vunpack.c.h.b16 %v6674
          %v6755 = vunpack.c.l.b16 %v6675
          %v6756 = vunpack.c.h.b16 %v6675
          %v6757 = vunpack.c.l.b16 %v6676
          %v6758 = vunpack.c.h.b16 %v6676
          %v6759 = vunpack.c.l.b16 %v6677
          %v6760 = vunpack.c.h.b16 %v6677
          %v6761 = vunpack.c.l.b16 %v6678
          %v6762 = vunpack.c.h.b16 %v6678
          %v6763 = vunpack.c.l.b16 %v6679
          %v6764 = vunpack.c.h.b16 %v6679
          %v6765 = vunpack.c.l.b16 %v6680
          %v6766 = vunpack.c.h.b16 %v6680
          %v6767 = vunpack.c.l.b16 %v6681
          %v6768 = vunpack.c.h.b16 %v6681
          %v6769 = vunpack.c.l.b16 %v6682
          %v6770 = vunpack.c.h.b16 %v6682
          %v6771 = vunpack.c.l.b16 %v6683
          %v6772 = vunpack.c.h.b16 %v6683
          %v6773 = vunpack.c.l.b16 %v6684
          %v6774 = vunpack.c.h.b16 %v6684
          %v6775 = vunpack.c.l.b16 %v6685
          %v6776 = vunpack.c.h.b16 %v6685
          %v6777 = vunpack.c.l.b16 %v6686
          %v6778 = vunpack.c.h.b16 %v6686
          %v6779 = vunpack.c.l.b16 %v6687
          %v6780 = vunpack.c.h.b16 %v6687
          %v6781 = vunpack.c.l.b16 %v6688
          %v6782 = vunpack.c.h.b16 %v6688
          %v6783 = vunpack.c.l.b16 %v6689
          %v6784 = vunpack.c.h.b16 %v6689
          %v6785 = vunpack.c.l.b16 %v6690
          %v6786 = vunpack.c.h.b16 %v6690
          %v6787 = vunpack.c.l.b16 %v6691
          %v6788 = vunpack.c.h.b16 %v6691
          %v6789 = vunpack.c.l.b16 %v6692
          %v6790 = vunpack.c.h.b16 %v6692
          %v6791 = vunpack.c.l.b16 %v6693
          %v6792 = vunpack.c.h.b16 %v6693
          %v6793 = vunpack.c.l.b16 %v6694
          %v6794 = vunpack.c.h.b16 %v6694
          %v6795 = vunpack.c.l.b16 %v6695
          %v6796 = vunpack.c.h.b16 %v6695
          %v6797 = vunpack.c.l.b16 %v6696
          %v6798 = vunpack.c.h.b16 %v6696
          %v6799 = vpack.c.b16 %v6737, %v6735
          %v6800 = vpack.c.b16 %v6738, %v6736
          %v6801 = vpack.c.b16 %v6741, %v6739
          %v6802 = vpack.c.b16 %v6742, %v6740
          %v6803 = vpack.c.b16 %v6745, %v6743
          %v6804 = vpack.c.b16 %v6746, %v6744
          %v6805 = vpack.c.b16 %v6749, %v6747
          %v6806 = vpack.c.b16 %v6750, %v6748
          %v6807 = vpack.c.b16 %v6753, %v6751
          %v6808 = vpack.c.b16 %v6754, %v6752
          %v6809 = vpack.c.b16 %v6757, %v6755
          %v6810 = vpack.c.b16 %v6758, %v6756
          %v6811 = vpack.c.b16 %v6761, %v6759
          %v6812 = vpack.c.b16 %v6762, %v6760
          %v6813 = vpack.c.b16 %v6765, %v6763
          %v6814 = vpack.c.b16 %v6766, %v6764
          %v6815 = vpack.c.b16 %v6769, %v6767
          %v6816 = vpack.c.b16 %v6770, %v6768
          %v6817 = vpack.c.b16 %v6773, %v6771
          %v6818 = vpack.c.b16 %v6774, %v6772
          %v6819 = vpack.c.b16 %v6777, %v6775
          %v6820 = vpack.c.b16 %v6778, %v6776
          %v6821 = vpack.c.b16 %v6781, %v6779
          %v6822 = vpack.c.b16 %v6782, %v6780
          %v6823 = vpack.c.b16 %v6785, %v6783
          %v6824 = vpack.c.b16 %v6786, %v6784
          %v6825 = vpack.c.b16 %v6789, %v6787
          %v6826 = vpack.c.b16 %v6790, %v6788
          %v6827 = vpack.c.b16 %v6793, %v6791
          %v6828 = vpack.c.b16 %v6794, %v6792
          %v6829 = vpack.c.b16 %v6797, %v6795
          %v6830 = vpack.c.b16 %v6798, %v6796
          %6863 = vmatpush.bf16.msra.mxu0 %v6813
          %6864 = vmatpush.bf16.msra.mxu0 %v6811
          %6865 = vmatpush.bf16.msra.mxu0 %v6809
          %6866 = vmatpush.bf16.msra.mxu0 %v6807
          %6867 = vmatpush.bf16.msra.mxu0 %v6805
          %6868 = vmatpush.bf16.msra.mxu0 %v6803
          %6869 = vmatpush.bf16.msra.mxu0 %v6801
          %6870 = vmatpush.bf16.msra.mxu0 %v6799
          %6871 = vmatmul.bf16.gmra.mxu0 %v6663
          %v6872 = vpop.f32.mrf.mxu0
          %v6873 = vadd.f32 %v6699, %v6872
          %v6874 = vpop.f32.mrf.mxu0
          %6875 = vdwg.mxu0
          %6876 = vmatpush.bf16.msra.mxu0 %v6829
          %6877 = vmatpush.bf16.msra.mxu0 %v6827
          %6878 = vmatpush.bf16.msra.mxu0 %v6825
          %6879 = vmatpush.bf16.msra.mxu0 %v6823
          %6880 = vmatpush.bf16.msra.mxu0 %v6821
          %6881 = vmatpush.bf16.msra.mxu0 %v6819
          %6882 = vmatpush.bf16.msra.mxu0 %v6817
          %6883 = vmatpush.bf16.msra.mxu0 %v6815
          %6884 = vmatmul.bf16.gmra.mxu0 %v6664
          %v6885 = vpop.f32.mrf.mxu0
          %v6886 = vadd.f32 %v6873, %v6885
          %v6887 = vpop.f32.mrf.mxu0
          %6888 = vdwg.mxu0
          %6889 = vmatpush.bf16.msra.mxu0 %v6814
          %6890 = vmatpush.bf16.msra.mxu0 %v6812
          %6891 = vmatpush.bf16.msra.mxu0 %v6810
          %6892 = vmatpush.bf16.msra.mxu0 %v6808
          %6893 = vmatpush.bf16.msra.mxu0 %v6806
          %6894 = vmatpush.bf16.msra.mxu0 %v6804
          %6895 = vmatpush.bf16.msra.mxu0 %v6802
          %6896 = vmatpush.bf16.msra.mxu0 %v6800
          %6897 = vmatmul.bf16.gmra.mxu0 %v6663
          %v6898 = vpop.f32.mrf.mxu0
          %v6899 = vadd.f32 %v6700, %v6898
          %v6900 = vpop.f32.mrf.mxu0
          %6901 = vdwg.mxu0
          %6902 = vmatpush.bf16.msra.mxu0 %v6830
          %6903 = vmatpush.bf16.msra.mxu0 %v6828
          %6904 = vmatpush.bf16.msra.mxu0 %v6826
          %6905 = vmatpush.bf16.msra.mxu0 %v6824
          %6906 = vmatpush.bf16.msra.mxu0 %v6822
          %6907 = vmatpush.bf16.msra.mxu0 %v6820
          %6908 = vmatpush.bf16.msra.mxu0 %v6818
          %6909 = vmatpush.bf16.msra.mxu0 %v6816
          %6910 = vmatmul.bf16.gmra.mxu0 %v6664
          %v6911 = vpop.f32.mrf.mxu0
          %v6912 = vadd.f32 %v6899, %v6911
          %v6913 = vpop.f32.mrf.mxu0
          %6914 = vdwg.mxu0
          %v6915 = vmax.f32 %v6886, 0.0
          %v6916 = vmax.f32 %v6912, 0.0
          %v6917 = vpack.c.bf16 %v6915, %v6915
          %v6918 = vpack.c.bf16 %v6916, %v6916
          %v6919 = vld [vmem:[%s14] sm:$0xf]
          %v6920 = vld [vmem:[%s14 + $0x4] sm:$0xf]
          %v6921 = vld [vmem:[%s14 + $0x8] sm:$0xf]
          %v6922 = vld [vmem:[%s14 + $0xc] sm:$0xf]
          %v6923 = vld [vmem:[%s14 + $0x10] sm:$0xf]
          %v6924 = vld [vmem:[%s14 + $0x14] sm:$0xf]
          %v6925 = vld [vmem:[%s14 + $0x18] sm:$0xf]
          %v6926 = vld [vmem:[%s14 + $0x1c] sm:$0xf]
          %v6927 = vld [vmem:[%s14 + $0x20] sm:$0xf]
          %v6928 = vld [vmem:[%s14 + $0x24] sm:$0xf]
          %v6929 = vld [vmem:[%s14 + $0x28] sm:$0xf]
          %v6930 = vld [vmem:[%s14 + $0x2c] sm:$0xf]
          %v6931 = vld [vmem:[%s14 + $0x30] sm:$0xf]
          %v6932 = vld [vmem:[%s14 + $0x34] sm:$0xf]
          %v6933 = vld [vmem:[%s14 + $0x38] sm:$0xf]
          %v6934 = vld [vmem:[%s14 + $0x3c] sm:$0xf]
          %v6935 = vld [vmem:[%s14 + $0x40] sm:$0xf]
          %v6936 = vld [vmem:[%s14 + $0x44] sm:$0xf]
          %v6937 = vld [vmem:[%s14 + $0x48] sm:$0xf]
          %v6938 = vld [vmem:[%s14 + $0x4c] sm:$0xf]
          %v6939 = vld [vmem:[%s14 + $0x50] sm:$0xf]
          %v6940 = vld [vmem:[%s14 + $0x54] sm:$0xf]
          %v6941 = vld [vmem:[%s14 + $0x58] sm:$0xf]
          %v6942 = vld [vmem:[%s14 + $0x5c] sm:$0xf]
          %v6943 = vld [vmem:[%s14 + $0x60] sm:$0xf]
          %v6944 = vld [vmem:[%s14 + $0x64] sm:$0xf]
          %v6945 = vld [vmem:[%s14 + $0x68] sm:$0xf]
          %v6946 = vld [vmem:[%s14 + $0x6c] sm:$0xf]
          %v6947 = vld [vmem:[%s14 + $0x70] sm:$0xf]
          %v6948 = vld [vmem:[%s14 + $0x74] sm:$0xf]
          %v6949 = vld [vmem:[%s14 + $0x78] sm:$0xf]
          %v6950 = vld [vmem:[%s14 + $0x7c] sm:$0xf]
          %v6951 = vld [vmem:[#allocation26] sm:$0x1]
          %v6953 = vperm.slane %v6951, 0
          %v6987 = vunpack.c.l.b16 %v6919
          %v6988 = vunpack.c.l.b16 %v6920
          %v6989 = vunpack.c.l.b16 %v6921
          %v6990 = vunpack.c.l.b16 %v6922
          %v6991 = vunpack.c.l.b16 %v6923
          %v6992 = vunpack.c.l.b16 %v6924
          %v6993 = vunpack.c.l.b16 %v6925
          %v6994 = vunpack.c.l.b16 %v6926
          %v6995 = vunpack.c.l.b16 %v6927
          %v6996 = vunpack.c.l.b16 %v6928
          %v6997 = vunpack.c.l.b16 %v6929
          %v6998 = vunpack.c.l.b16 %v6930
          %v6999 = vunpack.c.l.b16 %v6931
          %v7000 = vunpack.c.l.b16 %v6932
          %v7001 = vunpack.c.l.b16 %v6933
          %v7002 = vunpack.c.l.b16 %v6934
          %v7003 = vunpack.c.l.b16 %v6935
          %v7004 = vunpack.c.l.b16 %v6936
          %v7005 = vunpack.c.l.b16 %v6937
          %v7006 = vunpack.c.l.b16 %v6938
          %v7007 = vunpack.c.l.b16 %v6939
          %v7008 = vunpack.c.l.b16 %v6940
          %v7009 = vunpack.c.l.b16 %v6941
          %v7010 = vunpack.c.l.b16 %v6942
          %v7011 = vunpack.c.l.b16 %v6943
          %v7012 = vunpack.c.l.b16 %v6944
          %v7013 = vunpack.c.l.b16 %v6945
          %v7014 = vunpack.c.l.b16 %v6946
          %v7015 = vunpack.c.l.b16 %v6947
          %v7016 = vunpack.c.l.b16 %v6948
          %v7017 = vunpack.c.l.b16 %v6949
          %v7018 = vunpack.c.l.b16 %v6950
          %v7019 = vpack.c.b16 %v6988, %v6987
          %v7020 = vpack.c.b16 %v6990, %v6989
          %v7021 = vpack.c.b16 %v6992, %v6991
          %v7022 = vpack.c.b16 %v6994, %v6993
          %v7023 = vpack.c.b16 %v6996, %v6995
          %v7024 = vpack.c.b16 %v6998, %v6997
          %v7025 = vpack.c.b16 %v7000, %v6999
          %v7026 = vpack.c.b16 %v7002, %v7001
          %v7027 = vpack.c.b16 %v7004, %v7003
          %v7028 = vpack.c.b16 %v7006, %v7005
          %v7029 = vpack.c.b16 %v7008, %v7007
          %v7030 = vpack.c.b16 %v7010, %v7009
          %v7031 = vpack.c.b16 %v7012, %v7011
          %v7032 = vpack.c.b16 %v7014, %v7013
          %v7033 = vpack.c.b16 %v7016, %v7015
          %v7034 = vpack.c.b16 %v7018, %v7017
          %7051 = vmatpush.bf16.msra.mxu0 %v7026
          %7052 = vmatpush.bf16.msra.mxu0 %v7025
          %7053 = vmatpush.bf16.msra.mxu0 %v7024
          %7054 = vmatpush.bf16.msra.mxu0 %v7023
          %7055 = vmatpush.bf16.msra.mxu0 %v7022
          %7056 = vmatpush.bf16.msra.mxu0 %v7021
          %7057 = vmatpush.bf16.msra.mxu0 %v7020
          %7058 = vmatpush.bf16.msra.mxu0 %v7019
          %7059 = vmatmul.bf16.gmra.mxu0 %v6917
          %v7060 = vpop.f32.mrf.mxu0
          %v7061 = vadd.f32 %v6953, %v7060
          %v7062 = vpop.f32.mrf.mxu0
          %7063 = vdwg.mxu0
          %7064 = vmatpush.bf16.msra.mxu0 %v7034
          %7065 = vmatpush.bf16.msra.mxu0 %v7033
          %7066 = vmatpush.bf16.msra.mxu0 %v7032
          %7067 = vmatpush.bf16.msra.mxu0 %v7031
          %7068 = vmatpush.bf16.msra.mxu0 %v7030
          %7069 = vmatpush.bf16.msra.mxu0 %v7029
          %7070 = vmatpush.bf16.msra.mxu0 %v7028
          %7071 = vmatpush.bf16.msra.mxu0 %v7027
          %7072 = vmatmul.bf16.gmra.mxu0 %v6918
          %v7073 = vpop.f32.mrf.mxu0
          %v7074 = vadd.f32 %v7061, %v7073
          %v7075 = vpop.f32.mrf.mxu0
          %7076 = vdwg.mxu0
          %v7077 = vmax.f32 %v7074, 0.0
          %v7078 = vpack.c.bf16 %v7077, %v7077
          %v7079 = vld [vmem:[%s16] sm:$0xf]
          %v7080 = vld [vmem:[%s16 + $0x4] sm:$0xf]
          %v7081 = vld [vmem:[%s16 + $0x8] sm:$0xf]
          %v7082 = vld [vmem:[%s16 + $0xc] sm:$0xf]
          %v7083 = vld [vmem:[%s16 + $0x10] sm:$0xf]
          %v7084 = vld [vmem:[%s16 + $0x14] sm:$0xf]
          %v7085 = vld [vmem:[%s16 + $0x18] sm:$0xf]
          %v7086 = vld [vmem:[%s16 + $0x1c] sm:$0xf]
          %v7087 = vld [vmem:[#allocation27] sm:$0x1]
          %v7089 = vperm.slane %v7087, 0
          %v7099 = vunpack.c.l.b16 %v7079
          %v7100 = vunpack.c.l.b16 %v7080
          %v7101 = vunpack.c.l.b16 %v7081
          %v7102 = vunpack.c.l.b16 %v7082
          %v7103 = vunpack.c.l.b16 %v7083
          %v7104 = vunpack.c.l.b16 %v7084
          %v7105 = vunpack.c.l.b16 %v7085
          %v7106 = vunpack.c.l.b16 %v7086
          %v7107 = vpack.c.b16 %v7100, %v7099
          %v7108 = vpack.c.b16 %v7102, %v7101
          %v7109 = vpack.c.b16 %v7104, %v7103
          %v7110 = vpack.c.b16 %v7106, %v7105
          %vm7115 = vcmask 523264
          %v7117 = vsel %vm7115, %v7078, 0
          %7119 = vmatpush.bf16.msra.mxu0 0
          %7120 = vmatpush.bf16.msra.mxu0 0
          %7121 = vmatpush.bf16.msra.mxu0 0
          %7122 = vmatpush.bf16.msra.mxu0 0
          %7123 = vmatpush.bf16.msra.mxu0 %v7110
          %7124 = vmatpush.bf16.msra.mxu0 %v7109
          %7125 = vmatpush.bf16.msra.mxu0 %v7108
          %7126 = vmatpush.bf16.msra.mxu0 %v7107
          %7127 = vmatmul.bf16.gmra.mxu0 %v7117
          %v7128 = vpop.f32.mrf.mxu0
          %v7129 = vadd.f32 %v7089, %v7128
          %v7130 = vpop.f32.mrf.mxu0
          %7131 = vdwg.mxu0
          %vm7132 = vcmask 74752
          %v7133 = vsel %vm7132, %v7129, -inf
          %7134 = vmax.xlane.f32.xlu0 %v7133
          %v7135 = vpop.xlane.xlu0 %7134
          %v7136 = vsub.f32 %v7129, %v7135
          %v7137 = vmul.f32 %v7136, 1.442695
          %v7138 = vpow.pop %v7137
          %v7139 = vsel %vm7132, %v7138, 0.0
          %7140 = vadd.xlane.f32.xlu0 %v7139
          %v7141 = vpop.xlane.xlu0 %7140
          %v7142 = vrcp.pop %v7141
          %v7143 = vmul.f32 %v7141, %v7142
          %v7144 = vsub.f32 1.0, %v7143
          %v7145 = vmul.f32 %v7142, %v7144
          %v7146 = vadd.f32 %v7142, %v7145
          %vm7147 = vweird.f32 %v7141
          %vm7148 = vweird.f32 %v7142
          %vm7149 = vmor %vm7147, %vm7148
          %v7150 = vsel %vm7149, %v7142, %v7146
          %v7151 = vand.u32 2147483647, %v7141
          %vm7152 = vcmp.eq.f32.partialorder %v7151, 8.507059e+37
          %v7153 = vand.u32 %v7141, 2147483648
          %v7154 = vor.u32 1.1754944e-38, %v7153
          %v7155 = vsel %vm7152, %v7154, %v7150
          %v7156 = vmul.f32 %v7138, %v7155
          %7157 = vst.msk [vmem:[#allocation29] sm:$0x3] %vm7132, %v7156
        $region164: #{cnn_forward.1} parent=91 // pred_fallthru
          _
        // Predicated region
        $region165: #{cnn_forward.1} parent=91 // pred_check
          %p7158 = pneg %p454
        $region166: #{cnn_forward.1} parent=91 // pred_check_branch
          %7160 = sbr.rel (%p7158) target = $region168
        $region167: #{cnn_forward.1} parent=91 // pred_region
          %7162 = vsyncadd [#allocation5], 0
          %s7164 = sshll.u32 [#allocation29], 4
          %s7165 = int_to_ptr.vmem [resolvable:$true] %s7164
          %s7166 = sshll.u32 %s18, 4
          %s7167 = int_to_ptr.hbm [resolvable:$true] %s7166
          %7169 = dma.vmem_to_hbm [thread:$0]  %s7165, 32, %s7167, [#allocation5]
        $region168: #{cnn_forward.1} parent=91 // pred_fallthru
          _
        // Predicated region
        $region169: #{cnn_forward.1} parent=91 // pred_check
          %p7170 = pneg %p454
        $region170: #{cnn_forward.1} parent=91 // pred_check_branch
          %7172 = sbr.rel (%p7170) target = $region172
        $region171: #{cnn_forward.1} parent=91 // pred_region
          %7174 = dma.done [#allocation5], 32
        $region172: #{cnn_forward.1} parent=91 // pred_fallthru
          _
      $region92: #{cnn_forward.1} parent=5 // pred_fallthru
        _
      %p7175 = scmp.le.s32.totalorder 2, %s38
      // Predicated region
      $region173: #{cnn_forward.1} parent=5 // pred_check
        %p7176 = pneg %p7175
      $region174: #{cnn_forward.1} parent=5 // pred_check_branch
        %7178 = sbr.rel (%p7176) target = $region176
      $region175: #{cnn_forward.1} parent=5 // pred_region
        %s7179 = ssub.s32 %s38, 2
      $region176: #{cnn_forward.1} parent=5 // pred_fallthru
        _
    $region6: #{cnn_forward.1} parent=1 // loop_footer
      %s42 = sadd.s32 1, %s38
    $region7: #{cnn_forward.1} parent=1 // loop_footer_branch
      %37 = sbr.rel target = $region3
    $region8: #{cnn_forward.1} parent=1 // loop_exit
      _
    %7180 = vsyncpa [#allocation4], 1
    %s7181 = scalar_lea.sflag [#allocation4], 1
    %7182 = vsyncpa %s7181, 1
    %7183 = vsyncpa [#allocation7], 1
    %s7184 = scalar_lea.sflag [#allocation7], 1
    %7185 = vsyncpa %s7184, 1
    %7186 = vsyncpa [#allocation10], 1
    %s7187 = scalar_lea.sflag [#allocation10], 1
    %7188 = vsyncpa %s7187, 1
    %7189 = vsyncpa [#allocation13], 1
    %7190 = vsyncpa [#allocation16], 1
    %7191 = vsyncpa [#allocation19], 1
    %7192 = vsyncpa [#allocation22], 1
    %7193 = vsyncpa [#allocation25], 1
    %7194 = vsyncpa [#allocation28], 1
    %7195 = vsyncpa [#allocation5], 1
    %s7196 = scalar_lea.sflag [#allocation5], 1
    %7197 = vsyncpa %s7196, 1

</llo_original>
